<compile_context>
chip_gen: v7x
topology: tpu7x:2x2x1
jax: 0.10.0
libtpu: 0.0.40
codegen_flags: <defaults>
</compile_context>

<pallas_src>
import functools
import math

import jax
import jax.numpy as jnp
from jax.experimental import pallas as pl
from jax.experimental.pallas import tpu as pltpu

_NEG_INF = -1e9  # additive-mask "masked" value


# ----------------------------------------------------------------------------
# In-kernel helpers
# ----------------------------------------------------------------------------

def _layernorm(z, gamma, beta, eps):
    """LayerNorm over the last dim, float32 math."""
    mu = jnp.mean(z, axis=-1, keepdims=True)
    var = jnp.mean((z - mu) * (z - mu), axis=-1, keepdims=True)
    return (z - mu) * jax.lax.rsqrt(var + eps) * gamma + beta


def _split_heads(x2d, bt, s, h, dh):
    """(bt*s, h*dh) bf16 -> (bt*h, s, dh) bf16 (merged batch*head leading dim)."""
    x4 = x2d.reshape(bt, s, h, dh)
    x4 = jnp.swapaxes(x4, 1, 2)                  # (bt, h, s, dh)
    return x4.reshape(bt * h, s, dh)


def _merge_heads(ctx, bt, h):
    """(bt*h, s, dh) -> (bt*s, h*dh)."""
    _, s, dh = ctx.shape
    x4 = ctx.reshape(bt, h, s, dh)
    x4 = jnp.swapaxes(x4, 1, 2)                  # (bt, s, h, dh)
    return x4.reshape(bt * s, h * dh)


def _attention(qh, kh, vh, mask_fn, k_chunk):
    """Chunked online-softmax attention.

    qh: (Z, Sq, dh) bf16, already scaled by 1/sqrt(dh) (folded into Wq).
    kh, vh: (Z, Sk, dh) bf16.
    mask_fn(start, size) -> None or (Sq, size) f32 additive mask chunk.
    Returns (Z, Sq, dh) f32.  Normalization is deferred to the output
    (multiplies over dh, not Sk).
    """
    bf16 = jnp.bfloat16
    z, sq, dh = qh.shape
    sk = kh.shape[1]
    kc = k_chunk if (0 < k_chunk <= sk and sk % k_chunk == 0) else sk

    m = jnp.full((z, sq, 1), -jnp.inf, jnp.float32)
    l = jnp.zeros((z, sq, 1), jnp.float32)
    acc = jnp.zeros((z, sq, dh), jnp.float32)
    # Static chunk loop keeps the live score block at (Z, Sq, kc) instead of
    # the full (Z, Sq, Sk) f32 tensor.
    for i in range(sk // kc):
        k_blk = kh[:, i * kc:(i + 1) * kc, :]
        v_blk = vh[:, i * kc:(i + 1) * kc, :]
        s = jnp.einsum("zqd,zkd->zqk", qh, k_blk,
                       preferred_element_type=jnp.float32)
        m_add = mask_fn(i * kc, kc)
        if m_add is not None:
            s = s + m_add[None, :, :]
        m_new = jnp.maximum(m, jnp.max(s, axis=-1, keepdims=True))
        alpha = jnp.exp(m - m_new)
        p = jnp.exp(s - m_new)
        l = alpha * l + jnp.sum(p, axis=-1, keepdims=True)
        acc = alpha * acc + jnp.einsum("zqk,zkd->zqd", p.astype(bf16), v_blk,
                                       preferred_element_type=jnp.float32)
        m = m_new
    # Deferred softmax normalization; EUP reciprocal (free slot vs. VPU divide).
    return acc * pl.reciprocal(l, approx=True)


# ----------------------------------------------------------------------------
# Fused decoder-layer kernel (one batch tile per grid step)
# ----------------------------------------------------------------------------

def _decoder_layer_kernel(*refs, n_heads, eps, tgt_kind, src_kind,
                          ff_chunk, kc_self, kc_cross):
    refs = list(refs)
    out_ref = refs.pop()                         # single output, no scratch
    it = iter(refs)
    x_ref = next(it)                             # (bt, Sq, D) f32
    mem_ref = next(it)                           # (bt, Sk, D) bf16
    tgt_mask_ref = next(it) if tgt_kind == "dense" else None
    src_mask_ref = next(it) if src_kind == "dense" else None
    (sa_wqkv_ref, sa_bqkv_ref, sa_wo_ref, sa_bo_ref, ln1_g_ref, ln1_b_ref,
     ca_wq_ref, ca_bq_ref, ca_wkv_ref, ca_bkv_ref, ca_wo_ref, ca_bo_ref,
     ln2_g_ref, ln2_b_ref, ff_w1_ref, ff_b1_ref, ff_w2_ref, ff_b2_ref,
     ln3_g_ref, ln3_b_ref) = it

    bt, sq, d = x_ref.shape
    sk = mem_ref.shape[1]
    h = n_heads
    dh = d // h
    bf16 = jnp.bfloat16
    f32 = jnp.float32

    x2d = x_ref[...].reshape(bt * sq, d)         # f32 residual stream
    mem2d = mem_ref[...].reshape(bt * sk, d)     # bf16

    # ---- mask chunk generators (no HBM mask traffic when causal / None) ----
    def no_mask(start, size):
        return None

    def causal_mask(start, size):
        q_idx = jax.lax.broadcasted_iota(jnp.int32, (sq, size), 0)
        k_idx = jax.lax.broadcasted_iota(jnp.int32, (sq, size), 1) + start
        return jnp.where(k_idx <= q_idx, 0.0, _NEG_INF).astype(f32)

    def dense_mask(ref):
        def fn(start, size):
            return ref[:, start:start + size]
        return fn

    if tgt_kind == "causal":
        tgt_fn = causal_mask
    elif tgt_kind == "dense":
        tgt_fn = dense_mask(tgt_mask_ref)
    else:
        tgt_fn = no_mask
    src_fn = dense_mask(src_mask_ref) if src_kind == "dense" else no_mask

    # ---- self-attention (fused QKV, scale pre-folded into Wq) + LN1 --------
    qkv = jnp.dot(x2d.astype(bf16), sa_wqkv_ref[...],
                  preferred_element_type=f32) + sa_bqkv_ref[...]
    qkv = qkv.astype(bf16)                       # bf16 before the head relayout
    qh = _split_heads(qkv[:, :d], bt, sq, h, dh)
    kh = _split_heads(qkv[:, d:2 * d], bt, sq, h, dh)
    vh = _split_heads(qkv[:, 2 * d:], bt, sq, h, dh)
    ctx = _attention(qh, kh, vh, tgt_fn, kc_self)            # (bt*h, sq, dh) f32
    ctx = _merge_heads(ctx.astype(bf16), bt, h)
    sa_out = jnp.dot(ctx, sa_wo_ref[...],
                     preferred_element_type=f32) + sa_bo_ref[...]
    # dropout1 == identity (inference)
    attn = _layernorm(x2d + sa_out, ln1_g_ref[...], ln1_b_ref[...], eps)

    # ---- cross-attention (fused KV) + LN2 -----------------------------------
    q2 = jnp.dot(attn.astype(bf16), ca_wq_ref[...],
                 preferred_element_type=f32) + ca_bq_ref[...]
    kv2 = jnp.dot(mem2d, ca_wkv_ref[...],
                  preferred_element_type=f32) + ca_bkv_ref[...]
    q2 = q2.astype(bf16)
    kv2 = kv2.astype(bf16)
    q2h = _split_heads(q2, bt, sq, h, dh)
    k2h = _split_heads(kv2[:, :d], bt, sk, h, dh)
    v2h = _split_heads(kv2[:, d:], bt, sk, h, dh)
    ctx2 = _attention(q2h, k2h, v2h, src_fn, kc_cross)
    ctx2 = _merge_heads(ctx2.astype(bf16), bt, h)
    ca_out = jnp.dot(ctx2, ca_wo_ref[...],
                     preferred_element_type=f32) + ca_bo_ref[...]
    # dropout2 == identity (inference)
    cross = _layernorm(attn + ca_out, ln2_g_ref[...], ln2_b_ref[...], eps)

    # ---- position-wise FFN (chunked over d_ff) + LN3 ------------------------
    d_ff = ff_w1_ref.shape[1]
    cc = ff_chunk if (0 < ff_chunk <= d_ff and d_ff % ff_chunk == 0) else d_ff
    cross_bf16 = cross.astype(bf16)
    ff = jnp.zeros((bt * sq, d), f32)
    for i in range(d_ff // cc):
        hblk = jnp.dot(cross_bf16, ff_w1_ref[:, i * cc:(i + 1) * cc],
                       preferred_element_type=f32) + ff_b1_ref[:, i * cc:(i + 1) * cc]
        hblk = jnp.maximum(hblk, 0.0).astype(bf16)           # ReLU, bf16 interm.
        ff = ff + jnp.dot(hblk, ff_w2_ref[i * cc:(i + 1) * cc, :],
                          preferred_element_type=f32)
    ff = ff + ff_b2_ref[...]
    # dropout3 == identity (inference)
    out = _layernorm(cross + ff, ln3_g_ref[...], ln3_b_ref[...], eps)
    out_ref[...] = out.reshape(bt, sq, d)


# ----------------------------------------------------------------------------
# Wrapper (pallas_call plumbing)
# ----------------------------------------------------------------------------

def transformer_decoder_layer(x, memory, params, n_heads,
                              src_mask=None, tgt_mask=None, eps=1e-5,
                              batch_tile=None, k_chunk=512, ff_chunk=1024):
    """Forward pass matching the PyTorch TransformerDecoderLayer (inference).

    Masks: None (no masking), "causal" (generated in-kernel, tgt only), or a
    float array with 1.0 = keep / 0.0 = masked (inverted vs. PyTorch's
    boolean attn_mask where True = masked).
    """
    B, Sq, D = x.shape
    Sk = memory.shape[1]
    bf16 = jnp.bfloat16
    f32 = jnp.float32

    # --- batch folding: grow matmul M-dim (bt*Sq) toward the MXU width ------
    if batch_tile is None:
        batch_tile = 1
        for cand in range(1, B + 1):
            if B % cand == 0:
                batch_tile = cand
                if cand * Sq >= 256 or cand >= 8:
                    break
    bt = batch_tile
    assert B % bt == 0, "batch_tile must divide batch"

    # --- mask specialization --------------------------------------------------
    if tgt_mask is None:
        tgt_kind, tgt_arg = "none", None
    elif isinstance(tgt_mask, str) and tgt_mask == "causal":
        tgt_kind, tgt_arg = "causal", None
    else:
        tgt_kind = "dense"
        tgt_arg = (1.0 - jnp.asarray(tgt_mask, f32)) * _NEG_INF
    if src_mask is None:
        src_kind, src_arg = "none", None
    else:
        src_kind = "dense"
        src_arg = (1.0 - jnp.asarray(src_mask, f32)) * _NEG_INF

    p = params
    scale = 1.0 / math.sqrt(D // n_heads)
    # Fold the softmax scale into the Q projections (free); fuse QKV / KV
    # weight matmuls; cast weights & memory to bf16 once in the wrapper.
    sa_wqkv = jnp.concatenate([p["sa_wq"] * scale, p["sa_wk"], p["sa_wv"]],
                              axis=1).astype(bf16)
    sa_bqkv = jnp.concatenate([p["sa_bq"] * scale, p["sa_bk"], p["sa_bv"]],
                              axis=1).astype(f32)
    ca_wkv = jnp.concatenate([p["ca_wk"], p["ca_wv"]], axis=1).astype(bf16)
    ca_bkv = jnp.concatenate([p["ca_bk"], p["ca_bv"]], axis=1).astype(f32)

    args = [x.astype(f32), memory.astype(bf16)]
    if tgt_kind == "dense":
        args.append(tgt_arg)
    if src_kind == "dense":
        args.append(src_arg)
    args += [
        sa_wqkv, sa_bqkv, p["sa_wo"].astype(bf16), p["sa_bo"].astype(f32),
        p["ln1_g"].astype(f32), p["ln1_b"].astype(f32),
        (p["ca_wq"] * scale).astype(bf16), (p["ca_bq"] * scale).astype(f32),
        ca_wkv, ca_bkv, p["ca_wo"].astype(bf16), p["ca_bo"].astype(f32),
        p["ln2_g"].astype(f32), p["ln2_b"].astype(f32),
        p["ff_w1"].astype(bf16), p["ff_b1"].astype(f32),
        p["ff_w2"].astype(bf16), p["ff_b2"].astype(f32),
        p["ln3_g"].astype(f32), p["ln3_b"].astype(f32),
    ]

    kc_self = k_chunk if (Sq % k_chunk == 0 and k_chunk < Sq) else Sq
    kc_cross = k_chunk if (Sk % k_chunk == 0 and k_chunk < Sk) else Sk
    kernel = functools.partial(
        _decoder_layer_kernel, n_heads=n_heads, eps=eps,
        tgt_kind=tgt_kind, src_kind=src_kind,
        ff_chunk=ff_chunk, kc_self=kc_self, kc_cross=kc_cross)

    # Per-generation VMEM budget: ~48 MiB on v7x (64 MiB phys), ~96 MiB on
    # v5e/v6e (128 MiB phys).
    try:
        vmem_cap = pltpu.get_tpu_info().vmem_capacity_bytes
    except Exception:                             # pragma: no cover - fallback
        vmem_cap = 128 * 1024 * 1024
    vmem_limit = int(min((vmem_cap * 3) // 4, 100 * 1024 * 1024))

    def run(single_buffer_resident):
        pm = ({"pipeline_mode": pl.Buffered(1)}
              if single_buffer_resident else {})

        def resident(a):
            # Grid-invariant weights/biases/masks: constant block index
            # (fetched once); single-buffered so they don't pay 2x VMEM.
            return pl.BlockSpec(a.shape, lambda b: (0, 0), **pm)

        in_specs = [
            pl.BlockSpec((bt, Sq, D), lambda b: (b, 0, 0)),   # x
            pl.BlockSpec((bt, Sk, D), lambda b: (b, 0, 0)),   # memory
        ] + [resident(a) for a in args[2:]]

        return pl.pallas_call(
            kernel,
            out_shape=jax.ShapeDtypeStruct((B, Sq, D), f32),
            grid=(B // bt,),
            in_specs=in_specs,
            out_specs=pl.BlockSpec((bt, Sq, D), lambda b: (b, 0, 0)),
            compiler_params=pltpu.CompilerParams(
                dimension_semantics=("parallel",),   # megacore over batch tiles
                vmem_limit_bytes=vmem_limit,
            ),
        )(*args)

    try:
        return run(True)
    except Exception:
        # Fallback if this JAX build rejects single-buffered pipeline_mode.
        return run(False)


# ----------------------------------------------------------------------------
# Pure-JAX reference (f32) for validation
# ----------------------------------------------------------------------------

def _reference(x, memory, params, n_heads, tgt_mask=None, src_mask=None,
               eps=1e-5):
    p = params

    def mha(q_in, kv_in, wq, bq, wk, bk, wv, bv, wo, bo, mask):
        B, Sq, D = q_in.shape
        Sk = kv_in.shape[1]
        H, dh = n_heads, D // n_heads
        q = (q_in @ wq + bq).reshape(B, Sq, H, dh).transpose(0, 2, 1, 3)
        k = (kv_in @ wk + bk).reshape(B, Sk, H, dh).transpose(0, 2, 1, 3)
        v = (kv_in @ wv + bv).reshape(B, Sk, H, dh).transpose(0, 2, 1, 3)
        s = jnp.einsum("bhqd,bhkd->bhqk", q, k) / math.sqrt(dh)
        if mask is not None:
            s = jnp.where(mask[None, None] > 0, s, _NEG_INF)
        s = s - jnp.max(s, axis=-1, keepdims=True)
        pr = jnp.exp(s)
        pr = pr / jnp.sum(pr, axis=-1, keepdims=True)
        ctx = jnp.einsum("bhqk,bhkd->bhqd", pr, v)
        ctx = ctx.transpose(0, 2, 1, 3).reshape(B, Sq, D)
        return ctx @ wo + bo

    def ln(z, g, b):
        mu = z.mean(-1, keepdims=True)
        var = ((z - mu) ** 2).mean(-1, keepdims=True)
        return (z - mu) / jnp.sqrt(var + eps) * g + b

    a = ln(x + mha(x, x, p["sa_wq"], p["sa_bq"], p["sa_wk"], p["sa_bk"],
                   p["sa_wv"], p["sa_bv"], p["sa_wo"], p["sa_bo"], tgt_mask),
           p["ln1_g"], p["ln1_b"])
    c = ln(a + mha(a, memory, p["ca_wq"], p["ca_bq"], p["ca_wk"], p["ca_bk"],
                   p["ca_wv"], p["ca_bv"], p["ca_wo"], p["ca_bo"], src_mask),
           p["ln2_g"], p["ln2_b"])
    f = jnp.maximum(c @ p["ff_w1"] + p["ff_b1"], 0.0) @ p["ff_w2"] + p["ff_b2"]
    return ln(c + f, p["ln3_g"], p["ln3_b"])


# ----------------------------------------------------------------------------
# Parameter init (f32 master copies; bf16 cast happens at call time)
# ----------------------------------------------------------------------------

def init_params(key, d_model, d_ff):
    ks = jax.random.split(key, 12)
    s = 1.0 / math.sqrt(d_model)
    sf = 1.0 / math.sqrt(d_ff)

    def lin(k, din, dout, scale):
        return jax.random.normal(k, (din, dout), jnp.float32) * scale

    z = lambda n: jnp.zeros((1, n), jnp.float32)
    o = lambda n: jnp.ones((1, n), jnp.float32)

    return {
        # self-attention
        "sa_wq": lin(ks[0], d_model, d_model, s), "sa_bq": z(d_model),
        "sa_wk": lin(ks[1], d_model, d_model, s), "sa_bk": z(d_model),
        "sa_wv": lin(ks[2], d_model, d_model, s), "sa_bv": z(d_model),
        "sa_wo": lin(ks[3], d_model, d_model, s), "sa_bo": z(d_model),
        # cross-attention
        "ca_wq": lin(ks[4], d_model, d_model, s), "ca_bq": z(d_model),
        "ca_wk": lin(ks[5], d_model, d_model, s), "ca_bk": z(d_model),
        "ca_wv": lin(ks[6], d_model, d_model, s), "ca_bv": z(d_model),
        "ca_wo": lin(ks[7], d_model, d_model, s), "ca_bo": z(d_model),
        # feed-forward
        "ff_w1": lin(ks[8], d_model, d_ff, s), "ff_b1": z(d_ff),
        "ff_w2": lin(ks[9], d_ff, d_model, sf), "ff_b2": z(d_model),
        # layer norms
        "ln1_g": o(d_model), "ln1_b": z(d_model),
        "ln2_g": o(d_model), "ln2_b": z(d_model),
        "ln3_g": o(d_model), "ln3_b": z(d_model),
    }


if __name__ == "__main__":
    B, S_tgt, S_src = 2, 8, 8
    d_model, n_heads, d_ff = 32, 4, 64

    key = jax.random.PRNGKey(0)
    kx, kmem, kp = jax.random.split(key, 3)
    x = jax.random.normal(kx, (B, S_tgt, d_model), jnp.float32)
    memory = jax.random.normal(kmem, (B, S_src, d_model), jnp.float32)
    params = init_params(kp, d_model, d_ff)

    # Causal target mask generated in-kernel; no source mask.
    out = transformer_decoder_layer(x, memory, params, n_heads,
                                    src_mask=None, tgt_mask="causal")
    out = jax.block_until_ready(out)
    assert out.shape == (B, S_tgt, d_model)
    assert bool(jnp.all(jnp.isfinite(out)))

    # Validate against the pure-JAX f32 reference (bf16 matmuls + approx
    # reciprocal => tolerance, not bit-match).
    ref = _reference(x, memory, params, n_heads,
                     tgt_mask=jnp.tril(jnp.ones((S_tgt, S_tgt), jnp.float32)),
                     src_mask=None)
    max_err = float(jnp.max(jnp.abs(out - ref)))
    assert max_err < 0.2, f"kernel/reference mismatch: max_err={max_err}"

    print("KERNEL_OK")
</pallas_src>

<mosaic_0001>
module attributes {stable_mosaic.version = 11 : i64} {
  func.func @_decoder_layer_kernel(%arg0: i32, %arg1: memref<2x8x32xf32, #tpu.memory_space<vmem>>, %arg2: memref<2x8x32xbf16, #tpu.memory_space<vmem>>, %arg3: memref<32x96xbf16, #tpu.memory_space<vmem>>, %arg4: memref<1x96xf32, #tpu.memory_space<vmem>>, %arg5: memref<32x32xbf16, #tpu.memory_space<vmem>>, %arg6: memref<1x32xf32, #tpu.memory_space<vmem>>, %arg7: memref<1x32xf32, #tpu.memory_space<vmem>>, %arg8: memref<1x32xf32, #tpu.memory_space<vmem>>, %arg9: memref<32x32xbf16, #tpu.memory_space<vmem>>, %arg10: memref<1x32xf32, #tpu.memory_space<vmem>>, %arg11: memref<32x64xbf16, #tpu.memory_space<vmem>>, %arg12: memref<1x64xf32, #tpu.memory_space<vmem>>, %arg13: memref<32x32xbf16, #tpu.memory_space<vmem>>, %arg14: memref<1x32xf32, #tpu.memory_space<vmem>>, %arg15: memref<1x32xf32, #tpu.memory_space<vmem>>, %arg16: memref<1x32xf32, #tpu.memory_space<vmem>>, %arg17: memref<32x64xbf16, #tpu.memory_space<vmem>>, %arg18: memref<1x64xf32, #tpu.memory_space<vmem>>, %arg19: memref<64x32xbf16, #tpu.memory_space<vmem>>, %arg20: memref<1x32xf32, #tpu.memory_space<vmem>>, %arg21: memref<1x32xf32, #tpu.memory_space<vmem>>, %arg22: memref<1x32xf32, #tpu.memory_space<vmem>>, %arg23: memref<2x8x32xf32, #tpu.memory_space<vmem>>) attributes {dimension_semantics = [#tpu.dimension_semantics<parallel>], iteration_bounds = array<i64: 1>, scalar_prefetch = 0 : i64, scratch_operands = 0 : i64, tpu.core_type = #tpu.core_type<tc>, window_params = [{transform_indices = @transform_0, window_bounds = array<i64: 2, 8, 32>}, {transform_indices = @transform_1, window_bounds = array<i64: 2, 8, 32>}, {pipeline_mode = #tpu.pipeline_mode<synchronous>, transform_indices = @transform_2, window_bounds = array<i64: 32, 96>}, {pipeline_mode = #tpu.pipeline_mode<synchronous>, transform_indices = @transform_3, window_bounds = array<i64: 1, 96>}, {pipeline_mode = #tpu.pipeline_mode<synchronous>, transform_indices = @transform_4, window_bounds = array<i64: 32, 32>}, {pipeline_mode = #tpu.pipeline_mode<synchronous>, transform_indices = @transform_5, window_bounds = array<i64: 1, 32>}, {pipeline_mode = #tpu.pipeline_mode<synchronous>, transform_indices = @transform_6, window_bounds = array<i64: 1, 32>}, {pipeline_mode = #tpu.pipeline_mode<synchronous>, transform_indices = @transform_7, window_bounds = array<i64: 1, 32>}, {pipeline_mode = #tpu.pipeline_mode<synchronous>, transform_indices = @transform_8, window_bounds = array<i64: 32, 32>}, {pipeline_mode = #tpu.pipeline_mode<synchronous>, transform_indices = @transform_9, window_bounds = array<i64: 1, 32>}, {pipeline_mode = #tpu.pipeline_mode<synchronous>, transform_indices = @transform_10, window_bounds = array<i64: 32, 64>}, {pipeline_mode = #tpu.pipeline_mode<synchronous>, transform_indices = @transform_11, window_bounds = array<i64: 1, 64>}, {pipeline_mode = #tpu.pipeline_mode<synchronous>, transform_indices = @transform_12, window_bounds = array<i64: 32, 32>}, {pipeline_mode = #tpu.pipeline_mode<synchronous>, transform_indices = @transform_13, window_bounds = array<i64: 1, 32>}, {pipeline_mode = #tpu.pipeline_mode<synchronous>, transform_indices = @transform_14, window_bounds = array<i64: 1, 32>}, {pipeline_mode = #tpu.pipeline_mode<synchronous>, transform_indices = @transform_15, window_bounds = array<i64: 1, 32>}, {pipeline_mode = #tpu.pipeline_mode<synchronous>, transform_indices = @transform_16, window_bounds = array<i64: 32, 64>}, {pipeline_mode = #tpu.pipeline_mode<synchronous>, transform_indices = @transform_17, window_bounds = array<i64: 1, 64>}, {pipeline_mode = #tpu.pipeline_mode<synchronous>, transform_indices = @transform_18, window_bounds = array<i64: 64, 32>}, {pipeline_mode = #tpu.pipeline_mode<synchronous>, transform_indices = @transform_19, window_bounds = array<i64: 1, 32>}, {pipeline_mode = #tpu.pipeline_mode<synchronous>, transform_indices = @transform_20, window_bounds = array<i64: 1, 32>}, {pipeline_mode = #tpu.pipeline_mode<synchronous>, transform_indices = @transform_21, window_bounds = array<i64: 1, 32>}, {transform_indices = @transform_22, window_bounds = array<i64: 2, 8, 32>}]} {
    %c0 = arith.constant 0 : index
    %c0_0 = arith.constant 0 : index
    %c0_1 = arith.constant 0 : index
    %0 = vector.load %arg1[%c0, %c0_0, %c0_1] : memref<2x8x32xf32, #tpu.memory_space<vmem>>, vector<2x8x32xf32>
    %1 = vector.shape_cast %0 : vector<2x8x32xf32> to vector<16x32xf32>
    %c0_2 = arith.constant 0 : index
    %c0_3 = arith.constant 0 : index
    %c0_4 = arith.constant 0 : index
    %2 = vector.load %arg2[%c0_2, %c0_3, %c0_4] : memref<2x8x32xbf16, #tpu.memory_space<vmem>>, vector<2x8x32xbf16>
    %3 = vector.shape_cast %2 : vector<2x8x32xbf16> to vector<16x32xbf16>
    %4 = arith.truncf %1 : vector<16x32xf32> to vector<16x32xbf16>
    %c0_5 = arith.constant 0 : index
    %c0_6 = arith.constant 0 : index
    %5 = vector.load %arg3[%c0_5, %c0_6] : memref<32x96xbf16, #tpu.memory_space<vmem>>, vector<32x96xbf16>
    %cst = arith.constant dense<0.000000e+00> : vector<16x96xf32>
    %6 = tpu.matmul %4, %5, %cst {dimension_numbers = #tpu.dot_dimension_numbers<[1], [0], [0], [1], [0, 0, 1, 1], [], []>} : vector<16x32xbf16>, vector<32x96xbf16>, vector<16x96xf32> -> vector<16x96xf32>
    %c0_7 = arith.constant 0 : index
    %c0_8 = arith.constant 0 : index
    %7 = vector.load %arg4[%c0_7, %c0_8] : memref<1x96xf32, #tpu.memory_space<vmem>>, vector<1x96xf32>
    %8 = vector.broadcast %7 : vector<1x96xf32> to vector<16x96xf32>
    %9 = arith.addf %6, %8 : vector<16x96xf32>
    %10 = arith.truncf %9 : vector<16x96xf32> to vector<16x96xbf16>
    %11 = vector.extract_strided_slice %10 {offsets = [0, 0], sizes = [16, 32], strides = [1, 1]} : vector<16x96xbf16> to vector<16x32xbf16>
    %12 = vector.shape_cast %11 : vector<16x32xbf16> to vector<2x8x4x8xbf16>
    %13 = tpu.transpose %12, [0, 2, 1, 3] : vector<2x8x4x8xbf16> -> vector<2x4x8x8xbf16>
    %14 = vector.shape_cast %13 : vector<2x4x8x8xbf16> to vector<8x8x8xbf16>
    %15 = vector.extract_strided_slice %10 {offsets = [0, 32], sizes = [16, 32], strides = [1, 1]} : vector<16x96xbf16> to vector<16x32xbf16>
    %16 = vector.shape_cast %15 : vector<16x32xbf16> to vector<2x8x4x8xbf16>
    %17 = tpu.transpose %16, [0, 2, 1, 3] : vector<2x8x4x8xbf16> -> vector<2x4x8x8xbf16>
    %18 = vector.shape_cast %17 : vector<2x4x8x8xbf16> to vector<8x8x8xbf16>
    %19 = vector.extract_strided_slice %10 {offsets = [0, 64], sizes = [16, 32], strides = [1, 1]} : vector<16x96xbf16> to vector<16x32xbf16>
    %20 = vector.shape_cast %19 : vector<16x32xbf16> to vector<2x8x4x8xbf16>
    %21 = tpu.transpose %20, [0, 2, 1, 3] : vector<2x8x4x8xbf16> -> vector<2x4x8x8xbf16>
    %22 = vector.shape_cast %21 : vector<2x4x8x8xbf16> to vector<8x8x8xbf16>
    %cst_9 = arith.constant 0xFF800000 : f32
    %23 = vector.broadcast %cst_9 : f32 to vector<8x8x1xf32>
    %cst_10 = arith.constant 0.000000e+00 : f32
    %24 = vector.broadcast %cst_10 : f32 to vector<8x8x1xf32>
    %cst_11 = arith.constant 0.000000e+00 : f32
    %25 = vector.broadcast %cst_11 : f32 to vector<8x8x8xf32>
    "tpu.trace_start"() <{level = 10 : i32, message = "zqd,zkd->zqk"}> : () -> ()
    %cst_12 = arith.constant dense<0.000000e+00> : vector<8x8x8xf32>
    %26 = tpu.matmul %14, %18, %cst_12 {dimension_numbers = #tpu.dot_dimension_numbers<[2], [2], [1], [1], [0, 0, 0, 1, 1, 1], [0], [0]>} : vector<8x8x8xbf16>, vector<8x8x8xbf16>, vector<8x8x8xf32> -> vector<8x8x8xf32>
    "tpu.trace_stop"() : () -> ()
    %27 = tpu.iota {dimensions = array<i32: 0>} : vector<8x8xi32>
    %28 = tpu.iota {dimensions = array<i32: 1>} : vector<8x8xi32>
    %c0_i32 = arith.constant 0 : i32
    %29 = vector.broadcast %c0_i32 : i32 to vector<8x8xi32>
    %30 = arith.addi %28, %29 : vector<8x8xi32>
    %31 = arith.cmpi sle, %30, %27 : vector<8x8xi32>
    %cst_13 = arith.constant 0.000000e+00 : f32
    %cst_14 = arith.constant -1.000000e+09 : f32
    %32 = vector.broadcast %cst_13 : f32 to vector<8x8xf32>
    %33 = vector.broadcast %cst_14 : f32 to vector<8x8xf32>
    %34 = arith.select %31, %32, %33 : vector<8x8xi1>, vector<8x8xf32>
    %35 = vector.shape_cast %34 : vector<8x8xf32> to vector<1x8x8xf32>
    %36 = vector.broadcast %35 : vector<1x8x8xf32> to vector<8x8x8xf32>
    %37 = arith.addf %26, %36 : vector<8x8x8xf32>
    %cst_15 = arith.constant dense<0xFF800000> : vector<8x8xf32>
    %38 = vector.multi_reduction <maximumf>, %37, %cst_15 [2] : vector<8x8x8xf32> to vector<8x8xf32>
    %39 = vector.shape_cast %38 : vector<8x8xf32> to vector<8x8x1xf32>
    %40 = arith.maximumf %23, %39 : vector<8x8x1xf32>
    %41 = arith.subf %23, %40 : vector<8x8x1xf32>
    %42 = math.exp %41 : vector<8x8x1xf32>
    %43 = vector.broadcast %40 : vector<8x8x1xf32> to vector<8x8x8xf32>
    %44 = arith.subf %37, %43 : vector<8x8x8xf32>
    %45 = math.exp %44 : vector<8x8x8xf32>
    %46 = arith.mulf %42, %24 : vector<8x8x1xf32>
    %cst_16 = arith.constant dense<0.000000e+00> : vector<8x8xf32>
    %47 = vector.multi_reduction <add>, %45, %cst_16 [2] : vector<8x8x8xf32> to vector<8x8xf32>
    %48 = vector.shape_cast %47 : vector<8x8xf32> to vector<8x8x1xf32>
    %49 = arith.addf %46, %48 : vector<8x8x1xf32>
    %50 = vector.broadcast %42 : vector<8x8x1xf32> to vector<8x8x8xf32>
    %51 = arith.mulf %50, %25 : vector<8x8x8xf32>
    %52 = arith.truncf %45 : vector<8x8x8xf32> to vector<8x8x8xbf16>
    "tpu.trace_start"() <{level = 10 : i32, message = "zqk,zkd->zqd"}> : () -> ()
    %cst_17 = arith.constant dense<0.000000e+00> : vector<8x8x8xf32>
    %53 = tpu.matmul %52, %22, %cst_17 {dimension_numbers = #tpu.dot_dimension_numbers<[2], [1], [1], [2], [0, 0, 0, 1, 1, 2], [0], [0]>} : vector<8x8x8xbf16>, vector<8x8x8xbf16>, vector<8x8x8xf32> -> vector<8x8x8xf32>
    "tpu.trace_stop"() : () -> ()
    %54 = arith.addf %51, %53 : vector<8x8x8xf32>
    %55 = tpu.reciprocal %49 {approx = true} : vector<8x8x1xf32> -> vector<8x8x1xf32>
    %56 = vector.broadcast %55 : vector<8x8x1xf32> to vector<8x8x8xf32>
    %57 = arith.mulf %54, %56 : vector<8x8x8xf32>
    %58 = arith.truncf %57 : vector<8x8x8xf32> to vector<8x8x8xbf16>
    %59 = vector.shape_cast %58 : vector<8x8x8xbf16> to vector<2x4x8x8xbf16>
    %60 = tpu.transpose %59, [0, 2, 1, 3] : vector<2x4x8x8xbf16> -> vector<2x8x4x8xbf16>
    %61 = vector.shape_cast %60 : vector<2x8x4x8xbf16> to vector<16x32xbf16>
    %c0_18 = arith.constant 0 : index
    %c0_19 = arith.constant 0 : index
    %62 = vector.load %arg5[%c0_18, %c0_19] : memref<32x32xbf16, #tpu.memory_space<vmem>>, vector<32x32xbf16>
    %cst_20 = arith.constant dense<0.000000e+00> : vector<16x32xf32>
    %63 = tpu.matmul %61, %62, %cst_20 {dimension_numbers = #tpu.dot_dimension_numbers<[1], [0], [0], [1], [0, 0, 1, 1], [], []>} : vector<16x32xbf16>, vector<32x32xbf16>, vector<16x32xf32> -> vector<16x32xf32>
    %c0_21 = arith.constant 0 : index
    %c0_22 = arith.constant 0 : index
    %64 = vector.load %arg6[%c0_21, %c0_22] : memref<1x32xf32, #tpu.memory_space<vmem>>, vector<1x32xf32>
    %65 = vector.broadcast %64 : vector<1x32xf32> to vector<16x32xf32>
    %66 = arith.addf %63, %65 : vector<16x32xf32>
    %67 = arith.addf %1, %66 : vector<16x32xf32>
    %c0_23 = arith.constant 0 : index
    %c0_24 = arith.constant 0 : index
    %68 = vector.load %arg7[%c0_23, %c0_24] : memref<1x32xf32, #tpu.memory_space<vmem>>, vector<1x32xf32>
    %c0_25 = arith.constant 0 : index
    %c0_26 = arith.constant 0 : index
    %69 = vector.load %arg8[%c0_25, %c0_26] : memref<1x32xf32, #tpu.memory_space<vmem>>, vector<1x32xf32>
    %cst_27 = arith.constant dense<0.000000e+00> : vector<16xf32>
    %70 = vector.multi_reduction <add>, %67, %cst_27 [1] : vector<16x32xf32> to vector<16xf32>
    %71 = vector.shape_cast %70 : vector<16xf32> to vector<16x1xf32>
    %cst_28 = arith.constant 3.200000e+01 : f32
    %72 = vector.broadcast %cst_28 : f32 to vector<16x1xf32>
    %73 = arith.divf %71, %72 : vector<16x1xf32>
    %74 = vector.broadcast %73 : vector<16x1xf32> to vector<16x32xf32>
    %75 = arith.subf %67, %74 : vector<16x32xf32>
    %76 = vector.broadcast %73 : vector<16x1xf32> to vector<16x32xf32>
    %77 = arith.subf %67, %76 : vector<16x32xf32>
    %78 = arith.mulf %75, %77 : vector<16x32xf32>
    %cst_29 = arith.constant dense<0.000000e+00> : vector<16xf32>
    %79 = vector.multi_reduction <add>, %78, %cst_29 [1] : vector<16x32xf32> to vector<16xf32>
    %80 = vector.shape_cast %79 : vector<16xf32> to vector<16x1xf32>
    %cst_30 = arith.constant 3.200000e+01 : f32
    %81 = vector.broadcast %cst_30 : f32 to vector<16x1xf32>
    %82 = arith.divf %80, %81 : vector<16x1xf32>
    %83 = vector.broadcast %73 : vector<16x1xf32> to vector<16x32xf32>
    %84 = arith.subf %67, %83 : vector<16x32xf32>
    %cst_31 = arith.constant 9.99999974E-6 : f32
    %85 = vector.broadcast %cst_31 : f32 to vector<16x1xf32>
    %86 = arith.addf %82, %85 : vector<16x1xf32>
    %87 = math.rsqrt %86 : vector<16x1xf32>
    %88 = vector.broadcast %87 : vector<16x1xf32> to vector<16x32xf32>
    %89 = arith.mulf %84, %88 : vector<16x32xf32>
    %90 = vector.broadcast %68 : vector<1x32xf32> to vector<16x32xf32>
    %91 = arith.mulf %89, %90 : vector<16x32xf32>
    %92 = vector.broadcast %69 : vector<1x32xf32> to vector<16x32xf32>
    %93 = arith.addf %91, %92 : vector<16x32xf32>
    %94 = arith.truncf %93 : vector<16x32xf32> to vector<16x32xbf16>
    %c0_32 = arith.constant 0 : index
    %c0_33 = arith.constant 0 : index
    %95 = vector.load %arg9[%c0_32, %c0_33] : memref<32x32xbf16, #tpu.memory_space<vmem>>, vector<32x32xbf16>
    %cst_34 = arith.constant dense<0.000000e+00> : vector<16x32xf32>
    %96 = tpu.matmul %94, %95, %cst_34 {dimension_numbers = #tpu.dot_dimension_numbers<[1], [0], [0], [1], [0, 0, 1, 1], [], []>} : vector<16x32xbf16>, vector<32x32xbf16>, vector<16x32xf32> -> vector<16x32xf32>
    %c0_35 = arith.constant 0 : index
    %c0_36 = arith.constant 0 : index
    %97 = vector.load %arg10[%c0_35, %c0_36] : memref<1x32xf32, #tpu.memory_space<vmem>>, vector<1x32xf32>
    %98 = vector.broadcast %97 : vector<1x32xf32> to vector<16x32xf32>
    %99 = arith.addf %96, %98 : vector<16x32xf32>
    %c0_37 = arith.constant 0 : index
    %c0_38 = arith.constant 0 : index
    %100 = vector.load %arg11[%c0_37, %c0_38] : memref<32x64xbf16, #tpu.memory_space<vmem>>, vector<32x64xbf16>
    %cst_39 = arith.constant dense<0.000000e+00> : vector<16x64xf32>
    %101 = tpu.matmul %3, %100, %cst_39 {dimension_numbers = #tpu.dot_dimension_numbers<[1], [0], [0], [1], [0, 0, 1, 1], [], []>} : vector<16x32xbf16>, vector<32x64xbf16>, vector<16x64xf32> -> vector<16x64xf32>
    %c0_40 = arith.constant 0 : index
    %c0_41 = arith.constant 0 : index
    %102 = vector.load %arg12[%c0_40, %c0_41] : memref<1x64xf32, #tpu.memory_space<vmem>>, vector<1x64xf32>
    %103 = vector.broadcast %102 : vector<1x64xf32> to vector<16x64xf32>
    %104 = arith.addf %101, %103 : vector<16x64xf32>
    %105 = arith.truncf %99 : vector<16x32xf32> to vector<16x32xbf16>
    %106 = arith.truncf %104 : vector<16x64xf32> to vector<16x64xbf16>
    %107 = vector.shape_cast %105 : vector<16x32xbf16> to vector<2x8x4x8xbf16>
    %108 = tpu.transpose %107, [0, 2, 1, 3] : vector<2x8x4x8xbf16> -> vector<2x4x8x8xbf16>
    %109 = vector.shape_cast %108 : vector<2x4x8x8xbf16> to vector<8x8x8xbf16>
    %110 = vector.extract_strided_slice %106 {offsets = [0, 0], sizes = [16, 32], strides = [1, 1]} : vector<16x64xbf16> to vector<16x32xbf16>
    %111 = vector.shape_cast %110 : vector<16x32xbf16> to vector<2x8x4x8xbf16>
    %112 = tpu.transpose %111, [0, 2, 1, 3] : vector<2x8x4x8xbf16> -> vector<2x4x8x8xbf16>
    %113 = vector.shape_cast %112 : vector<2x4x8x8xbf16> to vector<8x8x8xbf16>
    %114 = vector.extract_strided_slice %106 {offsets = [0, 32], sizes = [16, 32], strides = [1, 1]} : vector<16x64xbf16> to vector<16x32xbf16>
    %115 = vector.shape_cast %114 : vector<16x32xbf16> to vector<2x8x4x8xbf16>
    %116 = tpu.transpose %115, [0, 2, 1, 3] : vector<2x8x4x8xbf16> -> vector<2x4x8x8xbf16>
    %117 = vector.shape_cast %116 : vector<2x4x8x8xbf16> to vector<8x8x8xbf16>
    %cst_42 = arith.constant 0xFF800000 : f32
    %118 = vector.broadcast %cst_42 : f32 to vector<8x8x1xf32>
    %cst_43 = arith.constant 0.000000e+00 : f32
    %119 = vector.broadcast %cst_43 : f32 to vector<8x8x1xf32>
    %cst_44 = arith.constant 0.000000e+00 : f32
    %120 = vector.broadcast %cst_44 : f32 to vector<8x8x8xf32>
    "tpu.trace_start"() <{level = 10 : i32, message = "zqd,zkd->zqk"}> : () -> ()
    %cst_45 = arith.constant dense<0.000000e+00> : vector<8x8x8xf32>
    %121 = tpu.matmul %109, %113, %cst_45 {dimension_numbers = #tpu.dot_dimension_numbers<[2], [2], [1], [1], [0, 0, 0, 1, 1, 1], [0], [0]>} : vector<8x8x8xbf16>, vector<8x8x8xbf16>, vector<8x8x8xf32> -> vector<8x8x8xf32>
    "tpu.trace_stop"() : () -> ()
    %cst_46 = arith.constant dense<0xFF800000> : vector<8x8xf32>
    %122 = vector.multi_reduction <maximumf>, %121, %cst_46 [2] : vector<8x8x8xf32> to vector<8x8xf32>
    %123 = vector.shape_cast %122 : vector<8x8xf32> to vector<8x8x1xf32>
    %124 = arith.maximumf %118, %123 : vector<8x8x1xf32>
    %125 = arith.subf %118, %124 : vector<8x8x1xf32>
    %126 = math.exp %125 : vector<8x8x1xf32>
    %127 = vector.broadcast %124 : vector<8x8x1xf32> to vector<8x8x8xf32>
    %128 = arith.subf %121, %127 : vector<8x8x8xf32>
    %129 = math.exp %128 : vector<8x8x8xf32>
    %130 = arith.mulf %126, %119 : vector<8x8x1xf32>
    %cst_47 = arith.constant dense<0.000000e+00> : vector<8x8xf32>
    %131 = vector.multi_reduction <add>, %129, %cst_47 [2] : vector<8x8x8xf32> to vector<8x8xf32>
    %132 = vector.shape_cast %131 : vector<8x8xf32> to vector<8x8x1xf32>
    %133 = arith.addf %130, %132 : vector<8x8x1xf32>
    %134 = vector.broadcast %126 : vector<8x8x1xf32> to vector<8x8x8xf32>
    %135 = arith.mulf %134, %120 : vector<8x8x8xf32>
    %136 = arith.truncf %129 : vector<8x8x8xf32> to vector<8x8x8xbf16>
    "tpu.trace_start"() <{level = 10 : i32, message = "zqk,zkd->zqd"}> : () -> ()
    %cst_48 = arith.constant dense<0.000000e+00> : vector<8x8x8xf32>
    %137 = tpu.matmul %136, %117, %cst_48 {dimension_numbers = #tpu.dot_dimension_numbers<[2], [1], [1], [2], [0, 0, 0, 1, 1, 2], [0], [0]>} : vector<8x8x8xbf16>, vector<8x8x8xbf16>, vector<8x8x8xf32> -> vector<8x8x8xf32>
    "tpu.trace_stop"() : () -> ()
    %138 = arith.addf %135, %137 : vector<8x8x8xf32>
    %139 = tpu.reciprocal %133 {approx = true} : vector<8x8x1xf32> -> vector<8x8x1xf32>
    %140 = vector.broadcast %139 : vector<8x8x1xf32> to vector<8x8x8xf32>
    %141 = arith.mulf %138, %140 : vector<8x8x8xf32>
    %142 = arith.truncf %141 : vector<8x8x8xf32> to vector<8x8x8xbf16>
    %143 = vector.shape_cast %142 : vector<8x8x8xbf16> to vector<2x4x8x8xbf16>
    %144 = tpu.transpose %143, [0, 2, 1, 3] : vector<2x4x8x8xbf16> -> vector<2x8x4x8xbf16>
    %145 = vector.shape_cast %144 : vector<2x8x4x8xbf16> to vector<16x32xbf16>
    %c0_49 = arith.constant 0 : index
    %c0_50 = arith.constant 0 : index
    %146 = vector.load %arg13[%c0_49, %c0_50] : memref<32x32xbf16, #tpu.memory_space<vmem>>, vector<32x32xbf16>
    %cst_51 = arith.constant dense<0.000000e+00> : vector<16x32xf32>
    %147 = tpu.matmul %145, %146, %cst_51 {dimension_numbers = #tpu.dot_dimension_numbers<[1], [0], [0], [1], [0, 0, 1, 1], [], []>} : vector<16x32xbf16>, vector<32x32xbf16>, vector<16x32xf32> -> vector<16x32xf32>
    %c0_52 = arith.constant 0 : index
    %c0_53 = arith.constant 0 : index
    %148 = vector.load %arg14[%c0_52, %c0_53] : memref<1x32xf32, #tpu.memory_space<vmem>>, vector<1x32xf32>
    %149 = vector.broadcast %148 : vector<1x32xf32> to vector<16x32xf32>
    %150 = arith.addf %147, %149 : vector<16x32xf32>
    %151 = arith.addf %93, %150 : vector<16x32xf32>
    %c0_54 = arith.constant 0 : index
    %c0_55 = arith.constant 0 : index
    %152 = vector.load %arg15[%c0_54, %c0_55] : memref<1x32xf32, #tpu.memory_space<vmem>>, vector<1x32xf32>
    %c0_56 = arith.constant 0 : index
    %c0_57 = arith.constant 0 : index
    %153 = vector.load %arg16[%c0_56, %c0_57] : memref<1x32xf32, #tpu.memory_space<vmem>>, vector<1x32xf32>
    %cst_58 = arith.constant dense<0.000000e+00> : vector<16xf32>
    %154 = vector.multi_reduction <add>, %151, %cst_58 [1] : vector<16x32xf32> to vector<16xf32>
    %155 = vector.shape_cast %154 : vector<16xf32> to vector<16x1xf32>
    %cst_59 = arith.constant 3.200000e+01 : f32
    %156 = vector.broadcast %cst_59 : f32 to vector<16x1xf32>
    %157 = arith.divf %155, %156 : vector<16x1xf32>
    %158 = vector.broadcast %157 : vector<16x1xf32> to vector<16x32xf32>
    %159 = arith.subf %151, %158 : vector<16x32xf32>
    %160 = vector.broadcast %157 : vector<16x1xf32> to vector<16x32xf32>
    %161 = arith.subf %151, %160 : vector<16x32xf32>
    %162 = arith.mulf %159, %161 : vector<16x32xf32>
    %cst_60 = arith.constant dense<0.000000e+00> : vector<16xf32>
    %163 = vector.multi_reduction <add>, %162, %cst_60 [1] : vector<16x32xf32> to vector<16xf32>
    %164 = vector.shape_cast %163 : vector<16xf32> to vector<16x1xf32>
    %cst_61 = arith.constant 3.200000e+01 : f32
    %165 = vector.broadcast %cst_61 : f32 to vector<16x1xf32>
    %166 = arith.divf %164, %165 : vector<16x1xf32>
    %167 = vector.broadcast %157 : vector<16x1xf32> to vector<16x32xf32>
    %168 = arith.subf %151, %167 : vector<16x32xf32>
    %cst_62 = arith.constant 9.99999974E-6 : f32
    %169 = vector.broadcast %cst_62 : f32 to vector<16x1xf32>
    %170 = arith.addf %166, %169 : vector<16x1xf32>
    %171 = math.rsqrt %170 : vector<16x1xf32>
    %172 = vector.broadcast %171 : vector<16x1xf32> to vector<16x32xf32>
    %173 = arith.mulf %168, %172 : vector<16x32xf32>
    %174 = vector.broadcast %152 : vector<1x32xf32> to vector<16x32xf32>
    %175 = arith.mulf %173, %174 : vector<16x32xf32>
    %176 = vector.broadcast %153 : vector<1x32xf32> to vector<16x32xf32>
    %177 = arith.addf %175, %176 : vector<16x32xf32>
    %178 = arith.truncf %177 : vector<16x32xf32> to vector<16x32xbf16>
    %cst_63 = arith.constant 0.000000e+00 : f32
    %179 = vector.broadcast %cst_63 : f32 to vector<16x32xf32>
    %c0_64 = arith.constant 0 : index
    %c0_65 = arith.constant 0 : index
    %180 = vector.load %arg17[%c0_64, %c0_65] : memref<32x64xbf16, #tpu.memory_space<vmem>>, vector<32x64xbf16>
    %cst_66 = arith.constant dense<0.000000e+00> : vector<16x64xf32>
    %181 = tpu.matmul %178, %180, %cst_66 {dimension_numbers = #tpu.dot_dimension_numbers<[1], [0], [0], [1], [0, 0, 1, 1], [], []>} : vector<16x32xbf16>, vector<32x64xbf16>, vector<16x64xf32> -> vector<16x64xf32>
    %c0_67 = arith.constant 0 : index
    %c0_68 = arith.constant 0 : index
    %182 = vector.load %arg18[%c0_67, %c0_68] : memref<1x64xf32, #tpu.memory_space<vmem>>, vector<1x64xf32>
    %183 = vector.broadcast %182 : vector<1x64xf32> to vector<16x64xf32>
    %184 = arith.addf %181, %183 : vector<16x64xf32>
    %cst_69 = arith.constant 0.000000e+00 : f32
    %185 = vector.broadcast %cst_69 : f32 to vector<16x64xf32>
    %186 = arith.maximumf %184, %185 : vector<16x64xf32>
    %187 = arith.truncf %186 : vector<16x64xf32> to vector<16x64xbf16>
    %c0_70 = arith.constant 0 : index
    %c0_71 = arith.constant 0 : index
    %188 = vector.load %arg19[%c0_70, %c0_71] : memref<64x32xbf16, #tpu.memory_space<vmem>>, vector<64x32xbf16>
    %cst_72 = arith.constant dense<0.000000e+00> : vector<16x32xf32>
    %189 = tpu.matmul %187, %188, %cst_72 {dimension_numbers = #tpu.dot_dimension_numbers<[1], [0], [0], [1], [0, 0, 1, 1], [], []>} : vector<16x64xbf16>, vector<64x32xbf16>, vector<16x32xf32> -> vector<16x32xf32>
    %190 = arith.addf %179, %189 : vector<16x32xf32>
    %c0_73 = arith.constant 0 : index
    %c0_74 = arith.constant 0 : index
    %191 = vector.load %arg20[%c0_73, %c0_74] : memref<1x32xf32, #tpu.memory_space<vmem>>, vector<1x32xf32>
    %192 = vector.broadcast %191 : vector<1x32xf32> to vector<16x32xf32>
    %193 = arith.addf %190, %192 : vector<16x32xf32>
    %194 = arith.addf %177, %193 : vector<16x32xf32>
    %c0_75 = arith.constant 0 : index
    %c0_76 = arith.constant 0 : index
    %195 = vector.load %arg21[%c0_75, %c0_76] : memref<1x32xf32, #tpu.memory_space<vmem>>, vector<1x32xf32>
    %c0_77 = arith.constant 0 : index
    %c0_78 = arith.constant 0 : index
    %196 = vector.load %arg22[%c0_77, %c0_78] : memref<1x32xf32, #tpu.memory_space<vmem>>, vector<1x32xf32>
    %cst_79 = arith.constant dense<0.000000e+00> : vector<16xf32>
    %197 = vector.multi_reduction <add>, %194, %cst_79 [1] : vector<16x32xf32> to vector<16xf32>
    %198 = vector.shape_cast %197 : vector<16xf32> to vector<16x1xf32>
    %cst_80 = arith.constant 3.200000e+01 : f32
    %199 = vector.broadcast %cst_80 : f32 to vector<16x1xf32>
    %200 = arith.divf %198, %199 : vector<16x1xf32>
    %201 = vector.broadcast %200 : vector<16x1xf32> to vector<16x32xf32>
    %202 = arith.subf %194, %201 : vector<16x32xf32>
    %203 = vector.broadcast %200 : vector<16x1xf32> to vector<16x32xf32>
    %204 = arith.subf %194, %203 : vector<16x32xf32>
    %205 = arith.mulf %202, %204 : vector<16x32xf32>
    %cst_81 = arith.constant dense<0.000000e+00> : vector<16xf32>
    %206 = vector.multi_reduction <add>, %205, %cst_81 [1] : vector<16x32xf32> to vector<16xf32>
    %207 = vector.shape_cast %206 : vector<16xf32> to vector<16x1xf32>
    %cst_82 = arith.constant 3.200000e+01 : f32
    %208 = vector.broadcast %cst_82 : f32 to vector<16x1xf32>
    %209 = arith.divf %207, %208 : vector<16x1xf32>
    %210 = vector.broadcast %200 : vector<16x1xf32> to vector<16x32xf32>
    %211 = arith.subf %194, %210 : vector<16x32xf32>
    %cst_83 = arith.constant 9.99999974E-6 : f32
    %212 = vector.broadcast %cst_83 : f32 to vector<16x1xf32>
    %213 = arith.addf %209, %212 : vector<16x1xf32>
    %214 = math.rsqrt %213 : vector<16x1xf32>
    %215 = vector.broadcast %214 : vector<16x1xf32> to vector<16x32xf32>
    %216 = arith.mulf %211, %215 : vector<16x32xf32>
    %217 = vector.broadcast %195 : vector<1x32xf32> to vector<16x32xf32>
    %218 = arith.mulf %216, %217 : vector<16x32xf32>
    %219 = vector.broadcast %196 : vector<1x32xf32> to vector<16x32xf32>
    %220 = arith.addf %218, %219 : vector<16x32xf32>
    %221 = vector.shape_cast %220 : vector<16x32xf32> to vector<2x8x32xf32>
    %c0_84 = arith.constant 0 : index
    %c0_85 = arith.constant 0 : index
    %c0_86 = arith.constant 0 : index
    %222 = vector.load %arg23[%c0_84, %c0_85, %c0_86] : memref<2x8x32xf32, #tpu.memory_space<vmem>>, vector<2x8x32xf32>
    tpu.vector_store %arg23[%c0_84, %c0_85, %c0_86], %221 {strides = array<i32>} : memref<2x8x32xf32, #tpu.memory_space<vmem>>, vector<2x8x32xf32>,
    return
  }
  func.func @transform_0(%arg0: i32) -> (i32, i32, i32) {
    %c0_i32 = arith.constant 0 : i32
    %c0_i32_0 = arith.constant 0 : i32
    %c0_i32_1 = arith.constant 0 : i32
    return %arg0, %c0_i32, %c0_i32_0 : i32, i32, i32
  }
  func.func @transform_1(%arg0: i32) -> (i32, i32, i32) {
    %c0_i32 = arith.constant 0 : i32
    %c0_i32_0 = arith.constant 0 : i32
    %c0_i32_1 = arith.constant 0 : i32
    return %arg0, %c0_i32, %c0_i32_0 : i32, i32, i32
  }
  func.func @transform_2(%arg0: i32) -> (i32, i32) {
    %c0_i32 = arith.constant 0 : i32
    %c0_i32_0 = arith.constant 0 : i32
    %c0_i32_1 = arith.constant 0 : i32
    return %c0_i32, %c0_i32_0 : i32, i32
  }
  func.func @transform_3(%arg0: i32) -> (i32, i32) {
    %c0_i32 = arith.constant 0 : i32
    %c0_i32_0 = arith.constant 0 : i32
    %c0_i32_1 = arith.constant 0 : i32
    return %c0_i32, %c0_i32_0 : i32, i32
  }
  func.func @transform_4(%arg0: i32) -> (i32, i32) {
    %c0_i32 = arith.constant 0 : i32
    %c0_i32_0 = arith.constant 0 : i32
    %c0_i32_1 = arith.constant 0 : i32
    return %c0_i32, %c0_i32_0 : i32, i32
  }
  func.func @transform_5(%arg0: i32) -> (i32, i32) {
    %c0_i32 = arith.constant 0 : i32
    %c0_i32_0 = arith.constant 0 : i32
    %c0_i32_1 = arith.constant 0 : i32
    return %c0_i32, %c0_i32_0 : i32, i32
  }
  func.func @transform_6(%arg0: i32) -> (i32, i32) {
    %c0_i32 = arith.constant 0 : i32
    %c0_i32_0 = arith.constant 0 : i32
    %c0_i32_1 = arith.constant 0 : i32
    return %c0_i32, %c0_i32_0 : i32, i32
  }
  func.func @transform_7(%arg0: i32) -> (i32, i32) {
    %c0_i32 = arith.constant 0 : i32
    %c0_i32_0 = arith.constant 0 : i32
    %c0_i32_1 = arith.constant 0 : i32
    return %c0_i32, %c0_i32_0 : i32, i32
  }
  func.func @transform_8(%arg0: i32) -> (i32, i32) {
    %c0_i32 = arith.constant 0 : i32
    %c0_i32_0 = arith.constant 0 : i32
    %c0_i32_1 = arith.constant 0 : i32
    return %c0_i32, %c0_i32_0 : i32, i32
  }
  func.func @transform_9(%arg0: i32) -> (i32, i32) {
    %c0_i32 = arith.constant 0 : i32
    %c0_i32_0 = arith.constant 0 : i32
    %c0_i32_1 = arith.constant 0 : i32
    return %c0_i32, %c0_i32_0 : i32, i32
  }
  func.func @transform_10(%arg0: i32) -> (i32, i32) {
    %c0_i32 = arith.constant 0 : i32
    %c0_i32_0 = arith.constant 0 : i32
    %c0_i32_1 = arith.constant 0 : i32
    return %c0_i32, %c0_i32_0 : i32, i32
  }
  func.func @transform_11(%arg0: i32) -> (i32, i32) {
    %c0_i32 = arith.constant 0 : i32
    %c0_i32_0 = arith.constant 0 : i32
    %c0_i32_1 = arith.constant 0 : i32
    return %c0_i32, %c0_i32_0 : i32, i32
  }
  func.func @transform_12(%arg0: i32) -> (i32, i32) {
    %c0_i32 = arith.constant 0 : i32
    %c0_i32_0 = arith.constant 0 : i32
    %c0_i32_1 = arith.constant 0 : i32
    return %c0_i32, %c0_i32_0 : i32, i32
  }
  func.func @transform_13(%arg0: i32) -> (i32, i32) {
    %c0_i32 = arith.constant 0 : i32
    %c0_i32_0 = arith.constant 0 : i32
    %c0_i32_1 = arith.constant 0 : i32
    return %c0_i32, %c0_i32_0 : i32, i32
  }
  func.func @transform_14(%arg0: i32) -> (i32, i32) {
    %c0_i32 = arith.constant 0 : i32
    %c0_i32_0 = arith.constant 0 : i32
    %c0_i32_1 = arith.constant 0 : i32
    return %c0_i32, %c0_i32_0 : i32, i32
  }
  func.func @transform_15(%arg0: i32) -> (i32, i32) {
    %c0_i32 = arith.constant 0 : i32
    %c0_i32_0 = arith.constant 0 : i32
    %c0_i32_1 = arith.constant 0 : i32
    return %c0_i32, %c0_i32_0 : i32, i32
  }
  func.func @transform_16(%arg0: i32) -> (i32, i32) {
    %c0_i32 = arith.constant 0 : i32
    %c0_i32_0 = arith.constant 0 : i32
    %c0_i32_1 = arith.constant 0 : i32
    return %c0_i32, %c0_i32_0 : i32, i32
  }
  func.func @transform_17(%arg0: i32) -> (i32, i32) {
    %c0_i32 = arith.constant 0 : i32
    %c0_i32_0 = arith.constant 0 : i32
    %c0_i32_1 = arith.constant 0 : i32
    return %c0_i32, %c0_i32_0 : i32, i32
  }
  func.func @transform_18(%arg0: i32) -> (i32, i32) {
    %c0_i32 = arith.constant 0 : i32
    %c0_i32_0 = arith.constant 0 : i32
    %c0_i32_1 = arith.constant 0 : i32
    return %c0_i32, %c0_i32_0 : i32, i32
  }
  func.func @transform_19(%arg0: i32) -> (i32, i32) {
    %c0_i32 = arith.constant 0 : i32
    %c0_i32_0 = arith.constant 0 : i32
    %c0_i32_1 = arith.constant 0 : i32
    return %c0_i32, %c0_i32_0 : i32, i32
  }
  func.func @transform_20(%arg0: i32) -> (i32, i32) {
    %c0_i32 = arith.constant 0 : i32
    %c0_i32_0 = arith.constant 0 : i32
    %c0_i32_1 = arith.constant 0 : i32
    return %c0_i32, %c0_i32_0 : i32, i32
  }
  func.func @transform_21(%arg0: i32) -> (i32, i32) {
    %c0_i32 = arith.constant 0 : i32
    %c0_i32_0 = arith.constant 0 : i32
    %c0_i32_1 = arith.constant 0 : i32
    return %c0_i32, %c0_i32_0 : i32, i32
  }
  func.func @transform_22(%arg0: i32) -> (i32, i32, i32) {
    %c0_i32 = arith.constant 0 : i32
    %c0_i32_0 = arith.constant 0 : i32
    %c0_i32_1 = arith.constant 0 : i32
    return %arg0, %c0_i32, %c0_i32_0 : i32, i32, i32
  }
}

module attributes {stable_mosaic.version = 11 : i64} {
  func.func @_decoder_layer_kernel(%arg0: i32, %arg1: memref<2x8x32xf32, #tpu.memory_space<vmem>>, %arg2: memref<2x8x32xbf16, #tpu.memory_space<vmem>>, %arg3: memref<32x96xbf16, #tpu.memory_space<vmem>>, %arg4: memref<1x96xf32, #tpu.memory_space<vmem>>, %arg5: memref<32x32xbf16, #tpu.memory_space<vmem>>, %arg6: memref<1x32xf32, #tpu.memory_space<vmem>>, %arg7: memref<1x32xf32, #tpu.memory_space<vmem>>, %arg8: memref<1x32xf32, #tpu.memory_space<vmem>>, %arg9: memref<32x32xbf16, #tpu.memory_space<vmem>>, %arg10: memref<1x32xf32, #tpu.memory_space<vmem>>, %arg11: memref<32x64xbf16, #tpu.memory_space<vmem>>, %arg12: memref<1x64xf32, #tpu.memory_space<vmem>>, %arg13: memref<32x32xbf16, #tpu.memory_space<vmem>>, %arg14: memref<1x32xf32, #tpu.memory_space<vmem>>, %arg15: memref<1x32xf32, #tpu.memory_space<vmem>>, %arg16: memref<1x32xf32, #tpu.memory_space<vmem>>, %arg17: memref<32x64xbf16, #tpu.memory_space<vmem>>, %arg18: memref<1x64xf32, #tpu.memory_space<vmem>>, %arg19: memref<64x32xbf16, #tpu.memory_space<vmem>>, %arg20: memref<1x32xf32, #tpu.memory_space<vmem>>, %arg21: memref<1x32xf32, #tpu.memory_space<vmem>>, %arg22: memref<1x32xf32, #tpu.memory_space<vmem>>, %arg23: memref<2x8x32xf32, #tpu.memory_space<vmem>>) attributes {dimension_semantics = [#tpu.dimension_semantics<parallel>], iteration_bounds = array<i64: 1>, scalar_prefetch = 0 : i64, scratch_operands = 0 : i64, tpu.core_type = #tpu.core_type<tc>, window_params = [{transform_indices = @transform_0, window_bounds = array<i64: 2, 8, 32>}, {transform_indices = @transform_1, window_bounds = array<i64: 2, 8, 32>}, {pipeline_mode = #tpu.pipeline_mode<synchronous>, transform_indices = @transform_2, window_bounds = array<i64: 32, 96>}, {pipeline_mode = #tpu.pipeline_mode<synchronous>, transform_indices = @transform_3, window_bounds = array<i64: 1, 96>}, {pipeline_mode = #tpu.pipeline_mode<synchronous>, transform_indices = @transform_4, window_bounds = array<i64: 32, 32>}, {pipeline_mode = #tpu.pipeline_mode<synchronous>, transform_indices = @transform_5, window_bounds = array<i64: 1, 32>}, {pipeline_mode = #tpu.pipeline_mode<synchronous>, transform_indices = @transform_6, window_bounds = array<i64: 1, 32>}, {pipeline_mode = #tpu.pipeline_mode<synchronous>, transform_indices = @transform_7, window_bounds = array<i64: 1, 32>}, {pipeline_mode = #tpu.pipeline_mode<synchronous>, transform_indices = @transform_8, window_bounds = array<i64: 32, 32>}, {pipeline_mode = #tpu.pipeline_mode<synchronous>, transform_indices = @transform_9, window_bounds = array<i64: 1, 32>}, {pipeline_mode = #tpu.pipeline_mode<synchronous>, transform_indices = @transform_10, window_bounds = array<i64: 32, 64>}, {pipeline_mode = #tpu.pipeline_mode<synchronous>, transform_indices = @transform_11, window_bounds = array<i64: 1, 64>}, {pipeline_mode = #tpu.pipeline_mode<synchronous>, transform_indices = @transform_12, window_bounds = array<i64: 32, 32>}, {pipeline_mode = #tpu.pipeline_mode<synchronous>, transform_indices = @transform_13, window_bounds = array<i64: 1, 32>}, {pipeline_mode = #tpu.pipeline_mode<synchronous>, transform_indices = @transform_14, window_bounds = array<i64: 1, 32>}, {pipeline_mode = #tpu.pipeline_mode<synchronous>, transform_indices = @transform_15, window_bounds = array<i64: 1, 32>}, {pipeline_mode = #tpu.pipeline_mode<synchronous>, transform_indices = @transform_16, window_bounds = array<i64: 32, 64>}, {pipeline_mode = #tpu.pipeline_mode<synchronous>, transform_indices = @transform_17, window_bounds = array<i64: 1, 64>}, {pipeline_mode = #tpu.pipeline_mode<synchronous>, transform_indices = @transform_18, window_bounds = array<i64: 64, 32>}, {pipeline_mode = #tpu.pipeline_mode<synchronous>, transform_indices = @transform_19, window_bounds = array<i64: 1, 32>}, {pipeline_mode = #tpu.pipeline_mode<synchronous>, transform_indices = @transform_20, window_bounds = array<i64: 1, 32>}, {pipeline_mode = #tpu.pipeline_mode<synchronous>, transform_indices = @transform_21, window_bounds = array<i64: 1, 32>}, {transform_indices = @transform_22, window_bounds = array<i64: 2, 8, 32>}]} {
    %c0 = arith.constant 0 : index
    %c0_0 = arith.constant 0 : index
    %c0_1 = arith.constant 0 : index
    %0 = vector.load %arg1[%c0, %c0_0, %c0_1] : memref<2x8x32xf32, #tpu.memory_space<vmem>>, vector<2x8x32xf32>
    %1 = vector.shape_cast %0 : vector<2x8x32xf32> to vector<16x32xf32>
    %c0_2 = arith.constant 0 : index
    %c0_3 = arith.constant 0 : index
    %c0_4 = arith.constant 0 : index
    %2 = vector.load %arg2[%c0_2, %c0_3, %c0_4] : memref<2x8x32xbf16, #tpu.memory_space<vmem>>, vector<2x8x32xbf16>
    %3 = vector.shape_cast %2 : vector<2x8x32xbf16> to vector<16x32xbf16>
    %4 = arith.truncf %1 : vector<16x32xf32> to vector<16x32xbf16>
    %c0_5 = arith.constant 0 : index
    %c0_6 = arith.constant 0 : index
    %5 = vector.load %arg3[%c0_5, %c0_6] : memref<32x96xbf16, #tpu.memory_space<vmem>>, vector<32x96xbf16>
    %cst = arith.constant dense<0.000000e+00> : vector<16x96xf32>
    %6 = tpu.matmul %4, %5, %cst {dimension_numbers = #tpu.dot_dimension_numbers<[1], [0], [0], [1], [0, 0, 1, 1], [], []>} : vector<16x32xbf16>, vector<32x96xbf16>, vector<16x96xf32> -> vector<16x96xf32>
    %c0_7 = arith.constant 0 : index
    %c0_8 = arith.constant 0 : index
    %7 = vector.load %arg4[%c0_7, %c0_8] : memref<1x96xf32, #tpu.memory_space<vmem>>, vector<1x96xf32>
    %8 = vector.broadcast %7 : vector<1x96xf32> to vector<16x96xf32>
    %9 = arith.addf %6, %8 : vector<16x96xf32>
    %10 = arith.truncf %9 : vector<16x96xf32> to vector<16x96xbf16>
    %11 = vector.extract_strided_slice %10 {offsets = [0, 0], sizes = [16, 32], strides = [1, 1]} : vector<16x96xbf16> to vector<16x32xbf16>
    %12 = vector.shape_cast %11 : vector<16x32xbf16> to vector<2x8x4x8xbf16>
    %13 = tpu.transpose %12, [0, 2, 1, 3] : vector<2x8x4x8xbf16> -> vector<2x4x8x8xbf16>
    %14 = vector.shape_cast %13 : vector<2x4x8x8xbf16> to vector<8x8x8xbf16>
    %15 = vector.extract_strided_slice %10 {offsets = [0, 32], sizes = [16, 32], strides = [1, 1]} : vector<16x96xbf16> to vector<16x32xbf16>
    %16 = vector.shape_cast %15 : vector<16x32xbf16> to vector<2x8x4x8xbf16>
    %17 = tpu.transpose %16, [0, 2, 1, 3] : vector<2x8x4x8xbf16> -> vector<2x4x8x8xbf16>
    %18 = vector.shape_cast %17 : vector<2x4x8x8xbf16> to vector<8x8x8xbf16>
    %19 = vector.extract_strided_slice %10 {offsets = [0, 64], sizes = [16, 32], strides = [1, 1]} : vector<16x96xbf16> to vector<16x32xbf16>
    %20 = vector.shape_cast %19 : vector<16x32xbf16> to vector<2x8x4x8xbf16>
    %21 = tpu.transpose %20, [0, 2, 1, 3] : vector<2x8x4x8xbf16> -> vector<2x4x8x8xbf16>
    %22 = vector.shape_cast %21 : vector<2x4x8x8xbf16> to vector<8x8x8xbf16>
    %cst_9 = arith.constant 0xFF800000 : f32
    %23 = vector.broadcast %cst_9 : f32 to vector<8x8x1xf32>
    %cst_10 = arith.constant 0.000000e+00 : f32
    %24 = vector.broadcast %cst_10 : f32 to vector<8x8x1xf32>
    %cst_11 = arith.constant 0.000000e+00 : f32
    %25 = vector.broadcast %cst_11 : f32 to vector<8x8x8xf32>
    "tpu.trace_start"() <{level = 10 : i32, message = "zqd,zkd->zqk"}> : () -> ()
    %cst_12 = arith.constant dense<0.000000e+00> : vector<8x8x8xf32>
    %26 = tpu.matmul %14, %18, %cst_12 {dimension_numbers = #tpu.dot_dimension_numbers<[2], [2], [1], [1], [0, 0, 0, 1, 1, 1], [0], [0]>} : vector<8x8x8xbf16>, vector<8x8x8xbf16>, vector<8x8x8xf32> -> vector<8x8x8xf32>
    "tpu.trace_stop"() : () -> ()
    %27 = tpu.iota {dimensions = array<i32: 0>} : vector<8x8xi32>
    %28 = tpu.iota {dimensions = array<i32: 1>} : vector<8x8xi32>
    %c0_i32 = arith.constant 0 : i32
    %29 = vector.broadcast %c0_i32 : i32 to vector<8x8xi32>
    %30 = arith.addi %28, %29 : vector<8x8xi32>
    %31 = arith.cmpi sle, %30, %27 : vector<8x8xi32>
    %cst_13 = arith.constant 0.000000e+00 : f32
    %cst_14 = arith.constant -1.000000e+09 : f32
    %32 = vector.broadcast %cst_13 : f32 to vector<8x8xf32>
    %33 = vector.broadcast %cst_14 : f32 to vector<8x8xf32>
    %34 = arith.select %31, %32, %33 : vector<8x8xi1>, vector<8x8xf32>
    %35 = vector.shape_cast %34 : vector<8x8xf32> to vector<1x8x8xf32>
    %36 = vector.broadcast %35 : vector<1x8x8xf32> to vector<8x8x8xf32>
    %37 = arith.addf %26, %36 : vector<8x8x8xf32>
    %cst_15 = arith.constant dense<0xFF800000> : vector<8x8xf32>
    %38 = vector.multi_reduction <maximumf>, %37, %cst_15 [2] : vector<8x8x8xf32> to vector<8x8xf32>
    %39 = vector.shape_cast %38 : vector<8x8xf32> to vector<8x8x1xf32>
    %40 = arith.maximumf %23, %39 : vector<8x8x1xf32>
    %41 = arith.subf %23, %40 : vector<8x8x1xf32>
    %42 = math.exp %41 : vector<8x8x1xf32>
    %43 = vector.broadcast %40 : vector<8x8x1xf32> to vector<8x8x8xf32>
    %44 = arith.subf %37, %43 : vector<8x8x8xf32>
    %45 = math.exp %44 : vector<8x8x8xf32>
    %46 = arith.mulf %42, %24 : vector<8x8x1xf32>
    %cst_16 = arith.constant dense<0.000000e+00> : vector<8x8xf32>
    %47 = vector.multi_reduction <add>, %45, %cst_16 [2] : vector<8x8x8xf32> to vector<8x8xf32>
    %48 = vector.shape_cast %47 : vector<8x8xf32> to vector<8x8x1xf32>
    %49 = arith.addf %46, %48 : vector<8x8x1xf32>
    %50 = vector.broadcast %42 : vector<8x8x1xf32> to vector<8x8x8xf32>
    %51 = arith.mulf %50, %25 : vector<8x8x8xf32>
    %52 = arith.truncf %45 : vector<8x8x8xf32> to vector<8x8x8xbf16>
    "tpu.trace_start"() <{level = 10 : i32, message = "zqk,zkd->zqd"}> : () -> ()
    %cst_17 = arith.constant dense<0.000000e+00> : vector<8x8x8xf32>
    %53 = tpu.matmul %52, %22, %cst_17 {dimension_numbers = #tpu.dot_dimension_numbers<[2], [1], [1], [2], [0, 0, 0, 1, 1, 2], [0], [0]>} : vector<8x8x8xbf16>, vector<8x8x8xbf16>, vector<8x8x8xf32> -> vector<8x8x8xf32>
    "tpu.trace_stop"() : () -> ()
    %54 = arith.addf %51, %53 : vector<8x8x8xf32>
    %55 = tpu.reciprocal %49 {approx = true} : vector<8x8x1xf32> -> vector<8x8x1xf32>
    %56 = vector.broadcast %55 : vector<8x8x1xf32> to vector<8x8x8xf32>
    %57 = arith.mulf %54, %56 : vector<8x8x8xf32>
    %58 = arith.truncf %57 : vector<8x8x8xf32> to vector<8x8x8xbf16>
    %59 = vector.shape_cast %58 : vector<8x8x8xbf16> to vector<2x4x8x8xbf16>
    %60 = tpu.transpose %59, [0, 2, 1, 3] : vector<2x4x8x8xbf16> -> vector<2x8x4x8xbf16>
    %61 = vector.shape_cast %60 : vector<2x8x4x8xbf16> to vector<16x32xbf16>
    %c0_18 = arith.constant 0 : index
    %c0_19 = arith.constant 0 : index
    %62 = vector.load %arg5[%c0_18, %c0_19] : memref<32x32xbf16, #tpu.memory_space<vmem>>, vector<32x32xbf16>
    %cst_20 = arith.constant dense<0.000000e+00> : vector<16x32xf32>
    %63 = tpu.matmul %61, %62, %cst_20 {dimension_numbers = #tpu.dot_dimension_numbers<[1], [0], [0], [1], [0, 0, 1, 1], [], []>} : vector<16x32xbf16>, vector<32x32xbf16>, vector<16x32xf32> -> vector<16x32xf32>
    %c0_21 = arith.constant 0 : index
    %c0_22 = arith.constant 0 : index
    %64 = vector.load %arg6[%c0_21, %c0_22] : memref<1x32xf32, #tpu.memory_space<vmem>>, vector<1x32xf32>
    %65 = vector.broadcast %64 : vector<1x32xf32> to vector<16x32xf32>
    %66 = arith.addf %63, %65 : vector<16x32xf32>
    %67 = arith.addf %1, %66 : vector<16x32xf32>
    %c0_23 = arith.constant 0 : index
    %c0_24 = arith.constant 0 : index
    %68 = vector.load %arg7[%c0_23, %c0_24] : memref<1x32xf32, #tpu.memory_space<vmem>>, vector<1x32xf32>
    %c0_25 = arith.constant 0 : index
    %c0_26 = arith.constant 0 : index
    %69 = vector.load %arg8[%c0_25, %c0_26] : memref<1x32xf32, #tpu.memory_space<vmem>>, vector<1x32xf32>
    %cst_27 = arith.constant dense<0.000000e+00> : vector<16xf32>
    %70 = vector.multi_reduction <add>, %67, %cst_27 [1] : vector<16x32xf32> to vector<16xf32>
    %71 = vector.shape_cast %70 : vector<16xf32> to vector<16x1xf32>
    %cst_28 = arith.constant 3.200000e+01 : f32
    %72 = vector.broadcast %cst_28 : f32 to vector<16x1xf32>
    %73 = arith.divf %71, %72 : vector<16x1xf32>
    %74 = vector.broadcast %73 : vector<16x1xf32> to vector<16x32xf32>
    %75 = arith.subf %67, %74 : vector<16x32xf32>
    %76 = vector.broadcast %73 : vector<16x1xf32> to vector<16x32xf32>
    %77 = arith.subf %67, %76 : vector<16x32xf32>
    %78 = arith.mulf %75, %77 : vector<16x32xf32>
    %cst_29 = arith.constant dense<0.000000e+00> : vector<16xf32>
    %79 = vector.multi_reduction <add>, %78, %cst_29 [1] : vector<16x32xf32> to vector<16xf32>
    %80 = vector.shape_cast %79 : vector<16xf32> to vector<16x1xf32>
    %cst_30 = arith.constant 3.200000e+01 : f32
    %81 = vector.broadcast %cst_30 : f32 to vector<16x1xf32>
    %82 = arith.divf %80, %81 : vector<16x1xf32>
    %83 = vector.broadcast %73 : vector<16x1xf32> to vector<16x32xf32>
    %84 = arith.subf %67, %83 : vector<16x32xf32>
    %cst_31 = arith.constant 9.99999974E-6 : f32
    %85 = vector.broadcast %cst_31 : f32 to vector<16x1xf32>
    %86 = arith.addf %82, %85 : vector<16x1xf32>
    %87 = math.rsqrt %86 : vector<16x1xf32>
    %88 = vector.broadcast %87 : vector<16x1xf32> to vector<16x32xf32>
    %89 = arith.mulf %84, %88 : vector<16x32xf32>
    %90 = vector.broadcast %68 : vector<1x32xf32> to vector<16x32xf32>
    %91 = arith.mulf %89, %90 : vector<16x32xf32>
    %92 = vector.broadcast %69 : vector<1x32xf32> to vector<16x32xf32>
    %93 = arith.addf %91, %92 : vector<16x32xf32>
    %94 = arith.truncf %93 : vector<16x32xf32> to vector<16x32xbf16>
    %c0_32 = arith.constant 0 : index
    %c0_33 = arith.constant 0 : index
    %95 = vector.load %arg9[%c0_32, %c0_33] : memref<32x32xbf16, #tpu.memory_space<vmem>>, vector<32x32xbf16>
    %cst_34 = arith.constant dense<0.000000e+00> : vector<16x32xf32>
    %96 = tpu.matmul %94, %95, %cst_34 {dimension_numbers = #tpu.dot_dimension_numbers<[1], [0], [0], [1], [0, 0, 1, 1], [], []>} : vector<16x32xbf16>, vector<32x32xbf16>, vector<16x32xf32> -> vector<16x32xf32>
    %c0_35 = arith.constant 0 : index
    %c0_36 = arith.constant 0 : index
    %97 = vector.load %arg10[%c0_35, %c0_36] : memref<1x32xf32, #tpu.memory_space<vmem>>, vector<1x32xf32>
    %98 = vector.broadcast %97 : vector<1x32xf32> to vector<16x32xf32>
    %99 = arith.addf %96, %98 : vector<16x32xf32>
    %c0_37 = arith.constant 0 : index
    %c0_38 = arith.constant 0 : index
    %100 = vector.load %arg11[%c0_37, %c0_38] : memref<32x64xbf16, #tpu.memory_space<vmem>>, vector<32x64xbf16>
    %cst_39 = arith.constant dense<0.000000e+00> : vector<16x64xf32>
    %101 = tpu.matmul %3, %100, %cst_39 {dimension_numbers = #tpu.dot_dimension_numbers<[1], [0], [0], [1], [0, 0, 1, 1], [], []>} : vector<16x32xbf16>, vector<32x64xbf16>, vector<16x64xf32> -> vector<16x64xf32>
    %c0_40 = arith.constant 0 : index
    %c0_41 = arith.constant 0 : index
    %102 = vector.load %arg12[%c0_40, %c0_41] : memref<1x64xf32, #tpu.memory_space<vmem>>, vector<1x64xf32>
    %103 = vector.broadcast %102 : vector<1x64xf32> to vector<16x64xf32>
    %104 = arith.addf %101, %103 : vector<16x64xf32>
    %105 = arith.truncf %99 : vector<16x32xf32> to vector<16x32xbf16>
    %106 = arith.truncf %104 : vector<16x64xf32> to vector<16x64xbf16>
    %107 = vector.shape_cast %105 : vector<16x32xbf16> to vector<2x8x4x8xbf16>
    %108 = tpu.transpose %107, [0, 2, 1, 3] : vector<2x8x4x8xbf16> -> vector<2x4x8x8xbf16>
    %109 = vector.shape_cast %108 : vector<2x4x8x8xbf16> to vector<8x8x8xbf16>
    %110 = vector.extract_strided_slice %106 {offsets = [0, 0], sizes = [16, 32], strides = [1, 1]} : vector<16x64xbf16> to vector<16x32xbf16>
    %111 = vector.shape_cast %110 : vector<16x32xbf16> to vector<2x8x4x8xbf16>
    %112 = tpu.transpose %111, [0, 2, 1, 3] : vector<2x8x4x8xbf16> -> vector<2x4x8x8xbf16>
    %113 = vector.shape_cast %112 : vector<2x4x8x8xbf16> to vector<8x8x8xbf16>
    %114 = vector.extract_strided_slice %106 {offsets = [0, 32], sizes = [16, 32], strides = [1, 1]} : vector<16x64xbf16> to vector<16x32xbf16>
    %115 = vector.shape_cast %114 : vector<16x32xbf16> to vector<2x8x4x8xbf16>
    %116 = tpu.transpose %115, [0, 2, 1, 3] : vector<2x8x4x8xbf16> -> vector<2x4x8x8xbf16>
    %117 = vector.shape_cast %116 : vector<2x4x8x8xbf16> to vector<8x8x8xbf16>
    %cst_42 = arith.constant 0xFF800000 : f32
    %118 = vector.broadcast %cst_42 : f32 to vector<8x8x1xf32>
    %cst_43 = arith.constant 0.000000e+00 : f32
    %119 = vector.broadcast %cst_43 : f32 to vector<8x8x1xf32>
    %cst_44 = arith.constant 0.000000e+00 : f32
    %120 = vector.broadcast %cst_44 : f32 to vector<8x8x8xf32>
    "tpu.trace_start"() <{level = 10 : i32, message = "zqd,zkd->zqk"}> : () -> ()
    %cst_45 = arith.constant dense<0.000000e+00> : vector<8x8x8xf32>
    %121 = tpu.matmul %109, %113, %cst_45 {dimension_numbers = #tpu.dot_dimension_numbers<[2], [2], [1], [1], [0, 0, 0, 1, 1, 1], [0], [0]>} : vector<8x8x8xbf16>, vector<8x8x8xbf16>, vector<8x8x8xf32> -> vector<8x8x8xf32>
    "tpu.trace_stop"() : () -> ()
    %cst_46 = arith.constant dense<0xFF800000> : vector<8x8xf32>
    %122 = vector.multi_reduction <maximumf>, %121, %cst_46 [2] : vector<8x8x8xf32> to vector<8x8xf32>
    %123 = vector.shape_cast %122 : vector<8x8xf32> to vector<8x8x1xf32>
    %124 = arith.maximumf %118, %123 : vector<8x8x1xf32>
    %125 = arith.subf %118, %124 : vector<8x8x1xf32>
    %126 = math.exp %125 : vector<8x8x1xf32>
    %127 = vector.broadcast %124 : vector<8x8x1xf32> to vector<8x8x8xf32>
    %128 = arith.subf %121, %127 : vector<8x8x8xf32>
    %129 = math.exp %128 : vector<8x8x8xf32>
    %130 = arith.mulf %126, %119 : vector<8x8x1xf32>
    %cst_47 = arith.constant dense<0.000000e+00> : vector<8x8xf32>
    %131 = vector.multi_reduction <add>, %129, %cst_47 [2] : vector<8x8x8xf32> to vector<8x8xf32>
    %132 = vector.shape_cast %131 : vector<8x8xf32> to vector<8x8x1xf32>
    %133 = arith.addf %130, %132 : vector<8x8x1xf32>
    %134 = vector.broadcast %126 : vector<8x8x1xf32> to vector<8x8x8xf32>
    %135 = arith.mulf %134, %120 : vector<8x8x8xf32>
    %136 = arith.truncf %129 : vector<8x8x8xf32> to vector<8x8x8xbf16>
    "tpu.trace_start"() <{level = 10 : i32, message = "zqk,zkd->zqd"}> : () -> ()
    %cst_48 = arith.constant dense<0.000000e+00> : vector<8x8x8xf32>
    %137 = tpu.matmul %136, %117, %cst_48 {dimension_numbers = #tpu.dot_dimension_numbers<[2], [1], [1], [2], [0, 0, 0, 1, 1, 2], [0], [0]>} : vector<8x8x8xbf16>, vector<8x8x8xbf16>, vector<8x8x8xf32> -> vector<8x8x8xf32>
    "tpu.trace_stop"() : () -> ()
    %138 = arith.addf %135, %137 : vector<8x8x8xf32>
    %139 = tpu.reciprocal %133 {approx = true} : vector<8x8x1xf32> -> vector<8x8x1xf32>
    %140 = vector.broadcast %139 : vector<8x8x1xf32> to vector<8x8x8xf32>
    %141 = arith.mulf %138, %140 : vector<8x8x8xf32>
    %142 = arith.truncf %141 : vector<8x8x8xf32> to vector<8x8x8xbf16>
    %143 = vector.shape_cast %142 : vector<8x8x8xbf16> to vector<2x4x8x8xbf16>
    %144 = tpu.transpose %143, [0, 2, 1, 3] : vector<2x4x8x8xbf16> -> vector<2x8x4x8xbf16>
    %145 = vector.shape_cast %144 : vector<2x8x4x8xbf16> to vector<16x32xbf16>
    %c0_49 = arith.constant 0 : index
    %c0_50 = arith.constant 0 : index
    %146 = vector.load %arg13[%c0_49, %c0_50] : memref<32x32xbf16, #tpu.memory_space<vmem>>, vector<32x32xbf16>
    %cst_51 = arith.constant dense<0.000000e+00> : vector<16x32xf32>
    %147 = tpu.matmul %145, %146, %cst_51 {dimension_numbers = #tpu.dot_dimension_numbers<[1], [0], [0], [1], [0, 0, 1, 1], [], []>} : vector<16x32xbf16>, vector<32x32xbf16>, vector<16x32xf32> -> vector<16x32xf32>
    %c0_52 = arith.constant 0 : index
    %c0_53 = arith.constant 0 : index
    %148 = vector.load %arg14[%c0_52, %c0_53] : memref<1x32xf32, #tpu.memory_space<vmem>>, vector<1x32xf32>
    %149 = vector.broadcast %148 : vector<1x32xf32> to vector<16x32xf32>
    %150 = arith.addf %147, %149 : vector<16x32xf32>
    %151 = arith.addf %93, %150 : vector<16x32xf32>
    %c0_54 = arith.constant 0 : index
    %c0_55 = arith.constant 0 : index
    %152 = vector.load %arg15[%c0_54, %c0_55] : memref<1x32xf32, #tpu.memory_space<vmem>>, vector<1x32xf32>
    %c0_56 = arith.constant 0 : index
    %c0_57 = arith.constant 0 : index
    %153 = vector.load %arg16[%c0_56, %c0_57] : memref<1x32xf32, #tpu.memory_space<vmem>>, vector<1x32xf32>
    %cst_58 = arith.constant dense<0.000000e+00> : vector<16xf32>
    %154 = vector.multi_reduction <add>, %151, %cst_58 [1] : vector<16x32xf32> to vector<16xf32>
    %155 = vector.shape_cast %154 : vector<16xf32> to vector<16x1xf32>
    %cst_59 = arith.constant 3.200000e+01 : f32
    %156 = vector.broadcast %cst_59 : f32 to vector<16x1xf32>
    %157 = arith.divf %155, %156 : vector<16x1xf32>
    %158 = vector.broadcast %157 : vector<16x1xf32> to vector<16x32xf32>
    %159 = arith.subf %151, %158 : vector<16x32xf32>
    %160 = vector.broadcast %157 : vector<16x1xf32> to vector<16x32xf32>
    %161 = arith.subf %151, %160 : vector<16x32xf32>
    %162 = arith.mulf %159, %161 : vector<16x32xf32>
    %cst_60 = arith.constant dense<0.000000e+00> : vector<16xf32>
    %163 = vector.multi_reduction <add>, %162, %cst_60 [1] : vector<16x32xf32> to vector<16xf32>
    %164 = vector.shape_cast %163 : vector<16xf32> to vector<16x1xf32>
    %cst_61 = arith.constant 3.200000e+01 : f32
    %165 = vector.broadcast %cst_61 : f32 to vector<16x1xf32>
    %166 = arith.divf %164, %165 : vector<16x1xf32>
    %167 = vector.broadcast %157 : vector<16x1xf32> to vector<16x32xf32>
    %168 = arith.subf %151, %167 : vector<16x32xf32>
    %cst_62 = arith.constant 9.99999974E-6 : f32
    %169 = vector.broadcast %cst_62 : f32 to vector<16x1xf32>
    %170 = arith.addf %166, %169 : vector<16x1xf32>
    %171 = math.rsqrt %170 : vector<16x1xf32>
    %172 = vector.broadcast %171 : vector<16x1xf32> to vector<16x32xf32>
    %173 = arith.mulf %168, %172 : vector<16x32xf32>
    %174 = vector.broadcast %152 : vector<1x32xf32> to vector<16x32xf32>
    %175 = arith.mulf %173, %174 : vector<16x32xf32>
    %176 = vector.broadcast %153 : vector<1x32xf32> to vector<16x32xf32>
    %177 = arith.addf %175, %176 : vector<16x32xf32>
    %178 = arith.truncf %177 : vector<16x32xf32> to vector<16x32xbf16>
    %cst_63 = arith.constant 0.000000e+00 : f32
    %179 = vector.broadcast %cst_63 : f32 to vector<16x32xf32>
    %c0_64 = arith.constant 0 : index
    %c0_65 = arith.constant 0 : index
    %180 = vector.load %arg17[%c0_64, %c0_65] : memref<32x64xbf16, #tpu.memory_space<vmem>>, vector<32x64xbf16>
    %cst_66 = arith.constant dense<0.000000e+00> : vector<16x64xf32>
    %181 = tpu.matmul %178, %180, %cst_66 {dimension_numbers = #tpu.dot_dimension_numbers<[1], [0], [0], [1], [0, 0, 1, 1], [], []>} : vector<16x32xbf16>, vector<32x64xbf16>, vector<16x64xf32> -> vector<16x64xf32>
    %c0_67 = arith.constant 0 : index
    %c0_68 = arith.constant 0 : index
    %182 = vector.load %arg18[%c0_67, %c0_68] : memref<1x64xf32, #tpu.memory_space<vmem>>, vector<1x64xf32>
    %183 = vector.broadcast %182 : vector<1x64xf32> to vector<16x64xf32>
    %184 = arith.addf %181, %183 : vector<16x64xf32>
    %cst_69 = arith.constant 0.000000e+00 : f32
    %185 = vector.broadcast %cst_69 : f32 to vector<16x64xf32>
    %186 = arith.maximumf %184, %185 : vector<16x64xf32>
    %187 = arith.truncf %186 : vector<16x64xf32> to vector<16x64xbf16>
    %c0_70 = arith.constant 0 : index
    %c0_71 = arith.constant 0 : index
    %188 = vector.load %arg19[%c0_70, %c0_71] : memref<64x32xbf16, #tpu.memory_space<vmem>>, vector<64x32xbf16>
    %cst_72 = arith.constant dense<0.000000e+00> : vector<16x32xf32>
    %189 = tpu.matmul %187, %188, %cst_72 {dimension_numbers = #tpu.dot_dimension_numbers<[1], [0], [0], [1], [0, 0, 1, 1], [], []>} : vector<16x64xbf16>, vector<64x32xbf16>, vector<16x32xf32> -> vector<16x32xf32>
    %190 = arith.addf %179, %189 : vector<16x32xf32>
    %c0_73 = arith.constant 0 : index
    %c0_74 = arith.constant 0 : index
    %191 = vector.load %arg20[%c0_73, %c0_74] : memref<1x32xf32, #tpu.memory_space<vmem>>, vector<1x32xf32>
    %192 = vector.broadcast %191 : vector<1x32xf32> to vector<16x32xf32>
    %193 = arith.addf %190, %192 : vector<16x32xf32>
    %194 = arith.addf %177, %193 : vector<16x32xf32>
    %c0_75 = arith.constant 0 : index
    %c0_76 = arith.constant 0 : index
    %195 = vector.load %arg21[%c0_75, %c0_76] : memref<1x32xf32, #tpu.memory_space<vmem>>, vector<1x32xf32>
    %c0_77 = arith.constant 0 : index
    %c0_78 = arith.constant 0 : index
    %196 = vector.load %arg22[%c0_77, %c0_78] : memref<1x32xf32, #tpu.memory_space<vmem>>, vector<1x32xf32>
    %cst_79 = arith.constant dense<0.000000e+00> : vector<16xf32>
    %197 = vector.multi_reduction <add>, %194, %cst_79 [1] : vector<16x32xf32> to vector<16xf32>
    %198 = vector.shape_cast %197 : vector<16xf32> to vector<16x1xf32>
    %cst_80 = arith.constant 3.200000e+01 : f32
    %199 = vector.broadcast %cst_80 : f32 to vector<16x1xf32>
    %200 = arith.divf %198, %199 : vector<16x1xf32>
    %201 = vector.broadcast %200 : vector<16x1xf32> to vector<16x32xf32>
    %202 = arith.subf %194, %201 : vector<16x32xf32>
    %203 = vector.broadcast %200 : vector<16x1xf32> to vector<16x32xf32>
    %204 = arith.subf %194, %203 : vector<16x32xf32>
    %205 = arith.mulf %202, %204 : vector<16x32xf32>
    %cst_81 = arith.constant dense<0.000000e+00> : vector<16xf32>
    %206 = vector.multi_reduction <add>, %205, %cst_81 [1] : vector<16x32xf32> to vector<16xf32>
    %207 = vector.shape_cast %206 : vector<16xf32> to vector<16x1xf32>
    %cst_82 = arith.constant 3.200000e+01 : f32
    %208 = vector.broadcast %cst_82 : f32 to vector<16x1xf32>
    %209 = arith.divf %207, %208 : vector<16x1xf32>
    %210 = vector.broadcast %200 : vector<16x1xf32> to vector<16x32xf32>
    %211 = arith.subf %194, %210 : vector<16x32xf32>
    %cst_83 = arith.constant 9.99999974E-6 : f32
    %212 = vector.broadcast %cst_83 : f32 to vector<16x1xf32>
    %213 = arith.addf %209, %212 : vector<16x1xf32>
    %214 = math.rsqrt %213 : vector<16x1xf32>
    %215 = vector.broadcast %214 : vector<16x1xf32> to vector<16x32xf32>
    %216 = arith.mulf %211, %215 : vector<16x32xf32>
    %217 = vector.broadcast %195 : vector<1x32xf32> to vector<16x32xf32>
    %218 = arith.mulf %216, %217 : vector<16x32xf32>
    %219 = vector.broadcast %196 : vector<1x32xf32> to vector<16x32xf32>
    %220 = arith.addf %218, %219 : vector<16x32xf32>
    %221 = vector.shape_cast %220 : vector<16x32xf32> to vector<2x8x32xf32>
    %c0_84 = arith.constant 0 : index
    %c0_85 = arith.constant 0 : index
    %c0_86 = arith.constant 0 : index
    %222 = vector.load %arg23[%c0_84, %c0_85, %c0_86] : memref<2x8x32xf32, #tpu.memory_space<vmem>>, vector<2x8x32xf32>
    tpu.vector_store %arg23[%c0_84, %c0_85, %c0_86], %221 {strides = array<i32>} : memref<2x8x32xf32, #tpu.memory_space<vmem>>, vector<2x8x32xf32>,
    return
  }
  func.func @transform_0(%arg0: i32) -> (i32, i32, i32) {
    %c0_i32 = arith.constant 0 : i32
    %c0_i32_0 = arith.constant 0 : i32
    %c0_i32_1 = arith.constant 0 : i32
    return %arg0, %c0_i32, %c0_i32_0 : i32, i32, i32
  }
  func.func @transform_1(%arg0: i32) -> (i32, i32, i32) {
    %c0_i32 = arith.constant 0 : i32
    %c0_i32_0 = arith.constant 0 : i32
    %c0_i32_1 = arith.constant 0 : i32
    return %arg0, %c0_i32, %c0_i32_0 : i32, i32, i32
  }
  func.func @transform_2(%arg0: i32) -> (i32, i32) {
    %c0_i32 = arith.constant 0 : i32
    %c0_i32_0 = arith.constant 0 : i32
    %c0_i32_1 = arith.constant 0 : i32
    return %c0_i32, %c0_i32_0 : i32, i32
  }
  func.func @transform_3(%arg0: i32) -> (i32, i32) {
    %c0_i32 = arith.constant 0 : i32
    %c0_i32_0 = arith.constant 0 : i32
    %c0_i32_1 = arith.constant 0 : i32
    return %c0_i32, %c0_i32_0 : i32, i32
  }
  func.func @transform_4(%arg0: i32) -> (i32, i32) {
    %c0_i32 = arith.constant 0 : i32
    %c0_i32_0 = arith.constant 0 : i32
    %c0_i32_1 = arith.constant 0 : i32
    return %c0_i32, %c0_i32_0 : i32, i32
  }
  func.func @transform_5(%arg0: i32) -> (i32, i32) {
    %c0_i32 = arith.constant 0 : i32
    %c0_i32_0 = arith.constant 0 : i32
    %c0_i32_1 = arith.constant 0 : i32
    return %c0_i32, %c0_i32_0 : i32, i32
  }
  func.func @transform_6(%arg0: i32) -> (i32, i32) {
    %c0_i32 = arith.constant 0 : i32
    %c0_i32_0 = arith.constant 0 : i32
    %c0_i32_1 = arith.constant 0 : i32
    return %c0_i32, %c0_i32_0 : i32, i32
  }
  func.func @transform_7(%arg0: i32) -> (i32, i32) {
    %c0_i32 = arith.constant 0 : i32
    %c0_i32_0 = arith.constant 0 : i32
    %c0_i32_1 = arith.constant 0 : i32
    return %c0_i32, %c0_i32_0 : i32, i32
  }
  func.func @transform_8(%arg0: i32) -> (i32, i32) {
    %c0_i32 = arith.constant 0 : i32
    %c0_i32_0 = arith.constant 0 : i32
    %c0_i32_1 = arith.constant 0 : i32
    return %c0_i32, %c0_i32_0 : i32, i32
  }
  func.func @transform_9(%arg0: i32) -> (i32, i32) {
    %c0_i32 = arith.constant 0 : i32
    %c0_i32_0 = arith.constant 0 : i32
    %c0_i32_1 = arith.constant 0 : i32
    return %c0_i32, %c0_i32_0 : i32, i32
  }
  func.func @transform_10(%arg0: i32) -> (i32, i32) {
    %c0_i32 = arith.constant 0 : i32
    %c0_i32_0 = arith.constant 0 : i32
    %c0_i32_1 = arith.constant 0 : i32
    return %c0_i32, %c0_i32_0 : i32, i32
  }
  func.func @transform_11(%arg0: i32) -> (i32, i32) {
    %c0_i32 = arith.constant 0 : i32
    %c0_i32_0 = arith.constant 0 : i32
    %c0_i32_1 = arith.constant 0 : i32
    return %c0_i32, %c0_i32_0 : i32, i32
  }
  func.func @transform_12(%arg0: i32) -> (i32, i32) {
    %c0_i32 = arith.constant 0 : i32
    %c0_i32_0 = arith.constant 0 : i32
    %c0_i32_1 = arith.constant 0 : i32
    return %c0_i32, %c0_i32_0 : i32, i32
  }
  func.func @transform_13(%arg0: i32) -> (i32, i32) {
    %c0_i32 = arith.constant 0 : i32
    %c0_i32_0 = arith.constant 0 : i32
    %c0_i32_1 = arith.constant 0 : i32
    return %c0_i32, %c0_i32_0 : i32, i32
  }
  func.func @transform_14(%arg0: i32) -> (i32, i32) {
    %c0_i32 = arith.constant 0 : i32
    %c0_i32_0 = arith.constant 0 : i32
    %c0_i32_1 = arith.constant 0 : i32
    return %c0_i32, %c0_i32_0 : i32, i32
  }
  func.func @transform_15(%arg0: i32) -> (i32, i32) {
    %c0_i32 = arith.constant 0 : i32
    %c0_i32_0 = arith.constant 0 : i32
    %c0_i32_1 = arith.constant 0 : i32
    return %c0_i32, %c0_i32_0 : i32, i32
  }
  func.func @transform_16(%arg0: i32) -> (i32, i32) {
    %c0_i32 = arith.constant 0 : i32
    %c0_i32_0 = arith.constant 0 : i32
    %c0_i32_1 = arith.constant 0 : i32
    return %c0_i32, %c0_i32_0 : i32, i32
  }
  func.func @transform_17(%arg0: i32) -> (i32, i32) {
    %c0_i32 = arith.constant 0 : i32
    %c0_i32_0 = arith.constant 0 : i32
    %c0_i32_1 = arith.constant 0 : i32
    return %c0_i32, %c0_i32_0 : i32, i32
  }
  func.func @transform_18(%arg0: i32) -> (i32, i32) {
    %c0_i32 = arith.constant 0 : i32
    %c0_i32_0 = arith.constant 0 : i32
    %c0_i32_1 = arith.constant 0 : i32
    return %c0_i32, %c0_i32_0 : i32, i32
  }
  func.func @transform_19(%arg0: i32) -> (i32, i32) {
    %c0_i32 = arith.constant 0 : i32
    %c0_i32_0 = arith.constant 0 : i32
    %c0_i32_1 = arith.constant 0 : i32
    return %c0_i32, %c0_i32_0 : i32, i32
  }
  func.func @transform_20(%arg0: i32) -> (i32, i32) {
    %c0_i32 = arith.constant 0 : i32
    %c0_i32_0 = arith.constant 0 : i32
    %c0_i32_1 = arith.constant 0 : i32
    return %c0_i32, %c0_i32_0 : i32, i32
  }
  func.func @transform_21(%arg0: i32) -> (i32, i32) {
    %c0_i32 = arith.constant 0 : i32
    %c0_i32_0 = arith.constant 0 : i32
    %c0_i32_1 = arith.constant 0 : i32
    return %c0_i32, %c0_i32_0 : i32, i32
  }
  func.func @transform_22(%arg0: i32) -> (i32, i32, i32) {
    %c0_i32 = arith.constant 0 : i32
    %c0_i32_0 = arith.constant 0 : i32
    %c0_i32_1 = arith.constant 0 : i32
    return %arg0, %c0_i32, %c0_i32_0 : i32, i32, i32
  }
}

</mosaic_0001>

<llo_original>
// kernel: tpu_custom_call.1
$region0: #{tpu_custom_call.1}
  #allocation0 [shape = 'u32[]', space=smem, size = 0x4, offset = 0x4, fixed_abs, tag = 'smem constant byte address 0x4 - core index']
  #allocation1 [shape = 'u32[144,128]{1,0:T(1,128)}', space=vmem, size = 0x12000, scoped, tag = 'internal scratch']
  %s0 = inlined_call_operand.hbm [shape: f32[2,8,32], index: 0, kind: input, shape index: {}]
  %s1 = inlined_call_operand.hbm [shape: bf16[2,8,32], index: 1, kind: input, shape index: {}]
  %s2 = inlined_call_operand.hbm [shape: bf16[32,96], index: 2, kind: input, shape index: {}]
  %s3 = inlined_call_operand.hbm [shape: f32[1,96], index: 3, kind: input, shape index: {}]
  %s4 = inlined_call_operand.hbm [shape: bf16[32,32], index: 4, kind: input, shape index: {}]
  %s5 = inlined_call_operand.hbm [shape: f32[1,32], index: 5, kind: input, shape index: {}]
  %s6 = inlined_call_operand.hbm [shape: f32[1,32], index: 6, kind: input, shape index: {}]
  %s7 = inlined_call_operand.hbm [shape: f32[1,32], index: 7, kind: input, shape index: {}]
  %s8 = inlined_call_operand.hbm [shape: bf16[32,32], index: 8, kind: input, shape index: {}]
  %s9 = inlined_call_operand.hbm [shape: f32[1,32], index: 9, kind: input, shape index: {}]
  %s10 = inlined_call_operand.hbm [shape: bf16[32,64], index: 10, kind: input, shape index: {}]
  %s11 = inlined_call_operand.hbm [shape: f32[1,64], index: 11, kind: input, shape index: {}]
  %s12 = inlined_call_operand.hbm [shape: bf16[32,32], index: 12, kind: input, shape index: {}]
  %s13 = inlined_call_operand.hbm [shape: f32[1,32], index: 13, kind: input, shape index: {}]
  %s14 = inlined_call_operand.hbm [shape: f32[1,32], index: 14, kind: input, shape index: {}]
  %s15 = inlined_call_operand.hbm [shape: f32[1,32], index: 15, kind: input, shape index: {}]
  %s16 = inlined_call_operand.hbm [shape: bf16[32,64], index: 16, kind: input, shape index: {}]
  %s17 = inlined_call_operand.hbm [shape: f32[1,64], index: 17, kind: input, shape index: {}]
  %s18 = inlined_call_operand.hbm [shape: bf16[64,32], index: 18, kind: input, shape index: {}]
  %s19 = inlined_call_operand.hbm [shape: f32[1,32], index: 19, kind: input, shape index: {}]
  %s20 = inlined_call_operand.hbm [shape: f32[1,32], index: 20, kind: input, shape index: {}]
  %s21 = inlined_call_operand.hbm [shape: f32[1,32], index: 21, kind: input, shape index: {}]
  %s22 = inlined_call_operand.hbm [shape: f32[2,8,32], index: 22, kind: output, shape index: {}]
  %s23 = sld [smem:[#allocation0]]
  $region186: #{tpu_custom_call.1} parent=0
    _
  %s25 = ssub.s32 1, %s23
  %s26 = scalar_select 0, %s25, %s23
  $region1: #{tpu_custom_call.1} parent=0
    #allocation2 [shape = 'u8[8192]{0}', space=vmem, size = 0x2000, scoped, tag = 'input window, operand 0, single buffered']
    #allocation3 [shape = 's32[1]{0}', space=sflag, size = 0x4, scoped, tag = 'scoped memory for tpu_custom_call.1']
    #allocation4 [shape = 's32[1]{0}', space=sflag, size = 0x4, scoped, tag = 'scoped memory for tpu_custom_call.1']
    #allocation5 [shape = 'u8[4096]{0}', space=vmem, size = 0x1000, scoped, tag = 'input window, operand 1, single buffered']
    #allocation6 [shape = 's32[1]{0}', space=sflag, size = 0x4, scoped, tag = 'scoped memory for tpu_custom_call.1']
    #allocation7 [shape = 'u8[8192]{0}', space=vmem, size = 0x2000, scoped, tag = 'input window, operand 2, single buffered']
    #allocation8 [shape = 'u8[512]{0}', space=vmem, size = 0x400, scoped, tag = 'input window, operand 3, single buffered']
    #allocation9 [shape = 's32[1]{0}', space=sflag, size = 0x4, scoped, tag = 'scoped memory for tpu_custom_call.1']
    #allocation10 [shape = 'u8[8192]{0}', space=vmem, size = 0x2000, scoped, tag = 'input window, operand 4, single buffered']
    #allocation11 [shape = 'u8[512]{0}', space=vmem, size = 0x400, scoped, tag = 'input window, operand 5, single buffered']
    #allocation12 [shape = 's32[1]{0}', space=sflag, size = 0x4, scoped, tag = 'scoped memory for tpu_custom_call.1']
    #allocation13 [shape = 'u8[512]{0}', space=vmem, size = 0x400, scoped, tag = 'input window, operand 6, single buffered']
    #allocation14 [shape = 'u8[512]{0}', space=vmem, size = 0x400, scoped, tag = 'input window, operand 7, single buffered']
    #allocation15 [shape = 's32[1]{0}', space=sflag, size = 0x4, scoped, tag = 'scoped memory for tpu_custom_call.1']
    #allocation16 [shape = 'u8[8192]{0}', space=vmem, size = 0x2000, scoped, tag = 'input window, operand 8, single buffered']
    #allocation17 [shape = 'u8[512]{0}', space=vmem, size = 0x400, scoped, tag = 'input window, operand 9, single buffered']
    #allocation18 [shape = 's32[1]{0}', space=sflag, size = 0x4, scoped, tag = 'scoped memory for tpu_custom_call.1']
    #allocation19 [shape = 'u8[8192]{0}', space=vmem, size = 0x2000, scoped, tag = 'input window, operand 10, single buffered']
    #allocation20 [shape = 'u8[512]{0}', space=vmem, size = 0x400, scoped, tag = 'input window, operand 11, single buffered']
    #allocation21 [shape = 's32[1]{0}', space=sflag, size = 0x4, scoped, tag = 'scoped memory for tpu_custom_call.1']
    #allocation22 [shape = 'u8[8192]{0}', space=vmem, size = 0x2000, scoped, tag = 'input window, operand 12, single buffered']
    #allocation23 [shape = 'u8[512]{0}', space=vmem, size = 0x400, scoped, tag = 'input window, operand 13, single buffered']
    #allocation24 [shape = 's32[1]{0}', space=sflag, size = 0x4, scoped, tag = 'scoped memory for tpu_custom_call.1']
    #allocation25 [shape = 'u8[512]{0}', space=vmem, size = 0x400, scoped, tag = 'input window, operand 14, single buffered']
    #allocation26 [shape = 'u8[512]{0}', space=vmem, size = 0x400, scoped, tag = 'input window, operand 15, single buffered']
    #allocation27 [shape = 's32[1]{0}', space=sflag, size = 0x4, scoped, tag = 'scoped memory for tpu_custom_call.1']
    #allocation28 [shape = 'u8[8192]{0}', space=vmem, size = 0x2000, scoped, tag = 'input window, operand 16, single buffered']
    #allocation29 [shape = 'u8[512]{0}', space=vmem, size = 0x400, scoped, tag = 'input window, operand 17, single buffered']
    #allocation30 [shape = 's32[1]{0}', space=sflag, size = 0x4, scoped, tag = 'scoped memory for tpu_custom_call.1']
    #allocation31 [shape = 'u8[16384]{0}', space=vmem, size = 0x4000, scoped, tag = 'input window, operand 18, single buffered']
    #allocation32 [shape = 'u8[512]{0}', space=vmem, size = 0x400, scoped, tag = 'input window, operand 19, single buffered']
    #allocation33 [shape = 's32[1]{0}', space=sflag, size = 0x4, scoped, tag = 'scoped memory for tpu_custom_call.1']
    #allocation34 [shape = 'u8[512]{0}', space=vmem, size = 0x400, scoped, tag = 'input window, operand 20, single buffered']
    #allocation35 [shape = 'u8[512]{0}', space=vmem, size = 0x400, scoped, tag = 'input window, operand 21, single buffered']
    #allocation36 [shape = 's32[1]{0}', space=sflag, size = 0x4, scoped, tag = 'scoped memory for tpu_custom_call.1']
    #allocation37 [shape = 'u8[8192]{0}', space=vmem, size = 0x2000, scoped, tag = 'output window, operand 0, single buffered']
    %27 = vsyncpa [#allocation3], 0
    %28 = vsyncpa [#allocation6], 0
    %29 = vsyncpa [#allocation9], 0
    %30 = vsyncpa [#allocation12], 0
    %31 = vsyncpa [#allocation15], 0
    %32 = vsyncpa [#allocation18], 0
    %33 = vsyncpa [#allocation21], 0
    %34 = vsyncpa [#allocation24], 0
    %35 = vsyncpa [#allocation27], 0
    %36 = vsyncpa [#allocation30], 0
    %37 = vsyncpa [#allocation33], 0
    %38 = vsyncpa [#allocation36], 0
    %39 = vsyncpa [#allocation4], 0
    // Predicated region
    $region2: #{tpu_custom_call.1} parent=1 // pred_check
      _
    $region3: #{tpu_custom_call.1} parent=1 // pred_check_branch
      %41 = sbr.rel (0) target = $region5
    $region4: #{tpu_custom_call.1} parent=1 // pred_region
      %s43 = ssub.s32 256, 256
      %44 = vsyncadd [#allocation3], %s43
      %s45 = sshll.u32 [#allocation2], 4
      %s46 = int_to_ptr.vmem [resolvable:$true] %s45
      %51 = dma.hbm_to_vmem [thread:$0]  %s0, 256, %s46, [#allocation3], 128, 128, 8
    $region5: #{tpu_custom_call.1} parent=1 // pred_fallthru
      _
    // Predicated region
    $region6: #{tpu_custom_call.1} parent=1 // pred_check
      _
    $region7: #{tpu_custom_call.1} parent=1 // pred_check_branch
      %53 = sbr.rel (0) target = $region9
    $region8: #{tpu_custom_call.1} parent=1 // pred_region
      %s55 = ssub.s32 128, 128
      %56 = vsyncadd [#allocation6], %s55
      %s57 = sshll.u32 [#allocation5], 4
      %s58 = int_to_ptr.vmem [resolvable:$true] %s57
      %63 = dma.hbm_to_vmem [thread:$0]  %s1, 128, %s58, [#allocation6], 64, 64, 4
    $region9: #{tpu_custom_call.1} parent=1 // pred_fallthru
      _
    // Predicated region
    $region10: #{tpu_custom_call.1} parent=1 // pred_check
      _
    $region11: #{tpu_custom_call.1} parent=1 // pred_check_branch
      %65 = sbr.rel (0) target = $region13
    $region12: #{tpu_custom_call.1} parent=1 // pred_region
      %s67 = ssub.s32 256, 256
      %68 = vsyncadd [#allocation6], %s67
      %s69 = sshll.u32 [#allocation7], 4
      %s70 = int_to_ptr.vmem [resolvable:$true] %s69
      %75 = dma.hbm_to_vmem [thread:$0]  %s2, 256, %s70, [#allocation6], 64, 64, 4
    $region13: #{tpu_custom_call.1} parent=1 // pred_fallthru
      _
    // Predicated region
    $region14: #{tpu_custom_call.1} parent=1 // pred_check
      _
    $region15: #{tpu_custom_call.1} parent=1 // pred_check_branch
      %77 = sbr.rel (0) target = $region17
    $region16: #{tpu_custom_call.1} parent=1 // pred_region
      %s79 = ssub.s32 16, 16
      %80 = vsyncadd [#allocation9], %s79
      %s82 = sshll.u32 [#allocation8], 4
      %s83 = int_to_ptr.vmem [resolvable:$true] %s82
      %85 = dma.hbm_to_vmem [thread:$0]  %s3, 16, %s83, [#allocation9]
    $region17: #{tpu_custom_call.1} parent=1 // pred_fallthru
      _
    // Predicated region
    $region18: #{tpu_custom_call.1} parent=1 // pred_check
      _
    $region19: #{tpu_custom_call.1} parent=1 // pred_check_branch
      %87 = sbr.rel (0) target = $region21
    $region20: #{tpu_custom_call.1} parent=1 // pred_region
      %s89 = ssub.s32 256, 256
      %90 = vsyncadd [#allocation9], %s89
      %s91 = sshll.u32 [#allocation10], 4
      %s92 = int_to_ptr.vmem [resolvable:$true] %s91
      %97 = dma.hbm_to_vmem [thread:$0]  %s4, 256, %s92, [#allocation9], 64, 64, 4
    $region21: #{tpu_custom_call.1} parent=1 // pred_fallthru
      _
    // Predicated region
    $region22: #{tpu_custom_call.1} parent=1 // pred_check
      _
    $region23: #{tpu_custom_call.1} parent=1 // pred_check_branch
      %99 = sbr.rel (0) target = $region25
    $region24: #{tpu_custom_call.1} parent=1 // pred_region
      %s101 = ssub.s32 16, 16
      %102 = vsyncadd [#allocation12], %s101
      %s104 = sshll.u32 [#allocation11], 4
      %s105 = int_to_ptr.vmem [resolvable:$true] %s104
      %107 = dma.hbm_to_vmem [thread:$0]  %s5, 16, %s105, [#allocation12]
    $region25: #{tpu_custom_call.1} parent=1 // pred_fallthru
      _
    // Predicated region
    $region26: #{tpu_custom_call.1} parent=1 // pred_check
      _
    $region27: #{tpu_custom_call.1} parent=1 // pred_check_branch
      %109 = sbr.rel (0) target = $region29
    $region28: #{tpu_custom_call.1} parent=1 // pred_region
      %s111 = ssub.s32 16, 16
      %112 = vsyncadd [#allocation12], %s111
      %s114 = sshll.u32 [#allocation13], 4
      %s115 = int_to_ptr.vmem [resolvable:$true] %s114
      %117 = dma.hbm_to_vmem [thread:$0]  %s6, 16, %s115, [#allocation12]
    $region29: #{tpu_custom_call.1} parent=1 // pred_fallthru
      _
    // Predicated region
    $region30: #{tpu_custom_call.1} parent=1 // pred_check
      _
    $region31: #{tpu_custom_call.1} parent=1 // pred_check_branch
      %119 = sbr.rel (0) target = $region33
    $region32: #{tpu_custom_call.1} parent=1 // pred_region
      %s121 = ssub.s32 16, 16
      %122 = vsyncadd [#allocation15], %s121
      %s124 = sshll.u32 [#allocation14], 4
      %s125 = int_to_ptr.vmem [resolvable:$true] %s124
      %127 = dma.hbm_to_vmem [thread:$0]  %s7, 16, %s125, [#allocation15]
    $region33: #{tpu_custom_call.1} parent=1 // pred_fallthru
      _
    // Predicated region
    $region34: #{tpu_custom_call.1} parent=1 // pred_check
      _
    $region35: #{tpu_custom_call.1} parent=1 // pred_check_branch
      %129 = sbr.rel (0) target = $region37
    $region36: #{tpu_custom_call.1} parent=1 // pred_region
      %s131 = ssub.s32 256, 256
      %132 = vsyncadd [#allocation15], %s131
      %s133 = sshll.u32 [#allocation16], 4
      %s134 = int_to_ptr.vmem [resolvable:$true] %s133
      %139 = dma.hbm_to_vmem [thread:$0]  %s8, 256, %s134, [#allocation15], 64, 64, 4
    $region37: #{tpu_custom_call.1} parent=1 // pred_fallthru
      _
    // Predicated region
    $region38: #{tpu_custom_call.1} parent=1 // pred_check
      _
    $region39: #{tpu_custom_call.1} parent=1 // pred_check_branch
      %141 = sbr.rel (0) target = $region41
    $region40: #{tpu_custom_call.1} parent=1 // pred_region
      %s143 = ssub.s32 16, 16
      %144 = vsyncadd [#allocation18], %s143
      %s146 = sshll.u32 [#allocation17], 4
      %s147 = int_to_ptr.vmem [resolvable:$true] %s146
      %149 = dma.hbm_to_vmem [thread:$0]  %s9, 16, %s147, [#allocation18]
    $region41: #{tpu_custom_call.1} parent=1 // pred_fallthru
      _
    // Predicated region
    $region42: #{tpu_custom_call.1} parent=1 // pred_check
      _
    $region43: #{tpu_custom_call.1} parent=1 // pred_check_branch
      %151 = sbr.rel (0) target = $region45
    $region44: #{tpu_custom_call.1} parent=1 // pred_region
      %s153 = ssub.s32 256, 256
      %154 = vsyncadd [#allocation18], %s153
      %s155 = sshll.u32 [#allocation19], 4
      %s156 = int_to_ptr.vmem [resolvable:$true] %s155
      %161 = dma.hbm_to_vmem [thread:$0]  %s10, 256, %s156, [#allocation18], 64, 64, 4
    $region45: #{tpu_custom_call.1} parent=1 // pred_fallthru
      _
    // Predicated region
    $region46: #{tpu_custom_call.1} parent=1 // pred_check
      _
    $region47: #{tpu_custom_call.1} parent=1 // pred_check_branch
      %163 = sbr.rel (0) target = $region49
    $region48: #{tpu_custom_call.1} parent=1 // pred_region
      %s165 = ssub.s32 16, 16
      %166 = vsyncadd [#allocation21], %s165
      %s168 = sshll.u32 [#allocation20], 4
      %s169 = int_to_ptr.vmem [resolvable:$true] %s168
      %171 = dma.hbm_to_vmem [thread:$0]  %s11, 16, %s169, [#allocation21]
    $region49: #{tpu_custom_call.1} parent=1 // pred_fallthru
      _
    // Predicated region
    $region50: #{tpu_custom_call.1} parent=1 // pred_check
      _
    $region51: #{tpu_custom_call.1} parent=1 // pred_check_branch
      %173 = sbr.rel (0) target = $region53
    $region52: #{tpu_custom_call.1} parent=1 // pred_region
      %s175 = ssub.s32 256, 256
      %176 = vsyncadd [#allocation21], %s175
      %s177 = sshll.u32 [#allocation22], 4
      %s178 = int_to_ptr.vmem [resolvable:$true] %s177
      %183 = dma.hbm_to_vmem [thread:$0]  %s12, 256, %s178, [#allocation21], 64, 64, 4
    $region53: #{tpu_custom_call.1} parent=1 // pred_fallthru
      _
    // Predicated region
    $region54: #{tpu_custom_call.1} parent=1 // pred_check
      _
    $region55: #{tpu_custom_call.1} parent=1 // pred_check_branch
      %185 = sbr.rel (0) target = $region57
    $region56: #{tpu_custom_call.1} parent=1 // pred_region
      %s187 = ssub.s32 16, 16
      %188 = vsyncadd [#allocation24], %s187
      %s190 = sshll.u32 [#allocation23], 4
      %s191 = int_to_ptr.vmem [resolvable:$true] %s190
      %193 = dma.hbm_to_vmem [thread:$0]  %s13, 16, %s191, [#allocation24]
    $region57: #{tpu_custom_call.1} parent=1 // pred_fallthru
      _
    // Predicated region
    $region58: #{tpu_custom_call.1} parent=1 // pred_check
      _
    $region59: #{tpu_custom_call.1} parent=1 // pred_check_branch
      %195 = sbr.rel (0) target = $region61
    $region60: #{tpu_custom_call.1} parent=1 // pred_region
      %s197 = ssub.s32 16, 16
      %198 = vsyncadd [#allocation24], %s197
      %s200 = sshll.u32 [#allocation25], 4
      %s201 = int_to_ptr.vmem [resolvable:$true] %s200
      %203 = dma.hbm_to_vmem [thread:$0]  %s14, 16, %s201, [#allocation24]
    $region61: #{tpu_custom_call.1} parent=1 // pred_fallthru
      _
    // Predicated region
    $region62: #{tpu_custom_call.1} parent=1 // pred_check
      _
    $region63: #{tpu_custom_call.1} parent=1 // pred_check_branch
      %205 = sbr.rel (0) target = $region65
    $region64: #{tpu_custom_call.1} parent=1 // pred_region
      %s207 = ssub.s32 16, 16
      %208 = vsyncadd [#allocation27], %s207
      %s210 = sshll.u32 [#allocation26], 4
      %s211 = int_to_ptr.vmem [resolvable:$true] %s210
      %213 = dma.hbm_to_vmem [thread:$0]  %s15, 16, %s211, [#allocation27]
    $region65: #{tpu_custom_call.1} parent=1 // pred_fallthru
      _
    // Predicated region
    $region66: #{tpu_custom_call.1} parent=1 // pred_check
      _
    $region67: #{tpu_custom_call.1} parent=1 // pred_check_branch
      %215 = sbr.rel (0) target = $region69
    $region68: #{tpu_custom_call.1} parent=1 // pred_region
      %s217 = ssub.s32 256, 256
      %218 = vsyncadd [#allocation27], %s217
      %s219 = sshll.u32 [#allocation28], 4
      %s220 = int_to_ptr.vmem [resolvable:$true] %s219
      %225 = dma.hbm_to_vmem [thread:$0]  %s16, 256, %s220, [#allocation27], 64, 64, 4
    $region69: #{tpu_custom_call.1} parent=1 // pred_fallthru
      _
    // Predicated region
    $region70: #{tpu_custom_call.1} parent=1 // pred_check
      _
    $region71: #{tpu_custom_call.1} parent=1 // pred_check_branch
      %227 = sbr.rel (0) target = $region73
    $region72: #{tpu_custom_call.1} parent=1 // pred_region
      %s229 = ssub.s32 16, 16
      %230 = vsyncadd [#allocation30], %s229
      %s232 = sshll.u32 [#allocation29], 4
      %s233 = int_to_ptr.vmem [resolvable:$true] %s232
      %235 = dma.hbm_to_vmem [thread:$0]  %s17, 16, %s233, [#allocation30]
    $region73: #{tpu_custom_call.1} parent=1 // pred_fallthru
      _
    // Predicated region
    $region74: #{tpu_custom_call.1} parent=1 // pred_check
      _
    $region75: #{tpu_custom_call.1} parent=1 // pred_check_branch
      %237 = sbr.rel (0) target = $region77
    $region76: #{tpu_custom_call.1} parent=1 // pred_region
      %s239 = ssub.s32 512, 512
      %240 = vsyncadd [#allocation30], %s239
      %s241 = sshll.u32 [#allocation31], 4
      %s242 = int_to_ptr.vmem [resolvable:$true] %s241
      %247 = dma.hbm_to_vmem [thread:$0]  %s18, 512, %s242, [#allocation30], 64, 64, 4
    $region77: #{tpu_custom_call.1} parent=1 // pred_fallthru
      _
    // Predicated region
    $region78: #{tpu_custom_call.1} parent=1 // pred_check
      _
    $region79: #{tpu_custom_call.1} parent=1 // pred_check_branch
      %249 = sbr.rel (0) target = $region81
    $region80: #{tpu_custom_call.1} parent=1 // pred_region
      %s251 = ssub.s32 16, 16
      %252 = vsyncadd [#allocation33], %s251
      %s254 = sshll.u32 [#allocation32], 4
      %s255 = int_to_ptr.vmem [resolvable:$true] %s254
      %257 = dma.hbm_to_vmem [thread:$0]  %s19, 16, %s255, [#allocation33]
    $region81: #{tpu_custom_call.1} parent=1 // pred_fallthru
      _
    // Predicated region
    $region82: #{tpu_custom_call.1} parent=1 // pred_check
      _
    $region83: #{tpu_custom_call.1} parent=1 // pred_check_branch
      %259 = sbr.rel (0) target = $region85
    $region84: #{tpu_custom_call.1} parent=1 // pred_region
      %s261 = ssub.s32 16, 16
      %262 = vsyncadd [#allocation33], %s261
      %s264 = sshll.u32 [#allocation34], 4
      %s265 = int_to_ptr.vmem [resolvable:$true] %s264
      %267 = dma.hbm_to_vmem [thread:$0]  %s20, 16, %s265, [#allocation33]
    $region85: #{tpu_custom_call.1} parent=1 // pred_fallthru
      _
    // Predicated region
    $region86: #{tpu_custom_call.1} parent=1 // pred_check
      _
    $region87: #{tpu_custom_call.1} parent=1 // pred_check_branch
      %269 = sbr.rel (0) target = $region89
    $region88: #{tpu_custom_call.1} parent=1 // pred_region
      %s271 = ssub.s32 16, 16
      %272 = vsyncadd [#allocation36], %s271
      %s274 = sshll.u32 [#allocation35], 4
      %s275 = int_to_ptr.vmem [resolvable:$true] %s274
      %277 = dma.hbm_to_vmem [thread:$0]  %s21, 16, %s275, [#allocation36]
    $region89: #{tpu_custom_call.1} parent=1 // pred_fallthru
      _
    // Predicated region
    $region90: #{tpu_custom_call.1} parent=1 // pred_check
      _
    $region91: #{tpu_custom_call.1} parent=1 // pred_check_branch
      %279 = sbr.rel (0) target = $region93
    $region92: #{tpu_custom_call.1} parent=1 // pred_region
      %280 = dma.done [#allocation3], 256
    $region93: #{tpu_custom_call.1} parent=1 // pred_fallthru
      _
    // Predicated region
    $region94: #{tpu_custom_call.1} parent=1 // pred_check
      _
    $region95: #{tpu_custom_call.1} parent=1 // pred_check_branch
      %282 = sbr.rel (0) target = $region97
    $region96: #{tpu_custom_call.1} parent=1 // pred_region
      %283 = dma.done [#allocation6], 128
    $region97: #{tpu_custom_call.1} parent=1 // pred_fallthru
      _
    // Predicated region
    $region98: #{tpu_custom_call.1} parent=1 // pred_check
      _
    $region99: #{tpu_custom_call.1} parent=1 // pred_check_branch
      %285 = sbr.rel (0) target = $region101
    $region100: #{tpu_custom_call.1} parent=1 // pred_region
      %286 = dma.done [#allocation6], 256
    $region101: #{tpu_custom_call.1} parent=1 // pred_fallthru
      _
    // Predicated region
    $region102: #{tpu_custom_call.1} parent=1 // pred_check
      _
    $region103: #{tpu_custom_call.1} parent=1 // pred_check_branch
      %288 = sbr.rel (0) target = $region105
    $region104: #{tpu_custom_call.1} parent=1 // pred_region
      %289 = dma.done [#allocation9], 16
    $region105: #{tpu_custom_call.1} parent=1 // pred_fallthru
      _
    // Predicated region
    $region106: #{tpu_custom_call.1} parent=1 // pred_check
      _
    $region107: #{tpu_custom_call.1} parent=1 // pred_check_branch
      %291 = sbr.rel (0) target = $region109
    $region108: #{tpu_custom_call.1} parent=1 // pred_region
      %292 = dma.done [#allocation9], 256
    $region109: #{tpu_custom_call.1} parent=1 // pred_fallthru
      _
    // Predicated region
    $region110: #{tpu_custom_call.1} parent=1 // pred_check
      _
    $region111: #{tpu_custom_call.1} parent=1 // pred_check_branch
      %294 = sbr.rel (0) target = $region113
    $region112: #{tpu_custom_call.1} parent=1 // pred_region
      %295 = dma.done [#allocation12], 16
    $region113: #{tpu_custom_call.1} parent=1 // pred_fallthru
      _
    // Predicated region
    $region114: #{tpu_custom_call.1} parent=1 // pred_check
      _
    $region115: #{tpu_custom_call.1} parent=1 // pred_check_branch
      %297 = sbr.rel (0) target = $region117
    $region116: #{tpu_custom_call.1} parent=1 // pred_region
      %298 = dma.done [#allocation12], 16
    $region117: #{tpu_custom_call.1} parent=1 // pred_fallthru
      _
    // Predicated region
    $region118: #{tpu_custom_call.1} parent=1 // pred_check
      _
    $region119: #{tpu_custom_call.1} parent=1 // pred_check_branch
      %300 = sbr.rel (0) target = $region121
    $region120: #{tpu_custom_call.1} parent=1 // pred_region
      %301 = dma.done [#allocation15], 16
    $region121: #{tpu_custom_call.1} parent=1 // pred_fallthru
      _
    // Predicated region
    $region122: #{tpu_custom_call.1} parent=1 // pred_check
      _
    $region123: #{tpu_custom_call.1} parent=1 // pred_check_branch
      %303 = sbr.rel (0) target = $region125
    $region124: #{tpu_custom_call.1} parent=1 // pred_region
      %304 = dma.done [#allocation15], 256
    $region125: #{tpu_custom_call.1} parent=1 // pred_fallthru
      _
    // Predicated region
    $region126: #{tpu_custom_call.1} parent=1 // pred_check
      _
    $region127: #{tpu_custom_call.1} parent=1 // pred_check_branch
      %306 = sbr.rel (0) target = $region129
    $region128: #{tpu_custom_call.1} parent=1 // pred_region
      %307 = dma.done [#allocation18], 16
    $region129: #{tpu_custom_call.1} parent=1 // pred_fallthru
      _
    // Predicated region
    $region130: #{tpu_custom_call.1} parent=1 // pred_check
      _
    $region131: #{tpu_custom_call.1} parent=1 // pred_check_branch
      %309 = sbr.rel (0) target = $region133
    $region132: #{tpu_custom_call.1} parent=1 // pred_region
      %310 = dma.done [#allocation18], 256
    $region133: #{tpu_custom_call.1} parent=1 // pred_fallthru
      _
    // Predicated region
    $region134: #{tpu_custom_call.1} parent=1 // pred_check
      _
    $region135: #{tpu_custom_call.1} parent=1 // pred_check_branch
      %312 = sbr.rel (0) target = $region137
    $region136: #{tpu_custom_call.1} parent=1 // pred_region
      %313 = dma.done [#allocation21], 16
    $region137: #{tpu_custom_call.1} parent=1 // pred_fallthru
      _
    // Predicated region
    $region138: #{tpu_custom_call.1} parent=1 // pred_check
      _
    $region139: #{tpu_custom_call.1} parent=1 // pred_check_branch
      %315 = sbr.rel (0) target = $region141
    $region140: #{tpu_custom_call.1} parent=1 // pred_region
      %316 = dma.done [#allocation21], 256
    $region141: #{tpu_custom_call.1} parent=1 // pred_fallthru
      _
    // Predicated region
    $region142: #{tpu_custom_call.1} parent=1 // pred_check
      _
    $region143: #{tpu_custom_call.1} parent=1 // pred_check_branch
      %318 = sbr.rel (0) target = $region145
    $region144: #{tpu_custom_call.1} parent=1 // pred_region
      %319 = dma.done [#allocation24], 16
    $region145: #{tpu_custom_call.1} parent=1 // pred_fallthru
      _
    // Predicated region
    $region146: #{tpu_custom_call.1} parent=1 // pred_check
      _
    $region147: #{tpu_custom_call.1} parent=1 // pred_check_branch
      %321 = sbr.rel (0) target = $region149
    $region148: #{tpu_custom_call.1} parent=1 // pred_region
      %322 = dma.done [#allocation24], 16
    $region149: #{tpu_custom_call.1} parent=1 // pred_fallthru
      _
    // Predicated region
    $region150: #{tpu_custom_call.1} parent=1 // pred_check
      _
    $region151: #{tpu_custom_call.1} parent=1 // pred_check_branch
      %324 = sbr.rel (0) target = $region153
    $region152: #{tpu_custom_call.1} parent=1 // pred_region
      %325 = dma.done [#allocation27], 16
    $region153: #{tpu_custom_call.1} parent=1 // pred_fallthru
      _
    // Predicated region
    $region154: #{tpu_custom_call.1} parent=1 // pred_check
      _
    $region155: #{tpu_custom_call.1} parent=1 // pred_check_branch
      %327 = sbr.rel (0) target = $region157
    $region156: #{tpu_custom_call.1} parent=1 // pred_region
      %328 = dma.done [#allocation27], 256
    $region157: #{tpu_custom_call.1} parent=1 // pred_fallthru
      _
    // Predicated region
    $region158: #{tpu_custom_call.1} parent=1 // pred_check
      _
    $region159: #{tpu_custom_call.1} parent=1 // pred_check_branch
      %330 = sbr.rel (0) target = $region161
    $region160: #{tpu_custom_call.1} parent=1 // pred_region
      %331 = dma.done [#allocation30], 16
    $region161: #{tpu_custom_call.1} parent=1 // pred_fallthru
      _
    // Predicated region
    $region162: #{tpu_custom_call.1} parent=1 // pred_check
      _
    $region163: #{tpu_custom_call.1} parent=1 // pred_check_branch
      %333 = sbr.rel (0) target = $region165
    $region164: #{tpu_custom_call.1} parent=1 // pred_region
      %334 = dma.done [#allocation30], 512
    $region165: #{tpu_custom_call.1} parent=1 // pred_fallthru
      _
    // Predicated region
    $region166: #{tpu_custom_call.1} parent=1 // pred_check
      _
    $region167: #{tpu_custom_call.1} parent=1 // pred_check_branch
      %336 = sbr.rel (0) target = $region169
    $region168: #{tpu_custom_call.1} parent=1 // pred_region
      %337 = dma.done [#allocation33], 16
    $region169: #{tpu_custom_call.1} parent=1 // pred_fallthru
      _
    // Predicated region
    $region170: #{tpu_custom_call.1} parent=1 // pred_check
      _
    $region171: #{tpu_custom_call.1} parent=1 // pred_check_branch
      %339 = sbr.rel (0) target = $region173
    $region172: #{tpu_custom_call.1} parent=1 // pred_region
      %340 = dma.done [#allocation33], 16
    $region173: #{tpu_custom_call.1} parent=1 // pred_fallthru
      _
    // Predicated region
    $region174: #{tpu_custom_call.1} parent=1 // pred_check
      _
    $region175: #{tpu_custom_call.1} parent=1 // pred_check_branch
      %342 = sbr.rel (0) target = $region177
    $region176: #{tpu_custom_call.1} parent=1 // pred_region
      %343 = dma.done [#allocation36], 16
    $region177: #{tpu_custom_call.1} parent=1 // pred_fallthru
      _
    %v345 = vld [vmem:[#allocation2] sm:$0xff]
    %v346 = vld [vmem:[#allocation2 + $0x8] sm:$0xff]
    %v347 = vld [vmem:[#allocation5] sm:$0xf]
    %v348 = vld [vmem:[#allocation5 + $0x4] sm:$0xf]
    %v349 = vpack.c.bf16 %v346, %v345
    %v350 = vld [vmem:[#allocation7] sm:$0xf]
    %v351 = vld [vmem:[#allocation7 + $0x4] sm:$0xf]
    %v352 = vld [vmem:[#allocation7 + $0x8] sm:$0xf]
    %v353 = vld [vmem:[#allocation7 + $0xc] sm:$0xf]
    %v354 = vld [vmem:[#allocation8] sm:$0x1]
    %v356 = vlaneseq
    %v357 = vshrl.u32 %v356, 7
    %v358 = vsub.s32 0, %v357
    %v359 = vrot.slane %v354, %v358
    %v365 = vunpack.c.l.b16 %v350
    %v366 = vunpack.c.l.b16 %v351
    %v367 = vunpack.c.l.b16 %v352
    %v368 = vunpack.c.l.b16 %v353
    %v369 = vpack.c.b16 %v366, %v365
    %v370 = vpack.c.b16 %v368, %v367
    %vm373 = vcmask 261120
    %v375 = vsel %vm373, %v349, 0
    %377 = vmatprep.subr.bf16.mxu0 0
    %378 = vmatpush1.bf16.msra.mxu0 %v369
    %379 = vmatprep.subr.bf16.mxu0 0
    %380 = vmatpush1.bf16.msra.mxu0 %v370
    %381 = vmatprep.subr.bf16.mxu0 0
    %382 = vmatpush1.bf16.msra.mxu0 0
    %383 = vmatprep.subr.bf16.mxu0 0
    %384 = vmatpush1.bf16.msra.mxu0 0
    %385 = vmatprep.subr.bf16.mxu0 0
    %386 = vmatpush1.bf16.msra.mxu0 0
    %387 = vmatprep.subr.bf16.mxu0 0
    %388 = vmatpush1.bf16.msra.mxu0 0
    %389 = vmatprep.subr.bf16.mxu0 0
    %390 = vmatpush1.bf16.msra.mxu0 0
    %391 = vmatprep.subr.bf16.mxu0 0
    %392 = vmatpush1.bf16.msra.mxu0 0
    %393 = vmatprep.subr.bf16.mxu0 0
    %394 = vmatpush1.bf16.msra.mxu0 0
    %395 = vmatprep.subr.bf16.mxu0 0
    %396 = vmatpush1.bf16.msra.mxu0 0
    %397 = vmatprep.subr.bf16.mxu0 0
    %398 = vmatpush1.bf16.msra.mxu0 0
    %399 = vmatprep.subr.bf16.mxu0 0
    %400 = vmatpush1.bf16.msra.mxu0 0
    %401 = vmatprep.subr.bf16.mxu0 0
    %402 = vmatpush1.bf16.msra.mxu0 0
    %403 = vmatprep.subr.bf16.mxu0 0
    %404 = vmatpush1.bf16.msra.mxu0 0
    %405 = vmatprep.subr.bf16.mxu0 0
    %406 = vmatpush1.bf16.msra.mxu0 0
    %407 = vmatprep.subr.bf16.mxu0 0
    %408 = vmatpush1.bf16.msra.mxu0 0
    %409 = vmatprep.mubr.bf16.mxu0 0
    %410 = vmatmul.mubr.bf16.gmra.mrb[0].mxu0 %v375
    %v411 = vpop.f32.mrb[0].mxu0
    %v412 = vadd.f32 %v359, %v411
    %v413 = vpop.f32.mrb[0].mxu0
    %v414 = vpop.f32.mrb[0].mxu0
    %v415 = vadd.f32 %v359, %v414
    %v416 = vpop.f32.mrb[0].mxu0
    %417 = vdwg.mxu0
    %v418 = vpack.c.bf16 %v415, %v412
    %420 = vrot.lane.b32.xlu0 %v418, 120
    %v421 = vpop.permute.xlu0 %420
    %422 = vrot.lane.b32.xlu0 %v418, 112
    %v423 = vpop.permute.xlu0 %422
    %424 = vrot.lane.b32.xlu0 %v418, 104
    %v425 = vpop.permute.xlu0 %424
    %v428 = vpack.i.b16 %v421, %v418
    %v430 = vshrl.u32 %v418, 16
    %v431 = vshrl.u32 %v421, 16
    %v432 = vpack.i.b16 %v431, %v430
    %v436 = vpack.i.b16 %v425, %v423
    %v438 = vshrl.u32 %v423, 16
    %v439 = vshrl.u32 %v425, 16
    %v440 = vpack.i.b16 %v439, %v438
    %v443 = vpack.i.b16 0, 0
    %v445 = vshrl.u32 0, 16
    %v446 = vpack.i.b16 %v445, %v445
    %v448 = vcombine.high %v428, %v443
    %v450 = vunpack.c.l.s4 1983009808
    %v451 = vunpack.c.0.s8 %v450
    %v452 = vlaneseq
    %v453 = vshrl.u32 %v452, 7
    %v454 = vsub.s32 %v451, %v453
    %v455 = vrot.slane %v428, %v454
    %v457 = vunpack.c.l.s4 1983009808
    %v458 = vunpack.c.0.s8 %v457
    %v459 = vlaneseq
    %v460 = vshrl.u32 %v459, 7
    %v461 = vsub.s32 %v458, %v460
    %v462 = vrot.slane %v448, %v461
    %v463 = vcombine.high %v436, %v443
    %v465 = vunpack.c.l.s4 1983009808
    %v466 = vunpack.c.0.s8 %v465
    %v467 = vlaneseq
    %v468 = vshrl.u32 %v467, 7
    %v469 = vsub.s32 %v466, %v468
    %v470 = vrot.slane %v436, %v469
    %v472 = vunpack.c.l.s4 1983009808
    %v473 = vunpack.c.0.s8 %v472
    %v474 = vlaneseq
    %v475 = vshrl.u32 %v474, 7
    %v476 = vsub.s32 %v473, %v475
    %v477 = vrot.slane %v463, %v476
    %v478 = vcombine.low %v455, %v470
    %v479 = vcombine.high %v455, %v470
    %v481 = vunpack.c.l.s4 1934713408
    %v482 = vunpack.c.0.s8 %v481
    %v483 = vlaneseq
    %v484 = vshrl.u32 %v483, 7
    %v485 = vsub.s32 %v482, %v484
    %v486 = vrot.slane %v478, %v485
    %v488 = vunpack.c.l.s4 1934713408
    %v489 = vunpack.c.0.s8 %v488
    %v490 = vlaneseq
    %v491 = vshrl.u32 %v490, 7
    %v492 = vsub.s32 %v489, %v491
    %v493 = vrot.slane %v479, %v492
    %v494 = vcombine.low %v462, %v477
    %v495 = vcombine.high %v462, %v477
    %v497 = vunpack.c.l.s4 1934713408
    %v498 = vunpack.c.0.s8 %v497
    %v499 = vlaneseq
    %v500 = vshrl.u32 %v499, 7
    %v501 = vsub.s32 %v498, %v500
    %v502 = vrot.slane %v494, %v501
    %v504 = vunpack.c.l.s4 1934713408
    %v505 = vunpack.c.0.s8 %v504
    %v506 = vlaneseq
    %v507 = vshrl.u32 %v506, 7
    %v508 = vsub.s32 %v505, %v507
    %v509 = vrot.slane %v495, %v508
    %v510 = vcombine.high %v486, 0
    %v511 = vcombine.high %v493, 0
    %v512 = vcombine.high %v502, 0
    %v513 = vcombine.high %v509, 0
    %v514 = vcombine.high %v432, %v446
    %v516 = vunpack.c.l.s4 1983009808
    %v517 = vunpack.c.0.s8 %v516
    %v518 = vlaneseq
    %v519 = vshrl.u32 %v518, 7
    %v520 = vsub.s32 %v517, %v519
    %v521 = vrot.slane %v432, %v520
    %v523 = vunpack.c.l.s4 1983009808
    %v524 = vunpack.c.0.s8 %v523
    %v525 = vlaneseq
    %v526 = vshrl.u32 %v525, 7
    %v527 = vsub.s32 %v524, %v526
    %v528 = vrot.slane %v514, %v527
    %v529 = vcombine.high %v440, %v446
    %v531 = vunpack.c.l.s4 1983009808
    %v532 = vunpack.c.0.s8 %v531
    %v533 = vlaneseq
    %v534 = vshrl.u32 %v533, 7
    %v535 = vsub.s32 %v532, %v534
    %v536 = vrot.slane %v440, %v535
    %v538 = vunpack.c.l.s4 1983009808
    %v539 = vunpack.c.0.s8 %v538
    %v540 = vlaneseq
    %v541 = vshrl.u32 %v540, 7
    %v542 = vsub.s32 %v539, %v541
    %v543 = vrot.slane %v529, %v542
    %v544 = vcombine.low %v521, %v536
    %v545 = vcombine.high %v521, %v536
    %v547 = vunpack.c.l.s4 1934713408
    %v548 = vunpack.c.0.s8 %v547
    %v549 = vlaneseq
    %v550 = vshrl.u32 %v549, 7
    %v551 = vsub.s32 %v548, %v550
    %v552 = vrot.slane %v544, %v551
    %v554 = vunpack.c.l.s4 1934713408
    %v555 = vunpack.c.0.s8 %v554
    %v556 = vlaneseq
    %v557 = vshrl.u32 %v556, 7
    %v558 = vsub.s32 %v555, %v557
    %v559 = vrot.slane %v545, %v558
    %v560 = vcombine.low %v528, %v543
    %v561 = vcombine.high %v528, %v543
    %v563 = vunpack.c.l.s4 1934713408
    %v564 = vunpack.c.0.s8 %v563
    %v565 = vlaneseq
    %v566 = vshrl.u32 %v565, 7
    %v567 = vsub.s32 %v564, %v566
    %v568 = vrot.slane %v560, %v567
    %v570 = vunpack.c.l.s4 1934713408
    %v571 = vunpack.c.0.s8 %v570
    %v572 = vlaneseq
    %v573 = vshrl.u32 %v572, 7
    %v574 = vsub.s32 %v571, %v573
    %v575 = vrot.slane %v561, %v574
    %v576 = vcombine.high %v552, 0
    %v577 = vcombine.high %v559, 0
    %v578 = vcombine.high %v568, 0
    %v579 = vcombine.high %v575, 0
    %v580 = vcombine.low %v486, %v493
    %v582 = vunpack.c.l.s4 1983009808
    %v583 = vunpack.c.0.s8 %v582
    %v584 = vlaneseq
    %v585 = vshrl.u32 %v584, 7
    %v586 = vsub.s32 %v583, %v585
    %v587 = vrot.slane %v580, %v586
    %v588 = vcombine.low %v510, %v511
    %v590 = vunpack.c.l.s4 1983009808
    %v591 = vunpack.c.0.s8 %v590
    %v592 = vlaneseq
    %v593 = vshrl.u32 %v592, 7
    %v594 = vsub.s32 %v591, %v593
    %v595 = vrot.slane %v588, %v594
    %v596 = vcombine.low %v587, %v595
    %v598 = vunpack.c.l.s4 1934713408
    %v599 = vunpack.c.0.s8 %v598
    %v600 = vlaneseq
    %v601 = vshrl.u32 %v600, 7
    %v602 = vsub.s32 %v599, %v601
    %v603 = vrot.slane %v596, %v602
    %v604 = vcombine.high %v603, 0
    %v605 = vcombine.low %v552, %v559
    %v607 = vunpack.c.l.s4 1983009808
    %v608 = vunpack.c.0.s8 %v607
    %v609 = vlaneseq
    %v610 = vshrl.u32 %v609, 7
    %v611 = vsub.s32 %v608, %v610
    %v612 = vrot.slane %v605, %v611
    %v613 = vcombine.low %v576, %v577
    %v615 = vunpack.c.l.s4 1983009808
    %v616 = vunpack.c.0.s8 %v615
    %v617 = vlaneseq
    %v618 = vshrl.u32 %v617, 7
    %v619 = vsub.s32 %v616, %v618
    %v620 = vrot.slane %v613, %v619
    %v621 = vcombine.low %v612, %v620
    %v623 = vunpack.c.l.s4 1934713408
    %v624 = vunpack.c.0.s8 %v623
    %v625 = vlaneseq
    %v626 = vshrl.u32 %v625, 7
    %v627 = vsub.s32 %v624, %v626
    %v628 = vrot.slane %v621, %v627
    %v629 = vcombine.high %v628, 0
    %v630 = vcombine.low %v502, %v509
    %v632 = vunpack.c.l.s4 1983009808
    %v633 = vunpack.c.0.s8 %v632
    %v634 = vlaneseq
    %v635 = vshrl.u32 %v634, 7
    %v636 = vsub.s32 %v633, %v635
    %v637 = vrot.slane %v630, %v636
    %v638 = vcombine.low %v512, %v513
    %v640 = vunpack.c.l.s4 1983009808
    %v641 = vunpack.c.0.s8 %v640
    %v642 = vlaneseq
    %v643 = vshrl.u32 %v642, 7
    %v644 = vsub.s32 %v641, %v643
    %v645 = vrot.slane %v638, %v644
    %v646 = vcombine.low %v637, %v645
    %v648 = vunpack.c.l.s4 1934713408
    %v649 = vunpack.c.0.s8 %v648
    %v650 = vlaneseq
    %v651 = vshrl.u32 %v650, 7
    %v652 = vsub.s32 %v649, %v651
    %v653 = vrot.slane %v646, %v652
    %v654 = vcombine.high %v653, 0
    %v655 = vcombine.low %v568, %v575
    %v657 = vunpack.c.l.s4 1983009808
    %v658 = vunpack.c.0.s8 %v657
    %v659 = vlaneseq
    %v660 = vshrl.u32 %v659, 7
    %v661 = vsub.s32 %v658, %v660
    %v662 = vrot.slane %v655, %v661
    %v663 = vcombine.low %v578, %v579
    %v665 = vunpack.c.l.s4 1983009808
    %v666 = vunpack.c.0.s8 %v665
    %v667 = vlaneseq
    %v668 = vshrl.u32 %v667, 7
    %v669 = vsub.s32 %v666, %v668
    %v670 = vrot.slane %v663, %v669
    %v671 = vcombine.low %v662, %v670
    %v673 = vunpack.c.l.s4 1934713408
    %v674 = vunpack.c.0.s8 %v673
    %v675 = vlaneseq
    %v676 = vshrl.u32 %v675, 7
    %v677 = vsub.s32 %v674, %v676
    %v678 = vrot.slane %v671, %v677
    %v679 = vcombine.high %v678, 0
    %v682 = vpack.i.b16 %v628, %v603
    %v683 = vshrl.u32 %v603, 16
    %v684 = vshrl.u32 %v628, 16
    %v685 = vpack.i.b16 %v684, %v683
    %v688 = vpack.i.b16 %v629, %v604
    %v689 = vshrl.u32 %v604, 16
    %v690 = vshrl.u32 %v629, 16
    %v691 = vpack.i.b16 %v690, %v689
    %v694 = vpack.i.b16 %v678, %v653
    %v695 = vshrl.u32 %v653, 16
    %v696 = vshrl.u32 %v678, 16
    %v697 = vpack.i.b16 %v696, %v695
    %v700 = vpack.i.b16 %v679, %v654
    %v701 = vshrl.u32 %v654, 16
    %v702 = vshrl.u32 %v679, 16
    %v703 = vpack.i.b16 %v702, %v701
    %704 = vrot.lane.b32.xlu0 %v418, 96
    %v705 = vpop.permute.xlu0 %704
    %706 = vrot.lane.b32.xlu0 %v421, 96
    %v707 = vpop.permute.xlu0 %706
    %708 = vrot.lane.b32.xlu0 %v423, 96
    %v709 = vpop.permute.xlu0 %708
    %710 = vrot.lane.b32.xlu0 %v425, 96
    %v711 = vpop.permute.xlu0 %710
    %v714 = vpack.i.b16 %v707, %v705
    %v716 = vshrl.u32 %v705, 16
    %v717 = vshrl.u32 %v707, 16
    %v718 = vpack.i.b16 %v717, %v716
    %v722 = vpack.i.b16 %v711, %v709
    %v724 = vshrl.u32 %v709, 16
    %v725 = vshrl.u32 %v711, 16
    %v726 = vpack.i.b16 %v725, %v724
    %v728 = vcombine.high %v714, %v443
    %v730 = vunpack.c.l.s4 1983009808
    %v731 = vunpack.c.0.s8 %v730
    %v732 = vlaneseq
    %v733 = vshrl.u32 %v732, 7
    %v734 = vsub.s32 %v731, %v733
    %v735 = vrot.slane %v714, %v734
    %v737 = vunpack.c.l.s4 1983009808
    %v738 = vunpack.c.0.s8 %v737
    %v739 = vlaneseq
    %v740 = vshrl.u32 %v739, 7
    %v741 = vsub.s32 %v738, %v740
    %v742 = vrot.slane %v728, %v741
    %v743 = vcombine.high %v722, %v443
    %v745 = vunpack.c.l.s4 1983009808
    %v746 = vunpack.c.0.s8 %v745
    %v747 = vlaneseq
    %v748 = vshrl.u32 %v747, 7
    %v749 = vsub.s32 %v746, %v748
    %v750 = vrot.slane %v722, %v749
    %v752 = vunpack.c.l.s4 1983009808
    %v753 = vunpack.c.0.s8 %v752
    %v754 = vlaneseq
    %v755 = vshrl.u32 %v754, 7
    %v756 = vsub.s32 %v753, %v755
    %v757 = vrot.slane %v743, %v756
    %v758 = vcombine.low %v735, %v750
    %v759 = vcombine.high %v735, %v750
    %v761 = vunpack.c.l.s4 1934713408
    %v762 = vunpack.c.0.s8 %v761
    %v763 = vlaneseq
    %v764 = vshrl.u32 %v763, 7
    %v765 = vsub.s32 %v762, %v764
    %v766 = vrot.slane %v758, %v765
    %v768 = vunpack.c.l.s4 1934713408
    %v769 = vunpack.c.0.s8 %v768
    %v770 = vlaneseq
    %v771 = vshrl.u32 %v770, 7
    %v772 = vsub.s32 %v769, %v771
    %v773 = vrot.slane %v759, %v772
    %v774 = vcombine.low %v742, %v757
    %v775 = vcombine.high %v742, %v757
    %v777 = vunpack.c.l.s4 1934713408
    %v778 = vunpack.c.0.s8 %v777
    %v779 = vlaneseq
    %v780 = vshrl.u32 %v779, 7
    %v781 = vsub.s32 %v778, %v780
    %v782 = vrot.slane %v774, %v781
    %v784 = vunpack.c.l.s4 1934713408
    %v785 = vunpack.c.0.s8 %v784
    %v786 = vlaneseq
    %v787 = vshrl.u32 %v786, 7
    %v788 = vsub.s32 %v785, %v787
    %v789 = vrot.slane %v775, %v788
    %v790 = vcombine.high %v766, 0
    %v791 = vcombine.high %v773, 0
    %v792 = vcombine.high %v782, 0
    %v793 = vcombine.high %v789, 0
    %v794 = vcombine.high %v718, %v446
    %v796 = vunpack.c.l.s4 1983009808
    %v797 = vunpack.c.0.s8 %v796
    %v798 = vlaneseq
    %v799 = vshrl.u32 %v798, 7
    %v800 = vsub.s32 %v797, %v799
    %v801 = vrot.slane %v718, %v800
    %v803 = vunpack.c.l.s4 1983009808
    %v804 = vunpack.c.0.s8 %v803
    %v805 = vlaneseq
    %v806 = vshrl.u32 %v805, 7
    %v807 = vsub.s32 %v804, %v806
    %v808 = vrot.slane %v794, %v807
    %v809 = vcombine.high %v726, %v446
    %v811 = vunpack.c.l.s4 1983009808
    %v812 = vunpack.c.0.s8 %v811
    %v813 = vlaneseq
    %v814 = vshrl.u32 %v813, 7
    %v815 = vsub.s32 %v812, %v814
    %v816 = vrot.slane %v726, %v815
    %v818 = vunpack.c.l.s4 1983009808
    %v819 = vunpack.c.0.s8 %v818
    %v820 = vlaneseq
    %v821 = vshrl.u32 %v820, 7
    %v822 = vsub.s32 %v819, %v821
    %v823 = vrot.slane %v809, %v822
    %v824 = vcombine.low %v801, %v816
    %v825 = vcombine.high %v801, %v816
    %v827 = vunpack.c.l.s4 1934713408
    %v828 = vunpack.c.0.s8 %v827
    %v829 = vlaneseq
    %v830 = vshrl.u32 %v829, 7
    %v831 = vsub.s32 %v828, %v830
    %v832 = vrot.slane %v824, %v831
    %v834 = vunpack.c.l.s4 1934713408
    %v835 = vunpack.c.0.s8 %v834
    %v836 = vlaneseq
    %v837 = vshrl.u32 %v836, 7
    %v838 = vsub.s32 %v835, %v837
    %v839 = vrot.slane %v825, %v838
    %v840 = vcombine.low %v808, %v823
    %v841 = vcombine.high %v808, %v823
    %v843 = vunpack.c.l.s4 1934713408
    %v844 = vunpack.c.0.s8 %v843
    %v845 = vlaneseq
    %v846 = vshrl.u32 %v845, 7
    %v847 = vsub.s32 %v844, %v846
    %v848 = vrot.slane %v840, %v847
    %v850 = vunpack.c.l.s4 1934713408
    %v851 = vunpack.c.0.s8 %v850
    %v852 = vlaneseq
    %v853 = vshrl.u32 %v852, 7
    %v854 = vsub.s32 %v851, %v853
    %v855 = vrot.slane %v841, %v854
    %v856 = vcombine.high %v832, 0
    %v857 = vcombine.high %v839, 0
    %v858 = vcombine.high %v848, 0
    %v859 = vcombine.high %v855, 0
    %v860 = vcombine.low %v766, %v773
    %v862 = vunpack.c.l.s4 1983009808
    %v863 = vunpack.c.0.s8 %v862
    %v864 = vlaneseq
    %v865 = vshrl.u32 %v864, 7
    %v866 = vsub.s32 %v863, %v865
    %v867 = vrot.slane %v860, %v866
    %v868 = vcombine.low %v790, %v791
    %v870 = vunpack.c.l.s4 1983009808
    %v871 = vunpack.c.0.s8 %v870
    %v872 = vlaneseq
    %v873 = vshrl.u32 %v872, 7
    %v874 = vsub.s32 %v871, %v873
    %v875 = vrot.slane %v868, %v874
    %v876 = vcombine.low %v867, %v875
    %v878 = vunpack.c.l.s4 1934713408
    %v879 = vunpack.c.0.s8 %v878
    %v880 = vlaneseq
    %v881 = vshrl.u32 %v880, 7
    %v882 = vsub.s32 %v879, %v881
    %v883 = vrot.slane %v876, %v882
    %v884 = vcombine.high %v883, 0
    %v885 = vcombine.low %v832, %v839
    %v887 = vunpack.c.l.s4 1983009808
    %v888 = vunpack.c.0.s8 %v887
    %v889 = vlaneseq
    %v890 = vshrl.u32 %v889, 7
    %v891 = vsub.s32 %v888, %v890
    %v892 = vrot.slane %v885, %v891
    %v893 = vcombine.low %v856, %v857
    %v895 = vunpack.c.l.s4 1983009808
    %v896 = vunpack.c.0.s8 %v895
    %v897 = vlaneseq
    %v898 = vshrl.u32 %v897, 7
    %v899 = vsub.s32 %v896, %v898
    %v900 = vrot.slane %v893, %v899
    %v901 = vcombine.low %v892, %v900
    %v903 = vunpack.c.l.s4 1934713408
    %v904 = vunpack.c.0.s8 %v903
    %v905 = vlaneseq
    %v906 = vshrl.u32 %v905, 7
    %v907 = vsub.s32 %v904, %v906
    %v908 = vrot.slane %v901, %v907
    %v909 = vcombine.high %v908, 0
    %v910 = vcombine.low %v782, %v789
    %v912 = vunpack.c.l.s4 1983009808
    %v913 = vunpack.c.0.s8 %v912
    %v914 = vlaneseq
    %v915 = vshrl.u32 %v914, 7
    %v916 = vsub.s32 %v913, %v915
    %v917 = vrot.slane %v910, %v916
    %v918 = vcombine.low %v792, %v793
    %v920 = vunpack.c.l.s4 1983009808
    %v921 = vunpack.c.0.s8 %v920
    %v922 = vlaneseq
    %v923 = vshrl.u32 %v922, 7
    %v924 = vsub.s32 %v921, %v923
    %v925 = vrot.slane %v918, %v924
    %v926 = vcombine.low %v917, %v925
    %v928 = vunpack.c.l.s4 1934713408
    %v929 = vunpack.c.0.s8 %v928
    %v930 = vlaneseq
    %v931 = vshrl.u32 %v930, 7
    %v932 = vsub.s32 %v929, %v931
    %v933 = vrot.slane %v926, %v932
    %v934 = vcombine.high %v933, 0
    %v935 = vcombine.low %v848, %v855
    %v937 = vunpack.c.l.s4 1983009808
    %v938 = vunpack.c.0.s8 %v937
    %v939 = vlaneseq
    %v940 = vshrl.u32 %v939, 7
    %v941 = vsub.s32 %v938, %v940
    %v942 = vrot.slane %v935, %v941
    %v943 = vcombine.low %v858, %v859
    %v945 = vunpack.c.l.s4 1983009808
    %v946 = vunpack.c.0.s8 %v945
    %v947 = vlaneseq
    %v948 = vshrl.u32 %v947, 7
    %v949 = vsub.s32 %v946, %v948
    %v950 = vrot.slane %v943, %v949
    %v951 = vcombine.low %v942, %v950
    %v953 = vunpack.c.l.s4 1934713408
    %v954 = vunpack.c.0.s8 %v953
    %v955 = vlaneseq
    %v956 = vshrl.u32 %v955, 7
    %v957 = vsub.s32 %v954, %v956
    %v958 = vrot.slane %v951, %v957
    %v959 = vcombine.high %v958, 0
    %v962 = vpack.i.b16 %v908, %v883
    %v963 = vshrl.u32 %v883, 16
    %v964 = vshrl.u32 %v908, 16
    %v965 = vpack.i.b16 %v964, %v963
    %v968 = vpack.i.b16 %v909, %v884
    %v969 = vshrl.u32 %v884, 16
    %v970 = vshrl.u32 %v909, 16
    %v971 = vpack.i.b16 %v970, %v969
    %v974 = vpack.i.b16 %v958, %v933
    %v975 = vshrl.u32 %v933, 16
    %v976 = vshrl.u32 %v958, 16
    %v977 = vpack.i.b16 %v976, %v975
    %v980 = vpack.i.b16 %v959, %v934
    %v981 = vshrl.u32 %v934, 16
    %v982 = vshrl.u32 %v959, 16
    %v983 = vpack.i.b16 %v982, %v981
    %984 = vrot.lane.b32.xlu0 %v418, 64
    %v985 = vpop.permute.xlu0 %984
    %986 = vrot.lane.b32.xlu0 %v421, 64
    %v987 = vpop.permute.xlu0 %986
    %988 = vrot.lane.b32.xlu0 %v423, 64
    %v989 = vpop.permute.xlu0 %988
    %990 = vrot.lane.b32.xlu0 %v425, 64
    %v991 = vpop.permute.xlu0 %990
    %v994 = vpack.i.b16 %v987, %v985
    %v996 = vshrl.u32 %v985, 16
    %v997 = vshrl.u32 %v987, 16
    %v998 = vpack.i.b16 %v997, %v996
    %v1002 = vpack.i.b16 %v991, %v989
    %v1004 = vshrl.u32 %v989, 16
    %v1005 = vshrl.u32 %v991, 16
    %v1006 = vpack.i.b16 %v1005, %v1004
    %v1008 = vcombine.high %v994, %v443
    %v1010 = vunpack.c.l.s4 1983009808
    %v1011 = vunpack.c.0.s8 %v1010
    %v1012 = vlaneseq
    %v1013 = vshrl.u32 %v1012, 7
    %v1014 = vsub.s32 %v1011, %v1013
    %v1015 = vrot.slane %v994, %v1014
    %v1017 = vunpack.c.l.s4 1983009808
    %v1018 = vunpack.c.0.s8 %v1017
    %v1019 = vlaneseq
    %v1020 = vshrl.u32 %v1019, 7
    %v1021 = vsub.s32 %v1018, %v1020
    %v1022 = vrot.slane %v1008, %v1021
    %v1023 = vcombine.high %v1002, %v443
    %v1025 = vunpack.c.l.s4 1983009808
    %v1026 = vunpack.c.0.s8 %v1025
    %v1027 = vlaneseq
    %v1028 = vshrl.u32 %v1027, 7
    %v1029 = vsub.s32 %v1026, %v1028
    %v1030 = vrot.slane %v1002, %v1029
    %v1032 = vunpack.c.l.s4 1983009808
    %v1033 = vunpack.c.0.s8 %v1032
    %v1034 = vlaneseq
    %v1035 = vshrl.u32 %v1034, 7
    %v1036 = vsub.s32 %v1033, %v1035
    %v1037 = vrot.slane %v1023, %v1036
    %v1038 = vcombine.low %v1015, %v1030
    %v1039 = vcombine.high %v1015, %v1030
    %v1041 = vunpack.c.l.s4 1934713408
    %v1042 = vunpack.c.0.s8 %v1041
    %v1043 = vlaneseq
    %v1044 = vshrl.u32 %v1043, 7
    %v1045 = vsub.s32 %v1042, %v1044
    %v1046 = vrot.slane %v1038, %v1045
    %v1048 = vunpack.c.l.s4 1934713408
    %v1049 = vunpack.c.0.s8 %v1048
    %v1050 = vlaneseq
    %v1051 = vshrl.u32 %v1050, 7
    %v1052 = vsub.s32 %v1049, %v1051
    %v1053 = vrot.slane %v1039, %v1052
    %v1054 = vcombine.low %v1022, %v1037
    %v1055 = vcombine.high %v1022, %v1037
    %v1057 = vunpack.c.l.s4 1934713408
    %v1058 = vunpack.c.0.s8 %v1057
    %v1059 = vlaneseq
    %v1060 = vshrl.u32 %v1059, 7
    %v1061 = vsub.s32 %v1058, %v1060
    %v1062 = vrot.slane %v1054, %v1061
    %v1064 = vunpack.c.l.s4 1934713408
    %v1065 = vunpack.c.0.s8 %v1064
    %v1066 = vlaneseq
    %v1067 = vshrl.u32 %v1066, 7
    %v1068 = vsub.s32 %v1065, %v1067
    %v1069 = vrot.slane %v1055, %v1068
    %v1070 = vcombine.high %v1046, 0
    %v1071 = vcombine.high %v1053, 0
    %v1072 = vcombine.high %v1062, 0
    %v1073 = vcombine.high %v1069, 0
    %v1074 = vcombine.high %v998, %v446
    %v1076 = vunpack.c.l.s4 1983009808
    %v1077 = vunpack.c.0.s8 %v1076
    %v1078 = vlaneseq
    %v1079 = vshrl.u32 %v1078, 7
    %v1080 = vsub.s32 %v1077, %v1079
    %v1081 = vrot.slane %v998, %v1080
    %v1083 = vunpack.c.l.s4 1983009808
    %v1084 = vunpack.c.0.s8 %v1083
    %v1085 = vlaneseq
    %v1086 = vshrl.u32 %v1085, 7
    %v1087 = vsub.s32 %v1084, %v1086
    %v1088 = vrot.slane %v1074, %v1087
    %v1089 = vcombine.high %v1006, %v446
    %v1091 = vunpack.c.l.s4 1983009808
    %v1092 = vunpack.c.0.s8 %v1091
    %v1093 = vlaneseq
    %v1094 = vshrl.u32 %v1093, 7
    %v1095 = vsub.s32 %v1092, %v1094
    %v1096 = vrot.slane %v1006, %v1095
    %v1098 = vunpack.c.l.s4 1983009808
    %v1099 = vunpack.c.0.s8 %v1098
    %v1100 = vlaneseq
    %v1101 = vshrl.u32 %v1100, 7
    %v1102 = vsub.s32 %v1099, %v1101
    %v1103 = vrot.slane %v1089, %v1102
    %v1104 = vcombine.low %v1081, %v1096
    %v1105 = vcombine.high %v1081, %v1096
    %v1107 = vunpack.c.l.s4 1934713408
    %v1108 = vunpack.c.0.s8 %v1107
    %v1109 = vlaneseq
    %v1110 = vshrl.u32 %v1109, 7
    %v1111 = vsub.s32 %v1108, %v1110
    %v1112 = vrot.slane %v1104, %v1111
    %v1114 = vunpack.c.l.s4 1934713408
    %v1115 = vunpack.c.0.s8 %v1114
    %v1116 = vlaneseq
    %v1117 = vshrl.u32 %v1116, 7
    %v1118 = vsub.s32 %v1115, %v1117
    %v1119 = vrot.slane %v1105, %v1118
    %v1120 = vcombine.low %v1088, %v1103
    %v1121 = vcombine.high %v1088, %v1103
    %v1123 = vunpack.c.l.s4 1934713408
    %v1124 = vunpack.c.0.s8 %v1123
    %v1125 = vlaneseq
    %v1126 = vshrl.u32 %v1125, 7
    %v1127 = vsub.s32 %v1124, %v1126
    %v1128 = vrot.slane %v1120, %v1127
    %v1130 = vunpack.c.l.s4 1934713408
    %v1131 = vunpack.c.0.s8 %v1130
    %v1132 = vlaneseq
    %v1133 = vshrl.u32 %v1132, 7
    %v1134 = vsub.s32 %v1131, %v1133
    %v1135 = vrot.slane %v1121, %v1134
    %v1136 = vcombine.high %v1112, 0
    %v1137 = vcombine.high %v1119, 0
    %v1138 = vcombine.high %v1128, 0
    %v1139 = vcombine.high %v1135, 0
    %v1140 = vcombine.low %v1046, %v1053
    %v1142 = vunpack.c.l.s4 1983009808
    %v1143 = vunpack.c.0.s8 %v1142
    %v1144 = vlaneseq
    %v1145 = vshrl.u32 %v1144, 7
    %v1146 = vsub.s32 %v1143, %v1145
    %v1147 = vrot.slane %v1140, %v1146
    %v1148 = vcombine.low %v1070, %v1071
    %v1150 = vunpack.c.l.s4 1983009808
    %v1151 = vunpack.c.0.s8 %v1150
    %v1152 = vlaneseq
    %v1153 = vshrl.u32 %v1152, 7
    %v1154 = vsub.s32 %v1151, %v1153
    %v1155 = vrot.slane %v1148, %v1154
    %v1156 = vcombine.low %v1147, %v1155
    %v1158 = vunpack.c.l.s4 1934713408
    %v1159 = vunpack.c.0.s8 %v1158
    %v1160 = vlaneseq
    %v1161 = vshrl.u32 %v1160, 7
    %v1162 = vsub.s32 %v1159, %v1161
    %v1163 = vrot.slane %v1156, %v1162
    %v1164 = vcombine.high %v1163, 0
    %v1165 = vcombine.low %v1112, %v1119
    %v1167 = vunpack.c.l.s4 1983009808
    %v1168 = vunpack.c.0.s8 %v1167
    %v1169 = vlaneseq
    %v1170 = vshrl.u32 %v1169, 7
    %v1171 = vsub.s32 %v1168, %v1170
    %v1172 = vrot.slane %v1165, %v1171
    %v1173 = vcombine.low %v1136, %v1137
    %v1175 = vunpack.c.l.s4 1983009808
    %v1176 = vunpack.c.0.s8 %v1175
    %v1177 = vlaneseq
    %v1178 = vshrl.u32 %v1177, 7
    %v1179 = vsub.s32 %v1176, %v1178
    %v1180 = vrot.slane %v1173, %v1179
    %v1181 = vcombine.low %v1172, %v1180
    %v1183 = vunpack.c.l.s4 1934713408
    %v1184 = vunpack.c.0.s8 %v1183
    %v1185 = vlaneseq
    %v1186 = vshrl.u32 %v1185, 7
    %v1187 = vsub.s32 %v1184, %v1186
    %v1188 = vrot.slane %v1181, %v1187
    %v1189 = vcombine.high %v1188, 0
    %v1190 = vcombine.low %v1062, %v1069
    %v1192 = vunpack.c.l.s4 1983009808
    %v1193 = vunpack.c.0.s8 %v1192
    %v1194 = vlaneseq
    %v1195 = vshrl.u32 %v1194, 7
    %v1196 = vsub.s32 %v1193, %v1195
    %v1197 = vrot.slane %v1190, %v1196
    %v1198 = vcombine.low %v1072, %v1073
    %v1200 = vunpack.c.l.s4 1983009808
    %v1201 = vunpack.c.0.s8 %v1200
    %v1202 = vlaneseq
    %v1203 = vshrl.u32 %v1202, 7
    %v1204 = vsub.s32 %v1201, %v1203
    %v1205 = vrot.slane %v1198, %v1204
    %v1206 = vcombine.low %v1197, %v1205
    %v1208 = vunpack.c.l.s4 1934713408
    %v1209 = vunpack.c.0.s8 %v1208
    %v1210 = vlaneseq
    %v1211 = vshrl.u32 %v1210, 7
    %v1212 = vsub.s32 %v1209, %v1211
    %v1213 = vrot.slane %v1206, %v1212
    %v1214 = vcombine.high %v1213, 0
    %v1215 = vcombine.low %v1128, %v1135
    %v1217 = vunpack.c.l.s4 1983009808
    %v1218 = vunpack.c.0.s8 %v1217
    %v1219 = vlaneseq
    %v1220 = vshrl.u32 %v1219, 7
    %v1221 = vsub.s32 %v1218, %v1220
    %v1222 = vrot.slane %v1215, %v1221
    %v1223 = vcombine.low %v1138, %v1139
    %v1225 = vunpack.c.l.s4 1983009808
    %v1226 = vunpack.c.0.s8 %v1225
    %v1227 = vlaneseq
    %v1228 = vshrl.u32 %v1227, 7
    %v1229 = vsub.s32 %v1226, %v1228
    %v1230 = vrot.slane %v1223, %v1229
    %v1231 = vcombine.low %v1222, %v1230
    %v1233 = vunpack.c.l.s4 1934713408
    %v1234 = vunpack.c.0.s8 %v1233
    %v1235 = vlaneseq
    %v1236 = vshrl.u32 %v1235, 7
    %v1237 = vsub.s32 %v1234, %v1236
    %v1238 = vrot.slane %v1231, %v1237
    %v1239 = vcombine.high %v1238, 0
    %v1242 = vpack.i.b16 %v1188, %v1163
    %v1243 = vshrl.u32 %v1163, 16
    %v1244 = vshrl.u32 %v1188, 16
    %v1245 = vpack.i.b16 %v1244, %v1243
    %v1248 = vpack.i.b16 %v1189, %v1164
    %v1249 = vshrl.u32 %v1164, 16
    %v1250 = vshrl.u32 %v1189, 16
    %v1251 = vpack.i.b16 %v1250, %v1249
    %v1254 = vpack.i.b16 %v1238, %v1213
    %v1255 = vshrl.u32 %v1213, 16
    %v1256 = vshrl.u32 %v1238, 16
    %v1257 = vpack.i.b16 %v1256, %v1255
    %v1260 = vpack.i.b16 %v1239, %v1214
    %v1261 = vshrl.u32 %v1214, 16
    %v1262 = vshrl.u32 %v1239, 16
    %v1263 = vpack.i.b16 %v1262, %v1261
    %v1264 = vlaneseq
    %v1265 = vshrl.u32 %v1264, 7
    %v1266 = vlaneseq
    %v1267 = vand.u32 %v1266, 127
    %vm1268 = vcmp.le.s32.totalorder %v1267, %v1265
    %v1269 = vsel %vm1268, 0.0, -1e+09
    %vm1270 = vcmask 64512
    %v1272 = vsel %vm1270, %v682, 0
    %v1275 = vsel %vm1270, %v962, 0
    %1277 = vmatprep.subr.bf16.mxu0 0
    %1278 = vmatpush1.bf16.xpose.msra.mxu0 %v1275
    %1279 = vmatprep.subr.bf16.mxu0 0
    %1280 = vmatpush1.bf16.xpose.msra.mxu0 0
    %1281 = vmatprep.subr.bf16.mxu0 0
    %1282 = vmatpush1.bf16.xpose.msra.mxu0 0
    %1283 = vmatprep.subr.bf16.mxu0 0
    %1284 = vmatpush1.bf16.xpose.msra.mxu0 0
    %1285 = vmatprep.subr.bf16.mxu0 0
    %1286 = vmatpush1.bf16.xpose.msra.mxu0 0
    %1287 = vmatprep.subr.bf16.mxu0 0
    %1288 = vmatpush1.bf16.xpose.msra.mxu0 0
    %1289 = vmatprep.subr.bf16.mxu0 0
    %1290 = vmatpush1.bf16.xpose.msra.mxu0 0
    %1291 = vmatprep.subr.bf16.mxu0 0
    %1292 = vmatpush1.bf16.xpose.msra.mxu0 0
    %1293 = vmatprep.subr.bf16.mxu0 0
    %1294 = vmatpush1.bf16.xpose.msra.mxu0 0
    %1295 = vmatprep.subr.bf16.mxu0 0
    %1296 = vmatpush1.bf16.xpose.msra.mxu0 0
    %1297 = vmatprep.subr.bf16.mxu0 0
    %1298 = vmatpush1.bf16.xpose.msra.mxu0 0
    %1299 = vmatprep.subr.bf16.mxu0 0
    %1300 = vmatpush1.bf16.xpose.msra.mxu0 0
    %1301 = vmatprep.subr.bf16.mxu0 0
    %1302 = vmatpush1.bf16.xpose.msra.mxu0 0
    %1303 = vmatprep.subr.bf16.mxu0 0
    %1304 = vmatpush1.bf16.xpose.msra.mxu0 0
    %1305 = vmatprep.subr.bf16.mxu0 0
    %1306 = vmatpush1.bf16.xpose.msra.mxu0 0
    %1307 = vmatprep.subr.bf16.mxu0 0
    %1308 = vmatpush1.bf16.xpose.msra.mxu0 0
    %1309 = vmatprep.mubr.bf16.mxu0 0
    %1310 = vmatmul.mubr.bf16.gmra.mrb[0].mxu0 %v1272
    %v1311 = vpop.f32.mrb[0].mxu0
    %v1312 = vadd.f32 %v1269, %v1311
    %v1313 = vpop.f32.mrb[0].mxu0
    %v1314 = vpop.f32.mrb[0].mxu0
    %v1315 = vpop.f32.mrb[0].mxu0
    %1316 = vdwg.mxu0
    %v1318 = vsel %vm1270, %v685, 0
    %v1321 = vsel %vm1270, %v965, 0
    %1323 = vmatprep.subr.bf16.mxu0 0
    %1324 = vmatpush1.bf16.xpose.msra.mxu0 %v1321
    %1325 = vmatprep.subr.bf16.mxu0 0
    %1326 = vmatpush1.bf16.xpose.msra.mxu0 0
    %1327 = vmatprep.subr.bf16.mxu0 0
    %1328 = vmatpush1.bf16.xpose.msra.mxu0 0
    %1329 = vmatprep.subr.bf16.mxu0 0
    %1330 = vmatpush1.bf16.xpose.msra.mxu0 0
    %1331 = vmatprep.subr.bf16.mxu0 0
    %1332 = vmatpush1.bf16.xpose.msra.mxu0 0
    %1333 = vmatprep.subr.bf16.mxu0 0
    %1334 = vmatpush1.bf16.xpose.msra.mxu0 0
    %1335 = vmatprep.subr.bf16.mxu0 0
    %1336 = vmatpush1.bf16.xpose.msra.mxu0 0
    %1337 = vmatprep.subr.bf16.mxu0 0
    %1338 = vmatpush1.bf16.xpose.msra.mxu0 0
    %1339 = vmatprep.subr.bf16.mxu0 0
    %1340 = vmatpush1.bf16.xpose.msra.mxu0 0
    %1341 = vmatprep.subr.bf16.mxu0 0
    %1342 = vmatpush1.bf16.xpose.msra.mxu0 0
    %1343 = vmatprep.subr.bf16.mxu0 0
    %1344 = vmatpush1.bf16.xpose.msra.mxu0 0
    %1345 = vmatprep.subr.bf16.mxu0 0
    %1346 = vmatpush1.bf16.xpose.msra.mxu0 0
    %1347 = vmatprep.subr.bf16.mxu0 0
    %1348 = vmatpush1.bf16.xpose.msra.mxu0 0
    %1349 = vmatprep.subr.bf16.mxu0 0
    %1350 = vmatpush1.bf16.xpose.msra.mxu0 0
    %1351 = vmatprep.subr.bf16.mxu0 0
    %1352 = vmatpush1.bf16.xpose.msra.mxu0 0
    %1353 = vmatprep.subr.bf16.mxu0 0
    %1354 = vmatpush1.bf16.xpose.msra.mxu0 0
    %1355 = vmatprep.mubr.bf16.mxu0 0
    %1356 = vmatmul.mubr.bf16.gmra.mrb[0].mxu0 %v1318
    %v1357 = vpop.f32.mrb[0].mxu0
    %v1358 = vadd.f32 %v1269, %v1357
    %v1359 = vpop.f32.mrb[0].mxu0
    %v1360 = vpop.f32.mrb[0].mxu0
    %v1361 = vpop.f32.mrb[0].mxu0
    %1362 = vdwg.mxu0
    %v1364 = vsel %vm1270, %v688, 0
    %v1367 = vsel %vm1270, %v968, 0
    %1369 = vmatprep.subr.bf16.mxu0 0
    %1370 = vmatpush1.bf16.xpose.msra.mxu0 %v1367
    %1371 = vmatprep.subr.bf16.mxu0 0
    %1372 = vmatpush1.bf16.xpose.msra.mxu0 0
    %1373 = vmatprep.subr.bf16.mxu0 0
    %1374 = vmatpush1.bf16.xpose.msra.mxu0 0
    %1375 = vmatprep.subr.bf16.mxu0 0
    %1376 = vmatpush1.bf16.xpose.msra.mxu0 0
    %1377 = vmatprep.subr.bf16.mxu0 0
    %1378 = vmatpush1.bf16.xpose.msra.mxu0 0
    %1379 = vmatprep.subr.bf16.mxu0 0
    %1380 = vmatpush1.bf16.xpose.msra.mxu0 0
    %1381 = vmatprep.subr.bf16.mxu0 0
    %1382 = vmatpush1.bf16.xpose.msra.mxu0 0
    %1383 = vmatprep.subr.bf16.mxu0 0
    %1384 = vmatpush1.bf16.xpose.msra.mxu0 0
    %1385 = vmatprep.subr.bf16.mxu0 0
    %1386 = vmatpush1.bf16.xpose.msra.mxu0 0
    %1387 = vmatprep.subr.bf16.mxu0 0
    %1388 = vmatpush1.bf16.xpose.msra.mxu0 0
    %1389 = vmatprep.subr.bf16.mxu0 0
    %1390 = vmatpush1.bf16.xpose.msra.mxu0 0
    %1391 = vmatprep.subr.bf16.mxu0 0
    %1392 = vmatpush1.bf16.xpose.msra.mxu0 0
    %1393 = vmatprep.subr.bf16.mxu0 0
    %1394 = vmatpush1.bf16.xpose.msra.mxu0 0
    %1395 = vmatprep.subr.bf16.mxu0 0
    %1396 = vmatpush1.bf16.xpose.msra.mxu0 0
    %1397 = vmatprep.subr.bf16.mxu0 0
    %1398 = vmatpush1.bf16.xpose.msra.mxu0 0
    %1399 = vmatprep.subr.bf16.mxu0 0
    %1400 = vmatpush1.bf16.xpose.msra.mxu0 0
    %1401 = vmatprep.mubr.bf16.mxu0 0
    %1402 = vmatmul.mubr.bf16.gmra.mrb[0].mxu0 %v1364
    %v1403 = vpop.f32.mrb[0].mxu0
    %v1404 = vadd.f32 %v1269, %v1403
    %v1405 = vpop.f32.mrb[0].mxu0
    %v1406 = vpop.f32.mrb[0].mxu0
    %v1407 = vpop.f32.mrb[0].mxu0
    %1408 = vdwg.mxu0
    %v1410 = vsel %vm1270, %v691, 0
    %v1413 = vsel %vm1270, %v971, 0
    %1415 = vmatprep.subr.bf16.mxu0 0
    %1416 = vmatpush1.bf16.xpose.msra.mxu0 %v1413
    %1417 = vmatprep.subr.bf16.mxu0 0
    %1418 = vmatpush1.bf16.xpose.msra.mxu0 0
    %1419 = vmatprep.subr.bf16.mxu0 0
    %1420 = vmatpush1.bf16.xpose.msra.mxu0 0
    %1421 = vmatprep.subr.bf16.mxu0 0
    %1422 = vmatpush1.bf16.xpose.msra.mxu0 0
    %1423 = vmatprep.subr.bf16.mxu0 0
    %1424 = vmatpush1.bf16.xpose.msra.mxu0 0
    %1425 = vmatprep.subr.bf16.mxu0 0
    %1426 = vmatpush1.bf16.xpose.msra.mxu0 0
    %1427 = vmatprep.subr.bf16.mxu0 0
    %1428 = vmatpush1.bf16.xpose.msra.mxu0 0
    %1429 = vmatprep.subr.bf16.mxu0 0
    %1430 = vmatpush1.bf16.xpose.msra.mxu0 0
    %1431 = vmatprep.subr.bf16.mxu0 0
    %1432 = vmatpush1.bf16.xpose.msra.mxu0 0
    %1433 = vmatprep.subr.bf16.mxu0 0
    %1434 = vmatpush1.bf16.xpose.msra.mxu0 0
    %1435 = vmatprep.subr.bf16.mxu0 0
    %1436 = vmatpush1.bf16.xpose.msra.mxu0 0
    %1437 = vmatprep.subr.bf16.mxu0 0
    %1438 = vmatpush1.bf16.xpose.msra.mxu0 0
    %1439 = vmatprep.subr.bf16.mxu0 0
    %1440 = vmatpush1.bf16.xpose.msra.mxu0 0
    %1441 = vmatprep.subr.bf16.mxu0 0
    %1442 = vmatpush1.bf16.xpose.msra.mxu0 0
    %1443 = vmatprep.subr.bf16.mxu0 0
    %1444 = vmatpush1.bf16.xpose.msra.mxu0 0
    %1445 = vmatprep.subr.bf16.mxu0 0
    %1446 = vmatpush1.bf16.xpose.msra.mxu0 0
    %1447 = vmatprep.mubr.bf16.mxu0 0
    %1448 = vmatmul.mubr.bf16.gmra.mrb[0].mxu0 %v1410
    %v1449 = vpop.f32.mrb[0].mxu0
    %v1450 = vadd.f32 %v1269, %v1449
    %v1451 = vpop.f32.mrb[0].mxu0
    %v1452 = vpop.f32.mrb[0].mxu0
    %v1453 = vpop.f32.mrb[0].mxu0
    %1454 = vdwg.mxu0
    %v1456 = vsel %vm1270, %v694, 0
    %v1459 = vsel %vm1270, %v974, 0
    %1461 = vmatprep.subr.bf16.mxu0 0
    %1462 = vmatpush1.bf16.xpose.msra.mxu0 %v1459
    %1463 = vmatprep.subr.bf16.mxu0 0
    %1464 = vmatpush1.bf16.xpose.msra.mxu0 0
    %1465 = vmatprep.subr.bf16.mxu0 0
    %1466 = vmatpush1.bf16.xpose.msra.mxu0 0
    %1467 = vmatprep.subr.bf16.mxu0 0
    %1468 = vmatpush1.bf16.xpose.msra.mxu0 0
    %1469 = vmatprep.subr.bf16.mxu0 0
    %1470 = vmatpush1.bf16.xpose.msra.mxu0 0
    %1471 = vmatprep.subr.bf16.mxu0 0
    %1472 = vmatpush1.bf16.xpose.msra.mxu0 0
    %1473 = vmatprep.subr.bf16.mxu0 0
    %1474 = vmatpush1.bf16.xpose.msra.mxu0 0
    %1475 = vmatprep.subr.bf16.mxu0 0
    %1476 = vmatpush1.bf16.xpose.msra.mxu0 0
    %1477 = vmatprep.subr.bf16.mxu0 0
    %1478 = vmatpush1.bf16.xpose.msra.mxu0 0
    %1479 = vmatprep.subr.bf16.mxu0 0
    %1480 = vmatpush1.bf16.xpose.msra.mxu0 0
    %1481 = vmatprep.subr.bf16.mxu0 0
    %1482 = vmatpush1.bf16.xpose.msra.mxu0 0
    %1483 = vmatprep.subr.bf16.mxu0 0
    %1484 = vmatpush1.bf16.xpose.msra.mxu0 0
    %1485 = vmatprep.subr.bf16.mxu0 0
    %1486 = vmatpush1.bf16.xpose.msra.mxu0 0
    %1487 = vmatprep.subr.bf16.mxu0 0
    %1488 = vmatpush1.bf16.xpose.msra.mxu0 0
    %1489 = vmatprep.subr.bf16.mxu0 0
    %1490 = vmatpush1.bf16.xpose.msra.mxu0 0
    %1491 = vmatprep.subr.bf16.mxu0 0
    %1492 = vmatpush1.bf16.xpose.msra.mxu0 0
    %1493 = vmatprep.mubr.bf16.mxu0 0
    %1494 = vmatmul.mubr.bf16.gmra.mrb[0].mxu0 %v1456
    %v1495 = vpop.f32.mrb[0].mxu0
    %v1496 = vadd.f32 %v1269, %v1495
    %v1497 = vpop.f32.mrb[0].mxu0
    %v1498 = vpop.f32.mrb[0].mxu0
    %v1499 = vpop.f32.mrb[0].mxu0
    %1500 = vdwg.mxu0
    %v1502 = vsel %vm1270, %v697, 0
    %v1505 = vsel %vm1270, %v977, 0
    %1507 = vmatprep.subr.bf16.mxu0 0
    %1508 = vmatpush1.bf16.xpose.msra.mxu0 %v1505
    %1509 = vmatprep.subr.bf16.mxu0 0
    %1510 = vmatpush1.bf16.xpose.msra.mxu0 0
    %1511 = vmatprep.subr.bf16.mxu0 0
    %1512 = vmatpush1.bf16.xpose.msra.mxu0 0
    %1513 = vmatprep.subr.bf16.mxu0 0
    %1514 = vmatpush1.bf16.xpose.msra.mxu0 0
    %1515 = vmatprep.subr.bf16.mxu0 0
    %1516 = vmatpush1.bf16.xpose.msra.mxu0 0
    %1517 = vmatprep.subr.bf16.mxu0 0
    %1518 = vmatpush1.bf16.xpose.msra.mxu0 0
    %1519 = vmatprep.subr.bf16.mxu0 0
    %1520 = vmatpush1.bf16.xpose.msra.mxu0 0
    %1521 = vmatprep.subr.bf16.mxu0 0
    %1522 = vmatpush1.bf16.xpose.msra.mxu0 0
    %1523 = vmatprep.subr.bf16.mxu0 0
    %1524 = vmatpush1.bf16.xpose.msra.mxu0 0
    %1525 = vmatprep.subr.bf16.mxu0 0
    %1526 = vmatpush1.bf16.xpose.msra.mxu0 0
    %1527 = vmatprep.subr.bf16.mxu0 0
    %1528 = vmatpush1.bf16.xpose.msra.mxu0 0
    %1529 = vmatprep.subr.bf16.mxu0 0
    %1530 = vmatpush1.bf16.xpose.msra.mxu0 0
    %1531 = vmatprep.subr.bf16.mxu0 0
    %1532 = vmatpush1.bf16.xpose.msra.mxu0 0
    %1533 = vmatprep.subr.bf16.mxu0 0
    %1534 = vmatpush1.bf16.xpose.msra.mxu0 0
    %1535 = vmatprep.subr.bf16.mxu0 0
    %1536 = vmatpush1.bf16.xpose.msra.mxu0 0
    %1537 = vmatprep.subr.bf16.mxu0 0
    %1538 = vmatpush1.bf16.xpose.msra.mxu0 0
    %1539 = vmatprep.mubr.bf16.mxu0 0
    %1540 = vmatmul.mubr.bf16.gmra.mrb[0].mxu0 %v1502
    %v1541 = vpop.f32.mrb[0].mxu0
    %v1542 = vadd.f32 %v1269, %v1541
    %v1543 = vpop.f32.mrb[0].mxu0
    %v1544 = vpop.f32.mrb[0].mxu0
    %v1545 = vpop.f32.mrb[0].mxu0
    %1546 = vdwg.mxu0
    %v1548 = vsel %vm1270, %v700, 0
    %v1551 = vsel %vm1270, %v980, 0
    %1553 = vmatprep.subr.bf16.mxu0 0
    %1554 = vmatpush1.bf16.xpose.msra.mxu0 %v1551
    %1555 = vmatprep.subr.bf16.mxu0 0
    %1556 = vmatpush1.bf16.xpose.msra.mxu0 0
    %1557 = vmatprep.subr.bf16.mxu0 0
    %1558 = vmatpush1.bf16.xpose.msra.mxu0 0
    %1559 = vmatprep.subr.bf16.mxu0 0
    %1560 = vmatpush1.bf16.xpose.msra.mxu0 0
    %1561 = vmatprep.subr.bf16.mxu0 0
    %1562 = vmatpush1.bf16.xpose.msra.mxu0 0
    %1563 = vmatprep.subr.bf16.mxu0 0
    %1564 = vmatpush1.bf16.xpose.msra.mxu0 0
    %1565 = vmatprep.subr.bf16.mxu0 0
    %1566 = vmatpush1.bf16.xpose.msra.mxu0 0
    %1567 = vmatprep.subr.bf16.mxu0 0
    %1568 = vmatpush1.bf16.xpose.msra.mxu0 0
    %1569 = vmatprep.subr.bf16.mxu0 0
    %1570 = vmatpush1.bf16.xpose.msra.mxu0 0
    %1571 = vmatprep.subr.bf16.mxu0 0
    %1572 = vmatpush1.bf16.xpose.msra.mxu0 0
    %1573 = vmatprep.subr.bf16.mxu0 0
    %1574 = vmatpush1.bf16.xpose.msra.mxu0 0
    %1575 = vmatprep.subr.bf16.mxu0 0
    %1576 = vmatpush1.bf16.xpose.msra.mxu0 0
    %1577 = vmatprep.subr.bf16.mxu0 0
    %1578 = vmatpush1.bf16.xpose.msra.mxu0 0
    %1579 = vmatprep.subr.bf16.mxu0 0
    %1580 = vmatpush1.bf16.xpose.msra.mxu0 0
    %1581 = vmatprep.subr.bf16.mxu0 0
    %1582 = vmatpush1.bf16.xpose.msra.mxu0 0
    %1583 = vmatprep.subr.bf16.mxu0 0
    %1584 = vmatpush1.bf16.xpose.msra.mxu0 0
    %1585 = vmatprep.mubr.bf16.mxu0 0
    %1586 = vmatmul.mubr.bf16.gmra.mrb[0].mxu0 %v1548
    %v1587 = vpop.f32.mrb[0].mxu0
    %v1588 = vadd.f32 %v1269, %v1587
    %v1589 = vpop.f32.mrb[0].mxu0
    %v1590 = vpop.f32.mrb[0].mxu0
    %v1591 = vpop.f32.mrb[0].mxu0
    %1592 = vdwg.mxu0
    %v1594 = vsel %vm1270, %v703, 0
    %v1597 = vsel %vm1270, %v983, 0
    %1599 = vmatprep.subr.bf16.mxu0 0
    %1600 = vmatpush1.bf16.xpose.msra.mxu0 %v1597
    %1601 = vmatprep.subr.bf16.mxu0 0
    %1602 = vmatpush1.bf16.xpose.msra.mxu0 0
    %1603 = vmatprep.subr.bf16.mxu0 0
    %1604 = vmatpush1.bf16.xpose.msra.mxu0 0
    %1605 = vmatprep.subr.bf16.mxu0 0
    %1606 = vmatpush1.bf16.xpose.msra.mxu0 0
    %1607 = vmatprep.subr.bf16.mxu0 0
    %1608 = vmatpush1.bf16.xpose.msra.mxu0 0
    %1609 = vmatprep.subr.bf16.mxu0 0
    %1610 = vmatpush1.bf16.xpose.msra.mxu0 0
    %1611 = vmatprep.subr.bf16.mxu0 0
    %1612 = vmatpush1.bf16.xpose.msra.mxu0 0
    %1613 = vmatprep.subr.bf16.mxu0 0
    %1614 = vmatpush1.bf16.xpose.msra.mxu0 0
    %1615 = vmatprep.subr.bf16.mxu0 0
    %1616 = vmatpush1.bf16.xpose.msra.mxu0 0
    %1617 = vmatprep.subr.bf16.mxu0 0
    %1618 = vmatpush1.bf16.xpose.msra.mxu0 0
    %1619 = vmatprep.subr.bf16.mxu0 0
    %1620 = vmatpush1.bf16.xpose.msra.mxu0 0
    %1621 = vmatprep.subr.bf16.mxu0 0
    %1622 = vmatpush1.bf16.xpose.msra.mxu0 0
    %1623 = vmatprep.subr.bf16.mxu0 0
    %1624 = vmatpush1.bf16.xpose.msra.mxu0 0
    %1625 = vmatprep.subr.bf16.mxu0 0
    %1626 = vmatpush1.bf16.xpose.msra.mxu0 0
    %1627 = vmatprep.subr.bf16.mxu0 0
    %1628 = vmatpush1.bf16.xpose.msra.mxu0 0
    %1629 = vmatprep.subr.bf16.mxu0 0
    %1630 = vmatpush1.bf16.xpose.msra.mxu0 0
    %1631 = vmatprep.mubr.bf16.mxu0 0
    %1632 = vmatmul.mubr.bf16.gmra.mrb[0].mxu0 %v1594
    %v1633 = vpop.f32.mrb[0].mxu0
    %v1634 = vadd.f32 %v1269, %v1633
    %v1635 = vpop.f32.mrb[0].mxu0
    %v1636 = vpop.f32.mrb[0].mxu0
    %v1637 = vpop.f32.mrb[0].mxu0
    %1638 = vdwg.mxu0
    %v1639 = vsel %vm1270, %v1312, -inf
    %1640 = vmax.xlane.f32.xlu0 %v1639
    %v1641 = vpop.xlane.xlu0 %1640
    %v1642 = vsel %vm1270, %v1358, -inf
    %1643 = vmax.xlane.f32.xlu0 %v1642
    %v1644 = vpop.xlane.xlu0 %1643
    %v1645 = vsel %vm1270, %v1404, -inf
    %1646 = vmax.xlane.f32.xlu0 %v1645
    %v1647 = vpop.xlane.xlu0 %1646
    %v1648 = vsel %vm1270, %v1450, -inf
    %1649 = vmax.xlane.f32.xlu0 %v1648
    %v1650 = vpop.xlane.xlu0 %1649
    %v1651 = vsel %vm1270, %v1496, -inf
    %1652 = vmax.xlane.f32.xlu0 %v1651
    %v1653 = vpop.xlane.xlu0 %1652
    %v1654 = vsel %vm1270, %v1542, -inf
    %1655 = vmax.xlane.f32.xlu0 %v1654
    %v1656 = vpop.xlane.xlu0 %1655
    %v1657 = vsel %vm1270, %v1588, -inf
    %1658 = vmax.xlane.f32.xlu0 %v1657
    %v1659 = vpop.xlane.xlu0 %1658
    %v1660 = vsel %vm1270, %v1634, -inf
    %1661 = vmax.xlane.f32.xlu0 %v1660
    %v1662 = vpop.xlane.xlu0 %1661
    %v1663 = vsub.f32 -inf, %v1641
    %v1664 = vsub.f32 -inf, %v1644
    %v1665 = vsub.f32 -inf, %v1647
    %v1666 = vsub.f32 -inf, %v1650
    %v1667 = vsub.f32 -inf, %v1653
    %v1668 = vsub.f32 -inf, %v1656
    %v1669 = vsub.f32 -inf, %v1659
    %v1670 = vsub.f32 -inf, %v1662
    %v1671 = vmul.f32 %v1663, 1.442695
    %v1672 = vpow.pop %v1671
    %v1673 = vmul.f32 %v1664, 1.442695
    %v1674 = vpow.pop %v1673
    %v1675 = vmul.f32 %v1665, 1.442695
    %v1676 = vpow.pop %v1675
    %v1677 = vmul.f32 %v1666, 1.442695
    %v1678 = vpow.pop %v1677
    %v1679 = vmul.f32 %v1667, 1.442695
    %v1680 = vpow.pop %v1679
    %v1681 = vmul.f32 %v1668, 1.442695
    %v1682 = vpow.pop %v1681
    %v1683 = vmul.f32 %v1669, 1.442695
    %v1684 = vpow.pop %v1683
    %v1685 = vmul.f32 %v1670, 1.442695
    %v1686 = vpow.pop %v1685
    %v1687 = vsub.f32 %v1312, %v1641
    %v1688 = vsub.f32 %v1358, %v1644
    %v1689 = vsub.f32 %v1404, %v1647
    %v1690 = vsub.f32 %v1450, %v1650
    %v1691 = vsub.f32 %v1496, %v1653
    %v1692 = vsub.f32 %v1542, %v1656
    %v1693 = vsub.f32 %v1588, %v1659
    %v1694 = vsub.f32 %v1634, %v1662
    %v1695 = vmul.f32 %v1687, 1.442695
    %v1696 = vpow.pop %v1695
    %v1697 = vmul.f32 %v1688, 1.442695
    %v1698 = vpow.pop %v1697
    %v1699 = vmul.f32 %v1689, 1.442695
    %v1700 = vpow.pop %v1699
    %v1701 = vmul.f32 %v1690, 1.442695
    %v1702 = vpow.pop %v1701
    %v1703 = vmul.f32 %v1691, 1.442695
    %v1704 = vpow.pop %v1703
    %v1705 = vmul.f32 %v1692, 1.442695
    %v1706 = vpow.pop %v1705
    %v1707 = vmul.f32 %v1693, 1.442695
    %v1708 = vpow.pop %v1707
    %v1709 = vmul.f32 %v1694, 1.442695
    %v1710 = vpow.pop %v1709
    %v1711 = vmul.f32 %v1672, 0.0
    %v1712 = vmul.f32 %v1674, 0.0
    %v1713 = vmul.f32 %v1676, 0.0
    %v1714 = vmul.f32 %v1678, 0.0
    %v1715 = vmul.f32 %v1680, 0.0
    %v1716 = vmul.f32 %v1682, 0.0
    %v1717 = vmul.f32 %v1684, 0.0
    %v1718 = vmul.f32 %v1686, 0.0
    %v1719 = vsel %vm1270, %v1696, 0.0
    %1720 = vadd.xlane.f32.xlu0 %v1719
    %v1721 = vpop.xlane.xlu0 %1720
    %v1722 = vsel %vm1270, %v1698, 0.0
    %1723 = vadd.xlane.f32.xlu0 %v1722
    %v1724 = vpop.xlane.xlu0 %1723
    %v1725 = vsel %vm1270, %v1700, 0.0
    %1726 = vadd.xlane.f32.xlu0 %v1725
    %v1727 = vpop.xlane.xlu0 %1726
    %v1728 = vsel %vm1270, %v1702, 0.0
    %1729 = vadd.xlane.f32.xlu0 %v1728
    %v1730 = vpop.xlane.xlu0 %1729
    %v1731 = vsel %vm1270, %v1704, 0.0
    %1732 = vadd.xlane.f32.xlu0 %v1731
    %v1733 = vpop.xlane.xlu0 %1732
    %v1734 = vsel %vm1270, %v1706, 0.0
    %1735 = vadd.xlane.f32.xlu0 %v1734
    %v1736 = vpop.xlane.xlu0 %1735
    %v1737 = vsel %vm1270, %v1708, 0.0
    %1738 = vadd.xlane.f32.xlu0 %v1737
    %v1739 = vpop.xlane.xlu0 %1738
    %v1740 = vsel %vm1270, %v1710, 0.0
    %1741 = vadd.xlane.f32.xlu0 %v1740
    %v1742 = vpop.xlane.xlu0 %1741
    %v1743 = vadd.f32 %v1711, %v1721
    %v1744 = vadd.f32 %v1712, %v1724
    %v1745 = vadd.f32 %v1713, %v1727
    %v1746 = vadd.f32 %v1714, %v1730
    %v1747 = vadd.f32 %v1715, %v1733
    %v1748 = vadd.f32 %v1716, %v1736
    %v1749 = vadd.f32 %v1717, %v1739
    %v1750 = vadd.f32 %v1718, %v1742
    %v1751 = vpack.c.bf16 %v1696, %v1696
    %v1752 = vpack.c.bf16 %v1698, %v1698
    %v1753 = vpack.c.bf16 %v1700, %v1700
    %v1754 = vpack.c.bf16 %v1702, %v1702
    %v1755 = vpack.c.bf16 %v1704, %v1704
    %v1756 = vpack.c.bf16 %v1706, %v1706
    %v1757 = vpack.c.bf16 %v1708, %v1708
    %v1758 = vpack.c.bf16 %v1710, %v1710
    %v1760 = vsel %vm1270, %v1751, 0
    %vm1762 = vcmask 1043456
    %v1764 = vsel %vm1762, %v1242, 0
    %1766 = vmatprep.subr.bf16.mxu0 0
    %1767 = vmatpush1.bf16.msra.mxu0 %v1764
    %1768 = vmatprep.subr.bf16.mxu0 0
    %1769 = vmatpush1.bf16.msra.mxu0 0
    %1770 = vmatprep.subr.bf16.mxu0 0
    %1771 = vmatpush1.bf16.msra.mxu0 0
    %1772 = vmatprep.subr.bf16.mxu0 0
    %1773 = vmatpush1.bf16.msra.mxu0 0
    %1774 = vmatprep.subr.bf16.mxu0 0
    %1775 = vmatpush1.bf16.msra.mxu0 0
    %1776 = vmatprep.subr.bf16.mxu0 0
    %1777 = vmatpush1.bf16.msra.mxu0 0
    %1778 = vmatprep.subr.bf16.mxu0 0
    %1779 = vmatpush1.bf16.msra.mxu0 0
    %1780 = vmatprep.subr.bf16.mxu0 0
    %1781 = vmatpush1.bf16.msra.mxu0 0
    %1782 = vmatprep.subr.bf16.mxu0 0
    %1783 = vmatpush1.bf16.msra.mxu0 0
    %1784 = vmatprep.subr.bf16.mxu0 0
    %1785 = vmatpush1.bf16.msra.mxu0 0
    %1786 = vmatprep.subr.bf16.mxu0 0
    %1787 = vmatpush1.bf16.msra.mxu0 0
    %1788 = vmatprep.subr.bf16.mxu0 0
    %1789 = vmatpush1.bf16.msra.mxu0 0
    %1790 = vmatprep.subr.bf16.mxu0 0
    %1791 = vmatpush1.bf16.msra.mxu0 0
    %1792 = vmatprep.subr.bf16.mxu0 0
    %1793 = vmatpush1.bf16.msra.mxu0 0
    %1794 = vmatprep.subr.bf16.mxu0 0
    %1795 = vmatpush1.bf16.msra.mxu0 0
    %1796 = vmatprep.subr.bf16.mxu0 0
    %1797 = vmatpush1.bf16.msra.mxu0 0
    %1798 = vmatprep.mubr.bf16.mxu0 0
    %1799 = vmatmul.mubr.bf16.gmra.mrb[0].mxu0 %v1760
    %v1800 = vpop.f32.mrb[0].mxu0
    %v1801 = vadd.f32 0.0, %v1800
    %v1802 = vpop.f32.mrb[0].mxu0
    %v1803 = vpop.f32.mrb[0].mxu0
    %v1804 = vpop.f32.mrb[0].mxu0
    %1805 = vdwg.mxu0
    %v1807 = vsel %vm1270, %v1752, 0
    %v1810 = vsel %vm1762, %v1245, 0
    %1812 = vmatprep.subr.bf16.mxu0 0
    %1813 = vmatpush1.bf16.msra.mxu0 %v1810
    %1814 = vmatprep.subr.bf16.mxu0 0
    %1815 = vmatpush1.bf16.msra.mxu0 0
    %1816 = vmatprep.subr.bf16.mxu0 0
    %1817 = vmatpush1.bf16.msra.mxu0 0
    %1818 = vmatprep.subr.bf16.mxu0 0
    %1819 = vmatpush1.bf16.msra.mxu0 0
    %1820 = vmatprep.subr.bf16.mxu0 0
    %1821 = vmatpush1.bf16.msra.mxu0 0
    %1822 = vmatprep.subr.bf16.mxu0 0
    %1823 = vmatpush1.bf16.msra.mxu0 0
    %1824 = vmatprep.subr.bf16.mxu0 0
    %1825 = vmatpush1.bf16.msra.mxu0 0
    %1826 = vmatprep.subr.bf16.mxu0 0
    %1827 = vmatpush1.bf16.msra.mxu0 0
    %1828 = vmatprep.subr.bf16.mxu0 0
    %1829 = vmatpush1.bf16.msra.mxu0 0
    %1830 = vmatprep.subr.bf16.mxu0 0
    %1831 = vmatpush1.bf16.msra.mxu0 0
    %1832 = vmatprep.subr.bf16.mxu0 0
    %1833 = vmatpush1.bf16.msra.mxu0 0
    %1834 = vmatprep.subr.bf16.mxu0 0
    %1835 = vmatpush1.bf16.msra.mxu0 0
    %1836 = vmatprep.subr.bf16.mxu0 0
    %1837 = vmatpush1.bf16.msra.mxu0 0
    %1838 = vmatprep.subr.bf16.mxu0 0
    %1839 = vmatpush1.bf16.msra.mxu0 0
    %1840 = vmatprep.subr.bf16.mxu0 0
    %1841 = vmatpush1.bf16.msra.mxu0 0
    %1842 = vmatprep.subr.bf16.mxu0 0
    %1843 = vmatpush1.bf16.msra.mxu0 0
    %1844 = vmatprep.mubr.bf16.mxu0 0
    %1845 = vmatmul.mubr.bf16.gmra.mrb[0].mxu0 %v1807
    %v1846 = vpop.f32.mrb[0].mxu0
    %v1847 = vadd.f32 0.0, %v1846
    %v1848 = vpop.f32.mrb[0].mxu0
    %v1849 = vpop.f32.mrb[0].mxu0
    %v1850 = vpop.f32.mrb[0].mxu0
    %1851 = vdwg.mxu0
    %v1853 = vsel %vm1270, %v1753, 0
    %v1856 = vsel %vm1762, %v1248, 0
    %1858 = vmatprep.subr.bf16.mxu0 0
    %1859 = vmatpush1.bf16.msra.mxu0 %v1856
    %1860 = vmatprep.subr.bf16.mxu0 0
    %1861 = vmatpush1.bf16.msra.mxu0 0
    %1862 = vmatprep.subr.bf16.mxu0 0
    %1863 = vmatpush1.bf16.msra.mxu0 0
    %1864 = vmatprep.subr.bf16.mxu0 0
    %1865 = vmatpush1.bf16.msra.mxu0 0
    %1866 = vmatprep.subr.bf16.mxu0 0
    %1867 = vmatpush1.bf16.msra.mxu0 0
    %1868 = vmatprep.subr.bf16.mxu0 0
    %1869 = vmatpush1.bf16.msra.mxu0 0
    %1870 = vmatprep.subr.bf16.mxu0 0
    %1871 = vmatpush1.bf16.msra.mxu0 0
    %1872 = vmatprep.subr.bf16.mxu0 0
    %1873 = vmatpush1.bf16.msra.mxu0 0
    %1874 = vmatprep.subr.bf16.mxu0 0
    %1875 = vmatpush1.bf16.msra.mxu0 0
    %1876 = vmatprep.subr.bf16.mxu0 0
    %1877 = vmatpush1.bf16.msra.mxu0 0
    %1878 = vmatprep.subr.bf16.mxu0 0
    %1879 = vmatpush1.bf16.msra.mxu0 0
    %1880 = vmatprep.subr.bf16.mxu0 0
    %1881 = vmatpush1.bf16.msra.mxu0 0
    %1882 = vmatprep.subr.bf16.mxu0 0
    %1883 = vmatpush1.bf16.msra.mxu0 0
    %1884 = vmatprep.subr.bf16.mxu0 0
    %1885 = vmatpush1.bf16.msra.mxu0 0
    %1886 = vmatprep.subr.bf16.mxu0 0
    %1887 = vmatpush1.bf16.msra.mxu0 0
    %1888 = vmatprep.subr.bf16.mxu0 0
    %1889 = vmatpush1.bf16.msra.mxu0 0
    %1890 = vmatprep.mubr.bf16.mxu0 0
    %1891 = vmatmul.mubr.bf16.gmra.mrb[0].mxu0 %v1853
    %v1892 = vpop.f32.mrb[0].mxu0
    %v1893 = vadd.f32 0.0, %v1892
    %v1894 = vpop.f32.mrb[0].mxu0
    %v1895 = vpop.f32.mrb[0].mxu0
    %v1896 = vpop.f32.mrb[0].mxu0
    %1897 = vdwg.mxu0
    %v1899 = vsel %vm1270, %v1754, 0
    %v1902 = vsel %vm1762, %v1251, 0
    %1904 = vmatprep.subr.bf16.mxu0 0
    %1905 = vmatpush1.bf16.msra.mxu0 %v1902
    %1906 = vmatprep.subr.bf16.mxu0 0
    %1907 = vmatpush1.bf16.msra.mxu0 0
    %1908 = vmatprep.subr.bf16.mxu0 0
    %1909 = vmatpush1.bf16.msra.mxu0 0
    %1910 = vmatprep.subr.bf16.mxu0 0
    %1911 = vmatpush1.bf16.msra.mxu0 0
    %1912 = vmatprep.subr.bf16.mxu0 0
    %1913 = vmatpush1.bf16.msra.mxu0 0
    %1914 = vmatprep.subr.bf16.mxu0 0
    %1915 = vmatpush1.bf16.msra.mxu0 0
    %1916 = vmatprep.subr.bf16.mxu0 0
    %1917 = vmatpush1.bf16.msra.mxu0 0
    %1918 = vmatprep.subr.bf16.mxu0 0
    %1919 = vmatpush1.bf16.msra.mxu0 0
    %1920 = vmatprep.subr.bf16.mxu0 0
    %1921 = vmatpush1.bf16.msra.mxu0 0
    %1922 = vmatprep.subr.bf16.mxu0 0
    %1923 = vmatpush1.bf16.msra.mxu0 0
    %1924 = vmatprep.subr.bf16.mxu0 0
    %1925 = vmatpush1.bf16.msra.mxu0 0
    %1926 = vmatprep.subr.bf16.mxu0 0
    %1927 = vmatpush1.bf16.msra.mxu0 0
    %1928 = vmatprep.subr.bf16.mxu0 0
    %1929 = vmatpush1.bf16.msra.mxu0 0
    %1930 = vmatprep.subr.bf16.mxu0 0
    %1931 = vmatpush1.bf16.msra.mxu0 0
    %1932 = vmatprep.subr.bf16.mxu0 0
    %1933 = vmatpush1.bf16.msra.mxu0 0
    %1934 = vmatprep.subr.bf16.mxu0 0
    %1935 = vmatpush1.bf16.msra.mxu0 0
    %1936 = vmatprep.mubr.bf16.mxu0 0
    %1937 = vmatmul.mubr.bf16.gmra.mrb[0].mxu0 %v1899
    %v1938 = vpop.f32.mrb[0].mxu0
    %v1939 = vadd.f32 0.0, %v1938
    %v1940 = vpop.f32.mrb[0].mxu0
    %v1941 = vpop.f32.mrb[0].mxu0
    %v1942 = vpop.f32.mrb[0].mxu0
    %1943 = vdwg.mxu0
    %v1945 = vsel %vm1270, %v1755, 0
    %v1948 = vsel %vm1762, %v1254, 0
    %1950 = vmatprep.subr.bf16.mxu0 0
    %1951 = vmatpush1.bf16.msra.mxu0 %v1948
    %1952 = vmatprep.subr.bf16.mxu0 0
    %1953 = vmatpush1.bf16.msra.mxu0 0
    %1954 = vmatprep.subr.bf16.mxu0 0
    %1955 = vmatpush1.bf16.msra.mxu0 0
    %1956 = vmatprep.subr.bf16.mxu0 0
    %1957 = vmatpush1.bf16.msra.mxu0 0
    %1958 = vmatprep.subr.bf16.mxu0 0
    %1959 = vmatpush1.bf16.msra.mxu0 0
    %1960 = vmatprep.subr.bf16.mxu0 0
    %1961 = vmatpush1.bf16.msra.mxu0 0
    %1962 = vmatprep.subr.bf16.mxu0 0
    %1963 = vmatpush1.bf16.msra.mxu0 0
    %1964 = vmatprep.subr.bf16.mxu0 0
    %1965 = vmatpush1.bf16.msra.mxu0 0
    %1966 = vmatprep.subr.bf16.mxu0 0
    %1967 = vmatpush1.bf16.msra.mxu0 0
    %1968 = vmatprep.subr.bf16.mxu0 0
    %1969 = vmatpush1.bf16.msra.mxu0 0
    %1970 = vmatprep.subr.bf16.mxu0 0
    %1971 = vmatpush1.bf16.msra.mxu0 0
    %1972 = vmatprep.subr.bf16.mxu0 0
    %1973 = vmatpush1.bf16.msra.mxu0 0
    %1974 = vmatprep.subr.bf16.mxu0 0
    %1975 = vmatpush1.bf16.msra.mxu0 0
    %1976 = vmatprep.subr.bf16.mxu0 0
    %1977 = vmatpush1.bf16.msra.mxu0 0
    %1978 = vmatprep.subr.bf16.mxu0 0
    %1979 = vmatpush1.bf16.msra.mxu0 0
    %1980 = vmatprep.subr.bf16.mxu0 0
    %1981 = vmatpush1.bf16.msra.mxu0 0
    %1982 = vmatprep.mubr.bf16.mxu0 0
    %1983 = vmatmul.mubr.bf16.gmra.mrb[0].mxu0 %v1945
    %v1984 = vpop.f32.mrb[0].mxu0
    %v1985 = vadd.f32 0.0, %v1984
    %v1986 = vpop.f32.mrb[0].mxu0
    %v1987 = vpop.f32.mrb[0].mxu0
    %v1988 = vpop.f32.mrb[0].mxu0
    %1989 = vdwg.mxu0
    %v1991 = vsel %vm1270, %v1756, 0
    %v1994 = vsel %vm1762, %v1257, 0
    %1996 = vmatprep.subr.bf16.mxu0 0
    %1997 = vmatpush1.bf16.msra.mxu0 %v1994
    %1998 = vmatprep.subr.bf16.mxu0 0
    %1999 = vmatpush1.bf16.msra.mxu0 0
    %2000 = vmatprep.subr.bf16.mxu0 0
    %2001 = vmatpush1.bf16.msra.mxu0 0
    %2002 = vmatprep.subr.bf16.mxu0 0
    %2003 = vmatpush1.bf16.msra.mxu0 0
    %2004 = vmatprep.subr.bf16.mxu0 0
    %2005 = vmatpush1.bf16.msra.mxu0 0
    %2006 = vmatprep.subr.bf16.mxu0 0
    %2007 = vmatpush1.bf16.msra.mxu0 0
    %2008 = vmatprep.subr.bf16.mxu0 0
    %2009 = vmatpush1.bf16.msra.mxu0 0
    %2010 = vmatprep.subr.bf16.mxu0 0
    %2011 = vmatpush1.bf16.msra.mxu0 0
    %2012 = vmatprep.subr.bf16.mxu0 0
    %2013 = vmatpush1.bf16.msra.mxu0 0
    %2014 = vmatprep.subr.bf16.mxu0 0
    %2015 = vmatpush1.bf16.msra.mxu0 0
    %2016 = vmatprep.subr.bf16.mxu0 0
    %2017 = vmatpush1.bf16.msra.mxu0 0
    %2018 = vmatprep.subr.bf16.mxu0 0
    %2019 = vmatpush1.bf16.msra.mxu0 0
    %2020 = vmatprep.subr.bf16.mxu0 0
    %2021 = vmatpush1.bf16.msra.mxu0 0
    %2022 = vmatprep.subr.bf16.mxu0 0
    %2023 = vmatpush1.bf16.msra.mxu0 0
    %2024 = vmatprep.subr.bf16.mxu0 0
    %2025 = vmatpush1.bf16.msra.mxu0 0
    %2026 = vmatprep.subr.bf16.mxu0 0
    %2027 = vmatpush1.bf16.msra.mxu0 0
    %2028 = vmatprep.mubr.bf16.mxu0 0
    %2029 = vmatmul.mubr.bf16.gmra.mrb[0].mxu0 %v1991
    %v2030 = vpop.f32.mrb[0].mxu0
    %v2031 = vadd.f32 0.0, %v2030
    %v2032 = vpop.f32.mrb[0].mxu0
    %v2033 = vpop.f32.mrb[0].mxu0
    %v2034 = vpop.f32.mrb[0].mxu0
    %2035 = vdwg.mxu0
    %v2037 = vsel %vm1270, %v1757, 0
    %v2040 = vsel %vm1762, %v1260, 0
    %2042 = vmatprep.subr.bf16.mxu0 0
    %2043 = vmatpush1.bf16.msra.mxu0 %v2040
    %2044 = vmatprep.subr.bf16.mxu0 0
    %2045 = vmatpush1.bf16.msra.mxu0 0
    %2046 = vmatprep.subr.bf16.mxu0 0
    %2047 = vmatpush1.bf16.msra.mxu0 0
    %2048 = vmatprep.subr.bf16.mxu0 0
    %2049 = vmatpush1.bf16.msra.mxu0 0
    %2050 = vmatprep.subr.bf16.mxu0 0
    %2051 = vmatpush1.bf16.msra.mxu0 0
    %2052 = vmatprep.subr.bf16.mxu0 0
    %2053 = vmatpush1.bf16.msra.mxu0 0
    %2054 = vmatprep.subr.bf16.mxu0 0
    %2055 = vmatpush1.bf16.msra.mxu0 0
    %2056 = vmatprep.subr.bf16.mxu0 0
    %2057 = vmatpush1.bf16.msra.mxu0 0
    %2058 = vmatprep.subr.bf16.mxu0 0
    %2059 = vmatpush1.bf16.msra.mxu0 0
    %2060 = vmatprep.subr.bf16.mxu0 0
    %2061 = vmatpush1.bf16.msra.mxu0 0
    %2062 = vmatprep.subr.bf16.mxu0 0
    %2063 = vmatpush1.bf16.msra.mxu0 0
    %2064 = vmatprep.subr.bf16.mxu0 0
    %2065 = vmatpush1.bf16.msra.mxu0 0
    %2066 = vmatprep.subr.bf16.mxu0 0
    %2067 = vmatpush1.bf16.msra.mxu0 0
    %2068 = vmatprep.subr.bf16.mxu0 0
    %2069 = vmatpush1.bf16.msra.mxu0 0
    %2070 = vmatprep.subr.bf16.mxu0 0
    %2071 = vmatpush1.bf16.msra.mxu0 0
    %2072 = vmatprep.subr.bf16.mxu0 0
    %2073 = vmatpush1.bf16.msra.mxu0 0
    %2074 = vmatprep.mubr.bf16.mxu0 0
    %2075 = vmatmul.mubr.bf16.gmra.mrb[0].mxu0 %v2037
    %v2076 = vpop.f32.mrb[0].mxu0
    %v2077 = vadd.f32 0.0, %v2076
    %v2078 = vpop.f32.mrb[0].mxu0
    %v2079 = vpop.f32.mrb[0].mxu0
    %v2080 = vpop.f32.mrb[0].mxu0
    %2081 = vdwg.mxu0
    %v2083 = vsel %vm1270, %v1758, 0
    %v2086 = vsel %vm1762, %v1263, 0
    %2088 = vmatprep.subr.bf16.mxu0 0
    %2089 = vmatpush1.bf16.msra.mxu0 %v2086
    %2090 = vmatprep.subr.bf16.mxu0 0
    %2091 = vmatpush1.bf16.msra.mxu0 0
    %2092 = vmatprep.subr.bf16.mxu0 0
    %2093 = vmatpush1.bf16.msra.mxu0 0
    %2094 = vmatprep.subr.bf16.mxu0 0
    %2095 = vmatpush1.bf16.msra.mxu0 0
    %2096 = vmatprep.subr.bf16.mxu0 0
    %2097 = vmatpush1.bf16.msra.mxu0 0
    %2098 = vmatprep.subr.bf16.mxu0 0
    %2099 = vmatpush1.bf16.msra.mxu0 0
    %2100 = vmatprep.subr.bf16.mxu0 0
    %2101 = vmatpush1.bf16.msra.mxu0 0
    %2102 = vmatprep.subr.bf16.mxu0 0
    %2103 = vmatpush1.bf16.msra.mxu0 0
    %2104 = vmatprep.subr.bf16.mxu0 0
    %2105 = vmatpush1.bf16.msra.mxu0 0
    %2106 = vmatprep.subr.bf16.mxu0 0
    %2107 = vmatpush1.bf16.msra.mxu0 0
    %2108 = vmatprep.subr.bf16.mxu0 0
    %2109 = vmatpush1.bf16.msra.mxu0 0
    %2110 = vmatprep.subr.bf16.mxu0 0
    %2111 = vmatpush1.bf16.msra.mxu0 0
    %2112 = vmatprep.subr.bf16.mxu0 0
    %2113 = vmatpush1.bf16.msra.mxu0 0
    %2114 = vmatprep.subr.bf16.mxu0 0
    %2115 = vmatpush1.bf16.msra.mxu0 0
    %2116 = vmatprep.subr.bf16.mxu0 0
    %2117 = vmatpush1.bf16.msra.mxu0 0
    %2118 = vmatprep.subr.bf16.mxu0 0
    %2119 = vmatpush1.bf16.msra.mxu0 0
    %2120 = vmatprep.mubr.bf16.mxu0 0
    %2121 = vmatmul.mubr.bf16.gmra.mrb[0].mxu0 %v2083
    %v2122 = vpop.f32.mrb[0].mxu0
    %v2123 = vadd.f32 0.0, %v2122
    %v2124 = vpop.f32.mrb[0].mxu0
    %v2125 = vpop.f32.mrb[0].mxu0
    %v2126 = vpop.f32.mrb[0].mxu0
    %2127 = vdwg.mxu0
    %v2128 = vadd.f32 %v1711, %v1801
    %v2129 = vadd.f32 %v1712, %v1847
    %v2130 = vadd.f32 %v1713, %v1893
    %v2131 = vadd.f32 %v1714, %v1939
    %v2132 = vadd.f32 %v1715, %v1985
    %v2133 = vadd.f32 %v1716, %v2031
    %v2134 = vadd.f32 %v1717, %v2077
    %v2135 = vadd.f32 %v1718, %v2123
    %v2136 = vrcp.pop %v1743
    %v2137 = vrcp.pop %v1744
    %v2138 = vrcp.pop %v1745
    %v2139 = vrcp.pop %v1746
    %v2140 = vrcp.pop %v1747
    %v2141 = vrcp.pop %v1748
    %v2142 = vrcp.pop %v1749
    %v2143 = vrcp.pop %v1750
    %v2144 = vmul.f32 %v2128, %v2136
    %v2145 = vmul.f32 %v2129, %v2137
    %v2146 = vmul.f32 %v2130, %v2138
    %v2147 = vmul.f32 %v2131, %v2139
    %v2148 = vmul.f32 %v2132, %v2140
    %v2149 = vmul.f32 %v2133, %v2141
    %v2150 = vmul.f32 %v2134, %v2142
    %v2151 = vmul.f32 %v2135, %v2143
    %v2152 = vpack.c.bf16 %v2144, %v2144
    %v2154 = vunpack.c.l.s4 1983009808
    %v2155 = vunpack.c.0.s8 %v2154
    %v2156 = vlaneseq
    %v2157 = vshrl.u32 %v2156, 7
    %v2158 = vsub.s32 %v2155, %v2157
    %v2159 = vrot.slane %v2152, %v2158
    %v2160 = vpack.c.bf16 %v2146, %v2146
    %v2162 = vunpack.c.l.s4 1983009808
    %v2163 = vunpack.c.0.s8 %v2162
    %v2164 = vlaneseq
    %v2165 = vshrl.u32 %v2164, 7
    %v2166 = vsub.s32 %v2163, %v2165
    %v2167 = vrot.slane %v2160, %v2166
    %v2168 = vcombine.low %v2159, %v2167
    %v2169 = vcombine.high %v2159, %v2167
    %v2171 = vunpack.c.l.s4 1934713408
    %v2172 = vunpack.c.0.s8 %v2171
    %v2173 = vlaneseq
    %v2174 = vshrl.u32 %v2173, 7
    %v2175 = vsub.s32 %v2172, %v2174
    %v2176 = vrot.slane %v2168, %v2175
    %v2178 = vunpack.c.l.s4 1934713408
    %v2179 = vunpack.c.0.s8 %v2178
    %v2180 = vlaneseq
    %v2181 = vshrl.u32 %v2180, 7
    %v2182 = vsub.s32 %v2179, %v2181
    %v2183 = vrot.slane %v2169, %v2182
    %v2184 = vcombine.high %v2176, 0
    %v2185 = vcombine.high %v2183, 0
    %v2186 = vpack.c.bf16 %v2145, %v2145
    %v2188 = vunpack.c.l.s4 1983009808
    %v2189 = vunpack.c.0.s8 %v2188
    %v2190 = vlaneseq
    %v2191 = vshrl.u32 %v2190, 7
    %v2192 = vsub.s32 %v2189, %v2191
    %v2193 = vrot.slane %v2186, %v2192
    %v2194 = vpack.c.bf16 %v2147, %v2147
    %v2196 = vunpack.c.l.s4 1983009808
    %v2197 = vunpack.c.0.s8 %v2196
    %v2198 = vlaneseq
    %v2199 = vshrl.u32 %v2198, 7
    %v2200 = vsub.s32 %v2197, %v2199
    %v2201 = vrot.slane %v2194, %v2200
    %v2202 = vcombine.low %v2193, %v2201
    %v2203 = vcombine.high %v2193, %v2201
    %v2205 = vunpack.c.l.s4 1934713408
    %v2206 = vunpack.c.0.s8 %v2205
    %v2207 = vlaneseq
    %v2208 = vshrl.u32 %v2207, 7
    %v2209 = vsub.s32 %v2206, %v2208
    %v2210 = vrot.slane %v2202, %v2209
    %v2212 = vunpack.c.l.s4 1934713408
    %v2213 = vunpack.c.0.s8 %v2212
    %v2214 = vlaneseq
    %v2215 = vshrl.u32 %v2214, 7
    %v2216 = vsub.s32 %v2213, %v2215
    %v2217 = vrot.slane %v2203, %v2216
    %v2218 = vcombine.high %v2210, 0
    %v2219 = vcombine.high %v2217, 0
    %v2220 = vpack.c.bf16 %v2148, %v2148
    %v2222 = vunpack.c.l.s4 1983009808
    %v2223 = vunpack.c.0.s8 %v2222
    %v2224 = vlaneseq
    %v2225 = vshrl.u32 %v2224, 7
    %v2226 = vsub.s32 %v2223, %v2225
    %v2227 = vrot.slane %v2220, %v2226
    %v2228 = vpack.c.bf16 %v2150, %v2150
    %v2230 = vunpack.c.l.s4 1983009808
    %v2231 = vunpack.c.0.s8 %v2230
    %v2232 = vlaneseq
    %v2233 = vshrl.u32 %v2232, 7
    %v2234 = vsub.s32 %v2231, %v2233
    %v2235 = vrot.slane %v2228, %v2234
    %v2236 = vcombine.low %v2227, %v2235
    %v2237 = vcombine.high %v2227, %v2235
    %v2239 = vunpack.c.l.s4 1934713408
    %v2240 = vunpack.c.0.s8 %v2239
    %v2241 = vlaneseq
    %v2242 = vshrl.u32 %v2241, 7
    %v2243 = vsub.s32 %v2240, %v2242
    %v2244 = vrot.slane %v2236, %v2243
    %v2246 = vunpack.c.l.s4 1934713408
    %v2247 = vunpack.c.0.s8 %v2246
    %v2248 = vlaneseq
    %v2249 = vshrl.u32 %v2248, 7
    %v2250 = vsub.s32 %v2247, %v2249
    %v2251 = vrot.slane %v2237, %v2250
    %v2252 = vcombine.high %v2244, 0
    %v2253 = vcombine.high %v2251, 0
    %v2254 = vpack.c.bf16 %v2149, %v2149
    %v2256 = vunpack.c.l.s4 1983009808
    %v2257 = vunpack.c.0.s8 %v2256
    %v2258 = vlaneseq
    %v2259 = vshrl.u32 %v2258, 7
    %v2260 = vsub.s32 %v2257, %v2259
    %v2261 = vrot.slane %v2254, %v2260
    %v2262 = vpack.c.bf16 %v2151, %v2151
    %v2264 = vunpack.c.l.s4 1983009808
    %v2265 = vunpack.c.0.s8 %v2264
    %v2266 = vlaneseq
    %v2267 = vshrl.u32 %v2266, 7
    %v2268 = vsub.s32 %v2265, %v2267
    %v2269 = vrot.slane %v2262, %v2268
    %v2270 = vcombine.low %v2261, %v2269
    %v2271 = vcombine.high %v2261, %v2269
    %v2273 = vunpack.c.l.s4 1934713408
    %v2274 = vunpack.c.0.s8 %v2273
    %v2275 = vlaneseq
    %v2276 = vshrl.u32 %v2275, 7
    %v2277 = vsub.s32 %v2274, %v2276
    %v2278 = vrot.slane %v2270, %v2277
    %v2280 = vunpack.c.l.s4 1934713408
    %v2281 = vunpack.c.0.s8 %v2280
    %v2282 = vlaneseq
    %v2283 = vshrl.u32 %v2282, 7
    %v2284 = vsub.s32 %v2281, %v2283
    %v2285 = vrot.slane %v2271, %v2284
    %v2286 = vcombine.high %v2278, 0
    %v2287 = vcombine.high %v2285, 0
    %v2290 = vpack.i.b16 %v2210, %v2176
    %v2292 = vshrl.u32 %v2176, 16
    %v2293 = vshrl.u32 %v2210, 16
    %v2294 = vpack.i.b16 %v2293, %v2292
    %v2298 = vpack.i.b16 %v2218, %v2184
    %v2300 = vshrl.u32 %v2184, 16
    %v2301 = vshrl.u32 %v2218, 16
    %v2302 = vpack.i.b16 %v2301, %v2300
    %v2306 = vpack.i.b16 %v2217, %v2183
    %v2308 = vshrl.u32 %v2183, 16
    %v2309 = vshrl.u32 %v2217, 16
    %v2310 = vpack.i.b16 %v2309, %v2308
    %v2314 = vpack.i.b16 %v2219, %v2185
    %v2316 = vshrl.u32 %v2185, 16
    %v2317 = vshrl.u32 %v2219, 16
    %v2318 = vpack.i.b16 %v2317, %v2316
    %v2322 = vpack.i.b16 %v2278, %v2244
    %v2324 = vshrl.u32 %v2244, 16
    %v2325 = vshrl.u32 %v2278, 16
    %v2326 = vpack.i.b16 %v2325, %v2324
    %v2330 = vpack.i.b16 %v2286, %v2252
    %v2332 = vshrl.u32 %v2252, 16
    %v2333 = vshrl.u32 %v2286, 16
    %v2334 = vpack.i.b16 %v2333, %v2332
    %v2338 = vpack.i.b16 %v2285, %v2251
    %v2340 = vshrl.u32 %v2251, 16
    %v2341 = vshrl.u32 %v2285, 16
    %v2342 = vpack.i.b16 %v2341, %v2340
    %v2346 = vpack.i.b16 %v2287, %v2253
    %v2348 = vshrl.u32 %v2253, 16
    %v2349 = vshrl.u32 %v2287, 16
    %v2350 = vpack.i.b16 %v2349, %v2348
    %v2352 = vcombine.low %v2290, %v2306
    %v2354 = vunpack.c.l.s4 1983009808
    %v2355 = vunpack.c.0.s8 %v2354
    %v2356 = vlaneseq
    %v2357 = vshrl.u32 %v2356, 7
    %v2358 = vsub.s32 %v2355, %v2357
    %v2359 = vrot.slane %v2352, %v2358
    %v2360 = vcombine.low %v2298, %v2314
    %v2362 = vunpack.c.l.s4 1983009808
    %v2363 = vunpack.c.0.s8 %v2362
    %v2364 = vlaneseq
    %v2365 = vshrl.u32 %v2364, 7
    %v2366 = vsub.s32 %v2363, %v2365
    %v2367 = vrot.slane %v2360, %v2366
    %v2368 = vcombine.low %v2322, %v2338
    %v2370 = vunpack.c.l.s4 1983009808
    %v2371 = vunpack.c.0.s8 %v2370
    %v2372 = vlaneseq
    %v2373 = vshrl.u32 %v2372, 7
    %v2374 = vsub.s32 %v2371, %v2373
    %v2375 = vrot.slane %v2368, %v2374
    %v2376 = vcombine.low %v2330, %v2346
    %v2378 = vunpack.c.l.s4 1983009808
    %v2379 = vunpack.c.0.s8 %v2378
    %v2380 = vlaneseq
    %v2381 = vshrl.u32 %v2380, 7
    %v2382 = vsub.s32 %v2379, %v2381
    %v2383 = vrot.slane %v2376, %v2382
    %v2384 = vcombine.low %v2359, %v2367
    %v2386 = vunpack.c.l.s4 1934713408
    %v2387 = vunpack.c.0.s8 %v2386
    %v2388 = vlaneseq
    %v2389 = vshrl.u32 %v2388, 7
    %v2390 = vsub.s32 %v2387, %v2389
    %v2391 = vrot.slane %v2384, %v2390
    %v2392 = vcombine.low %v2375, %v2383
    %v2394 = vunpack.c.l.s4 1934713408
    %v2395 = vunpack.c.0.s8 %v2394
    %v2396 = vlaneseq
    %v2397 = vshrl.u32 %v2396, 7
    %v2398 = vsub.s32 %v2395, %v2397
    %v2399 = vrot.slane %v2392, %v2398
    %v2400 = vcombine.low %v2391, %v2399
    %v2401 = vcombine.high %v2391, %v2399
    %v2402 = vcombine.low %v2294, %v2310
    %v2404 = vunpack.c.l.s4 1983009808
    %v2405 = vunpack.c.0.s8 %v2404
    %v2406 = vlaneseq
    %v2407 = vshrl.u32 %v2406, 7
    %v2408 = vsub.s32 %v2405, %v2407
    %v2409 = vrot.slane %v2402, %v2408
    %v2410 = vcombine.low %v2302, %v2318
    %v2412 = vunpack.c.l.s4 1983009808
    %v2413 = vunpack.c.0.s8 %v2412
    %v2414 = vlaneseq
    %v2415 = vshrl.u32 %v2414, 7
    %v2416 = vsub.s32 %v2413, %v2415
    %v2417 = vrot.slane %v2410, %v2416
    %v2418 = vcombine.low %v2326, %v2342
    %v2420 = vunpack.c.l.s4 1983009808
    %v2421 = vunpack.c.0.s8 %v2420
    %v2422 = vlaneseq
    %v2423 = vshrl.u32 %v2422, 7
    %v2424 = vsub.s32 %v2421, %v2423
    %v2425 = vrot.slane %v2418, %v2424
    %v2426 = vcombine.low %v2334, %v2350
    %v2428 = vunpack.c.l.s4 1983009808
    %v2429 = vunpack.c.0.s8 %v2428
    %v2430 = vlaneseq
    %v2431 = vshrl.u32 %v2430, 7
    %v2432 = vsub.s32 %v2429, %v2431
    %v2433 = vrot.slane %v2426, %v2432
    %v2434 = vcombine.low %v2409, %v2417
    %v2436 = vunpack.c.l.s4 1934713408
    %v2437 = vunpack.c.0.s8 %v2436
    %v2438 = vlaneseq
    %v2439 = vshrl.u32 %v2438, 7
    %v2440 = vsub.s32 %v2437, %v2439
    %v2441 = vrot.slane %v2434, %v2440
    %v2442 = vcombine.low %v2425, %v2433
    %v2444 = vunpack.c.l.s4 1934713408
    %v2445 = vunpack.c.0.s8 %v2444
    %v2446 = vlaneseq
    %v2447 = vshrl.u32 %v2446, 7
    %v2448 = vsub.s32 %v2445, %v2447
    %v2449 = vrot.slane %v2442, %v2448
    %v2450 = vcombine.low %v2441, %v2449
    %v2451 = vcombine.high %v2441, %v2449
    %v2454 = vpack.i.b16 %v2450, %v2400
    %v2455 = vshrl.u32 %v2400, 16
    %v2456 = vshrl.u32 %v2450, 16
    %v2457 = vpack.i.b16 %v2456, %v2455
    %v2460 = vpack.i.b16 %v2451, %v2401
    %v2461 = vshrl.u32 %v2401, 16
    %v2462 = vshrl.u32 %v2451, 16
    %v2463 = vpack.i.b16 %v2462, %v2461
    %2464 = vrot.lane.b32.xlu0 %v2457, 8
    %v2465 = vpop.permute.xlu0 %2464
    %2466 = vrot.lane.b32.xlu0 %v2460, 16
    %v2467 = vpop.permute.xlu0 %2466
    %2468 = vrot.lane.b32.xlu0 %v2463, 24
    %v2469 = vpop.permute.xlu0 %2468
    %v2472 = vsel %vm1270, %v2454, %v2465
    %vm2473 = vcmask 130048
    %v2475 = vsel %vm2473, %v2472, %v2467
    %vm2476 = vcmask 195584
    %v2478 = vsel %vm2476, %v2475, %v2469
    %v2479 = vld [vmem:[#allocation10] sm:$0xf]
    %v2480 = vld [vmem:[#allocation10 + $0x4] sm:$0xf]
    %v2481 = vld [vmem:[#allocation10 + $0x8] sm:$0xf]
    %v2482 = vld [vmem:[#allocation10 + $0xc] sm:$0xf]
    %v2483 = vld [vmem:[#allocation11] sm:$0x1]
    %v2485 = vlaneseq
    %v2486 = vshrl.u32 %v2485, 7
    %v2487 = vsub.s32 0, %v2486
    %v2488 = vrot.slane %v2483, %v2487
    %v2494 = vunpack.c.l.b16 %v2479
    %v2495 = vunpack.c.l.b16 %v2480
    %v2496 = vunpack.c.l.b16 %v2481
    %v2497 = vunpack.c.l.b16 %v2482
    %v2498 = vpack.c.b16 %v2495, %v2494
    %v2499 = vpack.c.b16 %v2497, %v2496
    %v2502 = vsel %vm373, %v2478, 0
    %2504 = vmatprep.subr.bf16.mxu0 0
    %2505 = vmatpush1.bf16.msra.mxu0 %v2498
    %2506 = vmatprep.subr.bf16.mxu0 0
    %2507 = vmatpush1.bf16.msra.mxu0 %v2499
    %2508 = vmatprep.subr.bf16.mxu0 0
    %2509 = vmatpush1.bf16.msra.mxu0 0
    %2510 = vmatprep.subr.bf16.mxu0 0
    %2511 = vmatpush1.bf16.msra.mxu0 0
    %2512 = vmatprep.subr.bf16.mxu0 0
    %2513 = vmatpush1.bf16.msra.mxu0 0
    %2514 = vmatprep.subr.bf16.mxu0 0
    %2515 = vmatpush1.bf16.msra.mxu0 0
    %2516 = vmatprep.subr.bf16.mxu0 0
    %2517 = vmatpush1.bf16.msra.mxu0 0
    %2518 = vmatprep.subr.bf16.mxu0 0
    %2519 = vmatpush1.bf16.msra.mxu0 0
    %2520 = vmatprep.subr.bf16.mxu0 0
    %2521 = vmatpush1.bf16.msra.mxu0 0
    %2522 = vmatprep.subr.bf16.mxu0 0
    %2523 = vmatpush1.bf16.msra.mxu0 0
    %2524 = vmatprep.subr.bf16.mxu0 0
    %2525 = vmatpush1.bf16.msra.mxu0 0
    %2526 = vmatprep.subr.bf16.mxu0 0
    %2527 = vmatpush1.bf16.msra.mxu0 0
    %2528 = vmatprep.subr.bf16.mxu0 0
    %2529 = vmatpush1.bf16.msra.mxu0 0
    %2530 = vmatprep.subr.bf16.mxu0 0
    %2531 = vmatpush1.bf16.msra.mxu0 0
    %2532 = vmatprep.subr.bf16.mxu0 0
    %2533 = vmatpush1.bf16.msra.mxu0 0
    %2534 = vmatprep.subr.bf16.mxu0 0
    %2535 = vmatpush1.bf16.msra.mxu0 0
    %2536 = vmatprep.mubr.bf16.mxu0 0
    %2537 = vmatmul.mubr.bf16.gmra.mrb[0].mxu0 %v2502
    %v2538 = vpop.f32.mrb[0].mxu0
    %v2539 = vadd.f32 %v2488, %v2538
    %v2540 = vpop.f32.mrb[0].mxu0
    %v2541 = vpop.f32.mrb[0].mxu0
    %v2542 = vadd.f32 %v2488, %v2541
    %v2543 = vpop.f32.mrb[0].mxu0
    %2544 = vdwg.mxu0
    %v2545 = vadd.f32 %v345, %v2539
    %v2546 = vadd.f32 %v346, %v2542
    %v2547 = vld [vmem:[#allocation13] sm:$0x1]
    %v2548 = vld [vmem:[#allocation14] sm:$0x1]
    %v2549 = vsel %vm373, %v2545, 0.0
    %2550 = vadd.xlane.f32.xlu0 %v2549
    %v2551 = vpop.xlane.xlu0 %2550
    %v2552 = vsel %vm373, %v2546, 0.0
    %2553 = vadd.xlane.f32.xlu0 %v2552
    %v2554 = vpop.xlane.xlu0 %2553
    %v2555 = vrcp.pop 32.0
    %v2556 = vmul.f32 %v2551, %v2555
    %v2557 = vmul.f32 %v2554, %v2555
    %v2558 = vsub.f32 %v2545, %v2556
    %v2559 = vsub.f32 %v2546, %v2557
    %v2560 = vmul.f32 %v2558, %v2558
    %v2561 = vmul.f32 %v2559, %v2559
    %v2562 = vsel %vm373, %v2560, 0.0
    %2563 = vadd.xlane.f32.xlu0 %v2562
    %v2564 = vpop.xlane.xlu0 %2563
    %v2565 = vsel %vm373, %v2561, 0.0
    %2566 = vadd.xlane.f32.xlu0 %v2565
    %v2567 = vpop.xlane.xlu0 %2566
    %v2568 = vmul.f32 %v2564, %v2555
    %v2569 = vmul.f32 %v2567, %v2555
    %v2570 = vadd.f32 %v2568, 1e-05
    %v2571 = vadd.f32 %v2569, 1e-05
    %v2572 = vrsqrt.pop %v2570
    %v2573 = vrsqrt.pop %v2571
    %v2574 = vmul.f32 %v2558, %v2572
    %v2575 = vmul.f32 %v2559, %v2573
    %v2577 = vlaneseq
    %v2578 = vshrl.u32 %v2577, 7
    %v2579 = vsub.s32 0, %v2578
    %v2580 = vrot.slane %v2547, %v2579
    %v2582 = vmul.f32 %v2574, %v2580
    %v2583 = vmul.f32 %v2575, %v2580
    %v2585 = vlaneseq
    %v2586 = vshrl.u32 %v2585, 7
    %v2587 = vsub.s32 0, %v2586
    %v2588 = vrot.slane %v2548, %v2587
    %v2590 = vadd.f32 %v2582, %v2588
    %v2591 = vadd.f32 %v2583, %v2588
    %v2592 = vpack.c.bf16 %v2591, %v2590
    %v2593 = vld [vmem:[#allocation16] sm:$0xf]
    %v2594 = vld [vmem:[#allocation16 + $0x4] sm:$0xf]
    %v2595 = vld [vmem:[#allocation16 + $0x8] sm:$0xf]
    %v2596 = vld [vmem:[#allocation16 + $0xc] sm:$0xf]
    %v2597 = vld [vmem:[#allocation17] sm:$0x1]
    %v2599 = vlaneseq
    %v2600 = vshrl.u32 %v2599, 7
    %v2601 = vsub.s32 0, %v2600
    %v2602 = vrot.slane %v2597, %v2601
    %v2608 = vunpack.c.l.b16 %v2593
    %v2609 = vunpack.c.l.b16 %v2594
    %v2610 = vunpack.c.l.b16 %v2595
    %v2611 = vunpack.c.l.b16 %v2596
    %v2612 = vpack.c.b16 %v2609, %v2608
    %v2613 = vpack.c.b16 %v2611, %v2610
    %v2617 = vsel %vm373, %v2592, 0
    %2619 = vmatprep.subr.bf16.mxu0 0
    %2620 = vmatpush1.bf16.msra.mxu0 %v2612
    %2621 = vmatprep.subr.bf16.mxu0 0
    %2622 = vmatpush1.bf16.msra.mxu0 %v2613
    %2623 = vmatprep.subr.bf16.mxu0 0
    %2624 = vmatpush1.bf16.msra.mxu0 0
    %2625 = vmatprep.subr.bf16.mxu0 0
    %2626 = vmatpush1.bf16.msra.mxu0 0
    %2627 = vmatprep.subr.bf16.mxu0 0
    %2628 = vmatpush1.bf16.msra.mxu0 0
    %2629 = vmatprep.subr.bf16.mxu0 0
    %2630 = vmatpush1.bf16.msra.mxu0 0
    %2631 = vmatprep.subr.bf16.mxu0 0
    %2632 = vmatpush1.bf16.msra.mxu0 0
    %2633 = vmatprep.subr.bf16.mxu0 0
    %2634 = vmatpush1.bf16.msra.mxu0 0
    %2635 = vmatprep.subr.bf16.mxu0 0
    %2636 = vmatpush1.bf16.msra.mxu0 0
    %2637 = vmatprep.subr.bf16.mxu0 0
    %2638 = vmatpush1.bf16.msra.mxu0 0
    %2639 = vmatprep.subr.bf16.mxu0 0
    %2640 = vmatpush1.bf16.msra.mxu0 0
    %2641 = vmatprep.subr.bf16.mxu0 0
    %2642 = vmatpush1.bf16.msra.mxu0 0
    %2643 = vmatprep.subr.bf16.mxu0 0
    %2644 = vmatpush1.bf16.msra.mxu0 0
    %2645 = vmatprep.subr.bf16.mxu0 0
    %2646 = vmatpush1.bf16.msra.mxu0 0
    %2647 = vmatprep.subr.bf16.mxu0 0
    %2648 = vmatpush1.bf16.msra.mxu0 0
    %2649 = vmatprep.subr.bf16.mxu0 0
    %2650 = vmatpush1.bf16.msra.mxu0 0
    %2651 = vmatprep.mubr.bf16.mxu0 0
    %2652 = vmatmul.mubr.bf16.gmra.mrb[0].mxu0 %v2617
    %v2653 = vpop.f32.mrb[0].mxu0
    %v2654 = vadd.f32 %v2602, %v2653
    %v2655 = vpop.f32.mrb[0].mxu0
    %v2656 = vpop.f32.mrb[0].mxu0
    %v2657 = vadd.f32 %v2602, %v2656
    %v2658 = vpop.f32.mrb[0].mxu0
    %2659 = vdwg.mxu0
    %v2660 = vld [vmem:[#allocation19] sm:$0xf]
    %v2661 = vld [vmem:[#allocation19 + $0x4] sm:$0xf]
    %v2662 = vld [vmem:[#allocation19 + $0x8] sm:$0xf]
    %v2663 = vld [vmem:[#allocation19 + $0xc] sm:$0xf]
    %v2664 = vld [vmem:[#allocation20] sm:$0x1]
    %v2666 = vlaneseq
    %v2667 = vshrl.u32 %v2666, 7
    %v2668 = vsub.s32 0, %v2667
    %v2669 = vrot.slane %v2664, %v2668
    %v2673 = vunpack.c.l.b16 %v347
    %v2674 = vunpack.c.l.b16 %v348
    %v2675 = vpack.c.b16 %v2674, %v2673
    %v2680 = vunpack.c.l.b16 %v2660
    %v2681 = vunpack.c.l.b16 %v2661
    %v2682 = vunpack.c.l.b16 %v2662
    %v2683 = vunpack.c.l.b16 %v2663
    %v2684 = vpack.c.b16 %v2681, %v2680
    %v2685 = vpack.c.b16 %v2683, %v2682
    %v2689 = vsel %vm373, %v2675, 0
    %2691 = vmatprep.subr.bf16.mxu0 0
    %2692 = vmatpush1.bf16.msra.mxu0 %v2684
    %2693 = vmatprep.subr.bf16.mxu0 0
    %2694 = vmatpush1.bf16.msra.mxu0 %v2685
    %2695 = vmatprep.subr.bf16.mxu0 0
    %2696 = vmatpush1.bf16.msra.mxu0 0
    %2697 = vmatprep.subr.bf16.mxu0 0
    %2698 = vmatpush1.bf16.msra.mxu0 0
    %2699 = vmatprep.subr.bf16.mxu0 0
    %2700 = vmatpush1.bf16.msra.mxu0 0
    %2701 = vmatprep.subr.bf16.mxu0 0
    %2702 = vmatpush1.bf16.msra.mxu0 0
    %2703 = vmatprep.subr.bf16.mxu0 0
    %2704 = vmatpush1.bf16.msra.mxu0 0
    %2705 = vmatprep.subr.bf16.mxu0 0
    %2706 = vmatpush1.bf16.msra.mxu0 0
    %2707 = vmatprep.subr.bf16.mxu0 0
    %2708 = vmatpush1.bf16.msra.mxu0 0
    %2709 = vmatprep.subr.bf16.mxu0 0
    %2710 = vmatpush1.bf16.msra.mxu0 0
    %2711 = vmatprep.subr.bf16.mxu0 0
    %2712 = vmatpush1.bf16.msra.mxu0 0
    %2713 = vmatprep.subr.bf16.mxu0 0
    %2714 = vmatpush1.bf16.msra.mxu0 0
    %2715 = vmatprep.subr.bf16.mxu0 0
    %2716 = vmatpush1.bf16.msra.mxu0 0
    %2717 = vmatprep.subr.bf16.mxu0 0
    %2718 = vmatpush1.bf16.msra.mxu0 0
    %2719 = vmatprep.subr.bf16.mxu0 0
    %2720 = vmatpush1.bf16.msra.mxu0 0
    %2721 = vmatprep.subr.bf16.mxu0 0
    %2722 = vmatpush1.bf16.msra.mxu0 0
    %2723 = vmatprep.mubr.bf16.mxu0 0
    %2724 = vmatmul.mubr.bf16.gmra.mrb[0].mxu0 %v2689
    %v2725 = vpop.f32.mrb[0].mxu0
    %v2726 = vadd.f32 %v2669, %v2725
    %v2727 = vpop.f32.mrb[0].mxu0
    %v2728 = vpop.f32.mrb[0].mxu0
    %v2729 = vadd.f32 %v2669, %v2728
    %v2730 = vpop.f32.mrb[0].mxu0
    %2731 = vdwg.mxu0
    %v2732 = vpack.c.bf16 %v2657, %v2654
    %v2733 = vpack.c.bf16 %v2729, %v2726
    %2735 = vrot.lane.b32.xlu0 %v2732, 120
    %v2736 = vpop.permute.xlu0 %2735
    %2737 = vrot.lane.b32.xlu0 %v2732, 112
    %v2738 = vpop.permute.xlu0 %2737
    %2739 = vrot.lane.b32.xlu0 %v2732, 104
    %v2740 = vpop.permute.xlu0 %2739
    %v2743 = vpack.i.b16 %v2736, %v2732
    %v2745 = vshrl.u32 %v2732, 16
    %v2746 = vshrl.u32 %v2736, 16
    %v2747 = vpack.i.b16 %v2746, %v2745
    %v2751 = vpack.i.b16 %v2740, %v2738
    %v2753 = vshrl.u32 %v2738, 16
    %v2754 = vshrl.u32 %v2740, 16
    %v2755 = vpack.i.b16 %v2754, %v2753
    %v2757 = vcombine.high %v2743, %v443
    %v2759 = vunpack.c.l.s4 1983009808
    %v2760 = vunpack.c.0.s8 %v2759
    %v2761 = vlaneseq
    %v2762 = vshrl.u32 %v2761, 7
    %v2763 = vsub.s32 %v2760, %v2762
    %v2764 = vrot.slane %v2743, %v2763
    %v2766 = vunpack.c.l.s4 1983009808
    %v2767 = vunpack.c.0.s8 %v2766
    %v2768 = vlaneseq
    %v2769 = vshrl.u32 %v2768, 7
    %v2770 = vsub.s32 %v2767, %v2769
    %v2771 = vrot.slane %v2757, %v2770
    %v2772 = vcombine.high %v2751, %v443
    %v2774 = vunpack.c.l.s4 1983009808
    %v2775 = vunpack.c.0.s8 %v2774
    %v2776 = vlaneseq
    %v2777 = vshrl.u32 %v2776, 7
    %v2778 = vsub.s32 %v2775, %v2777
    %v2779 = vrot.slane %v2751, %v2778
    %v2781 = vunpack.c.l.s4 1983009808
    %v2782 = vunpack.c.0.s8 %v2781
    %v2783 = vlaneseq
    %v2784 = vshrl.u32 %v2783, 7
    %v2785 = vsub.s32 %v2782, %v2784
    %v2786 = vrot.slane %v2772, %v2785
    %v2787 = vcombine.low %v2764, %v2779
    %v2788 = vcombine.high %v2764, %v2779
    %v2790 = vunpack.c.l.s4 1934713408
    %v2791 = vunpack.c.0.s8 %v2790
    %v2792 = vlaneseq
    %v2793 = vshrl.u32 %v2792, 7
    %v2794 = vsub.s32 %v2791, %v2793
    %v2795 = vrot.slane %v2787, %v2794
    %v2797 = vunpack.c.l.s4 1934713408
    %v2798 = vunpack.c.0.s8 %v2797
    %v2799 = vlaneseq
    %v2800 = vshrl.u32 %v2799, 7
    %v2801 = vsub.s32 %v2798, %v2800
    %v2802 = vrot.slane %v2788, %v2801
    %v2803 = vcombine.low %v2771, %v2786
    %v2804 = vcombine.high %v2771, %v2786
    %v2806 = vunpack.c.l.s4 1934713408
    %v2807 = vunpack.c.0.s8 %v2806
    %v2808 = vlaneseq
    %v2809 = vshrl.u32 %v2808, 7
    %v2810 = vsub.s32 %v2807, %v2809
    %v2811 = vrot.slane %v2803, %v2810
    %v2813 = vunpack.c.l.s4 1934713408
    %v2814 = vunpack.c.0.s8 %v2813
    %v2815 = vlaneseq
    %v2816 = vshrl.u32 %v2815, 7
    %v2817 = vsub.s32 %v2814, %v2816
    %v2818 = vrot.slane %v2804, %v2817
    %v2819 = vcombine.high %v2795, 0
    %v2820 = vcombine.high %v2802, 0
    %v2821 = vcombine.high %v2811, 0
    %v2822 = vcombine.high %v2818, 0
    %v2823 = vcombine.high %v2747, %v446
    %v2825 = vunpack.c.l.s4 1983009808
    %v2826 = vunpack.c.0.s8 %v2825
    %v2827 = vlaneseq
    %v2828 = vshrl.u32 %v2827, 7
    %v2829 = vsub.s32 %v2826, %v2828
    %v2830 = vrot.slane %v2747, %v2829
    %v2832 = vunpack.c.l.s4 1983009808
    %v2833 = vunpack.c.0.s8 %v2832
    %v2834 = vlaneseq
    %v2835 = vshrl.u32 %v2834, 7
    %v2836 = vsub.s32 %v2833, %v2835
    %v2837 = vrot.slane %v2823, %v2836
    %v2838 = vcombine.high %v2755, %v446
    %v2840 = vunpack.c.l.s4 1983009808
    %v2841 = vunpack.c.0.s8 %v2840
    %v2842 = vlaneseq
    %v2843 = vshrl.u32 %v2842, 7
    %v2844 = vsub.s32 %v2841, %v2843
    %v2845 = vrot.slane %v2755, %v2844
    %v2847 = vunpack.c.l.s4 1983009808
    %v2848 = vunpack.c.0.s8 %v2847
    %v2849 = vlaneseq
    %v2850 = vshrl.u32 %v2849, 7
    %v2851 = vsub.s32 %v2848, %v2850
    %v2852 = vrot.slane %v2838, %v2851
    %v2853 = vcombine.low %v2830, %v2845
    %v2854 = vcombine.high %v2830, %v2845
    %v2856 = vunpack.c.l.s4 1934713408
    %v2857 = vunpack.c.0.s8 %v2856
    %v2858 = vlaneseq
    %v2859 = vshrl.u32 %v2858, 7
    %v2860 = vsub.s32 %v2857, %v2859
    %v2861 = vrot.slane %v2853, %v2860
    %v2863 = vunpack.c.l.s4 1934713408
    %v2864 = vunpack.c.0.s8 %v2863
    %v2865 = vlaneseq
    %v2866 = vshrl.u32 %v2865, 7
    %v2867 = vsub.s32 %v2864, %v2866
    %v2868 = vrot.slane %v2854, %v2867
    %v2869 = vcombine.low %v2837, %v2852
    %v2870 = vcombine.high %v2837, %v2852
    %v2872 = vunpack.c.l.s4 1934713408
    %v2873 = vunpack.c.0.s8 %v2872
    %v2874 = vlaneseq
    %v2875 = vshrl.u32 %v2874, 7
    %v2876 = vsub.s32 %v2873, %v2875
    %v2877 = vrot.slane %v2869, %v2876
    %v2879 = vunpack.c.l.s4 1934713408
    %v2880 = vunpack.c.0.s8 %v2879
    %v2881 = vlaneseq
    %v2882 = vshrl.u32 %v2881, 7
    %v2883 = vsub.s32 %v2880, %v2882
    %v2884 = vrot.slane %v2870, %v2883
    %v2885 = vcombine.high %v2861, 0
    %v2886 = vcombine.high %v2868, 0
    %v2887 = vcombine.high %v2877, 0
    %v2888 = vcombine.high %v2884, 0
    %v2889 = vcombine.low %v2795, %v2802
    %v2891 = vunpack.c.l.s4 1983009808
    %v2892 = vunpack.c.0.s8 %v2891
    %v2893 = vlaneseq
    %v2894 = vshrl.u32 %v2893, 7
    %v2895 = vsub.s32 %v2892, %v2894
    %v2896 = vrot.slane %v2889, %v2895
    %v2897 = vcombine.low %v2819, %v2820
    %v2899 = vunpack.c.l.s4 1983009808
    %v2900 = vunpack.c.0.s8 %v2899
    %v2901 = vlaneseq
    %v2902 = vshrl.u32 %v2901, 7
    %v2903 = vsub.s32 %v2900, %v2902
    %v2904 = vrot.slane %v2897, %v2903
    %v2905 = vcombine.low %v2896, %v2904
    %v2907 = vunpack.c.l.s4 1934713408
    %v2908 = vunpack.c.0.s8 %v2907
    %v2909 = vlaneseq
    %v2910 = vshrl.u32 %v2909, 7
    %v2911 = vsub.s32 %v2908, %v2910
    %v2912 = vrot.slane %v2905, %v2911
    %v2913 = vcombine.high %v2912, 0
    %v2914 = vcombine.low %v2861, %v2868
    %v2916 = vunpack.c.l.s4 1983009808
    %v2917 = vunpack.c.0.s8 %v2916
    %v2918 = vlaneseq
    %v2919 = vshrl.u32 %v2918, 7
    %v2920 = vsub.s32 %v2917, %v2919
    %v2921 = vrot.slane %v2914, %v2920
    %v2922 = vcombine.low %v2885, %v2886
    %v2924 = vunpack.c.l.s4 1983009808
    %v2925 = vunpack.c.0.s8 %v2924
    %v2926 = vlaneseq
    %v2927 = vshrl.u32 %v2926, 7
    %v2928 = vsub.s32 %v2925, %v2927
    %v2929 = vrot.slane %v2922, %v2928
    %v2930 = vcombine.low %v2921, %v2929
    %v2932 = vunpack.c.l.s4 1934713408
    %v2933 = vunpack.c.0.s8 %v2932
    %v2934 = vlaneseq
    %v2935 = vshrl.u32 %v2934, 7
    %v2936 = vsub.s32 %v2933, %v2935
    %v2937 = vrot.slane %v2930, %v2936
    %v2938 = vcombine.high %v2937, 0
    %v2939 = vcombine.low %v2811, %v2818
    %v2941 = vunpack.c.l.s4 1983009808
    %v2942 = vunpack.c.0.s8 %v2941
    %v2943 = vlaneseq
    %v2944 = vshrl.u32 %v2943, 7
    %v2945 = vsub.s32 %v2942, %v2944
    %v2946 = vrot.slane %v2939, %v2945
    %v2947 = vcombine.low %v2821, %v2822
    %v2949 = vunpack.c.l.s4 1983009808
    %v2950 = vunpack.c.0.s8 %v2949
    %v2951 = vlaneseq
    %v2952 = vshrl.u32 %v2951, 7
    %v2953 = vsub.s32 %v2950, %v2952
    %v2954 = vrot.slane %v2947, %v2953
    %v2955 = vcombine.low %v2946, %v2954
    %v2957 = vunpack.c.l.s4 1934713408
    %v2958 = vunpack.c.0.s8 %v2957
    %v2959 = vlaneseq
    %v2960 = vshrl.u32 %v2959, 7
    %v2961 = vsub.s32 %v2958, %v2960
    %v2962 = vrot.slane %v2955, %v2961
    %v2963 = vcombine.high %v2962, 0
    %v2964 = vcombine.low %v2877, %v2884
    %v2966 = vunpack.c.l.s4 1983009808
    %v2967 = vunpack.c.0.s8 %v2966
    %v2968 = vlaneseq
    %v2969 = vshrl.u32 %v2968, 7
    %v2970 = vsub.s32 %v2967, %v2969
    %v2971 = vrot.slane %v2964, %v2970
    %v2972 = vcombine.low %v2887, %v2888
    %v2974 = vunpack.c.l.s4 1983009808
    %v2975 = vunpack.c.0.s8 %v2974
    %v2976 = vlaneseq
    %v2977 = vshrl.u32 %v2976, 7
    %v2978 = vsub.s32 %v2975, %v2977
    %v2979 = vrot.slane %v2972, %v2978
    %v2980 = vcombine.low %v2971, %v2979
    %v2982 = vunpack.c.l.s4 1934713408
    %v2983 = vunpack.c.0.s8 %v2982
    %v2984 = vlaneseq
    %v2985 = vshrl.u32 %v2984, 7
    %v2986 = vsub.s32 %v2983, %v2985
    %v2987 = vrot.slane %v2980, %v2986
    %v2988 = vcombine.high %v2987, 0
    %v2991 = vpack.i.b16 %v2937, %v2912
    %v2992 = vshrl.u32 %v2912, 16
    %v2993 = vshrl.u32 %v2937, 16
    %v2994 = vpack.i.b16 %v2993, %v2992
    %v2997 = vpack.i.b16 %v2938, %v2913
    %v2998 = vshrl.u32 %v2913, 16
    %v2999 = vshrl.u32 %v2938, 16
    %v3000 = vpack.i.b16 %v2999, %v2998
    %v3003 = vpack.i.b16 %v2987, %v2962
    %v3004 = vshrl.u32 %v2962, 16
    %v3005 = vshrl.u32 %v2987, 16
    %v3006 = vpack.i.b16 %v3005, %v3004
    %v3009 = vpack.i.b16 %v2988, %v2963
    %v3010 = vshrl.u32 %v2963, 16
    %v3011 = vshrl.u32 %v2988, 16
    %v3012 = vpack.i.b16 %v3011, %v3010
    %3014 = vrot.lane.b32.xlu0 %v2733, 120
    %v3015 = vpop.permute.xlu0 %3014
    %3016 = vrot.lane.b32.xlu0 %v2733, 112
    %v3017 = vpop.permute.xlu0 %3016
    %3018 = vrot.lane.b32.xlu0 %v2733, 104
    %v3019 = vpop.permute.xlu0 %3018
    %v3022 = vpack.i.b16 %v3015, %v2733
    %v3024 = vshrl.u32 %v2733, 16
    %v3025 = vshrl.u32 %v3015, 16
    %v3026 = vpack.i.b16 %v3025, %v3024
    %v3030 = vpack.i.b16 %v3019, %v3017
    %v3032 = vshrl.u32 %v3017, 16
    %v3033 = vshrl.u32 %v3019, 16
    %v3034 = vpack.i.b16 %v3033, %v3032
    %v3036 = vcombine.high %v3022, %v443
    %v3038 = vunpack.c.l.s4 1983009808
    %v3039 = vunpack.c.0.s8 %v3038
    %v3040 = vlaneseq
    %v3041 = vshrl.u32 %v3040, 7
    %v3042 = vsub.s32 %v3039, %v3041
    %v3043 = vrot.slane %v3022, %v3042
    %v3045 = vunpack.c.l.s4 1983009808
    %v3046 = vunpack.c.0.s8 %v3045
    %v3047 = vlaneseq
    %v3048 = vshrl.u32 %v3047, 7
    %v3049 = vsub.s32 %v3046, %v3048
    %v3050 = vrot.slane %v3036, %v3049
    %v3051 = vcombine.high %v3030, %v443
    %v3053 = vunpack.c.l.s4 1983009808
    %v3054 = vunpack.c.0.s8 %v3053
    %v3055 = vlaneseq
    %v3056 = vshrl.u32 %v3055, 7
    %v3057 = vsub.s32 %v3054, %v3056
    %v3058 = vrot.slane %v3030, %v3057
    %v3060 = vunpack.c.l.s4 1983009808
    %v3061 = vunpack.c.0.s8 %v3060
    %v3062 = vlaneseq
    %v3063 = vshrl.u32 %v3062, 7
    %v3064 = vsub.s32 %v3061, %v3063
    %v3065 = vrot.slane %v3051, %v3064
    %v3066 = vcombine.low %v3043, %v3058
    %v3067 = vcombine.high %v3043, %v3058
    %v3069 = vunpack.c.l.s4 1934713408
    %v3070 = vunpack.c.0.s8 %v3069
    %v3071 = vlaneseq
    %v3072 = vshrl.u32 %v3071, 7
    %v3073 = vsub.s32 %v3070, %v3072
    %v3074 = vrot.slane %v3066, %v3073
    %v3076 = vunpack.c.l.s4 1934713408
    %v3077 = vunpack.c.0.s8 %v3076
    %v3078 = vlaneseq
    %v3079 = vshrl.u32 %v3078, 7
    %v3080 = vsub.s32 %v3077, %v3079
    %v3081 = vrot.slane %v3067, %v3080
    %v3082 = vcombine.low %v3050, %v3065
    %v3083 = vcombine.high %v3050, %v3065
    %v3085 = vunpack.c.l.s4 1934713408
    %v3086 = vunpack.c.0.s8 %v3085
    %v3087 = vlaneseq
    %v3088 = vshrl.u32 %v3087, 7
    %v3089 = vsub.s32 %v3086, %v3088
    %v3090 = vrot.slane %v3082, %v3089
    %v3092 = vunpack.c.l.s4 1934713408
    %v3093 = vunpack.c.0.s8 %v3092
    %v3094 = vlaneseq
    %v3095 = vshrl.u32 %v3094, 7
    %v3096 = vsub.s32 %v3093, %v3095
    %v3097 = vrot.slane %v3083, %v3096
    %v3098 = vcombine.high %v3074, 0
    %v3099 = vcombine.high %v3081, 0
    %v3100 = vcombine.high %v3090, 0
    %v3101 = vcombine.high %v3097, 0
    %v3102 = vcombine.high %v3026, %v446
    %v3104 = vunpack.c.l.s4 1983009808
    %v3105 = vunpack.c.0.s8 %v3104
    %v3106 = vlaneseq
    %v3107 = vshrl.u32 %v3106, 7
    %v3108 = vsub.s32 %v3105, %v3107
    %v3109 = vrot.slane %v3026, %v3108
    %v3111 = vunpack.c.l.s4 1983009808
    %v3112 = vunpack.c.0.s8 %v3111
    %v3113 = vlaneseq
    %v3114 = vshrl.u32 %v3113, 7
    %v3115 = vsub.s32 %v3112, %v3114
    %v3116 = vrot.slane %v3102, %v3115
    %v3117 = vcombine.high %v3034, %v446
    %v3119 = vunpack.c.l.s4 1983009808
    %v3120 = vunpack.c.0.s8 %v3119
    %v3121 = vlaneseq
    %v3122 = vshrl.u32 %v3121, 7
    %v3123 = vsub.s32 %v3120, %v3122
    %v3124 = vrot.slane %v3034, %v3123
    %v3126 = vunpack.c.l.s4 1983009808
    %v3127 = vunpack.c.0.s8 %v3126
    %v3128 = vlaneseq
    %v3129 = vshrl.u32 %v3128, 7
    %v3130 = vsub.s32 %v3127, %v3129
    %v3131 = vrot.slane %v3117, %v3130
    %v3132 = vcombine.low %v3109, %v3124
    %v3133 = vcombine.high %v3109, %v3124
    %v3135 = vunpack.c.l.s4 1934713408
    %v3136 = vunpack.c.0.s8 %v3135
    %v3137 = vlaneseq
    %v3138 = vshrl.u32 %v3137, 7
    %v3139 = vsub.s32 %v3136, %v3138
    %v3140 = vrot.slane %v3132, %v3139
    %v3142 = vunpack.c.l.s4 1934713408
    %v3143 = vunpack.c.0.s8 %v3142
    %v3144 = vlaneseq
    %v3145 = vshrl.u32 %v3144, 7
    %v3146 = vsub.s32 %v3143, %v3145
    %v3147 = vrot.slane %v3133, %v3146
    %v3148 = vcombine.low %v3116, %v3131
    %v3149 = vcombine.high %v3116, %v3131
    %v3151 = vunpack.c.l.s4 1934713408
    %v3152 = vunpack.c.0.s8 %v3151
    %v3153 = vlaneseq
    %v3154 = vshrl.u32 %v3153, 7
    %v3155 = vsub.s32 %v3152, %v3154
    %v3156 = vrot.slane %v3148, %v3155
    %v3158 = vunpack.c.l.s4 1934713408
    %v3159 = vunpack.c.0.s8 %v3158
    %v3160 = vlaneseq
    %v3161 = vshrl.u32 %v3160, 7
    %v3162 = vsub.s32 %v3159, %v3161
    %v3163 = vrot.slane %v3149, %v3162
    %v3164 = vcombine.high %v3140, 0
    %v3165 = vcombine.high %v3147, 0
    %v3166 = vcombine.high %v3156, 0
    %v3167 = vcombine.high %v3163, 0
    %v3168 = vcombine.low %v3074, %v3081
    %v3170 = vunpack.c.l.s4 1983009808
    %v3171 = vunpack.c.0.s8 %v3170
    %v3172 = vlaneseq
    %v3173 = vshrl.u32 %v3172, 7
    %v3174 = vsub.s32 %v3171, %v3173
    %v3175 = vrot.slane %v3168, %v3174
    %v3176 = vcombine.low %v3098, %v3099
    %v3178 = vunpack.c.l.s4 1983009808
    %v3179 = vunpack.c.0.s8 %v3178
    %v3180 = vlaneseq
    %v3181 = vshrl.u32 %v3180, 7
    %v3182 = vsub.s32 %v3179, %v3181
    %v3183 = vrot.slane %v3176, %v3182
    %v3184 = vcombine.low %v3175, %v3183
    %v3186 = vunpack.c.l.s4 1934713408
    %v3187 = vunpack.c.0.s8 %v3186
    %v3188 = vlaneseq
    %v3189 = vshrl.u32 %v3188, 7
    %v3190 = vsub.s32 %v3187, %v3189
    %v3191 = vrot.slane %v3184, %v3190
    %v3192 = vcombine.high %v3191, 0
    %v3193 = vcombine.low %v3140, %v3147
    %v3195 = vunpack.c.l.s4 1983009808
    %v3196 = vunpack.c.0.s8 %v3195
    %v3197 = vlaneseq
    %v3198 = vshrl.u32 %v3197, 7
    %v3199 = vsub.s32 %v3196, %v3198
    %v3200 = vrot.slane %v3193, %v3199
    %v3201 = vcombine.low %v3164, %v3165
    %v3203 = vunpack.c.l.s4 1983009808
    %v3204 = vunpack.c.0.s8 %v3203
    %v3205 = vlaneseq
    %v3206 = vshrl.u32 %v3205, 7
    %v3207 = vsub.s32 %v3204, %v3206
    %v3208 = vrot.slane %v3201, %v3207
    %v3209 = vcombine.low %v3200, %v3208
    %v3211 = vunpack.c.l.s4 1934713408
    %v3212 = vunpack.c.0.s8 %v3211
    %v3213 = vlaneseq
    %v3214 = vshrl.u32 %v3213, 7
    %v3215 = vsub.s32 %v3212, %v3214
    %v3216 = vrot.slane %v3209, %v3215
    %v3217 = vcombine.high %v3216, 0
    %v3218 = vcombine.low %v3090, %v3097
    %v3220 = vunpack.c.l.s4 1983009808
    %v3221 = vunpack.c.0.s8 %v3220
    %v3222 = vlaneseq
    %v3223 = vshrl.u32 %v3222, 7
    %v3224 = vsub.s32 %v3221, %v3223
    %v3225 = vrot.slane %v3218, %v3224
    %v3226 = vcombine.low %v3100, %v3101
    %v3228 = vunpack.c.l.s4 1983009808
    %v3229 = vunpack.c.0.s8 %v3228
    %v3230 = vlaneseq
    %v3231 = vshrl.u32 %v3230, 7
    %v3232 = vsub.s32 %v3229, %v3231
    %v3233 = vrot.slane %v3226, %v3232
    %v3234 = vcombine.low %v3225, %v3233
    %v3236 = vunpack.c.l.s4 1934713408
    %v3237 = vunpack.c.0.s8 %v3236
    %v3238 = vlaneseq
    %v3239 = vshrl.u32 %v3238, 7
    %v3240 = vsub.s32 %v3237, %v3239
    %v3241 = vrot.slane %v3234, %v3240
    %v3242 = vcombine.high %v3241, 0
    %v3243 = vcombine.low %v3156, %v3163
    %v3245 = vunpack.c.l.s4 1983009808
    %v3246 = vunpack.c.0.s8 %v3245
    %v3247 = vlaneseq
    %v3248 = vshrl.u32 %v3247, 7
    %v3249 = vsub.s32 %v3246, %v3248
    %v3250 = vrot.slane %v3243, %v3249
    %v3251 = vcombine.low %v3166, %v3167
    %v3253 = vunpack.c.l.s4 1983009808
    %v3254 = vunpack.c.0.s8 %v3253
    %v3255 = vlaneseq
    %v3256 = vshrl.u32 %v3255, 7
    %v3257 = vsub.s32 %v3254, %v3256
    %v3258 = vrot.slane %v3251, %v3257
    %v3259 = vcombine.low %v3250, %v3258
    %v3261 = vunpack.c.l.s4 1934713408
    %v3262 = vunpack.c.0.s8 %v3261
    %v3263 = vlaneseq
    %v3264 = vshrl.u32 %v3263, 7
    %v3265 = vsub.s32 %v3262, %v3264
    %v3266 = vrot.slane %v3259, %v3265
    %v3267 = vcombine.high %v3266, 0
    %v3270 = vpack.i.b16 %v3216, %v3191
    %v3271 = vshrl.u32 %v3191, 16
    %v3272 = vshrl.u32 %v3216, 16
    %v3273 = vpack.i.b16 %v3272, %v3271
    %v3276 = vpack.i.b16 %v3217, %v3192
    %v3277 = vshrl.u32 %v3192, 16
    %v3278 = vshrl.u32 %v3217, 16
    %v3279 = vpack.i.b16 %v3278, %v3277
    %v3282 = vpack.i.b16 %v3266, %v3241
    %v3283 = vshrl.u32 %v3241, 16
    %v3284 = vshrl.u32 %v3266, 16
    %v3285 = vpack.i.b16 %v3284, %v3283
    %v3288 = vpack.i.b16 %v3267, %v3242
    %v3289 = vshrl.u32 %v3242, 16
    %v3290 = vshrl.u32 %v3267, 16
    %v3291 = vpack.i.b16 %v3290, %v3289
    %3292 = vrot.lane.b32.xlu0 %v2733, 96
    %v3293 = vpop.permute.xlu0 %3292
    %3294 = vrot.lane.b32.xlu0 %v3015, 96
    %v3295 = vpop.permute.xlu0 %3294
    %3296 = vrot.lane.b32.xlu0 %v3017, 96
    %v3297 = vpop.permute.xlu0 %3296
    %3298 = vrot.lane.b32.xlu0 %v3019, 96
    %v3299 = vpop.permute.xlu0 %3298
    %v3302 = vpack.i.b16 %v3295, %v3293
    %v3304 = vshrl.u32 %v3293, 16
    %v3305 = vshrl.u32 %v3295, 16
    %v3306 = vpack.i.b16 %v3305, %v3304
    %v3310 = vpack.i.b16 %v3299, %v3297
    %v3312 = vshrl.u32 %v3297, 16
    %v3313 = vshrl.u32 %v3299, 16
    %v3314 = vpack.i.b16 %v3313, %v3312
    %v3316 = vcombine.high %v3302, %v443
    %v3318 = vunpack.c.l.s4 1983009808
    %v3319 = vunpack.c.0.s8 %v3318
    %v3320 = vlaneseq
    %v3321 = vshrl.u32 %v3320, 7
    %v3322 = vsub.s32 %v3319, %v3321
    %v3323 = vrot.slane %v3302, %v3322
    %v3325 = vunpack.c.l.s4 1983009808
    %v3326 = vunpack.c.0.s8 %v3325
    %v3327 = vlaneseq
    %v3328 = vshrl.u32 %v3327, 7
    %v3329 = vsub.s32 %v3326, %v3328
    %v3330 = vrot.slane %v3316, %v3329
    %v3331 = vcombine.high %v3310, %v443
    %v3333 = vunpack.c.l.s4 1983009808
    %v3334 = vunpack.c.0.s8 %v3333
    %v3335 = vlaneseq
    %v3336 = vshrl.u32 %v3335, 7
    %v3337 = vsub.s32 %v3334, %v3336
    %v3338 = vrot.slane %v3310, %v3337
    %v3340 = vunpack.c.l.s4 1983009808
    %v3341 = vunpack.c.0.s8 %v3340
    %v3342 = vlaneseq
    %v3343 = vshrl.u32 %v3342, 7
    %v3344 = vsub.s32 %v3341, %v3343
    %v3345 = vrot.slane %v3331, %v3344
    %v3346 = vcombine.low %v3323, %v3338
    %v3347 = vcombine.high %v3323, %v3338
    %v3349 = vunpack.c.l.s4 1934713408
    %v3350 = vunpack.c.0.s8 %v3349
    %v3351 = vlaneseq
    %v3352 = vshrl.u32 %v3351, 7
    %v3353 = vsub.s32 %v3350, %v3352
    %v3354 = vrot.slane %v3346, %v3353
    %v3356 = vunpack.c.l.s4 1934713408
    %v3357 = vunpack.c.0.s8 %v3356
    %v3358 = vlaneseq
    %v3359 = vshrl.u32 %v3358, 7
    %v3360 = vsub.s32 %v3357, %v3359
    %v3361 = vrot.slane %v3347, %v3360
    %v3362 = vcombine.low %v3330, %v3345
    %v3363 = vcombine.high %v3330, %v3345
    %v3365 = vunpack.c.l.s4 1934713408
    %v3366 = vunpack.c.0.s8 %v3365
    %v3367 = vlaneseq
    %v3368 = vshrl.u32 %v3367, 7
    %v3369 = vsub.s32 %v3366, %v3368
    %v3370 = vrot.slane %v3362, %v3369
    %v3372 = vunpack.c.l.s4 1934713408
    %v3373 = vunpack.c.0.s8 %v3372
    %v3374 = vlaneseq
    %v3375 = vshrl.u32 %v3374, 7
    %v3376 = vsub.s32 %v3373, %v3375
    %v3377 = vrot.slane %v3363, %v3376
    %v3378 = vcombine.high %v3354, 0
    %v3379 = vcombine.high %v3361, 0
    %v3380 = vcombine.high %v3370, 0
    %v3381 = vcombine.high %v3377, 0
    %v3382 = vcombine.high %v3306, %v446
    %v3384 = vunpack.c.l.s4 1983009808
    %v3385 = vunpack.c.0.s8 %v3384
    %v3386 = vlaneseq
    %v3387 = vshrl.u32 %v3386, 7
    %v3388 = vsub.s32 %v3385, %v3387
    %v3389 = vrot.slane %v3306, %v3388
    %v3391 = vunpack.c.l.s4 1983009808
    %v3392 = vunpack.c.0.s8 %v3391
    %v3393 = vlaneseq
    %v3394 = vshrl.u32 %v3393, 7
    %v3395 = vsub.s32 %v3392, %v3394
    %v3396 = vrot.slane %v3382, %v3395
    %v3397 = vcombine.high %v3314, %v446
    %v3399 = vunpack.c.l.s4 1983009808
    %v3400 = vunpack.c.0.s8 %v3399
    %v3401 = vlaneseq
    %v3402 = vshrl.u32 %v3401, 7
    %v3403 = vsub.s32 %v3400, %v3402
    %v3404 = vrot.slane %v3314, %v3403
    %v3406 = vunpack.c.l.s4 1983009808
    %v3407 = vunpack.c.0.s8 %v3406
    %v3408 = vlaneseq
    %v3409 = vshrl.u32 %v3408, 7
    %v3410 = vsub.s32 %v3407, %v3409
    %v3411 = vrot.slane %v3397, %v3410
    %v3412 = vcombine.low %v3389, %v3404
    %v3413 = vcombine.high %v3389, %v3404
    %v3415 = vunpack.c.l.s4 1934713408
    %v3416 = vunpack.c.0.s8 %v3415
    %v3417 = vlaneseq
    %v3418 = vshrl.u32 %v3417, 7
    %v3419 = vsub.s32 %v3416, %v3418
    %v3420 = vrot.slane %v3412, %v3419
    %v3422 = vunpack.c.l.s4 1934713408
    %v3423 = vunpack.c.0.s8 %v3422
    %v3424 = vlaneseq
    %v3425 = vshrl.u32 %v3424, 7
    %v3426 = vsub.s32 %v3423, %v3425
    %v3427 = vrot.slane %v3413, %v3426
    %v3428 = vcombine.low %v3396, %v3411
    %v3429 = vcombine.high %v3396, %v3411
    %v3431 = vunpack.c.l.s4 1934713408
    %v3432 = vunpack.c.0.s8 %v3431
    %v3433 = vlaneseq
    %v3434 = vshrl.u32 %v3433, 7
    %v3435 = vsub.s32 %v3432, %v3434
    %v3436 = vrot.slane %v3428, %v3435
    %v3438 = vunpack.c.l.s4 1934713408
    %v3439 = vunpack.c.0.s8 %v3438
    %v3440 = vlaneseq
    %v3441 = vshrl.u32 %v3440, 7
    %v3442 = vsub.s32 %v3439, %v3441
    %v3443 = vrot.slane %v3429, %v3442
    %v3444 = vcombine.high %v3420, 0
    %v3445 = vcombine.high %v3427, 0
    %v3446 = vcombine.high %v3436, 0
    %v3447 = vcombine.high %v3443, 0
    %v3448 = vcombine.low %v3354, %v3361
    %v3450 = vunpack.c.l.s4 1983009808
    %v3451 = vunpack.c.0.s8 %v3450
    %v3452 = vlaneseq
    %v3453 = vshrl.u32 %v3452, 7
    %v3454 = vsub.s32 %v3451, %v3453
    %v3455 = vrot.slane %v3448, %v3454
    %v3456 = vcombine.low %v3378, %v3379
    %v3458 = vunpack.c.l.s4 1983009808
    %v3459 = vunpack.c.0.s8 %v3458
    %v3460 = vlaneseq
    %v3461 = vshrl.u32 %v3460, 7
    %v3462 = vsub.s32 %v3459, %v3461
    %v3463 = vrot.slane %v3456, %v3462
    %v3464 = vcombine.low %v3455, %v3463
    %v3466 = vunpack.c.l.s4 1934713408
    %v3467 = vunpack.c.0.s8 %v3466
    %v3468 = vlaneseq
    %v3469 = vshrl.u32 %v3468, 7
    %v3470 = vsub.s32 %v3467, %v3469
    %v3471 = vrot.slane %v3464, %v3470
    %v3472 = vcombine.high %v3471, 0
    %v3473 = vcombine.low %v3420, %v3427
    %v3475 = vunpack.c.l.s4 1983009808
    %v3476 = vunpack.c.0.s8 %v3475
    %v3477 = vlaneseq
    %v3478 = vshrl.u32 %v3477, 7
    %v3479 = vsub.s32 %v3476, %v3478
    %v3480 = vrot.slane %v3473, %v3479
    %v3481 = vcombine.low %v3444, %v3445
    %v3483 = vunpack.c.l.s4 1983009808
    %v3484 = vunpack.c.0.s8 %v3483
    %v3485 = vlaneseq
    %v3486 = vshrl.u32 %v3485, 7
    %v3487 = vsub.s32 %v3484, %v3486
    %v3488 = vrot.slane %v3481, %v3487
    %v3489 = vcombine.low %v3480, %v3488
    %v3491 = vunpack.c.l.s4 1934713408
    %v3492 = vunpack.c.0.s8 %v3491
    %v3493 = vlaneseq
    %v3494 = vshrl.u32 %v3493, 7
    %v3495 = vsub.s32 %v3492, %v3494
    %v3496 = vrot.slane %v3489, %v3495
    %v3497 = vcombine.high %v3496, 0
    %v3498 = vcombine.low %v3370, %v3377
    %v3500 = vunpack.c.l.s4 1983009808
    %v3501 = vunpack.c.0.s8 %v3500
    %v3502 = vlaneseq
    %v3503 = vshrl.u32 %v3502, 7
    %v3504 = vsub.s32 %v3501, %v3503
    %v3505 = vrot.slane %v3498, %v3504
    %v3506 = vcombine.low %v3380, %v3381
    %v3508 = vunpack.c.l.s4 1983009808
    %v3509 = vunpack.c.0.s8 %v3508
    %v3510 = vlaneseq
    %v3511 = vshrl.u32 %v3510, 7
    %v3512 = vsub.s32 %v3509, %v3511
    %v3513 = vrot.slane %v3506, %v3512
    %v3514 = vcombine.low %v3505, %v3513
    %v3516 = vunpack.c.l.s4 1934713408
    %v3517 = vunpack.c.0.s8 %v3516
    %v3518 = vlaneseq
    %v3519 = vshrl.u32 %v3518, 7
    %v3520 = vsub.s32 %v3517, %v3519
    %v3521 = vrot.slane %v3514, %v3520
    %v3522 = vcombine.high %v3521, 0
    %v3523 = vcombine.low %v3436, %v3443
    %v3525 = vunpack.c.l.s4 1983009808
    %v3526 = vunpack.c.0.s8 %v3525
    %v3527 = vlaneseq
    %v3528 = vshrl.u32 %v3527, 7
    %v3529 = vsub.s32 %v3526, %v3528
    %v3530 = vrot.slane %v3523, %v3529
    %v3531 = vcombine.low %v3446, %v3447
    %v3533 = vunpack.c.l.s4 1983009808
    %v3534 = vunpack.c.0.s8 %v3533
    %v3535 = vlaneseq
    %v3536 = vshrl.u32 %v3535, 7
    %v3537 = vsub.s32 %v3534, %v3536
    %v3538 = vrot.slane %v3531, %v3537
    %v3539 = vcombine.low %v3530, %v3538
    %v3541 = vunpack.c.l.s4 1934713408
    %v3542 = vunpack.c.0.s8 %v3541
    %v3543 = vlaneseq
    %v3544 = vshrl.u32 %v3543, 7
    %v3545 = vsub.s32 %v3542, %v3544
    %v3546 = vrot.slane %v3539, %v3545
    %v3547 = vcombine.high %v3546, 0
    %v3550 = vpack.i.b16 %v3496, %v3471
    %v3551 = vshrl.u32 %v3471, 16
    %v3552 = vshrl.u32 %v3496, 16
    %v3553 = vpack.i.b16 %v3552, %v3551
    %v3556 = vpack.i.b16 %v3497, %v3472
    %v3557 = vshrl.u32 %v3472, 16
    %v3558 = vshrl.u32 %v3497, 16
    %v3559 = vpack.i.b16 %v3558, %v3557
    %v3562 = vpack.i.b16 %v3546, %v3521
    %v3563 = vshrl.u32 %v3521, 16
    %v3564 = vshrl.u32 %v3546, 16
    %v3565 = vpack.i.b16 %v3564, %v3563
    %v3568 = vpack.i.b16 %v3547, %v3522
    %v3569 = vshrl.u32 %v3522, 16
    %v3570 = vshrl.u32 %v3547, 16
    %v3571 = vpack.i.b16 %v3570, %v3569
    %v3573 = vsel %vm1270, %v2991, 0
    %v3576 = vsel %vm1270, %v3270, 0
    %3578 = vmatprep.subr.bf16.mxu0 0
    %3579 = vmatpush1.bf16.xpose.msra.mxu0 %v3576
    %3580 = vmatprep.subr.bf16.mxu0 0
    %3581 = vmatpush1.bf16.xpose.msra.mxu0 0
    %3582 = vmatprep.subr.bf16.mxu0 0
    %3583 = vmatpush1.bf16.xpose.msra.mxu0 0
    %3584 = vmatprep.subr.bf16.mxu0 0
    %3585 = vmatpush1.bf16.xpose.msra.mxu0 0
    %3586 = vmatprep.subr.bf16.mxu0 0
    %3587 = vmatpush1.bf16.xpose.msra.mxu0 0
    %3588 = vmatprep.subr.bf16.mxu0 0
    %3589 = vmatpush1.bf16.xpose.msra.mxu0 0
    %3590 = vmatprep.subr.bf16.mxu0 0
    %3591 = vmatpush1.bf16.xpose.msra.mxu0 0
    %3592 = vmatprep.subr.bf16.mxu0 0
    %3593 = vmatpush1.bf16.xpose.msra.mxu0 0
    %3594 = vmatprep.subr.bf16.mxu0 0
    %3595 = vmatpush1.bf16.xpose.msra.mxu0 0
    %3596 = vmatprep.subr.bf16.mxu0 0
    %3597 = vmatpush1.bf16.xpose.msra.mxu0 0
    %3598 = vmatprep.subr.bf16.mxu0 0
    %3599 = vmatpush1.bf16.xpose.msra.mxu0 0
    %3600 = vmatprep.subr.bf16.mxu0 0
    %3601 = vmatpush1.bf16.xpose.msra.mxu0 0
    %3602 = vmatprep.subr.bf16.mxu0 0
    %3603 = vmatpush1.bf16.xpose.msra.mxu0 0
    %3604 = vmatprep.subr.bf16.mxu0 0
    %3605 = vmatpush1.bf16.xpose.msra.mxu0 0
    %3606 = vmatprep.subr.bf16.mxu0 0
    %3607 = vmatpush1.bf16.xpose.msra.mxu0 0
    %3608 = vmatprep.subr.bf16.mxu0 0
    %3609 = vmatpush1.bf16.xpose.msra.mxu0 0
    %3610 = vmatprep.mubr.bf16.mxu0 0
    %3611 = vmatmul.mubr.bf16.gmra.mrb[0].mxu0 %v3573
    %v3612 = vpop.f32.mrb[0].mxu0
    %v3613 = vadd.f32 0.0, %v3612
    %v3614 = vpop.f32.mrb[0].mxu0
    %v3615 = vpop.f32.mrb[0].mxu0
    %v3616 = vpop.f32.mrb[0].mxu0
    %3617 = vdwg.mxu0
    %v3619 = vsel %vm1270, %v2994, 0
    %v3622 = vsel %vm1270, %v3273, 0
    %3624 = vmatprep.subr.bf16.mxu0 0
    %3625 = vmatpush1.bf16.xpose.msra.mxu0 %v3622
    %3626 = vmatprep.subr.bf16.mxu0 0
    %3627 = vmatpush1.bf16.xpose.msra.mxu0 0
    %3628 = vmatprep.subr.bf16.mxu0 0
    %3629 = vmatpush1.bf16.xpose.msra.mxu0 0
    %3630 = vmatprep.subr.bf16.mxu0 0
    %3631 = vmatpush1.bf16.xpose.msra.mxu0 0
    %3632 = vmatprep.subr.bf16.mxu0 0
    %3633 = vmatpush1.bf16.xpose.msra.mxu0 0
    %3634 = vmatprep.subr.bf16.mxu0 0
    %3635 = vmatpush1.bf16.xpose.msra.mxu0 0
    %3636 = vmatprep.subr.bf16.mxu0 0
    %3637 = vmatpush1.bf16.xpose.msra.mxu0 0
    %3638 = vmatprep.subr.bf16.mxu0 0
    %3639 = vmatpush1.bf16.xpose.msra.mxu0 0
    %3640 = vmatprep.subr.bf16.mxu0 0
    %3641 = vmatpush1.bf16.xpose.msra.mxu0 0
    %3642 = vmatprep.subr.bf16.mxu0 0
    %3643 = vmatpush1.bf16.xpose.msra.mxu0 0
    %3644 = vmatprep.subr.bf16.mxu0 0
    %3645 = vmatpush1.bf16.xpose.msra.mxu0 0
    %3646 = vmatprep.subr.bf16.mxu0 0
    %3647 = vmatpush1.bf16.xpose.msra.mxu0 0
    %3648 = vmatprep.subr.bf16.mxu0 0
    %3649 = vmatpush1.bf16.xpose.msra.mxu0 0
    %3650 = vmatprep.subr.bf16.mxu0 0
    %3651 = vmatpush1.bf16.xpose.msra.mxu0 0
    %3652 = vmatprep.subr.bf16.mxu0 0
    %3653 = vmatpush1.bf16.xpose.msra.mxu0 0
    %3654 = vmatprep.subr.bf16.mxu0 0
    %3655 = vmatpush1.bf16.xpose.msra.mxu0 0
    %3656 = vmatprep.mubr.bf16.mxu0 0
    %3657 = vmatmul.mubr.bf16.gmra.mrb[0].mxu0 %v3619
    %v3658 = vpop.f32.mrb[0].mxu0
    %v3659 = vadd.f32 0.0, %v3658
    %v3660 = vpop.f32.mrb[0].mxu0
    %v3661 = vpop.f32.mrb[0].mxu0
    %v3662 = vpop.f32.mrb[0].mxu0
    %3663 = vdwg.mxu0
    %v3665 = vsel %vm1270, %v2997, 0
    %v3668 = vsel %vm1270, %v3276, 0
    %3670 = vmatprep.subr.bf16.mxu0 0
    %3671 = vmatpush1.bf16.xpose.msra.mxu0 %v3668
    %3672 = vmatprep.subr.bf16.mxu0 0
    %3673 = vmatpush1.bf16.xpose.msra.mxu0 0
    %3674 = vmatprep.subr.bf16.mxu0 0
    %3675 = vmatpush1.bf16.xpose.msra.mxu0 0
    %3676 = vmatprep.subr.bf16.mxu0 0
    %3677 = vmatpush1.bf16.xpose.msra.mxu0 0
    %3678 = vmatprep.subr.bf16.mxu0 0
    %3679 = vmatpush1.bf16.xpose.msra.mxu0 0
    %3680 = vmatprep.subr.bf16.mxu0 0
    %3681 = vmatpush1.bf16.xpose.msra.mxu0 0
    %3682 = vmatprep.subr.bf16.mxu0 0
    %3683 = vmatpush1.bf16.xpose.msra.mxu0 0
    %3684 = vmatprep.subr.bf16.mxu0 0
    %3685 = vmatpush1.bf16.xpose.msra.mxu0 0
    %3686 = vmatprep.subr.bf16.mxu0 0
    %3687 = vmatpush1.bf16.xpose.msra.mxu0 0
    %3688 = vmatprep.subr.bf16.mxu0 0
    %3689 = vmatpush1.bf16.xpose.msra.mxu0 0
    %3690 = vmatprep.subr.bf16.mxu0 0
    %3691 = vmatpush1.bf16.xpose.msra.mxu0 0
    %3692 = vmatprep.subr.bf16.mxu0 0
    %3693 = vmatpush1.bf16.xpose.msra.mxu0 0
    %3694 = vmatprep.subr.bf16.mxu0 0
    %3695 = vmatpush1.bf16.xpose.msra.mxu0 0
    %3696 = vmatprep.subr.bf16.mxu0 0
    %3697 = vmatpush1.bf16.xpose.msra.mxu0 0
    %3698 = vmatprep.subr.bf16.mxu0 0
    %3699 = vmatpush1.bf16.xpose.msra.mxu0 0
    %3700 = vmatprep.subr.bf16.mxu0 0
    %3701 = vmatpush1.bf16.xpose.msra.mxu0 0
    %3702 = vmatprep.mubr.bf16.mxu0 0
    %3703 = vmatmul.mubr.bf16.gmra.mrb[0].mxu0 %v3665
    %v3704 = vpop.f32.mrb[0].mxu0
    %v3705 = vadd.f32 0.0, %v3704
    %v3706 = vpop.f32.mrb[0].mxu0
    %v3707 = vpop.f32.mrb[0].mxu0
    %v3708 = vpop.f32.mrb[0].mxu0
    %3709 = vdwg.mxu0
    %v3711 = vsel %vm1270, %v3000, 0
    %v3714 = vsel %vm1270, %v3279, 0
    %3716 = vmatprep.subr.bf16.mxu0 0
    %3717 = vmatpush1.bf16.xpose.msra.mxu0 %v3714
    %3718 = vmatprep.subr.bf16.mxu0 0
    %3719 = vmatpush1.bf16.xpose.msra.mxu0 0
    %3720 = vmatprep.subr.bf16.mxu0 0
    %3721 = vmatpush1.bf16.xpose.msra.mxu0 0
    %3722 = vmatprep.subr.bf16.mxu0 0
    %3723 = vmatpush1.bf16.xpose.msra.mxu0 0
    %3724 = vmatprep.subr.bf16.mxu0 0
    %3725 = vmatpush1.bf16.xpose.msra.mxu0 0
    %3726 = vmatprep.subr.bf16.mxu0 0
    %3727 = vmatpush1.bf16.xpose.msra.mxu0 0
    %3728 = vmatprep.subr.bf16.mxu0 0
    %3729 = vmatpush1.bf16.xpose.msra.mxu0 0
    %3730 = vmatprep.subr.bf16.mxu0 0
    %3731 = vmatpush1.bf16.xpose.msra.mxu0 0
    %3732 = vmatprep.subr.bf16.mxu0 0
    %3733 = vmatpush1.bf16.xpose.msra.mxu0 0
    %3734 = vmatprep.subr.bf16.mxu0 0
    %3735 = vmatpush1.bf16.xpose.msra.mxu0 0
    %3736 = vmatprep.subr.bf16.mxu0 0
    %3737 = vmatpush1.bf16.xpose.msra.mxu0 0
    %3738 = vmatprep.subr.bf16.mxu0 0
    %3739 = vmatpush1.bf16.xpose.msra.mxu0 0
    %3740 = vmatprep.subr.bf16.mxu0 0
    %3741 = vmatpush1.bf16.xpose.msra.mxu0 0
    %3742 = vmatprep.subr.bf16.mxu0 0
    %3743 = vmatpush1.bf16.xpose.msra.mxu0 0
    %3744 = vmatprep.subr.bf16.mxu0 0
    %3745 = vmatpush1.bf16.xpose.msra.mxu0 0
    %3746 = vmatprep.subr.bf16.mxu0 0
    %3747 = vmatpush1.bf16.xpose.msra.mxu0 0
    %3748 = vmatprep.mubr.bf16.mxu0 0
    %3749 = vmatmul.mubr.bf16.gmra.mrb[0].mxu0 %v3711
    %v3750 = vpop.f32.mrb[0].mxu0
    %v3751 = vadd.f32 0.0, %v3750
    %v3752 = vpop.f32.mrb[0].mxu0
    %v3753 = vpop.f32.mrb[0].mxu0
    %v3754 = vpop.f32.mrb[0].mxu0
    %3755 = vdwg.mxu0
    %v3757 = vsel %vm1270, %v3003, 0
    %v3760 = vsel %vm1270, %v3282, 0
    %3762 = vmatprep.subr.bf16.mxu0 0
    %3763 = vmatpush1.bf16.xpose.msra.mxu0 %v3760
    %3764 = vmatprep.subr.bf16.mxu0 0
    %3765 = vmatpush1.bf16.xpose.msra.mxu0 0
    %3766 = vmatprep.subr.bf16.mxu0 0
    %3767 = vmatpush1.bf16.xpose.msra.mxu0 0
    %3768 = vmatprep.subr.bf16.mxu0 0
    %3769 = vmatpush1.bf16.xpose.msra.mxu0 0
    %3770 = vmatprep.subr.bf16.mxu0 0
    %3771 = vmatpush1.bf16.xpose.msra.mxu0 0
    %3772 = vmatprep.subr.bf16.mxu0 0
    %3773 = vmatpush1.bf16.xpose.msra.mxu0 0
    %3774 = vmatprep.subr.bf16.mxu0 0
    %3775 = vmatpush1.bf16.xpose.msra.mxu0 0
    %3776 = vmatprep.subr.bf16.mxu0 0
    %3777 = vmatpush1.bf16.xpose.msra.mxu0 0
    %3778 = vmatprep.subr.bf16.mxu0 0
    %3779 = vmatpush1.bf16.xpose.msra.mxu0 0
    %3780 = vmatprep.subr.bf16.mxu0 0
    %3781 = vmatpush1.bf16.xpose.msra.mxu0 0
    %3782 = vmatprep.subr.bf16.mxu0 0
    %3783 = vmatpush1.bf16.xpose.msra.mxu0 0
    %3784 = vmatprep.subr.bf16.mxu0 0
    %3785 = vmatpush1.bf16.xpose.msra.mxu0 0
    %3786 = vmatprep.subr.bf16.mxu0 0
    %3787 = vmatpush1.bf16.xpose.msra.mxu0 0
    %3788 = vmatprep.subr.bf16.mxu0 0
    %3789 = vmatpush1.bf16.xpose.msra.mxu0 0
    %3790 = vmatprep.subr.bf16.mxu0 0
    %3791 = vmatpush1.bf16.xpose.msra.mxu0 0
    %3792 = vmatprep.subr.bf16.mxu0 0
    %3793 = vmatpush1.bf16.xpose.msra.mxu0 0
    %3794 = vmatprep.mubr.bf16.mxu0 0
    %3795 = vmatmul.mubr.bf16.gmra.mrb[0].mxu0 %v3757
    %v3796 = vpop.f32.mrb[0].mxu0
    %v3797 = vadd.f32 0.0, %v3796
    %v3798 = vpop.f32.mrb[0].mxu0
    %v3799 = vpop.f32.mrb[0].mxu0
    %v3800 = vpop.f32.mrb[0].mxu0
    %3801 = vdwg.mxu0
    %v3803 = vsel %vm1270, %v3006, 0
    %v3806 = vsel %vm1270, %v3285, 0
    %3808 = vmatprep.subr.bf16.mxu0 0
    %3809 = vmatpush1.bf16.xpose.msra.mxu0 %v3806
    %3810 = vmatprep.subr.bf16.mxu0 0
    %3811 = vmatpush1.bf16.xpose.msra.mxu0 0
    %3812 = vmatprep.subr.bf16.mxu0 0
    %3813 = vmatpush1.bf16.xpose.msra.mxu0 0
    %3814 = vmatprep.subr.bf16.mxu0 0
    %3815 = vmatpush1.bf16.xpose.msra.mxu0 0
    %3816 = vmatprep.subr.bf16.mxu0 0
    %3817 = vmatpush1.bf16.xpose.msra.mxu0 0
    %3818 = vmatprep.subr.bf16.mxu0 0
    %3819 = vmatpush1.bf16.xpose.msra.mxu0 0
    %3820 = vmatprep.subr.bf16.mxu0 0
    %3821 = vmatpush1.bf16.xpose.msra.mxu0 0
    %3822 = vmatprep.subr.bf16.mxu0 0
    %3823 = vmatpush1.bf16.xpose.msra.mxu0 0
    %3824 = vmatprep.subr.bf16.mxu0 0
    %3825 = vmatpush1.bf16.xpose.msra.mxu0 0
    %3826 = vmatprep.subr.bf16.mxu0 0
    %3827 = vmatpush1.bf16.xpose.msra.mxu0 0
    %3828 = vmatprep.subr.bf16.mxu0 0
    %3829 = vmatpush1.bf16.xpose.msra.mxu0 0
    %3830 = vmatprep.subr.bf16.mxu0 0
    %3831 = vmatpush1.bf16.xpose.msra.mxu0 0
    %3832 = vmatprep.subr.bf16.mxu0 0
    %3833 = vmatpush1.bf16.xpose.msra.mxu0 0
    %3834 = vmatprep.subr.bf16.mxu0 0
    %3835 = vmatpush1.bf16.xpose.msra.mxu0 0
    %3836 = vmatprep.subr.bf16.mxu0 0
    %3837 = vmatpush1.bf16.xpose.msra.mxu0 0
    %3838 = vmatprep.subr.bf16.mxu0 0
    %3839 = vmatpush1.bf16.xpose.msra.mxu0 0
    %3840 = vmatprep.mubr.bf16.mxu0 0
    %3841 = vmatmul.mubr.bf16.gmra.mrb[0].mxu0 %v3803
    %v3842 = vpop.f32.mrb[0].mxu0
    %v3843 = vadd.f32 0.0, %v3842
    %v3844 = vpop.f32.mrb[0].mxu0
    %v3845 = vpop.f32.mrb[0].mxu0
    %v3846 = vpop.f32.mrb[0].mxu0
    %3847 = vdwg.mxu0
    %v3849 = vsel %vm1270, %v3009, 0
    %v3852 = vsel %vm1270, %v3288, 0
    %3854 = vmatprep.subr.bf16.mxu0 0
    %3855 = vmatpush1.bf16.xpose.msra.mxu0 %v3852
    %3856 = vmatprep.subr.bf16.mxu0 0
    %3857 = vmatpush1.bf16.xpose.msra.mxu0 0
    %3858 = vmatprep.subr.bf16.mxu0 0
    %3859 = vmatpush1.bf16.xpose.msra.mxu0 0
    %3860 = vmatprep.subr.bf16.mxu0 0
    %3861 = vmatpush1.bf16.xpose.msra.mxu0 0
    %3862 = vmatprep.subr.bf16.mxu0 0
    %3863 = vmatpush1.bf16.xpose.msra.mxu0 0
    %3864 = vmatprep.subr.bf16.mxu0 0
    %3865 = vmatpush1.bf16.xpose.msra.mxu0 0
    %3866 = vmatprep.subr.bf16.mxu0 0
    %3867 = vmatpush1.bf16.xpose.msra.mxu0 0
    %3868 = vmatprep.subr.bf16.mxu0 0
    %3869 = vmatpush1.bf16.xpose.msra.mxu0 0
    %3870 = vmatprep.subr.bf16.mxu0 0
    %3871 = vmatpush1.bf16.xpose.msra.mxu0 0
    %3872 = vmatprep.subr.bf16.mxu0 0
    %3873 = vmatpush1.bf16.xpose.msra.mxu0 0
    %3874 = vmatprep.subr.bf16.mxu0 0
    %3875 = vmatpush1.bf16.xpose.msra.mxu0 0
    %3876 = vmatprep.subr.bf16.mxu0 0
    %3877 = vmatpush1.bf16.xpose.msra.mxu0 0
    %3878 = vmatprep.subr.bf16.mxu0 0
    %3879 = vmatpush1.bf16.xpose.msra.mxu0 0
    %3880 = vmatprep.subr.bf16.mxu0 0
    %3881 = vmatpush1.bf16.xpose.msra.mxu0 0
    %3882 = vmatprep.subr.bf16.mxu0 0
    %3883 = vmatpush1.bf16.xpose.msra.mxu0 0
    %3884 = vmatprep.subr.bf16.mxu0 0
    %3885 = vmatpush1.bf16.xpose.msra.mxu0 0
    %3886 = vmatprep.mubr.bf16.mxu0 0
    %3887 = vmatmul.mubr.bf16.gmra.mrb[0].mxu0 %v3849
    %v3888 = vpop.f32.mrb[0].mxu0
    %v3889 = vadd.f32 0.0, %v3888
    %v3890 = vpop.f32.mrb[0].mxu0
    %v3891 = vpop.f32.mrb[0].mxu0
    %v3892 = vpop.f32.mrb[0].mxu0
    %3893 = vdwg.mxu0
    %v3895 = vsel %vm1270, %v3012, 0
    %v3898 = vsel %vm1270, %v3291, 0
    %3900 = vmatprep.subr.bf16.mxu0 0
    %3901 = vmatpush1.bf16.xpose.msra.mxu0 %v3898
    %3902 = vmatprep.subr.bf16.mxu0 0
    %3903 = vmatpush1.bf16.xpose.msra.mxu0 0
    %3904 = vmatprep.subr.bf16.mxu0 0
    %3905 = vmatpush1.bf16.xpose.msra.mxu0 0
    %3906 = vmatprep.subr.bf16.mxu0 0
    %3907 = vmatpush1.bf16.xpose.msra.mxu0 0
    %3908 = vmatprep.subr.bf16.mxu0 0
    %3909 = vmatpush1.bf16.xpose.msra.mxu0 0
    %3910 = vmatprep.subr.bf16.mxu0 0
    %3911 = vmatpush1.bf16.xpose.msra.mxu0 0
    %3912 = vmatprep.subr.bf16.mxu0 0
    %3913 = vmatpush1.bf16.xpose.msra.mxu0 0
    %3914 = vmatprep.subr.bf16.mxu0 0
    %3915 = vmatpush1.bf16.xpose.msra.mxu0 0
    %3916 = vmatprep.subr.bf16.mxu0 0
    %3917 = vmatpush1.bf16.xpose.msra.mxu0 0
    %3918 = vmatprep.subr.bf16.mxu0 0
    %3919 = vmatpush1.bf16.xpose.msra.mxu0 0
    %3920 = vmatprep.subr.bf16.mxu0 0
    %3921 = vmatpush1.bf16.xpose.msra.mxu0 0
    %3922 = vmatprep.subr.bf16.mxu0 0
    %3923 = vmatpush1.bf16.xpose.msra.mxu0 0
    %3924 = vmatprep.subr.bf16.mxu0 0
    %3925 = vmatpush1.bf16.xpose.msra.mxu0 0
    %3926 = vmatprep.subr.bf16.mxu0 0
    %3927 = vmatpush1.bf16.xpose.msra.mxu0 0
    %3928 = vmatprep.subr.bf16.mxu0 0
    %3929 = vmatpush1.bf16.xpose.msra.mxu0 0
    %3930 = vmatprep.subr.bf16.mxu0 0
    %3931 = vmatpush1.bf16.xpose.msra.mxu0 0
    %3932 = vmatprep.mubr.bf16.mxu0 0
    %3933 = vmatmul.mubr.bf16.gmra.mrb[0].mxu0 %v3895
    %v3934 = vpop.f32.mrb[0].mxu0
    %v3935 = vadd.f32 0.0, %v3934
    %v3936 = vpop.f32.mrb[0].mxu0
    %v3937 = vpop.f32.mrb[0].mxu0
    %v3938 = vpop.f32.mrb[0].mxu0
    %3939 = vdwg.mxu0
    %v3940 = vsel %vm1270, %v3613, -inf
    %3941 = vmax.xlane.f32.xlu0 %v3940
    %v3942 = vpop.xlane.xlu0 %3941
    %v3943 = vsel %vm1270, %v3659, -inf
    %3944 = vmax.xlane.f32.xlu0 %v3943
    %v3945 = vpop.xlane.xlu0 %3944
    %v3946 = vsel %vm1270, %v3705, -inf
    %3947 = vmax.xlane.f32.xlu0 %v3946
    %v3948 = vpop.xlane.xlu0 %3947
    %v3949 = vsel %vm1270, %v3751, -inf
    %3950 = vmax.xlane.f32.xlu0 %v3949
    %v3951 = vpop.xlane.xlu0 %3950
    %v3952 = vsel %vm1270, %v3797, -inf
    %3953 = vmax.xlane.f32.xlu0 %v3952
    %v3954 = vpop.xlane.xlu0 %3953
    %v3955 = vsel %vm1270, %v3843, -inf
    %3956 = vmax.xlane.f32.xlu0 %v3955
    %v3957 = vpop.xlane.xlu0 %3956
    %v3958 = vsel %vm1270, %v3889, -inf
    %3959 = vmax.xlane.f32.xlu0 %v3958
    %v3960 = vpop.xlane.xlu0 %3959
    %v3961 = vsel %vm1270, %v3935, -inf
    %3962 = vmax.xlane.f32.xlu0 %v3961
    %v3963 = vpop.xlane.xlu0 %3962
    %v3964 = vsub.f32 -inf, %v3942
    %v3965 = vsub.f32 -inf, %v3945
    %v3966 = vsub.f32 -inf, %v3948
    %v3967 = vsub.f32 -inf, %v3951
    %v3968 = vsub.f32 -inf, %v3954
    %v3969 = vsub.f32 -inf, %v3957
    %v3970 = vsub.f32 -inf, %v3960
    %v3971 = vsub.f32 -inf, %v3963
    %v3972 = vmul.f32 %v3964, 1.442695
    %v3973 = vpow.pop %v3972
    %v3974 = vmul.f32 %v3965, 1.442695
    %v3975 = vpow.pop %v3974
    %v3976 = vmul.f32 %v3966, 1.442695
    %v3977 = vpow.pop %v3976
    %v3978 = vmul.f32 %v3967, 1.442695
    %v3979 = vpow.pop %v3978
    %v3980 = vmul.f32 %v3968, 1.442695
    %v3981 = vpow.pop %v3980
    %v3982 = vmul.f32 %v3969, 1.442695
    %v3983 = vpow.pop %v3982
    %v3984 = vmul.f32 %v3970, 1.442695
    %v3985 = vpow.pop %v3984
    %v3986 = vmul.f32 %v3971, 1.442695
    %v3987 = vpow.pop %v3986
    %v3988 = vsub.f32 %v3613, %v3942
    %v3989 = vsub.f32 %v3659, %v3945
    %v3990 = vsub.f32 %v3705, %v3948
    %v3991 = vsub.f32 %v3751, %v3951
    %v3992 = vsub.f32 %v3797, %v3954
    %v3993 = vsub.f32 %v3843, %v3957
    %v3994 = vsub.f32 %v3889, %v3960
    %v3995 = vsub.f32 %v3935, %v3963
    %v3996 = vmul.f32 %v3988, 1.442695
    %v3997 = vpow.pop %v3996
    %v3998 = vmul.f32 %v3989, 1.442695
    %v3999 = vpow.pop %v3998
    %v4000 = vmul.f32 %v3990, 1.442695
    %v4001 = vpow.pop %v4000
    %v4002 = vmul.f32 %v3991, 1.442695
    %v4003 = vpow.pop %v4002
    %v4004 = vmul.f32 %v3992, 1.442695
    %v4005 = vpow.pop %v4004
    %v4006 = vmul.f32 %v3993, 1.442695
    %v4007 = vpow.pop %v4006
    %v4008 = vmul.f32 %v3994, 1.442695
    %v4009 = vpow.pop %v4008
    %v4010 = vmul.f32 %v3995, 1.442695
    %v4011 = vpow.pop %v4010
    %v4012 = vmul.f32 %v3973, 0.0
    %v4013 = vmul.f32 %v3975, 0.0
    %v4014 = vmul.f32 %v3977, 0.0
    %v4015 = vmul.f32 %v3979, 0.0
    %v4016 = vmul.f32 %v3981, 0.0
    %v4017 = vmul.f32 %v3983, 0.0
    %v4018 = vmul.f32 %v3985, 0.0
    %v4019 = vmul.f32 %v3987, 0.0
    %v4020 = vsel %vm1270, %v3997, 0.0
    %4021 = vadd.xlane.f32.xlu0 %v4020
    %v4022 = vpop.xlane.xlu0 %4021
    %v4023 = vsel %vm1270, %v3999, 0.0
    %4024 = vadd.xlane.f32.xlu0 %v4023
    %v4025 = vpop.xlane.xlu0 %4024
    %v4026 = vsel %vm1270, %v4001, 0.0
    %4027 = vadd.xlane.f32.xlu0 %v4026
    %v4028 = vpop.xlane.xlu0 %4027
    %v4029 = vsel %vm1270, %v4003, 0.0
    %4030 = vadd.xlane.f32.xlu0 %v4029
    %v4031 = vpop.xlane.xlu0 %4030
    %v4032 = vsel %vm1270, %v4005, 0.0
    %4033 = vadd.xlane.f32.xlu0 %v4032
    %v4034 = vpop.xlane.xlu0 %4033
    %v4035 = vsel %vm1270, %v4007, 0.0
    %4036 = vadd.xlane.f32.xlu0 %v4035
    %v4037 = vpop.xlane.xlu0 %4036
    %v4038 = vsel %vm1270, %v4009, 0.0
    %4039 = vadd.xlane.f32.xlu0 %v4038
    %v4040 = vpop.xlane.xlu0 %4039
    %v4041 = vsel %vm1270, %v4011, 0.0
    %4042 = vadd.xlane.f32.xlu0 %v4041
    %v4043 = vpop.xlane.xlu0 %4042
    %v4044 = vadd.f32 %v4012, %v4022
    %v4045 = vadd.f32 %v4013, %v4025
    %v4046 = vadd.f32 %v4014, %v4028
    %v4047 = vadd.f32 %v4015, %v4031
    %v4048 = vadd.f32 %v4016, %v4034
    %v4049 = vadd.f32 %v4017, %v4037
    %v4050 = vadd.f32 %v4018, %v4040
    %v4051 = vadd.f32 %v4019, %v4043
    %v4052 = vpack.c.bf16 %v3997, %v3997
    %v4053 = vpack.c.bf16 %v3999, %v3999
    %v4054 = vpack.c.bf16 %v4001, %v4001
    %v4055 = vpack.c.bf16 %v4003, %v4003
    %v4056 = vpack.c.bf16 %v4005, %v4005
    %v4057 = vpack.c.bf16 %v4007, %v4007
    %v4058 = vpack.c.bf16 %v4009, %v4009
    %v4059 = vpack.c.bf16 %v4011, %v4011
    %v4061 = vsel %vm1270, %v4052, 0
    %v4064 = vsel %vm1762, %v3550, 0
    %4066 = vmatprep.subr.bf16.mxu0 0
    %4067 = vmatpush1.bf16.msra.mxu0 %v4064
    %4068 = vmatprep.subr.bf16.mxu0 0
    %4069 = vmatpush1.bf16.msra.mxu0 0
    %4070 = vmatprep.subr.bf16.mxu0 0
    %4071 = vmatpush1.bf16.msra.mxu0 0
    %4072 = vmatprep.subr.bf16.mxu0 0
    %4073 = vmatpush1.bf16.msra.mxu0 0
    %4074 = vmatprep.subr.bf16.mxu0 0
    %4075 = vmatpush1.bf16.msra.mxu0 0
    %4076 = vmatprep.subr.bf16.mxu0 0
    %4077 = vmatpush1.bf16.msra.mxu0 0
    %4078 = vmatprep.subr.bf16.mxu0 0
    %4079 = vmatpush1.bf16.msra.mxu0 0
    %4080 = vmatprep.subr.bf16.mxu0 0
    %4081 = vmatpush1.bf16.msra.mxu0 0
    %4082 = vmatprep.subr.bf16.mxu0 0
    %4083 = vmatpush1.bf16.msra.mxu0 0
    %4084 = vmatprep.subr.bf16.mxu0 0
    %4085 = vmatpush1.bf16.msra.mxu0 0
    %4086 = vmatprep.subr.bf16.mxu0 0
    %4087 = vmatpush1.bf16.msra.mxu0 0
    %4088 = vmatprep.subr.bf16.mxu0 0
    %4089 = vmatpush1.bf16.msra.mxu0 0
    %4090 = vmatprep.subr.bf16.mxu0 0
    %4091 = vmatpush1.bf16.msra.mxu0 0
    %4092 = vmatprep.subr.bf16.mxu0 0
    %4093 = vmatpush1.bf16.msra.mxu0 0
    %4094 = vmatprep.subr.bf16.mxu0 0
    %4095 = vmatpush1.bf16.msra.mxu0 0
    %4096 = vmatprep.subr.bf16.mxu0 0
    %4097 = vmatpush1.bf16.msra.mxu0 0
    %4098 = vmatprep.mubr.bf16.mxu0 0
    %4099 = vmatmul.mubr.bf16.gmra.mrb[0].mxu0 %v4061
    %v4100 = vpop.f32.mrb[0].mxu0
    %v4101 = vadd.f32 0.0, %v4100
    %v4102 = vpop.f32.mrb[0].mxu0
    %v4103 = vpop.f32.mrb[0].mxu0
    %v4104 = vpop.f32.mrb[0].mxu0
    %4105 = vdwg.mxu0
    %v4107 = vsel %vm1270, %v4053, 0
    %v4110 = vsel %vm1762, %v3553, 0
    %4112 = vmatprep.subr.bf16.mxu0 0
    %4113 = vmatpush1.bf16.msra.mxu0 %v4110
    %4114 = vmatprep.subr.bf16.mxu0 0
    %4115 = vmatpush1.bf16.msra.mxu0 0
    %4116 = vmatprep.subr.bf16.mxu0 0
    %4117 = vmatpush1.bf16.msra.mxu0 0
    %4118 = vmatprep.subr.bf16.mxu0 0
    %4119 = vmatpush1.bf16.msra.mxu0 0
    %4120 = vmatprep.subr.bf16.mxu0 0
    %4121 = vmatpush1.bf16.msra.mxu0 0
    %4122 = vmatprep.subr.bf16.mxu0 0
    %4123 = vmatpush1.bf16.msra.mxu0 0
    %4124 = vmatprep.subr.bf16.mxu0 0
    %4125 = vmatpush1.bf16.msra.mxu0 0
    %4126 = vmatprep.subr.bf16.mxu0 0
    %4127 = vmatpush1.bf16.msra.mxu0 0
    %4128 = vmatprep.subr.bf16.mxu0 0
    %4129 = vmatpush1.bf16.msra.mxu0 0
    %4130 = vmatprep.subr.bf16.mxu0 0
    %4131 = vmatpush1.bf16.msra.mxu0 0
    %4132 = vmatprep.subr.bf16.mxu0 0
    %4133 = vmatpush1.bf16.msra.mxu0 0
    %4134 = vmatprep.subr.bf16.mxu0 0
    %4135 = vmatpush1.bf16.msra.mxu0 0
    %4136 = vmatprep.subr.bf16.mxu0 0
    %4137 = vmatpush1.bf16.msra.mxu0 0
    %4138 = vmatprep.subr.bf16.mxu0 0
    %4139 = vmatpush1.bf16.msra.mxu0 0
    %4140 = vmatprep.subr.bf16.mxu0 0
    %4141 = vmatpush1.bf16.msra.mxu0 0
    %4142 = vmatprep.subr.bf16.mxu0 0
    %4143 = vmatpush1.bf16.msra.mxu0 0
    %4144 = vmatprep.mubr.bf16.mxu0 0
    %4145 = vmatmul.mubr.bf16.gmra.mrb[0].mxu0 %v4107
    %v4146 = vpop.f32.mrb[0].mxu0
    %v4147 = vadd.f32 0.0, %v4146
    %v4148 = vpop.f32.mrb[0].mxu0
    %v4149 = vpop.f32.mrb[0].mxu0
    %v4150 = vpop.f32.mrb[0].mxu0
    %4151 = vdwg.mxu0
    %v4153 = vsel %vm1270, %v4054, 0
    %v4156 = vsel %vm1762, %v3556, 0
    %4158 = vmatprep.subr.bf16.mxu0 0
    %4159 = vmatpush1.bf16.msra.mxu0 %v4156
    %4160 = vmatprep.subr.bf16.mxu0 0
    %4161 = vmatpush1.bf16.msra.mxu0 0
    %4162 = vmatprep.subr.bf16.mxu0 0
    %4163 = vmatpush1.bf16.msra.mxu0 0
    %4164 = vmatprep.subr.bf16.mxu0 0
    %4165 = vmatpush1.bf16.msra.mxu0 0
    %4166 = vmatprep.subr.bf16.mxu0 0
    %4167 = vmatpush1.bf16.msra.mxu0 0
    %4168 = vmatprep.subr.bf16.mxu0 0
    %4169 = vmatpush1.bf16.msra.mxu0 0
    %4170 = vmatprep.subr.bf16.mxu0 0
    %4171 = vmatpush1.bf16.msra.mxu0 0
    %4172 = vmatprep.subr.bf16.mxu0 0
    %4173 = vmatpush1.bf16.msra.mxu0 0
    %4174 = vmatprep.subr.bf16.mxu0 0
    %4175 = vmatpush1.bf16.msra.mxu0 0
    %4176 = vmatprep.subr.bf16.mxu0 0
    %4177 = vmatpush1.bf16.msra.mxu0 0
    %4178 = vmatprep.subr.bf16.mxu0 0
    %4179 = vmatpush1.bf16.msra.mxu0 0
    %4180 = vmatprep.subr.bf16.mxu0 0
    %4181 = vmatpush1.bf16.msra.mxu0 0
    %4182 = vmatprep.subr.bf16.mxu0 0
    %4183 = vmatpush1.bf16.msra.mxu0 0
    %4184 = vmatprep.subr.bf16.mxu0 0
    %4185 = vmatpush1.bf16.msra.mxu0 0
    %4186 = vmatprep.subr.bf16.mxu0 0
    %4187 = vmatpush1.bf16.msra.mxu0 0
    %4188 = vmatprep.subr.bf16.mxu0 0
    %4189 = vmatpush1.bf16.msra.mxu0 0
    %4190 = vmatprep.mubr.bf16.mxu0 0
    %4191 = vmatmul.mubr.bf16.gmra.mrb[0].mxu0 %v4153
    %v4192 = vpop.f32.mrb[0].mxu0
    %v4193 = vadd.f32 0.0, %v4192
    %v4194 = vpop.f32.mrb[0].mxu0
    %v4195 = vpop.f32.mrb[0].mxu0
    %v4196 = vpop.f32.mrb[0].mxu0
    %4197 = vdwg.mxu0
    %v4199 = vsel %vm1270, %v4055, 0
    %v4202 = vsel %vm1762, %v3559, 0
    %4204 = vmatprep.subr.bf16.mxu0 0
    %4205 = vmatpush1.bf16.msra.mxu0 %v4202
    %4206 = vmatprep.subr.bf16.mxu0 0
    %4207 = vmatpush1.bf16.msra.mxu0 0
    %4208 = vmatprep.subr.bf16.mxu0 0
    %4209 = vmatpush1.bf16.msra.mxu0 0
    %4210 = vmatprep.subr.bf16.mxu0 0
    %4211 = vmatpush1.bf16.msra.mxu0 0
    %4212 = vmatprep.subr.bf16.mxu0 0
    %4213 = vmatpush1.bf16.msra.mxu0 0
    %4214 = vmatprep.subr.bf16.mxu0 0
    %4215 = vmatpush1.bf16.msra.mxu0 0
    %4216 = vmatprep.subr.bf16.mxu0 0
    %4217 = vmatpush1.bf16.msra.mxu0 0
    %4218 = vmatprep.subr.bf16.mxu0 0
    %4219 = vmatpush1.bf16.msra.mxu0 0
    %4220 = vmatprep.subr.bf16.mxu0 0
    %4221 = vmatpush1.bf16.msra.mxu0 0
    %4222 = vmatprep.subr.bf16.mxu0 0
    %4223 = vmatpush1.bf16.msra.mxu0 0
    %4224 = vmatprep.subr.bf16.mxu0 0
    %4225 = vmatpush1.bf16.msra.mxu0 0
    %4226 = vmatprep.subr.bf16.mxu0 0
    %4227 = vmatpush1.bf16.msra.mxu0 0
    %4228 = vmatprep.subr.bf16.mxu0 0
    %4229 = vmatpush1.bf16.msra.mxu0 0
    %4230 = vmatprep.subr.bf16.mxu0 0
    %4231 = vmatpush1.bf16.msra.mxu0 0
    %4232 = vmatprep.subr.bf16.mxu0 0
    %4233 = vmatpush1.bf16.msra.mxu0 0
    %4234 = vmatprep.subr.bf16.mxu0 0
    %4235 = vmatpush1.bf16.msra.mxu0 0
    %4236 = vmatprep.mubr.bf16.mxu0 0
    %4237 = vmatmul.mubr.bf16.gmra.mrb[0].mxu0 %v4199
    %v4238 = vpop.f32.mrb[0].mxu0
    %v4239 = vadd.f32 0.0, %v4238
    %v4240 = vpop.f32.mrb[0].mxu0
    %v4241 = vpop.f32.mrb[0].mxu0
    %v4242 = vpop.f32.mrb[0].mxu0
    %4243 = vdwg.mxu0
    %v4245 = vsel %vm1270, %v4056, 0
    %v4248 = vsel %vm1762, %v3562, 0
    %4250 = vmatprep.subr.bf16.mxu0 0
    %4251 = vmatpush1.bf16.msra.mxu0 %v4248
    %4252 = vmatprep.subr.bf16.mxu0 0
    %4253 = vmatpush1.bf16.msra.mxu0 0
    %4254 = vmatprep.subr.bf16.mxu0 0
    %4255 = vmatpush1.bf16.msra.mxu0 0
    %4256 = vmatprep.subr.bf16.mxu0 0
    %4257 = vmatpush1.bf16.msra.mxu0 0
    %4258 = vmatprep.subr.bf16.mxu0 0
    %4259 = vmatpush1.bf16.msra.mxu0 0
    %4260 = vmatprep.subr.bf16.mxu0 0
    %4261 = vmatpush1.bf16.msra.mxu0 0
    %4262 = vmatprep.subr.bf16.mxu0 0
    %4263 = vmatpush1.bf16.msra.mxu0 0
    %4264 = vmatprep.subr.bf16.mxu0 0
    %4265 = vmatpush1.bf16.msra.mxu0 0
    %4266 = vmatprep.subr.bf16.mxu0 0
    %4267 = vmatpush1.bf16.msra.mxu0 0
    %4268 = vmatprep.subr.bf16.mxu0 0
    %4269 = vmatpush1.bf16.msra.mxu0 0
    %4270 = vmatprep.subr.bf16.mxu0 0
    %4271 = vmatpush1.bf16.msra.mxu0 0
    %4272 = vmatprep.subr.bf16.mxu0 0
    %4273 = vmatpush1.bf16.msra.mxu0 0
    %4274 = vmatprep.subr.bf16.mxu0 0
    %4275 = vmatpush1.bf16.msra.mxu0 0
    %4276 = vmatprep.subr.bf16.mxu0 0
    %4277 = vmatpush1.bf16.msra.mxu0 0
    %4278 = vmatprep.subr.bf16.mxu0 0
    %4279 = vmatpush1.bf16.msra.mxu0 0
    %4280 = vmatprep.subr.bf16.mxu0 0
    %4281 = vmatpush1.bf16.msra.mxu0 0
    %4282 = vmatprep.mubr.bf16.mxu0 0
    %4283 = vmatmul.mubr.bf16.gmra.mrb[0].mxu0 %v4245
    %v4284 = vpop.f32.mrb[0].mxu0
    %v4285 = vadd.f32 0.0, %v4284
    %v4286 = vpop.f32.mrb[0].mxu0
    %v4287 = vpop.f32.mrb[0].mxu0
    %v4288 = vpop.f32.mrb[0].mxu0
    %4289 = vdwg.mxu0
    %v4291 = vsel %vm1270, %v4057, 0
    %v4294 = vsel %vm1762, %v3565, 0
    %4296 = vmatprep.subr.bf16.mxu0 0
    %4297 = vmatpush1.bf16.msra.mxu0 %v4294
    %4298 = vmatprep.subr.bf16.mxu0 0
    %4299 = vmatpush1.bf16.msra.mxu0 0
    %4300 = vmatprep.subr.bf16.mxu0 0
    %4301 = vmatpush1.bf16.msra.mxu0 0
    %4302 = vmatprep.subr.bf16.mxu0 0
    %4303 = vmatpush1.bf16.msra.mxu0 0
    %4304 = vmatprep.subr.bf16.mxu0 0
    %4305 = vmatpush1.bf16.msra.mxu0 0
    %4306 = vmatprep.subr.bf16.mxu0 0
    %4307 = vmatpush1.bf16.msra.mxu0 0
    %4308 = vmatprep.subr.bf16.mxu0 0
    %4309 = vmatpush1.bf16.msra.mxu0 0
    %4310 = vmatprep.subr.bf16.mxu0 0
    %4311 = vmatpush1.bf16.msra.mxu0 0
    %4312 = vmatprep.subr.bf16.mxu0 0
    %4313 = vmatpush1.bf16.msra.mxu0 0
    %4314 = vmatprep.subr.bf16.mxu0 0
    %4315 = vmatpush1.bf16.msra.mxu0 0
    %4316 = vmatprep.subr.bf16.mxu0 0
    %4317 = vmatpush1.bf16.msra.mxu0 0
    %4318 = vmatprep.subr.bf16.mxu0 0
    %4319 = vmatpush1.bf16.msra.mxu0 0
    %4320 = vmatprep.subr.bf16.mxu0 0
    %4321 = vmatpush1.bf16.msra.mxu0 0
    %4322 = vmatprep.subr.bf16.mxu0 0
    %4323 = vmatpush1.bf16.msra.mxu0 0
    %4324 = vmatprep.subr.bf16.mxu0 0
    %4325 = vmatpush1.bf16.msra.mxu0 0
    %4326 = vmatprep.subr.bf16.mxu0 0
    %4327 = vmatpush1.bf16.msra.mxu0 0
    %4328 = vmatprep.mubr.bf16.mxu0 0
    %4329 = vmatmul.mubr.bf16.gmra.mrb[0].mxu0 %v4291
    %v4330 = vpop.f32.mrb[0].mxu0
    %v4331 = vadd.f32 0.0, %v4330
    %v4332 = vpop.f32.mrb[0].mxu0
    %v4333 = vpop.f32.mrb[0].mxu0
    %v4334 = vpop.f32.mrb[0].mxu0
    %4335 = vdwg.mxu0
    %v4337 = vsel %vm1270, %v4058, 0
    %v4340 = vsel %vm1762, %v3568, 0
    %4342 = vmatprep.subr.bf16.mxu0 0
    %4343 = vmatpush1.bf16.msra.mxu0 %v4340
    %4344 = vmatprep.subr.bf16.mxu0 0
    %4345 = vmatpush1.bf16.msra.mxu0 0
    %4346 = vmatprep.subr.bf16.mxu0 0
    %4347 = vmatpush1.bf16.msra.mxu0 0
    %4348 = vmatprep.subr.bf16.mxu0 0
    %4349 = vmatpush1.bf16.msra.mxu0 0
    %4350 = vmatprep.subr.bf16.mxu0 0
    %4351 = vmatpush1.bf16.msra.mxu0 0
    %4352 = vmatprep.subr.bf16.mxu0 0
    %4353 = vmatpush1.bf16.msra.mxu0 0
    %4354 = vmatprep.subr.bf16.mxu0 0
    %4355 = vmatpush1.bf16.msra.mxu0 0
    %4356 = vmatprep.subr.bf16.mxu0 0
    %4357 = vmatpush1.bf16.msra.mxu0 0
    %4358 = vmatprep.subr.bf16.mxu0 0
    %4359 = vmatpush1.bf16.msra.mxu0 0
    %4360 = vmatprep.subr.bf16.mxu0 0
    %4361 = vmatpush1.bf16.msra.mxu0 0
    %4362 = vmatprep.subr.bf16.mxu0 0
    %4363 = vmatpush1.bf16.msra.mxu0 0
    %4364 = vmatprep.subr.bf16.mxu0 0
    %4365 = vmatpush1.bf16.msra.mxu0 0
    %4366 = vmatprep.subr.bf16.mxu0 0
    %4367 = vmatpush1.bf16.msra.mxu0 0
    %4368 = vmatprep.subr.bf16.mxu0 0
    %4369 = vmatpush1.bf16.msra.mxu0 0
    %4370 = vmatprep.subr.bf16.mxu0 0
    %4371 = vmatpush1.bf16.msra.mxu0 0
    %4372 = vmatprep.subr.bf16.mxu0 0
    %4373 = vmatpush1.bf16.msra.mxu0 0
    %4374 = vmatprep.mubr.bf16.mxu0 0
    %4375 = vmatmul.mubr.bf16.gmra.mrb[0].mxu0 %v4337
    %v4376 = vpop.f32.mrb[0].mxu0
    %v4377 = vadd.f32 0.0, %v4376
    %v4378 = vpop.f32.mrb[0].mxu0
    %v4379 = vpop.f32.mrb[0].mxu0
    %v4380 = vpop.f32.mrb[0].mxu0
    %4381 = vdwg.mxu0
    %v4383 = vsel %vm1270, %v4059, 0
    %v4386 = vsel %vm1762, %v3571, 0
    %4388 = vmatprep.subr.bf16.mxu0 0
    %4389 = vmatpush1.bf16.msra.mxu0 %v4386
    %4390 = vmatprep.subr.bf16.mxu0 0
    %4391 = vmatpush1.bf16.msra.mxu0 0
    %4392 = vmatprep.subr.bf16.mxu0 0
    %4393 = vmatpush1.bf16.msra.mxu0 0
    %4394 = vmatprep.subr.bf16.mxu0 0
    %4395 = vmatpush1.bf16.msra.mxu0 0
    %4396 = vmatprep.subr.bf16.mxu0 0
    %4397 = vmatpush1.bf16.msra.mxu0 0
    %4398 = vmatprep.subr.bf16.mxu0 0
    %4399 = vmatpush1.bf16.msra.mxu0 0
    %4400 = vmatprep.subr.bf16.mxu0 0
    %4401 = vmatpush1.bf16.msra.mxu0 0
    %4402 = vmatprep.subr.bf16.mxu0 0
    %4403 = vmatpush1.bf16.msra.mxu0 0
    %4404 = vmatprep.subr.bf16.mxu0 0
    %4405 = vmatpush1.bf16.msra.mxu0 0
    %4406 = vmatprep.subr.bf16.mxu0 0
    %4407 = vmatpush1.bf16.msra.mxu0 0
    %4408 = vmatprep.subr.bf16.mxu0 0
    %4409 = vmatpush1.bf16.msra.mxu0 0
    %4410 = vmatprep.subr.bf16.mxu0 0
    %4411 = vmatpush1.bf16.msra.mxu0 0
    %4412 = vmatprep.subr.bf16.mxu0 0
    %4413 = vmatpush1.bf16.msra.mxu0 0
    %4414 = vmatprep.subr.bf16.mxu0 0
    %4415 = vmatpush1.bf16.msra.mxu0 0
    %4416 = vmatprep.subr.bf16.mxu0 0
    %4417 = vmatpush1.bf16.msra.mxu0 0
    %4418 = vmatprep.subr.bf16.mxu0 0
    %4419 = vmatpush1.bf16.msra.mxu0 0
    %4420 = vmatprep.mubr.bf16.mxu0 0
    %4421 = vmatmul.mubr.bf16.gmra.mrb[0].mxu0 %v4383
    %v4422 = vpop.f32.mrb[0].mxu0
    %v4423 = vadd.f32 0.0, %v4422
    %v4424 = vpop.f32.mrb[0].mxu0
    %v4425 = vpop.f32.mrb[0].mxu0
    %v4426 = vpop.f32.mrb[0].mxu0
    %4427 = vdwg.mxu0
    %v4428 = vadd.f32 %v4012, %v4101
    %v4429 = vadd.f32 %v4013, %v4147
    %v4430 = vadd.f32 %v4014, %v4193
    %v4431 = vadd.f32 %v4015, %v4239
    %v4432 = vadd.f32 %v4016, %v4285
    %v4433 = vadd.f32 %v4017, %v4331
    %v4434 = vadd.f32 %v4018, %v4377
    %v4435 = vadd.f32 %v4019, %v4423
    %v4436 = vrcp.pop %v4044
    %v4437 = vrcp.pop %v4045
    %v4438 = vrcp.pop %v4046
    %v4439 = vrcp.pop %v4047
    %v4440 = vrcp.pop %v4048
    %v4441 = vrcp.pop %v4049
    %v4442 = vrcp.pop %v4050
    %v4443 = vrcp.pop %v4051
    %v4444 = vmul.f32 %v4428, %v4436
    %v4445 = vmul.f32 %v4429, %v4437
    %v4446 = vmul.f32 %v4430, %v4438
    %v4447 = vmul.f32 %v4431, %v4439
    %v4448 = vmul.f32 %v4432, %v4440
    %v4449 = vmul.f32 %v4433, %v4441
    %v4450 = vmul.f32 %v4434, %v4442
    %v4451 = vmul.f32 %v4435, %v4443
    %v4452 = vpack.c.bf16 %v4444, %v4444
    %v4454 = vunpack.c.l.s4 1983009808
    %v4455 = vunpack.c.0.s8 %v4454
    %v4456 = vlaneseq
    %v4457 = vshrl.u32 %v4456, 7
    %v4458 = vsub.s32 %v4455, %v4457
    %v4459 = vrot.slane %v4452, %v4458
    %v4460 = vpack.c.bf16 %v4446, %v4446
    %v4462 = vunpack.c.l.s4 1983009808
    %v4463 = vunpack.c.0.s8 %v4462
    %v4464 = vlaneseq
    %v4465 = vshrl.u32 %v4464, 7
    %v4466 = vsub.s32 %v4463, %v4465
    %v4467 = vrot.slane %v4460, %v4466
    %v4468 = vcombine.low %v4459, %v4467
    %v4469 = vcombine.high %v4459, %v4467
    %v4471 = vunpack.c.l.s4 1934713408
    %v4472 = vunpack.c.0.s8 %v4471
    %v4473 = vlaneseq
    %v4474 = vshrl.u32 %v4473, 7
    %v4475 = vsub.s32 %v4472, %v4474
    %v4476 = vrot.slane %v4468, %v4475
    %v4478 = vunpack.c.l.s4 1934713408
    %v4479 = vunpack.c.0.s8 %v4478
    %v4480 = vlaneseq
    %v4481 = vshrl.u32 %v4480, 7
    %v4482 = vsub.s32 %v4479, %v4481
    %v4483 = vrot.slane %v4469, %v4482
    %v4484 = vcombine.high %v4476, 0
    %v4485 = vcombine.high %v4483, 0
    %v4486 = vpack.c.bf16 %v4445, %v4445
    %v4488 = vunpack.c.l.s4 1983009808
    %v4489 = vunpack.c.0.s8 %v4488
    %v4490 = vlaneseq
    %v4491 = vshrl.u32 %v4490, 7
    %v4492 = vsub.s32 %v4489, %v4491
    %v4493 = vrot.slane %v4486, %v4492
    %v4494 = vpack.c.bf16 %v4447, %v4447
    %v4496 = vunpack.c.l.s4 1983009808
    %v4497 = vunpack.c.0.s8 %v4496
    %v4498 = vlaneseq
    %v4499 = vshrl.u32 %v4498, 7
    %v4500 = vsub.s32 %v4497, %v4499
    %v4501 = vrot.slane %v4494, %v4500
    %v4502 = vcombine.low %v4493, %v4501
    %v4503 = vcombine.high %v4493, %v4501
    %v4505 = vunpack.c.l.s4 1934713408
    %v4506 = vunpack.c.0.s8 %v4505
    %v4507 = vlaneseq
    %v4508 = vshrl.u32 %v4507, 7
    %v4509 = vsub.s32 %v4506, %v4508
    %v4510 = vrot.slane %v4502, %v4509
    %v4512 = vunpack.c.l.s4 1934713408
    %v4513 = vunpack.c.0.s8 %v4512
    %v4514 = vlaneseq
    %v4515 = vshrl.u32 %v4514, 7
    %v4516 = vsub.s32 %v4513, %v4515
    %v4517 = vrot.slane %v4503, %v4516
    %v4518 = vcombine.high %v4510, 0
    %v4519 = vcombine.high %v4517, 0
    %v4520 = vpack.c.bf16 %v4448, %v4448
    %v4522 = vunpack.c.l.s4 1983009808
    %v4523 = vunpack.c.0.s8 %v4522
    %v4524 = vlaneseq
    %v4525 = vshrl.u32 %v4524, 7
    %v4526 = vsub.s32 %v4523, %v4525
    %v4527 = vrot.slane %v4520, %v4526
    %v4528 = vpack.c.bf16 %v4450, %v4450
    %v4530 = vunpack.c.l.s4 1983009808
    %v4531 = vunpack.c.0.s8 %v4530
    %v4532 = vlaneseq
    %v4533 = vshrl.u32 %v4532, 7
    %v4534 = vsub.s32 %v4531, %v4533
    %v4535 = vrot.slane %v4528, %v4534
    %v4536 = vcombine.low %v4527, %v4535
    %v4537 = vcombine.high %v4527, %v4535
    %v4539 = vunpack.c.l.s4 1934713408
    %v4540 = vunpack.c.0.s8 %v4539
    %v4541 = vlaneseq
    %v4542 = vshrl.u32 %v4541, 7
    %v4543 = vsub.s32 %v4540, %v4542
    %v4544 = vrot.slane %v4536, %v4543
    %v4546 = vunpack.c.l.s4 1934713408
    %v4547 = vunpack.c.0.s8 %v4546
    %v4548 = vlaneseq
    %v4549 = vshrl.u32 %v4548, 7
    %v4550 = vsub.s32 %v4547, %v4549
    %v4551 = vrot.slane %v4537, %v4550
    %v4552 = vcombine.high %v4544, 0
    %v4553 = vcombine.high %v4551, 0
    %v4554 = vpack.c.bf16 %v4449, %v4449
    %v4556 = vunpack.c.l.s4 1983009808
    %v4557 = vunpack.c.0.s8 %v4556
    %v4558 = vlaneseq
    %v4559 = vshrl.u32 %v4558, 7
    %v4560 = vsub.s32 %v4557, %v4559
    %v4561 = vrot.slane %v4554, %v4560
    %v4562 = vpack.c.bf16 %v4451, %v4451
    %v4564 = vunpack.c.l.s4 1983009808
    %v4565 = vunpack.c.0.s8 %v4564
    %v4566 = vlaneseq
    %v4567 = vshrl.u32 %v4566, 7
    %v4568 = vsub.s32 %v4565, %v4567
    %v4569 = vrot.slane %v4562, %v4568
    %v4570 = vcombine.low %v4561, %v4569
    %v4571 = vcombine.high %v4561, %v4569
    %v4573 = vunpack.c.l.s4 1934713408
    %v4574 = vunpack.c.0.s8 %v4573
    %v4575 = vlaneseq
    %v4576 = vshrl.u32 %v4575, 7
    %v4577 = vsub.s32 %v4574, %v4576
    %v4578 = vrot.slane %v4570, %v4577
    %v4580 = vunpack.c.l.s4 1934713408
    %v4581 = vunpack.c.0.s8 %v4580
    %v4582 = vlaneseq
    %v4583 = vshrl.u32 %v4582, 7
    %v4584 = vsub.s32 %v4581, %v4583
    %v4585 = vrot.slane %v4571, %v4584
    %v4586 = vcombine.high %v4578, 0
    %v4587 = vcombine.high %v4585, 0
    %v4590 = vpack.i.b16 %v4510, %v4476
    %v4592 = vshrl.u32 %v4476, 16
    %v4593 = vshrl.u32 %v4510, 16
    %v4594 = vpack.i.b16 %v4593, %v4592
    %v4598 = vpack.i.b16 %v4518, %v4484
    %v4600 = vshrl.u32 %v4484, 16
    %v4601 = vshrl.u32 %v4518, 16
    %v4602 = vpack.i.b16 %v4601, %v4600
    %v4606 = vpack.i.b16 %v4517, %v4483
    %v4608 = vshrl.u32 %v4483, 16
    %v4609 = vshrl.u32 %v4517, 16
    %v4610 = vpack.i.b16 %v4609, %v4608
    %v4614 = vpack.i.b16 %v4519, %v4485
    %v4616 = vshrl.u32 %v4485, 16
    %v4617 = vshrl.u32 %v4519, 16
    %v4618 = vpack.i.b16 %v4617, %v4616
    %v4622 = vpack.i.b16 %v4578, %v4544
    %v4624 = vshrl.u32 %v4544, 16
    %v4625 = vshrl.u32 %v4578, 16
    %v4626 = vpack.i.b16 %v4625, %v4624
    %v4630 = vpack.i.b16 %v4586, %v4552
    %v4632 = vshrl.u32 %v4552, 16
    %v4633 = vshrl.u32 %v4586, 16
    %v4634 = vpack.i.b16 %v4633, %v4632
    %v4638 = vpack.i.b16 %v4585, %v4551
    %v4640 = vshrl.u32 %v4551, 16
    %v4641 = vshrl.u32 %v4585, 16
    %v4642 = vpack.i.b16 %v4641, %v4640
    %v4646 = vpack.i.b16 %v4587, %v4553
    %v4648 = vshrl.u32 %v4553, 16
    %v4649 = vshrl.u32 %v4587, 16
    %v4650 = vpack.i.b16 %v4649, %v4648
    %v4652 = vcombine.low %v4590, %v4606
    %v4654 = vunpack.c.l.s4 1983009808
    %v4655 = vunpack.c.0.s8 %v4654
    %v4656 = vlaneseq
    %v4657 = vshrl.u32 %v4656, 7
    %v4658 = vsub.s32 %v4655, %v4657
    %v4659 = vrot.slane %v4652, %v4658
    %v4660 = vcombine.low %v4598, %v4614
    %v4662 = vunpack.c.l.s4 1983009808
    %v4663 = vunpack.c.0.s8 %v4662
    %v4664 = vlaneseq
    %v4665 = vshrl.u32 %v4664, 7
    %v4666 = vsub.s32 %v4663, %v4665
    %v4667 = vrot.slane %v4660, %v4666
    %v4668 = vcombine.low %v4622, %v4638
    %v4670 = vunpack.c.l.s4 1983009808
    %v4671 = vunpack.c.0.s8 %v4670
    %v4672 = vlaneseq
    %v4673 = vshrl.u32 %v4672, 7
    %v4674 = vsub.s32 %v4671, %v4673
    %v4675 = vrot.slane %v4668, %v4674
    %v4676 = vcombine.low %v4630, %v4646
    %v4678 = vunpack.c.l.s4 1983009808
    %v4679 = vunpack.c.0.s8 %v4678
    %v4680 = vlaneseq
    %v4681 = vshrl.u32 %v4680, 7
    %v4682 = vsub.s32 %v4679, %v4681
    %v4683 = vrot.slane %v4676, %v4682
    %v4684 = vcombine.low %v4659, %v4667
    %v4686 = vunpack.c.l.s4 1934713408
    %v4687 = vunpack.c.0.s8 %v4686
    %v4688 = vlaneseq
    %v4689 = vshrl.u32 %v4688, 7
    %v4690 = vsub.s32 %v4687, %v4689
    %v4691 = vrot.slane %v4684, %v4690
    %v4692 = vcombine.low %v4675, %v4683
    %v4694 = vunpack.c.l.s4 1934713408
    %v4695 = vunpack.c.0.s8 %v4694
    %v4696 = vlaneseq
    %v4697 = vshrl.u32 %v4696, 7
    %v4698 = vsub.s32 %v4695, %v4697
    %v4699 = vrot.slane %v4692, %v4698
    %v4700 = vcombine.low %v4691, %v4699
    %v4701 = vcombine.high %v4691, %v4699
    %v4702 = vcombine.low %v4594, %v4610
    %v4704 = vunpack.c.l.s4 1983009808
    %v4705 = vunpack.c.0.s8 %v4704
    %v4706 = vlaneseq
    %v4707 = vshrl.u32 %v4706, 7
    %v4708 = vsub.s32 %v4705, %v4707
    %v4709 = vrot.slane %v4702, %v4708
    %v4710 = vcombine.low %v4602, %v4618
    %v4712 = vunpack.c.l.s4 1983009808
    %v4713 = vunpack.c.0.s8 %v4712
    %v4714 = vlaneseq
    %v4715 = vshrl.u32 %v4714, 7
    %v4716 = vsub.s32 %v4713, %v4715
    %v4717 = vrot.slane %v4710, %v4716
    %v4718 = vcombine.low %v4626, %v4642
    %v4720 = vunpack.c.l.s4 1983009808
    %v4721 = vunpack.c.0.s8 %v4720
    %v4722 = vlaneseq
    %v4723 = vshrl.u32 %v4722, 7
    %v4724 = vsub.s32 %v4721, %v4723
    %v4725 = vrot.slane %v4718, %v4724
    %v4726 = vcombine.low %v4634, %v4650
    %v4728 = vunpack.c.l.s4 1983009808
    %v4729 = vunpack.c.0.s8 %v4728
    %v4730 = vlaneseq
    %v4731 = vshrl.u32 %v4730, 7
    %v4732 = vsub.s32 %v4729, %v4731
    %v4733 = vrot.slane %v4726, %v4732
    %v4734 = vcombine.low %v4709, %v4717
    %v4736 = vunpack.c.l.s4 1934713408
    %v4737 = vunpack.c.0.s8 %v4736
    %v4738 = vlaneseq
    %v4739 = vshrl.u32 %v4738, 7
    %v4740 = vsub.s32 %v4737, %v4739
    %v4741 = vrot.slane %v4734, %v4740
    %v4742 = vcombine.low %v4725, %v4733
    %v4744 = vunpack.c.l.s4 1934713408
    %v4745 = vunpack.c.0.s8 %v4744
    %v4746 = vlaneseq
    %v4747 = vshrl.u32 %v4746, 7
    %v4748 = vsub.s32 %v4745, %v4747
    %v4749 = vrot.slane %v4742, %v4748
    %v4750 = vcombine.low %v4741, %v4749
    %v4751 = vcombine.high %v4741, %v4749
    %v4754 = vpack.i.b16 %v4750, %v4700
    %v4755 = vshrl.u32 %v4700, 16
    %v4756 = vshrl.u32 %v4750, 16
    %v4757 = vpack.i.b16 %v4756, %v4755
    %v4760 = vpack.i.b16 %v4751, %v4701
    %v4761 = vshrl.u32 %v4701, 16
    %v4762 = vshrl.u32 %v4751, 16
    %v4763 = vpack.i.b16 %v4762, %v4761
    %4764 = vrot.lane.b32.xlu0 %v4757, 8
    %v4765 = vpop.permute.xlu0 %4764
    %4766 = vrot.lane.b32.xlu0 %v4760, 16
    %v4767 = vpop.permute.xlu0 %4766
    %4768 = vrot.lane.b32.xlu0 %v4763, 24
    %v4769 = vpop.permute.xlu0 %4768
    %v4772 = vsel %vm1270, %v4754, %v4765
    %v4774 = vsel %vm2473, %v4772, %v4767
    %v4776 = vsel %vm2476, %v4774, %v4769
    %v4777 = vld [vmem:[#allocation22] sm:$0xf]
    %v4778 = vld [vmem:[#allocation22 + $0x4] sm:$0xf]
    %v4779 = vld [vmem:[#allocation22 + $0x8] sm:$0xf]
    %v4780 = vld [vmem:[#allocation22 + $0xc] sm:$0xf]
    %v4781 = vld [vmem:[#allocation23] sm:$0x1]
    %v4783 = vlaneseq
    %v4784 = vshrl.u32 %v4783, 7
    %v4785 = vsub.s32 0, %v4784
    %v4786 = vrot.slane %v4781, %v4785
    %v4792 = vunpack.c.l.b16 %v4777
    %v4793 = vunpack.c.l.b16 %v4778
    %v4794 = vunpack.c.l.b16 %v4779
    %v4795 = vunpack.c.l.b16 %v4780
    %v4796 = vpack.c.b16 %v4793, %v4792
    %v4797 = vpack.c.b16 %v4795, %v4794
    %v4800 = vsel %vm373, %v4776, 0
    %4802 = vmatprep.subr.bf16.mxu0 0
    %4803 = vmatpush1.bf16.msra.mxu0 %v4796
    %4804 = vmatprep.subr.bf16.mxu0 0
    %4805 = vmatpush1.bf16.msra.mxu0 %v4797
    %4806 = vmatprep.subr.bf16.mxu0 0
    %4807 = vmatpush1.bf16.msra.mxu0 0
    %4808 = vmatprep.subr.bf16.mxu0 0
    %4809 = vmatpush1.bf16.msra.mxu0 0
    %4810 = vmatprep.subr.bf16.mxu0 0
    %4811 = vmatpush1.bf16.msra.mxu0 0
    %4812 = vmatprep.subr.bf16.mxu0 0
    %4813 = vmatpush1.bf16.msra.mxu0 0
    %4814 = vmatprep.subr.bf16.mxu0 0
    %4815 = vmatpush1.bf16.msra.mxu0 0
    %4816 = vmatprep.subr.bf16.mxu0 0
    %4817 = vmatpush1.bf16.msra.mxu0 0
    %4818 = vmatprep.subr.bf16.mxu0 0
    %4819 = vmatpush1.bf16.msra.mxu0 0
    %4820 = vmatprep.subr.bf16.mxu0 0
    %4821 = vmatpush1.bf16.msra.mxu0 0
    %4822 = vmatprep.subr.bf16.mxu0 0
    %4823 = vmatpush1.bf16.msra.mxu0 0
    %4824 = vmatprep.subr.bf16.mxu0 0
    %4825 = vmatpush1.bf16.msra.mxu0 0
    %4826 = vmatprep.subr.bf16.mxu0 0
    %4827 = vmatpush1.bf16.msra.mxu0 0
    %4828 = vmatprep.subr.bf16.mxu0 0
    %4829 = vmatpush1.bf16.msra.mxu0 0
    %4830 = vmatprep.subr.bf16.mxu0 0
    %4831 = vmatpush1.bf16.msra.mxu0 0
    %4832 = vmatprep.subr.bf16.mxu0 0
    %4833 = vmatpush1.bf16.msra.mxu0 0
    %4834 = vmatprep.mubr.bf16.mxu0 0
    %4835 = vmatmul.mubr.bf16.gmra.mrb[0].mxu0 %v4800
    %v4836 = vpop.f32.mrb[0].mxu0
    %v4837 = vadd.f32 %v4786, %v4836
    %v4838 = vpop.f32.mrb[0].mxu0
    %v4839 = vpop.f32.mrb[0].mxu0
    %v4840 = vadd.f32 %v4786, %v4839
    %v4841 = vpop.f32.mrb[0].mxu0
    %4842 = vdwg.mxu0
    %v4843 = vadd.f32 %v2590, %v4837
    %v4844 = vadd.f32 %v2591, %v4840
    %v4845 = vld [vmem:[#allocation25] sm:$0x1]
    %v4846 = vld [vmem:[#allocation26] sm:$0x1]
    %v4847 = vsel %vm373, %v4843, 0.0
    %4848 = vadd.xlane.f32.xlu0 %v4847
    %v4849 = vpop.xlane.xlu0 %4848
    %v4850 = vsel %vm373, %v4844, 0.0
    %4851 = vadd.xlane.f32.xlu0 %v4850
    %v4852 = vpop.xlane.xlu0 %4851
    %v4853 = vmul.f32 %v4849, %v2555
    %v4854 = vmul.f32 %v4852, %v2555
    %v4855 = vsub.f32 %v4843, %v4853
    %v4856 = vsub.f32 %v4844, %v4854
    %v4857 = vmul.f32 %v4855, %v4855
    %v4858 = vmul.f32 %v4856, %v4856
    %v4859 = vsel %vm373, %v4857, 0.0
    %4860 = vadd.xlane.f32.xlu0 %v4859
    %v4861 = vpop.xlane.xlu0 %4860
    %v4862 = vsel %vm373, %v4858, 0.0
    %4863 = vadd.xlane.f32.xlu0 %v4862
    %v4864 = vpop.xlane.xlu0 %4863
    %v4865 = vmul.f32 %v4861, %v2555
    %v4866 = vmul.f32 %v4864, %v2555
    %v4867 = vadd.f32 %v4865, 1e-05
    %v4868 = vadd.f32 %v4866, 1e-05
    %v4869 = vrsqrt.pop %v4867
    %v4870 = vrsqrt.pop %v4868
    %v4871 = vmul.f32 %v4855, %v4869
    %v4872 = vmul.f32 %v4856, %v4870
    %v4874 = vlaneseq
    %v4875 = vshrl.u32 %v4874, 7
    %v4876 = vsub.s32 0, %v4875
    %v4877 = vrot.slane %v4845, %v4876
    %v4879 = vmul.f32 %v4871, %v4877
    %v4880 = vmul.f32 %v4872, %v4877
    %v4882 = vlaneseq
    %v4883 = vshrl.u32 %v4882, 7
    %v4884 = vsub.s32 0, %v4883
    %v4885 = vrot.slane %v4846, %v4884
    %v4887 = vadd.f32 %v4879, %v4885
    %v4888 = vadd.f32 %v4880, %v4885
    %v4889 = vpack.c.bf16 %v4888, %v4887
    %v4890 = vld [vmem:[#allocation28] sm:$0xf]
    %v4891 = vld [vmem:[#allocation28 + $0x4] sm:$0xf]
    %v4892 = vld [vmem:[#allocation28 + $0x8] sm:$0xf]
    %v4893 = vld [vmem:[#allocation28 + $0xc] sm:$0xf]
    %v4894 = vld [vmem:[#allocation29] sm:$0x1]
    %v4896 = vlaneseq
    %v4897 = vshrl.u32 %v4896, 7
    %v4898 = vsub.s32 0, %v4897
    %v4899 = vrot.slane %v4894, %v4898
    %v4905 = vunpack.c.l.b16 %v4890
    %v4906 = vunpack.c.l.b16 %v4891
    %v4907 = vunpack.c.l.b16 %v4892
    %v4908 = vunpack.c.l.b16 %v4893
    %v4909 = vpack.c.b16 %v4906, %v4905
    %v4910 = vpack.c.b16 %v4908, %v4907
    %v4914 = vsel %vm373, %v4889, 0
    %4916 = vmatprep.subr.bf16.mxu0 0
    %4917 = vmatpush1.bf16.msra.mxu0 %v4909
    %4918 = vmatprep.subr.bf16.mxu0 0
    %4919 = vmatpush1.bf16.msra.mxu0 %v4910
    %4920 = vmatprep.subr.bf16.mxu0 0
    %4921 = vmatpush1.bf16.msra.mxu0 0
    %4922 = vmatprep.subr.bf16.mxu0 0
    %4923 = vmatpush1.bf16.msra.mxu0 0
    %4924 = vmatprep.subr.bf16.mxu0 0
    %4925 = vmatpush1.bf16.msra.mxu0 0
    %4926 = vmatprep.subr.bf16.mxu0 0
    %4927 = vmatpush1.bf16.msra.mxu0 0
    %4928 = vmatprep.subr.bf16.mxu0 0
    %4929 = vmatpush1.bf16.msra.mxu0 0
    %4930 = vmatprep.subr.bf16.mxu0 0
    %4931 = vmatpush1.bf16.msra.mxu0 0
    %4932 = vmatprep.subr.bf16.mxu0 0
    %4933 = vmatpush1.bf16.msra.mxu0 0
    %4934 = vmatprep.subr.bf16.mxu0 0
    %4935 = vmatpush1.bf16.msra.mxu0 0
    %4936 = vmatprep.subr.bf16.mxu0 0
    %4937 = vmatpush1.bf16.msra.mxu0 0
    %4938 = vmatprep.subr.bf16.mxu0 0
    %4939 = vmatpush1.bf16.msra.mxu0 0
    %4940 = vmatprep.subr.bf16.mxu0 0
    %4941 = vmatpush1.bf16.msra.mxu0 0
    %4942 = vmatprep.subr.bf16.mxu0 0
    %4943 = vmatpush1.bf16.msra.mxu0 0
    %4944 = vmatprep.subr.bf16.mxu0 0
    %4945 = vmatpush1.bf16.msra.mxu0 0
    %4946 = vmatprep.subr.bf16.mxu0 0
    %4947 = vmatpush1.bf16.msra.mxu0 0
    %4948 = vmatprep.mubr.bf16.mxu0 0
    %4949 = vmatmul.mubr.bf16.gmra.mrb[0].mxu0 %v4914
    %v4950 = vpop.f32.mrb[0].mxu0
    %v4951 = vadd.f32 %v4899, %v4950
    %v4952 = vpop.f32.mrb[0].mxu0
    %v4953 = vpop.f32.mrb[0].mxu0
    %v4954 = vadd.f32 %v4899, %v4953
    %v4955 = vpop.f32.mrb[0].mxu0
    %4956 = vdwg.mxu0
    %v4957 = vmax.f32 %v4951, 0.0
    %v4958 = vmax.f32 %v4954, 0.0
    %v4959 = vpack.c.bf16 %v4958, %v4957
    %v4960 = vld [vmem:[#allocation31] sm:$0xf]
    %v4961 = vld [vmem:[#allocation31 + $0x4] sm:$0xf]
    %v4962 = vld [vmem:[#allocation31 + $0x8] sm:$0xf]
    %v4963 = vld [vmem:[#allocation31 + $0xc] sm:$0xf]
    %v4964 = vld [vmem:[#allocation31 + $0x10] sm:$0xf]
    %v4965 = vld [vmem:[#allocation31 + $0x14] sm:$0xf]
    %v4966 = vld [vmem:[#allocation31 + $0x18] sm:$0xf]
    %v4967 = vld [vmem:[#allocation31 + $0x1c] sm:$0xf]
    %v4968 = vld [vmem:[#allocation32] sm:$0x1]
    %v4970 = vlaneseq
    %v4971 = vshrl.u32 %v4970, 7
    %v4972 = vsub.s32 0, %v4971
    %v4973 = vrot.slane %v4968, %v4972
    %v4983 = vunpack.c.l.b16 %v4960
    %v4984 = vunpack.c.l.b16 %v4961
    %v4985 = vunpack.c.l.b16 %v4962
    %v4986 = vunpack.c.l.b16 %v4963
    %v4987 = vunpack.c.l.b16 %v4964
    %v4988 = vunpack.c.l.b16 %v4965
    %v4989 = vunpack.c.l.b16 %v4966
    %v4990 = vunpack.c.l.b16 %v4967
    %v4991 = vpack.c.b16 %v4984, %v4983
    %v4992 = vpack.c.b16 %v4986, %v4985
    %v4993 = vpack.c.b16 %v4988, %v4987
    %v4994 = vpack.c.b16 %v4990, %v4989
    %vm4999 = vcmask 523264
    %v5001 = vsel %vm4999, %v4959, 0
    %5003 = vmatprep.subr.bf16.mxu0 0
    %5004 = vmatpush1.bf16.msra.mxu0 %v4991
    %5005 = vmatprep.subr.bf16.mxu0 0
    %5006 = vmatpush1.bf16.msra.mxu0 %v4992
    %5007 = vmatprep.subr.bf16.mxu0 0
    %5008 = vmatpush1.bf16.msra.mxu0 %v4993
    %5009 = vmatprep.subr.bf16.mxu0 0
    %5010 = vmatpush1.bf16.msra.mxu0 %v4994
    %5011 = vmatprep.subr.bf16.mxu0 0
    %5012 = vmatpush1.bf16.msra.mxu0 0
    %5013 = vmatprep.subr.bf16.mxu0 0
    %5014 = vmatpush1.bf16.msra.mxu0 0
    %5015 = vmatprep.subr.bf16.mxu0 0
    %5016 = vmatpush1.bf16.msra.mxu0 0
    %5017 = vmatprep.subr.bf16.mxu0 0
    %5018 = vmatpush1.bf16.msra.mxu0 0
    %5019 = vmatprep.subr.bf16.mxu0 0
    %5020 = vmatpush1.bf16.msra.mxu0 0
    %5021 = vmatprep.subr.bf16.mxu0 0
    %5022 = vmatpush1.bf16.msra.mxu0 0
    %5023 = vmatprep.subr.bf16.mxu0 0
    %5024 = vmatpush1.bf16.msra.mxu0 0
    %5025 = vmatprep.subr.bf16.mxu0 0
    %5026 = vmatpush1.bf16.msra.mxu0 0
    %5027 = vmatprep.subr.bf16.mxu0 0
    %5028 = vmatpush1.bf16.msra.mxu0 0
    %5029 = vmatprep.subr.bf16.mxu0 0
    %5030 = vmatpush1.bf16.msra.mxu0 0
    %5031 = vmatprep.subr.bf16.mxu0 0
    %5032 = vmatpush1.bf16.msra.mxu0 0
    %5033 = vmatprep.subr.bf16.mxu0 0
    %5034 = vmatpush1.bf16.msra.mxu0 0
    %5035 = vmatprep.mubr.bf16.mxu0 0
    %5036 = vmatmul.mubr.bf16.gmra.mrb[0].mxu0 %v5001
    %v5037 = vpop.f32.mrb[0].mxu0
    %v5038 = vadd.f32 %v4973, %v5037
    %v5039 = vpop.f32.mrb[0].mxu0
    %v5040 = vpop.f32.mrb[0].mxu0
    %v5041 = vadd.f32 %v4973, %v5040
    %v5042 = vpop.f32.mrb[0].mxu0
    %5043 = vdwg.mxu0
    %v5044 = vadd.f32 %v4887, %v5038
    %v5045 = vadd.f32 %v4888, %v5041
    %v5046 = vld [vmem:[#allocation34] sm:$0x1]
    %v5047 = vld [vmem:[#allocation35] sm:$0x1]
    %v5048 = vsel %vm373, %v5044, 0.0
    %5049 = vadd.xlane.f32.xlu0 %v5048
    %v5050 = vpop.xlane.xlu0 %5049
    %v5051 = vsel %vm373, %v5045, 0.0
    %5052 = vadd.xlane.f32.xlu0 %v5051
    %v5053 = vpop.xlane.xlu0 %5052
    %v5054 = vmul.f32 %v5050, %v2555
    %v5055 = vmul.f32 %v5053, %v2555
    %v5056 = vsub.f32 %v5044, %v5054
    %v5057 = vsub.f32 %v5045, %v5055
    %v5058 = vmul.f32 %v5056, %v5056
    %v5059 = vmul.f32 %v5057, %v5057
    %v5060 = vsel %vm373, %v5058, 0.0
    %5061 = vadd.xlane.f32.xlu0 %v5060
    %v5062 = vpop.xlane.xlu0 %5061
    %v5063 = vsel %vm373, %v5059, 0.0
    %5064 = vadd.xlane.f32.xlu0 %v5063
    %v5065 = vpop.xlane.xlu0 %5064
    %v5066 = vmul.f32 %v5062, %v2555
    %v5067 = vmul.f32 %v5065, %v2555
    %v5068 = vadd.f32 %v5066, 1e-05
    %v5069 = vadd.f32 %v5067, 1e-05
    %v5070 = vrsqrt.pop %v5068
    %v5071 = vrsqrt.pop %v5069
    %v5072 = vmul.f32 %v5056, %v5070
    %v5073 = vmul.f32 %v5057, %v5071
    %v5075 = vlaneseq
    %v5076 = vshrl.u32 %v5075, 7
    %v5077 = vsub.s32 0, %v5076
    %v5078 = vrot.slane %v5046, %v5077
    %v5080 = vmul.f32 %v5072, %v5078
    %v5081 = vmul.f32 %v5073, %v5078
    %v5083 = vlaneseq
    %v5084 = vshrl.u32 %v5083, 7
    %v5085 = vsub.s32 0, %v5084
    %v5086 = vrot.slane %v5047, %v5085
    %v5088 = vadd.f32 %v5080, %v5086
    %v5089 = vadd.f32 %v5081, %v5086
    %5090 = vst.msk [vmem:[#allocation37] sm:$0xff] %vm373, %v5088
    %5091 = vst.msk [vmem:[#allocation37 + $0x8] sm:$0xff] %vm373, %v5089
    // Predicated region
    $region178: #{tpu_custom_call.1} parent=1 // pred_check
      _
    $region179: #{tpu_custom_call.1} parent=1 // pred_check_branch
      %5093 = sbr.rel (0) target = $region181
    $region180: #{tpu_custom_call.1} parent=1 // pred_region
      %s5095 = ssub.s32 256, 256
      %5096 = vsyncadd [#allocation4], %s5095
      %s5097 = sshll.u32 [#allocation37], 4
      %s5098 = int_to_ptr.vmem [resolvable:$true] %s5097
      %5103 = dma.vmem_to_hbm [thread:$0]  %s5098, 256, %s22, [#allocation4], 128, 128, 8
    $region181: #{tpu_custom_call.1} parent=1 // pred_fallthru
      _
    // Predicated region
    $region182: #{tpu_custom_call.1} parent=1 // pred_check
      _
    $region183: #{tpu_custom_call.1} parent=1 // pred_check_branch
      %5105 = sbr.rel (0) target = $region185
    $region184: #{tpu_custom_call.1} parent=1 // pred_region
      %5106 = dma.done [#allocation4], 256
    $region185: #{tpu_custom_call.1} parent=1 // pred_fallthru
      _
    %5107 = vsyncpa [#allocation3], 1
    %5108 = vsyncpa [#allocation6], 1
    %5109 = vsyncpa [#allocation9], 1
    %5110 = vsyncpa [#allocation12], 1
    %5111 = vsyncpa [#allocation15], 1
    %5112 = vsyncpa [#allocation18], 1
    %5113 = vsyncpa [#allocation21], 1
    %5114 = vsyncpa [#allocation24], 1
    %5115 = vsyncpa [#allocation27], 1
    %5116 = vsyncpa [#allocation30], 1
    %5117 = vsyncpa [#allocation33], 1
    %5118 = vsyncpa [#allocation36], 1
    %5119 = vsyncpa [#allocation4], 1

// kernel: tpu_custom_call.1
$region0: #{tpu_custom_call.1}
  #allocation0 [shape = 'u32[]', space=smem, size = 0x4, offset = 0x4, fixed_abs, tag = 'smem constant byte address 0x4 - core index']
  #allocation1 [shape = 'u32[144,128]{1,0:T(1,128)}', space=vmem, size = 0x12000, scoped, tag = 'internal scratch']
  %s0 = inlined_call_operand.hbm [shape: f32[2,8,32], index: 0, kind: input, shape index: {}]
  %s1 = inlined_call_operand.hbm [shape: bf16[2,8,32], index: 1, kind: input, shape index: {}]
  %s2 = inlined_call_operand.hbm [shape: bf16[32,96], index: 2, kind: input, shape index: {}]
  %s3 = inlined_call_operand.hbm [shape: f32[1,96], index: 3, kind: input, shape index: {}]
  %s4 = inlined_call_operand.hbm [shape: bf16[32,32], index: 4, kind: input, shape index: {}]
  %s5 = inlined_call_operand.hbm [shape: f32[1,32], index: 5, kind: input, shape index: {}]
  %s6 = inlined_call_operand.hbm [shape: f32[1,32], index: 6, kind: input, shape index: {}]
  %s7 = inlined_call_operand.hbm [shape: f32[1,32], index: 7, kind: input, shape index: {}]
  %s8 = inlined_call_operand.hbm [shape: bf16[32,32], index: 8, kind: input, shape index: {}]
  %s9 = inlined_call_operand.hbm [shape: f32[1,32], index: 9, kind: input, shape index: {}]
  %s10 = inlined_call_operand.hbm [shape: bf16[32,64], index: 10, kind: input, shape index: {}]
  %s11 = inlined_call_operand.hbm [shape: f32[1,64], index: 11, kind: input, shape index: {}]
  %s12 = inlined_call_operand.hbm [shape: bf16[32,32], index: 12, kind: input, shape index: {}]
  %s13 = inlined_call_operand.hbm [shape: f32[1,32], index: 13, kind: input, shape index: {}]
  %s14 = inlined_call_operand.hbm [shape: f32[1,32], index: 14, kind: input, shape index: {}]
  %s15 = inlined_call_operand.hbm [shape: f32[1,32], index: 15, kind: input, shape index: {}]
  %s16 = inlined_call_operand.hbm [shape: bf16[32,64], index: 16, kind: input, shape index: {}]
  %s17 = inlined_call_operand.hbm [shape: f32[1,64], index: 17, kind: input, shape index: {}]
  %s18 = inlined_call_operand.hbm [shape: bf16[64,32], index: 18, kind: input, shape index: {}]
  %s19 = inlined_call_operand.hbm [shape: f32[1,32], index: 19, kind: input, shape index: {}]
  %s20 = inlined_call_operand.hbm [shape: f32[1,32], index: 20, kind: input, shape index: {}]
  %s21 = inlined_call_operand.hbm [shape: f32[1,32], index: 21, kind: input, shape index: {}]
  %s22 = inlined_call_operand.hbm [shape: f32[2,8,32], index: 22, kind: output, shape index: {}]
  %s23 = sld [smem:[#allocation0]]
  $region186: #{tpu_custom_call.1} parent=0
    _
  %s25 = ssub.s32 1, %s23
  %s26 = scalar_select 0, %s25, %s23
  $region1: #{tpu_custom_call.1} parent=0
    #allocation2 [shape = 'u8[8192]{0}', space=vmem, size = 0x2000, scoped, tag = 'input window, operand 0, single buffered']
    #allocation3 [shape = 's32[1]{0}', space=sflag, size = 0x4, scoped, tag = 'scoped memory for tpu_custom_call.1']
    #allocation4 [shape = 's32[1]{0}', space=sflag, size = 0x4, scoped, tag = 'scoped memory for tpu_custom_call.1']
    #allocation5 [shape = 'u8[4096]{0}', space=vmem, size = 0x1000, scoped, tag = 'input window, operand 1, single buffered']
    #allocation6 [shape = 's32[1]{0}', space=sflag, size = 0x4, scoped, tag = 'scoped memory for tpu_custom_call.1']
    #allocation7 [shape = 'u8[8192]{0}', space=vmem, size = 0x2000, scoped, tag = 'input window, operand 2, single buffered']
    #allocation8 [shape = 'u8[512]{0}', space=vmem, size = 0x400, scoped, tag = 'input window, operand 3, single buffered']
    #allocation9 [shape = 's32[1]{0}', space=sflag, size = 0x4, scoped, tag = 'scoped memory for tpu_custom_call.1']
    #allocation10 [shape = 'u8[8192]{0}', space=vmem, size = 0x2000, scoped, tag = 'input window, operand 4, single buffered']
    #allocation11 [shape = 'u8[512]{0}', space=vmem, size = 0x400, scoped, tag = 'input window, operand 5, single buffered']
    #allocation12 [shape = 's32[1]{0}', space=sflag, size = 0x4, scoped, tag = 'scoped memory for tpu_custom_call.1']
    #allocation13 [shape = 'u8[512]{0}', space=vmem, size = 0x400, scoped, tag = 'input window, operand 6, single buffered']
    #allocation14 [shape = 'u8[512]{0}', space=vmem, size = 0x400, scoped, tag = 'input window, operand 7, single buffered']
    #allocation15 [shape = 's32[1]{0}', space=sflag, size = 0x4, scoped, tag = 'scoped memory for tpu_custom_call.1']
    #allocation16 [shape = 'u8[8192]{0}', space=vmem, size = 0x2000, scoped, tag = 'input window, operand 8, single buffered']
    #allocation17 [shape = 'u8[512]{0}', space=vmem, size = 0x400, scoped, tag = 'input window, operand 9, single buffered']
    #allocation18 [shape = 's32[1]{0}', space=sflag, size = 0x4, scoped, tag = 'scoped memory for tpu_custom_call.1']
    #allocation19 [shape = 'u8[8192]{0}', space=vmem, size = 0x2000, scoped, tag = 'input window, operand 10, single buffered']
    #allocation20 [shape = 'u8[512]{0}', space=vmem, size = 0x400, scoped, tag = 'input window, operand 11, single buffered']
    #allocation21 [shape = 's32[1]{0}', space=sflag, size = 0x4, scoped, tag = 'scoped memory for tpu_custom_call.1']
    #allocation22 [shape = 'u8[8192]{0}', space=vmem, size = 0x2000, scoped, tag = 'input window, operand 12, single buffered']
    #allocation23 [shape = 'u8[512]{0}', space=vmem, size = 0x400, scoped, tag = 'input window, operand 13, single buffered']
    #allocation24 [shape = 's32[1]{0}', space=sflag, size = 0x4, scoped, tag = 'scoped memory for tpu_custom_call.1']
    #allocation25 [shape = 'u8[512]{0}', space=vmem, size = 0x400, scoped, tag = 'input window, operand 14, single buffered']
    #allocation26 [shape = 'u8[512]{0}', space=vmem, size = 0x400, scoped, tag = 'input window, operand 15, single buffered']
    #allocation27 [shape = 's32[1]{0}', space=sflag, size = 0x4, scoped, tag = 'scoped memory for tpu_custom_call.1']
    #allocation28 [shape = 'u8[8192]{0}', space=vmem, size = 0x2000, scoped, tag = 'input window, operand 16, single buffered']
    #allocation29 [shape = 'u8[512]{0}', space=vmem, size = 0x400, scoped, tag = 'input window, operand 17, single buffered']
    #allocation30 [shape = 's32[1]{0}', space=sflag, size = 0x4, scoped, tag = 'scoped memory for tpu_custom_call.1']
    #allocation31 [shape = 'u8[16384]{0}', space=vmem, size = 0x4000, scoped, tag = 'input window, operand 18, single buffered']
    #allocation32 [shape = 'u8[512]{0}', space=vmem, size = 0x400, scoped, tag = 'input window, operand 19, single buffered']
    #allocation33 [shape = 's32[1]{0}', space=sflag, size = 0x4, scoped, tag = 'scoped memory for tpu_custom_call.1']
    #allocation34 [shape = 'u8[512]{0}', space=vmem, size = 0x400, scoped, tag = 'input window, operand 20, single buffered']
    #allocation35 [shape = 'u8[512]{0}', space=vmem, size = 0x400, scoped, tag = 'input window, operand 21, single buffered']
    #allocation36 [shape = 's32[1]{0}', space=sflag, size = 0x4, scoped, tag = 'scoped memory for tpu_custom_call.1']
    #allocation37 [shape = 'u8[8192]{0}', space=vmem, size = 0x2000, scoped, tag = 'output window, operand 0, single buffered']
    %27 = vsyncpa [#allocation3], 0
    %28 = vsyncpa [#allocation6], 0
    %29 = vsyncpa [#allocation9], 0
    %30 = vsyncpa [#allocation12], 0
    %31 = vsyncpa [#allocation15], 0
    %32 = vsyncpa [#allocation18], 0
    %33 = vsyncpa [#allocation21], 0
    %34 = vsyncpa [#allocation24], 0
    %35 = vsyncpa [#allocation27], 0
    %36 = vsyncpa [#allocation30], 0
    %37 = vsyncpa [#allocation33], 0
    %38 = vsyncpa [#allocation36], 0
    %39 = vsyncpa [#allocation4], 0
    // Predicated region
    $region2: #{tpu_custom_call.1} parent=1 // pred_check
      _
    $region3: #{tpu_custom_call.1} parent=1 // pred_check_branch
      %41 = sbr.rel (0) target = $region5
    $region4: #{tpu_custom_call.1} parent=1 // pred_region
      %s43 = ssub.s32 256, 256
      %44 = vsyncadd [#allocation3], %s43
      %s45 = sshll.u32 [#allocation2], 4
      %s46 = int_to_ptr.vmem [resolvable:$true] %s45
      %51 = dma.hbm_to_vmem [thread:$0]  %s0, 256, %s46, [#allocation3], 128, 128, 8
    $region5: #{tpu_custom_call.1} parent=1 // pred_fallthru
      _
    // Predicated region
    $region6: #{tpu_custom_call.1} parent=1 // pred_check
      _
    $region7: #{tpu_custom_call.1} parent=1 // pred_check_branch
      %53 = sbr.rel (0) target = $region9
    $region8: #{tpu_custom_call.1} parent=1 // pred_region
      %s55 = ssub.s32 128, 128
      %56 = vsyncadd [#allocation6], %s55
      %s57 = sshll.u32 [#allocation5], 4
      %s58 = int_to_ptr.vmem [resolvable:$true] %s57
      %63 = dma.hbm_to_vmem [thread:$0]  %s1, 128, %s58, [#allocation6], 64, 64, 4
    $region9: #{tpu_custom_call.1} parent=1 // pred_fallthru
      _
    // Predicated region
    $region10: #{tpu_custom_call.1} parent=1 // pred_check
      _
    $region11: #{tpu_custom_call.1} parent=1 // pred_check_branch
      %65 = sbr.rel (0) target = $region13
    $region12: #{tpu_custom_call.1} parent=1 // pred_region
      %s67 = ssub.s32 256, 256
      %68 = vsyncadd [#allocation6], %s67
      %s69 = sshll.u32 [#allocation7], 4
      %s70 = int_to_ptr.vmem [resolvable:$true] %s69
      %75 = dma.hbm_to_vmem [thread:$0]  %s2, 256, %s70, [#allocation6], 64, 64, 4
    $region13: #{tpu_custom_call.1} parent=1 // pred_fallthru
      _
    // Predicated region
    $region14: #{tpu_custom_call.1} parent=1 // pred_check
      _
    $region15: #{tpu_custom_call.1} parent=1 // pred_check_branch
      %77 = sbr.rel (0) target = $region17
    $region16: #{tpu_custom_call.1} parent=1 // pred_region
      %s79 = ssub.s32 16, 16
      %80 = vsyncadd [#allocation9], %s79
      %s82 = sshll.u32 [#allocation8], 4
      %s83 = int_to_ptr.vmem [resolvable:$true] %s82
      %85 = dma.hbm_to_vmem [thread:$0]  %s3, 16, %s83, [#allocation9]
    $region17: #{tpu_custom_call.1} parent=1 // pred_fallthru
      _
    // Predicated region
    $region18: #{tpu_custom_call.1} parent=1 // pred_check
      _
    $region19: #{tpu_custom_call.1} parent=1 // pred_check_branch
      %87 = sbr.rel (0) target = $region21
    $region20: #{tpu_custom_call.1} parent=1 // pred_region
      %s89 = ssub.s32 256, 256
      %90 = vsyncadd [#allocation9], %s89
      %s91 = sshll.u32 [#allocation10], 4
      %s92 = int_to_ptr.vmem [resolvable:$true] %s91
      %97 = dma.hbm_to_vmem [thread:$0]  %s4, 256, %s92, [#allocation9], 64, 64, 4
    $region21: #{tpu_custom_call.1} parent=1 // pred_fallthru
      _
    // Predicated region
    $region22: #{tpu_custom_call.1} parent=1 // pred_check
      _
    $region23: #{tpu_custom_call.1} parent=1 // pred_check_branch
      %99 = sbr.rel (0) target = $region25
    $region24: #{tpu_custom_call.1} parent=1 // pred_region
      %s101 = ssub.s32 16, 16
      %102 = vsyncadd [#allocation12], %s101
      %s104 = sshll.u32 [#allocation11], 4
      %s105 = int_to_ptr.vmem [resolvable:$true] %s104
      %107 = dma.hbm_to_vmem [thread:$0]  %s5, 16, %s105, [#allocation12]
    $region25: #{tpu_custom_call.1} parent=1 // pred_fallthru
      _
    // Predicated region
    $region26: #{tpu_custom_call.1} parent=1 // pred_check
      _
    $region27: #{tpu_custom_call.1} parent=1 // pred_check_branch
      %109 = sbr.rel (0) target = $region29
    $region28: #{tpu_custom_call.1} parent=1 // pred_region
      %s111 = ssub.s32 16, 16
      %112 = vsyncadd [#allocation12], %s111
      %s114 = sshll.u32 [#allocation13], 4
      %s115 = int_to_ptr.vmem [resolvable:$true] %s114
      %117 = dma.hbm_to_vmem [thread:$0]  %s6, 16, %s115, [#allocation12]
    $region29: #{tpu_custom_call.1} parent=1 // pred_fallthru
      _
    // Predicated region
    $region30: #{tpu_custom_call.1} parent=1 // pred_check
      _
    $region31: #{tpu_custom_call.1} parent=1 // pred_check_branch
      %119 = sbr.rel (0) target = $region33
    $region32: #{tpu_custom_call.1} parent=1 // pred_region
      %s121 = ssub.s32 16, 16
      %122 = vsyncadd [#allocation15], %s121
      %s124 = sshll.u32 [#allocation14], 4
      %s125 = int_to_ptr.vmem [resolvable:$true] %s124
      %127 = dma.hbm_to_vmem [thread:$0]  %s7, 16, %s125, [#allocation15]
    $region33: #{tpu_custom_call.1} parent=1 // pred_fallthru
      _
    // Predicated region
    $region34: #{tpu_custom_call.1} parent=1 // pred_check
      _
    $region35: #{tpu_custom_call.1} parent=1 // pred_check_branch
      %129 = sbr.rel (0) target = $region37
    $region36: #{tpu_custom_call.1} parent=1 // pred_region
      %s131 = ssub.s32 256, 256
      %132 = vsyncadd [#allocation15], %s131
      %s133 = sshll.u32 [#allocation16], 4
      %s134 = int_to_ptr.vmem [resolvable:$true] %s133
      %139 = dma.hbm_to_vmem [thread:$0]  %s8, 256, %s134, [#allocation15], 64, 64, 4
    $region37: #{tpu_custom_call.1} parent=1 // pred_fallthru
      _
    // Predicated region
    $region38: #{tpu_custom_call.1} parent=1 // pred_check
      _
    $region39: #{tpu_custom_call.1} parent=1 // pred_check_branch
      %141 = sbr.rel (0) target = $region41
    $region40: #{tpu_custom_call.1} parent=1 // pred_region
      %s143 = ssub.s32 16, 16
      %144 = vsyncadd [#allocation18], %s143
      %s146 = sshll.u32 [#allocation17], 4
      %s147 = int_to_ptr.vmem [resolvable:$true] %s146
      %149 = dma.hbm_to_vmem [thread:$0]  %s9, 16, %s147, [#allocation18]
    $region41: #{tpu_custom_call.1} parent=1 // pred_fallthru
      _
    // Predicated region
    $region42: #{tpu_custom_call.1} parent=1 // pred_check
      _
    $region43: #{tpu_custom_call.1} parent=1 // pred_check_branch
      %151 = sbr.rel (0) target = $region45
    $region44: #{tpu_custom_call.1} parent=1 // pred_region
      %s153 = ssub.s32 256, 256
      %154 = vsyncadd [#allocation18], %s153
      %s155 = sshll.u32 [#allocation19], 4
      %s156 = int_to_ptr.vmem [resolvable:$true] %s155
      %161 = dma.hbm_to_vmem [thread:$0]  %s10, 256, %s156, [#allocation18], 64, 64, 4
    $region45: #{tpu_custom_call.1} parent=1 // pred_fallthru
      _
    // Predicated region
    $region46: #{tpu_custom_call.1} parent=1 // pred_check
      _
    $region47: #{tpu_custom_call.1} parent=1 // pred_check_branch
      %163 = sbr.rel (0) target = $region49
    $region48: #{tpu_custom_call.1} parent=1 // pred_region
      %s165 = ssub.s32 16, 16
      %166 = vsyncadd [#allocation21], %s165
      %s168 = sshll.u32 [#allocation20], 4
      %s169 = int_to_ptr.vmem [resolvable:$true] %s168
      %171 = dma.hbm_to_vmem [thread:$0]  %s11, 16, %s169, [#allocation21]
    $region49: #{tpu_custom_call.1} parent=1 // pred_fallthru
      _
    // Predicated region
    $region50: #{tpu_custom_call.1} parent=1 // pred_check
      _
    $region51: #{tpu_custom_call.1} parent=1 // pred_check_branch
      %173 = sbr.rel (0) target = $region53
    $region52: #{tpu_custom_call.1} parent=1 // pred_region
      %s175 = ssub.s32 256, 256
      %176 = vsyncadd [#allocation21], %s175
      %s177 = sshll.u32 [#allocation22], 4
      %s178 = int_to_ptr.vmem [resolvable:$true] %s177
      %183 = dma.hbm_to_vmem [thread:$0]  %s12, 256, %s178, [#allocation21], 64, 64, 4
    $region53: #{tpu_custom_call.1} parent=1 // pred_fallthru
      _
    // Predicated region
    $region54: #{tpu_custom_call.1} parent=1 // pred_check
      _
    $region55: #{tpu_custom_call.1} parent=1 // pred_check_branch
      %185 = sbr.rel (0) target = $region57
    $region56: #{tpu_custom_call.1} parent=1 // pred_region
      %s187 = ssub.s32 16, 16
      %188 = vsyncadd [#allocation24], %s187
      %s190 = sshll.u32 [#allocation23], 4
      %s191 = int_to_ptr.vmem [resolvable:$true] %s190
      %193 = dma.hbm_to_vmem [thread:$0]  %s13, 16, %s191, [#allocation24]
    $region57: #{tpu_custom_call.1} parent=1 // pred_fallthru
      _
    // Predicated region
    $region58: #{tpu_custom_call.1} parent=1 // pred_check
      _
    $region59: #{tpu_custom_call.1} parent=1 // pred_check_branch
      %195 = sbr.rel (0) target = $region61
    $region60: #{tpu_custom_call.1} parent=1 // pred_region
      %s197 = ssub.s32 16, 16
      %198 = vsyncadd [#allocation24], %s197
      %s200 = sshll.u32 [#allocation25], 4
      %s201 = int_to_ptr.vmem [resolvable:$true] %s200
      %203 = dma.hbm_to_vmem [thread:$0]  %s14, 16, %s201, [#allocation24]
    $region61: #{tpu_custom_call.1} parent=1 // pred_fallthru
      _
    // Predicated region
    $region62: #{tpu_custom_call.1} parent=1 // pred_check
      _
    $region63: #{tpu_custom_call.1} parent=1 // pred_check_branch
      %205 = sbr.rel (0) target = $region65
    $region64: #{tpu_custom_call.1} parent=1 // pred_region
      %s207 = ssub.s32 16, 16
      %208 = vsyncadd [#allocation27], %s207
      %s210 = sshll.u32 [#allocation26], 4
      %s211 = int_to_ptr.vmem [resolvable:$true] %s210
      %213 = dma.hbm_to_vmem [thread:$0]  %s15, 16, %s211, [#allocation27]
    $region65: #{tpu_custom_call.1} parent=1 // pred_fallthru
      _
    // Predicated region
    $region66: #{tpu_custom_call.1} parent=1 // pred_check
      _
    $region67: #{tpu_custom_call.1} parent=1 // pred_check_branch
      %215 = sbr.rel (0) target = $region69
    $region68: #{tpu_custom_call.1} parent=1 // pred_region
      %s217 = ssub.s32 256, 256
      %218 = vsyncadd [#allocation27], %s217
      %s219 = sshll.u32 [#allocation28], 4
      %s220 = int_to_ptr.vmem [resolvable:$true] %s219
      %225 = dma.hbm_to_vmem [thread:$0]  %s16, 256, %s220, [#allocation27], 64, 64, 4
    $region69: #{tpu_custom_call.1} parent=1 // pred_fallthru
      _
    // Predicated region
    $region70: #{tpu_custom_call.1} parent=1 // pred_check
      _
    $region71: #{tpu_custom_call.1} parent=1 // pred_check_branch
      %227 = sbr.rel (0) target = $region73
    $region72: #{tpu_custom_call.1} parent=1 // pred_region
      %s229 = ssub.s32 16, 16
      %230 = vsyncadd [#allocation30], %s229
      %s232 = sshll.u32 [#allocation29], 4
      %s233 = int_to_ptr.vmem [resolvable:$true] %s232
      %235 = dma.hbm_to_vmem [thread:$0]  %s17, 16, %s233, [#allocation30]
    $region73: #{tpu_custom_call.1} parent=1 // pred_fallthru
      _
    // Predicated region
    $region74: #{tpu_custom_call.1} parent=1 // pred_check
      _
    $region75: #{tpu_custom_call.1} parent=1 // pred_check_branch
      %237 = sbr.rel (0) target = $region77
    $region76: #{tpu_custom_call.1} parent=1 // pred_region
      %s239 = ssub.s32 512, 512
      %240 = vsyncadd [#allocation30], %s239
      %s241 = sshll.u32 [#allocation31], 4
      %s242 = int_to_ptr.vmem [resolvable:$true] %s241
      %247 = dma.hbm_to_vmem [thread:$0]  %s18, 512, %s242, [#allocation30], 64, 64, 4
    $region77: #{tpu_custom_call.1} parent=1 // pred_fallthru
      _
    // Predicated region
    $region78: #{tpu_custom_call.1} parent=1 // pred_check
      _
    $region79: #{tpu_custom_call.1} parent=1 // pred_check_branch
      %249 = sbr.rel (0) target = $region81
    $region80: #{tpu_custom_call.1} parent=1 // pred_region
      %s251 = ssub.s32 16, 16
      %252 = vsyncadd [#allocation33], %s251
      %s254 = sshll.u32 [#allocation32], 4
      %s255 = int_to_ptr.vmem [resolvable:$true] %s254
      %257 = dma.hbm_to_vmem [thread:$0]  %s19, 16, %s255, [#allocation33]
    $region81: #{tpu_custom_call.1} parent=1 // pred_fallthru
      _
    // Predicated region
    $region82: #{tpu_custom_call.1} parent=1 // pred_check
      _
    $region83: #{tpu_custom_call.1} parent=1 // pred_check_branch
      %259 = sbr.rel (0) target = $region85
    $region84: #{tpu_custom_call.1} parent=1 // pred_region
      %s261 = ssub.s32 16, 16
      %262 = vsyncadd [#allocation33], %s261
      %s264 = sshll.u32 [#allocation34], 4
      %s265 = int_to_ptr.vmem [resolvable:$true] %s264
      %267 = dma.hbm_to_vmem [thread:$0]  %s20, 16, %s265, [#allocation33]
    $region85: #{tpu_custom_call.1} parent=1 // pred_fallthru
      _
    // Predicated region
    $region86: #{tpu_custom_call.1} parent=1 // pred_check
      _
    $region87: #{tpu_custom_call.1} parent=1 // pred_check_branch
      %269 = sbr.rel (0) target = $region89
    $region88: #{tpu_custom_call.1} parent=1 // pred_region
      %s271 = ssub.s32 16, 16
      %272 = vsyncadd [#allocation36], %s271
      %s274 = sshll.u32 [#allocation35], 4
      %s275 = int_to_ptr.vmem [resolvable:$true] %s274
      %277 = dma.hbm_to_vmem [thread:$0]  %s21, 16, %s275, [#allocation36]
    $region89: #{tpu_custom_call.1} parent=1 // pred_fallthru
      _
    // Predicated region
    $region90: #{tpu_custom_call.1} parent=1 // pred_check
      _
    $region91: #{tpu_custom_call.1} parent=1 // pred_check_branch
      %279 = sbr.rel (0) target = $region93
    $region92: #{tpu_custom_call.1} parent=1 // pred_region
      %280 = dma.done [#allocation3], 256
    $region93: #{tpu_custom_call.1} parent=1 // pred_fallthru
      _
    // Predicated region
    $region94: #{tpu_custom_call.1} parent=1 // pred_check
      _
    $region95: #{tpu_custom_call.1} parent=1 // pred_check_branch
      %282 = sbr.rel (0) target = $region97
    $region96: #{tpu_custom_call.1} parent=1 // pred_region
      %283 = dma.done [#allocation6], 128
    $region97: #{tpu_custom_call.1} parent=1 // pred_fallthru
      _
    // Predicated region
    $region98: #{tpu_custom_call.1} parent=1 // pred_check
      _
    $region99: #{tpu_custom_call.1} parent=1 // pred_check_branch
      %285 = sbr.rel (0) target = $region101
    $region100: #{tpu_custom_call.1} parent=1 // pred_region
      %286 = dma.done [#allocation6], 256
    $region101: #{tpu_custom_call.1} parent=1 // pred_fallthru
      _
    // Predicated region
    $region102: #{tpu_custom_call.1} parent=1 // pred_check
      _
    $region103: #{tpu_custom_call.1} parent=1 // pred_check_branch
      %288 = sbr.rel (0) target = $region105
    $region104: #{tpu_custom_call.1} parent=1 // pred_region
      %289 = dma.done [#allocation9], 16
    $region105: #{tpu_custom_call.1} parent=1 // pred_fallthru
      _
    // Predicated region
    $region106: #{tpu_custom_call.1} parent=1 // pred_check
      _
    $region107: #{tpu_custom_call.1} parent=1 // pred_check_branch
      %291 = sbr.rel (0) target = $region109
    $region108: #{tpu_custom_call.1} parent=1 // pred_region
      %292 = dma.done [#allocation9], 256
    $region109: #{tpu_custom_call.1} parent=1 // pred_fallthru
      _
    // Predicated region
    $region110: #{tpu_custom_call.1} parent=1 // pred_check
      _
    $region111: #{tpu_custom_call.1} parent=1 // pred_check_branch
      %294 = sbr.rel (0) target = $region113
    $region112: #{tpu_custom_call.1} parent=1 // pred_region
      %295 = dma.done [#allocation12], 16
    $region113: #{tpu_custom_call.1} parent=1 // pred_fallthru
      _
    // Predicated region
    $region114: #{tpu_custom_call.1} parent=1 // pred_check
      _
    $region115: #{tpu_custom_call.1} parent=1 // pred_check_branch
      %297 = sbr.rel (0) target = $region117
    $region116: #{tpu_custom_call.1} parent=1 // pred_region
      %298 = dma.done [#allocation12], 16
    $region117: #{tpu_custom_call.1} parent=1 // pred_fallthru
      _
    // Predicated region
    $region118: #{tpu_custom_call.1} parent=1 // pred_check
      _
    $region119: #{tpu_custom_call.1} parent=1 // pred_check_branch
      %300 = sbr.rel (0) target = $region121
    $region120: #{tpu_custom_call.1} parent=1 // pred_region
      %301 = dma.done [#allocation15], 16
    $region121: #{tpu_custom_call.1} parent=1 // pred_fallthru
      _
    // Predicated region
    $region122: #{tpu_custom_call.1} parent=1 // pred_check
      _
    $region123: #{tpu_custom_call.1} parent=1 // pred_check_branch
      %303 = sbr.rel (0) target = $region125
    $region124: #{tpu_custom_call.1} parent=1 // pred_region
      %304 = dma.done [#allocation15], 256
    $region125: #{tpu_custom_call.1} parent=1 // pred_fallthru
      _
    // Predicated region
    $region126: #{tpu_custom_call.1} parent=1 // pred_check
      _
    $region127: #{tpu_custom_call.1} parent=1 // pred_check_branch
      %306 = sbr.rel (0) target = $region129
    $region128: #{tpu_custom_call.1} parent=1 // pred_region
      %307 = dma.done [#allocation18], 16
    $region129: #{tpu_custom_call.1} parent=1 // pred_fallthru
      _
    // Predicated region
    $region130: #{tpu_custom_call.1} parent=1 // pred_check
      _
    $region131: #{tpu_custom_call.1} parent=1 // pred_check_branch
      %309 = sbr.rel (0) target = $region133
    $region132: #{tpu_custom_call.1} parent=1 // pred_region
      %310 = dma.done [#allocation18], 256
    $region133: #{tpu_custom_call.1} parent=1 // pred_fallthru
      _
    // Predicated region
    $region134: #{tpu_custom_call.1} parent=1 // pred_check
      _
    $region135: #{tpu_custom_call.1} parent=1 // pred_check_branch
      %312 = sbr.rel (0) target = $region137
    $region136: #{tpu_custom_call.1} parent=1 // pred_region
      %313 = dma.done [#allocation21], 16
    $region137: #{tpu_custom_call.1} parent=1 // pred_fallthru
      _
    // Predicated region
    $region138: #{tpu_custom_call.1} parent=1 // pred_check
      _
    $region139: #{tpu_custom_call.1} parent=1 // pred_check_branch
      %315 = sbr.rel (0) target = $region141
    $region140: #{tpu_custom_call.1} parent=1 // pred_region
      %316 = dma.done [#allocation21], 256
    $region141: #{tpu_custom_call.1} parent=1 // pred_fallthru
      _
    // Predicated region
    $region142: #{tpu_custom_call.1} parent=1 // pred_check
      _
    $region143: #{tpu_custom_call.1} parent=1 // pred_check_branch
      %318 = sbr.rel (0) target = $region145
    $region144: #{tpu_custom_call.1} parent=1 // pred_region
      %319 = dma.done [#allocation24], 16
    $region145: #{tpu_custom_call.1} parent=1 // pred_fallthru
      _
    // Predicated region
    $region146: #{tpu_custom_call.1} parent=1 // pred_check
      _
    $region147: #{tpu_custom_call.1} parent=1 // pred_check_branch
      %321 = sbr.rel (0) target = $region149
    $region148: #{tpu_custom_call.1} parent=1 // pred_region
      %322 = dma.done [#allocation24], 16
    $region149: #{tpu_custom_call.1} parent=1 // pred_fallthru
      _
    // Predicated region
    $region150: #{tpu_custom_call.1} parent=1 // pred_check
      _
    $region151: #{tpu_custom_call.1} parent=1 // pred_check_branch
      %324 = sbr.rel (0) target = $region153
    $region152: #{tpu_custom_call.1} parent=1 // pred_region
      %325 = dma.done [#allocation27], 16
    $region153: #{tpu_custom_call.1} parent=1 // pred_fallthru
      _
    // Predicated region
    $region154: #{tpu_custom_call.1} parent=1 // pred_check
      _
    $region155: #{tpu_custom_call.1} parent=1 // pred_check_branch
      %327 = sbr.rel (0) target = $region157
    $region156: #{tpu_custom_call.1} parent=1 // pred_region
      %328 = dma.done [#allocation27], 256
    $region157: #{tpu_custom_call.1} parent=1 // pred_fallthru
      _
    // Predicated region
    $region158: #{tpu_custom_call.1} parent=1 // pred_check
      _
    $region159: #{tpu_custom_call.1} parent=1 // pred_check_branch
      %330 = sbr.rel (0) target = $region161
    $region160: #{tpu_custom_call.1} parent=1 // pred_region
      %331 = dma.done [#allocation30], 16
    $region161: #{tpu_custom_call.1} parent=1 // pred_fallthru
      _
    // Predicated region
    $region162: #{tpu_custom_call.1} parent=1 // pred_check
      _
    $region163: #{tpu_custom_call.1} parent=1 // pred_check_branch
      %333 = sbr.rel (0) target = $region165
    $region164: #{tpu_custom_call.1} parent=1 // pred_region
      %334 = dma.done [#allocation30], 512
    $region165: #{tpu_custom_call.1} parent=1 // pred_fallthru
      _
    // Predicated region
    $region166: #{tpu_custom_call.1} parent=1 // pred_check
      _
    $region167: #{tpu_custom_call.1} parent=1 // pred_check_branch
      %336 = sbr.rel (0) target = $region169
    $region168: #{tpu_custom_call.1} parent=1 // pred_region
      %337 = dma.done [#allocation33], 16
    $region169: #{tpu_custom_call.1} parent=1 // pred_fallthru
      _
    // Predicated region
    $region170: #{tpu_custom_call.1} parent=1 // pred_check
      _
    $region171: #{tpu_custom_call.1} parent=1 // pred_check_branch
      %339 = sbr.rel (0) target = $region173
    $region172: #{tpu_custom_call.1} parent=1 // pred_region
      %340 = dma.done [#allocation33], 16
    $region173: #{tpu_custom_call.1} parent=1 // pred_fallthru
      _
    // Predicated region
    $region174: #{tpu_custom_call.1} parent=1 // pred_check
      _
    $region175: #{tpu_custom_call.1} parent=1 // pred_check_branch
      %342 = sbr.rel (0) target = $region177
    $region176: #{tpu_custom_call.1} parent=1 // pred_region
      %343 = dma.done [#allocation36], 16
    $region177: #{tpu_custom_call.1} parent=1 // pred_fallthru
      _
    %v345 = vld [vmem:[#allocation2] sm:$0xff]
    %v346 = vld [vmem:[#allocation2 + $0x8] sm:$0xff]
    %v347 = vld [vmem:[#allocation5] sm:$0xf]
    %v348 = vld [vmem:[#allocation5 + $0x4] sm:$0xf]
    %v349 = vpack.c.bf16 %v346, %v345
    %v350 = vld [vmem:[#allocation7] sm:$0xf]
    %v351 = vld [vmem:[#allocation7 + $0x4] sm:$0xf]
    %v352 = vld [vmem:[#allocation7 + $0x8] sm:$0xf]
    %v353 = vld [vmem:[#allocation7 + $0xc] sm:$0xf]
    %v354 = vld [vmem:[#allocation8] sm:$0x1]
    %v356 = vlaneseq
    %v357 = vshrl.u32 %v356, 7
    %v358 = vsub.s32 0, %v357
    %v359 = vrot.slane %v354, %v358
    %v365 = vunpack.c.l.b16 %v350
    %v366 = vunpack.c.l.b16 %v351
    %v367 = vunpack.c.l.b16 %v352
    %v368 = vunpack.c.l.b16 %v353
    %v369 = vpack.c.b16 %v366, %v365
    %v370 = vpack.c.b16 %v368, %v367
    %vm373 = vcmask 261120
    %v375 = vsel %vm373, %v349, 0
    %377 = vmatprep.subr.bf16.mxu0 0
    %378 = vmatpush1.bf16.msra.mxu0 %v369
    %379 = vmatprep.subr.bf16.mxu0 0
    %380 = vmatpush1.bf16.msra.mxu0 %v370
    %381 = vmatprep.subr.bf16.mxu0 0
    %382 = vmatpush1.bf16.msra.mxu0 0
    %383 = vmatprep.subr.bf16.mxu0 0
    %384 = vmatpush1.bf16.msra.mxu0 0
    %385 = vmatprep.subr.bf16.mxu0 0
    %386 = vmatpush1.bf16.msra.mxu0 0
    %387 = vmatprep.subr.bf16.mxu0 0
    %388 = vmatpush1.bf16.msra.mxu0 0
    %389 = vmatprep.subr.bf16.mxu0 0
    %390 = vmatpush1.bf16.msra.mxu0 0
    %391 = vmatprep.subr.bf16.mxu0 0
    %392 = vmatpush1.bf16.msra.mxu0 0
    %393 = vmatprep.subr.bf16.mxu0 0
    %394 = vmatpush1.bf16.msra.mxu0 0
    %395 = vmatprep.subr.bf16.mxu0 0
    %396 = vmatpush1.bf16.msra.mxu0 0
    %397 = vmatprep.subr.bf16.mxu0 0
    %398 = vmatpush1.bf16.msra.mxu0 0
    %399 = vmatprep.subr.bf16.mxu0 0
    %400 = vmatpush1.bf16.msra.mxu0 0
    %401 = vmatprep.subr.bf16.mxu0 0
    %402 = vmatpush1.bf16.msra.mxu0 0
    %403 = vmatprep.subr.bf16.mxu0 0
    %404 = vmatpush1.bf16.msra.mxu0 0
    %405 = vmatprep.subr.bf16.mxu0 0
    %406 = vmatpush1.bf16.msra.mxu0 0
    %407 = vmatprep.subr.bf16.mxu0 0
    %408 = vmatpush1.bf16.msra.mxu0 0
    %409 = vmatprep.mubr.bf16.mxu0 0
    %410 = vmatmul.mubr.bf16.gmra.mrb[0].mxu0 %v375
    %v411 = vpop.f32.mrb[0].mxu0
    %v412 = vadd.f32 %v359, %v411
    %v413 = vpop.f32.mrb[0].mxu0
    %v414 = vpop.f32.mrb[0].mxu0
    %v415 = vadd.f32 %v359, %v414
    %v416 = vpop.f32.mrb[0].mxu0
    %417 = vdwg.mxu0
    %v418 = vpack.c.bf16 %v415, %v412
    %420 = vrot.lane.b32.xlu0 %v418, 120
    %v421 = vpop.permute.xlu0 %420
    %422 = vrot.lane.b32.xlu0 %v418, 112
    %v423 = vpop.permute.xlu0 %422
    %424 = vrot.lane.b32.xlu0 %v418, 104
    %v425 = vpop.permute.xlu0 %424
    %v428 = vpack.i.b16 %v421, %v418
    %v430 = vshrl.u32 %v418, 16
    %v431 = vshrl.u32 %v421, 16
    %v432 = vpack.i.b16 %v431, %v430
    %v436 = vpack.i.b16 %v425, %v423
    %v438 = vshrl.u32 %v423, 16
    %v439 = vshrl.u32 %v425, 16
    %v440 = vpack.i.b16 %v439, %v438
    %v443 = vpack.i.b16 0, 0
    %v445 = vshrl.u32 0, 16
    %v446 = vpack.i.b16 %v445, %v445
    %v448 = vcombine.high %v428, %v443
    %v450 = vunpack.c.l.s4 1983009808
    %v451 = vunpack.c.0.s8 %v450
    %v452 = vlaneseq
    %v453 = vshrl.u32 %v452, 7
    %v454 = vsub.s32 %v451, %v453
    %v455 = vrot.slane %v428, %v454
    %v457 = vunpack.c.l.s4 1983009808
    %v458 = vunpack.c.0.s8 %v457
    %v459 = vlaneseq
    %v460 = vshrl.u32 %v459, 7
    %v461 = vsub.s32 %v458, %v460
    %v462 = vrot.slane %v448, %v461
    %v463 = vcombine.high %v436, %v443
    %v465 = vunpack.c.l.s4 1983009808
    %v466 = vunpack.c.0.s8 %v465
    %v467 = vlaneseq
    %v468 = vshrl.u32 %v467, 7
    %v469 = vsub.s32 %v466, %v468
    %v470 = vrot.slane %v436, %v469
    %v472 = vunpack.c.l.s4 1983009808
    %v473 = vunpack.c.0.s8 %v472
    %v474 = vlaneseq
    %v475 = vshrl.u32 %v474, 7
    %v476 = vsub.s32 %v473, %v475
    %v477 = vrot.slane %v463, %v476
    %v478 = vcombine.low %v455, %v470
    %v479 = vcombine.high %v455, %v470
    %v481 = vunpack.c.l.s4 1934713408
    %v482 = vunpack.c.0.s8 %v481
    %v483 = vlaneseq
    %v484 = vshrl.u32 %v483, 7
    %v485 = vsub.s32 %v482, %v484
    %v486 = vrot.slane %v478, %v485
    %v488 = vunpack.c.l.s4 1934713408
    %v489 = vunpack.c.0.s8 %v488
    %v490 = vlaneseq
    %v491 = vshrl.u32 %v490, 7
    %v492 = vsub.s32 %v489, %v491
    %v493 = vrot.slane %v479, %v492
    %v494 = vcombine.low %v462, %v477
    %v495 = vcombine.high %v462, %v477
    %v497 = vunpack.c.l.s4 1934713408
    %v498 = vunpack.c.0.s8 %v497
    %v499 = vlaneseq
    %v500 = vshrl.u32 %v499, 7
    %v501 = vsub.s32 %v498, %v500
    %v502 = vrot.slane %v494, %v501
    %v504 = vunpack.c.l.s4 1934713408
    %v505 = vunpack.c.0.s8 %v504
    %v506 = vlaneseq
    %v507 = vshrl.u32 %v506, 7
    %v508 = vsub.s32 %v505, %v507
    %v509 = vrot.slane %v495, %v508
    %v510 = vcombine.high %v486, 0
    %v511 = vcombine.high %v493, 0
    %v512 = vcombine.high %v502, 0
    %v513 = vcombine.high %v509, 0
    %v514 = vcombine.high %v432, %v446
    %v516 = vunpack.c.l.s4 1983009808
    %v517 = vunpack.c.0.s8 %v516
    %v518 = vlaneseq
    %v519 = vshrl.u32 %v518, 7
    %v520 = vsub.s32 %v517, %v519
    %v521 = vrot.slane %v432, %v520
    %v523 = vunpack.c.l.s4 1983009808
    %v524 = vunpack.c.0.s8 %v523
    %v525 = vlaneseq
    %v526 = vshrl.u32 %v525, 7
    %v527 = vsub.s32 %v524, %v526
    %v528 = vrot.slane %v514, %v527
    %v529 = vcombine.high %v440, %v446
    %v531 = vunpack.c.l.s4 1983009808
    %v532 = vunpack.c.0.s8 %v531
    %v533 = vlaneseq
    %v534 = vshrl.u32 %v533, 7
    %v535 = vsub.s32 %v532, %v534
    %v536 = vrot.slane %v440, %v535
    %v538 = vunpack.c.l.s4 1983009808
    %v539 = vunpack.c.0.s8 %v538
    %v540 = vlaneseq
    %v541 = vshrl.u32 %v540, 7
    %v542 = vsub.s32 %v539, %v541
    %v543 = vrot.slane %v529, %v542
    %v544 = vcombine.low %v521, %v536
    %v545 = vcombine.high %v521, %v536
    %v547 = vunpack.c.l.s4 1934713408
    %v548 = vunpack.c.0.s8 %v547
    %v549 = vlaneseq
    %v550 = vshrl.u32 %v549, 7
    %v551 = vsub.s32 %v548, %v550
    %v552 = vrot.slane %v544, %v551
    %v554 = vunpack.c.l.s4 1934713408
    %v555 = vunpack.c.0.s8 %v554
    %v556 = vlaneseq
    %v557 = vshrl.u32 %v556, 7
    %v558 = vsub.s32 %v555, %v557
    %v559 = vrot.slane %v545, %v558
    %v560 = vcombine.low %v528, %v543
    %v561 = vcombine.high %v528, %v543
    %v563 = vunpack.c.l.s4 1934713408
    %v564 = vunpack.c.0.s8 %v563
    %v565 = vlaneseq
    %v566 = vshrl.u32 %v565, 7
    %v567 = vsub.s32 %v564, %v566
    %v568 = vrot.slane %v560, %v567
    %v570 = vunpack.c.l.s4 1934713408
    %v571 = vunpack.c.0.s8 %v570
    %v572 = vlaneseq
    %v573 = vshrl.u32 %v572, 7
    %v574 = vsub.s32 %v571, %v573
    %v575 = vrot.slane %v561, %v574
    %v576 = vcombine.high %v552, 0
    %v577 = vcombine.high %v559, 0
    %v578 = vcombine.high %v568, 0
    %v579 = vcombine.high %v575, 0
    %v580 = vcombine.low %v486, %v493
    %v582 = vunpack.c.l.s4 1983009808
    %v583 = vunpack.c.0.s8 %v582
    %v584 = vlaneseq
    %v585 = vshrl.u32 %v584, 7
    %v586 = vsub.s32 %v583, %v585
    %v587 = vrot.slane %v580, %v586
    %v588 = vcombine.low %v510, %v511
    %v590 = vunpack.c.l.s4 1983009808
    %v591 = vunpack.c.0.s8 %v590
    %v592 = vlaneseq
    %v593 = vshrl.u32 %v592, 7
    %v594 = vsub.s32 %v591, %v593
    %v595 = vrot.slane %v588, %v594
    %v596 = vcombine.low %v587, %v595
    %v598 = vunpack.c.l.s4 1934713408
    %v599 = vunpack.c.0.s8 %v598
    %v600 = vlaneseq
    %v601 = vshrl.u32 %v600, 7
    %v602 = vsub.s32 %v599, %v601
    %v603 = vrot.slane %v596, %v602
    %v604 = vcombine.high %v603, 0
    %v605 = vcombine.low %v552, %v559
    %v607 = vunpack.c.l.s4 1983009808
    %v608 = vunpack.c.0.s8 %v607
    %v609 = vlaneseq
    %v610 = vshrl.u32 %v609, 7
    %v611 = vsub.s32 %v608, %v610
    %v612 = vrot.slane %v605, %v611
    %v613 = vcombine.low %v576, %v577
    %v615 = vunpack.c.l.s4 1983009808
    %v616 = vunpack.c.0.s8 %v615
    %v617 = vlaneseq
    %v618 = vshrl.u32 %v617, 7
    %v619 = vsub.s32 %v616, %v618
    %v620 = vrot.slane %v613, %v619
    %v621 = vcombine.low %v612, %v620
    %v623 = vunpack.c.l.s4 1934713408
    %v624 = vunpack.c.0.s8 %v623
    %v625 = vlaneseq
    %v626 = vshrl.u32 %v625, 7
    %v627 = vsub.s32 %v624, %v626
    %v628 = vrot.slane %v621, %v627
    %v629 = vcombine.high %v628, 0
    %v630 = vcombine.low %v502, %v509
    %v632 = vunpack.c.l.s4 1983009808
    %v633 = vunpack.c.0.s8 %v632
    %v634 = vlaneseq
    %v635 = vshrl.u32 %v634, 7
    %v636 = vsub.s32 %v633, %v635
    %v637 = vrot.slane %v630, %v636
    %v638 = vcombine.low %v512, %v513
    %v640 = vunpack.c.l.s4 1983009808
    %v641 = vunpack.c.0.s8 %v640
    %v642 = vlaneseq
    %v643 = vshrl.u32 %v642, 7
    %v644 = vsub.s32 %v641, %v643
    %v645 = vrot.slane %v638, %v644
    %v646 = vcombine.low %v637, %v645
    %v648 = vunpack.c.l.s4 1934713408
    %v649 = vunpack.c.0.s8 %v648
    %v650 = vlaneseq
    %v651 = vshrl.u32 %v650, 7
    %v652 = vsub.s32 %v649, %v651
    %v653 = vrot.slane %v646, %v652
    %v654 = vcombine.high %v653, 0
    %v655 = vcombine.low %v568, %v575
    %v657 = vunpack.c.l.s4 1983009808
    %v658 = vunpack.c.0.s8 %v657
    %v659 = vlaneseq
    %v660 = vshrl.u32 %v659, 7
    %v661 = vsub.s32 %v658, %v660
    %v662 = vrot.slane %v655, %v661
    %v663 = vcombine.low %v578, %v579
    %v665 = vunpack.c.l.s4 1983009808
    %v666 = vunpack.c.0.s8 %v665
    %v667 = vlaneseq
    %v668 = vshrl.u32 %v667, 7
    %v669 = vsub.s32 %v666, %v668
    %v670 = vrot.slane %v663, %v669
    %v671 = vcombine.low %v662, %v670
    %v673 = vunpack.c.l.s4 1934713408
    %v674 = vunpack.c.0.s8 %v673
    %v675 = vlaneseq
    %v676 = vshrl.u32 %v675, 7
    %v677 = vsub.s32 %v674, %v676
    %v678 = vrot.slane %v671, %v677
    %v679 = vcombine.high %v678, 0
    %v682 = vpack.i.b16 %v628, %v603
    %v683 = vshrl.u32 %v603, 16
    %v684 = vshrl.u32 %v628, 16
    %v685 = vpack.i.b16 %v684, %v683
    %v688 = vpack.i.b16 %v629, %v604
    %v689 = vshrl.u32 %v604, 16
    %v690 = vshrl.u32 %v629, 16
    %v691 = vpack.i.b16 %v690, %v689
    %v694 = vpack.i.b16 %v678, %v653
    %v695 = vshrl.u32 %v653, 16
    %v696 = vshrl.u32 %v678, 16
    %v697 = vpack.i.b16 %v696, %v695
    %v700 = vpack.i.b16 %v679, %v654
    %v701 = vshrl.u32 %v654, 16
    %v702 = vshrl.u32 %v679, 16
    %v703 = vpack.i.b16 %v702, %v701
    %704 = vrot.lane.b32.xlu0 %v418, 96
    %v705 = vpop.permute.xlu0 %704
    %706 = vrot.lane.b32.xlu0 %v421, 96
    %v707 = vpop.permute.xlu0 %706
    %708 = vrot.lane.b32.xlu0 %v423, 96
    %v709 = vpop.permute.xlu0 %708
    %710 = vrot.lane.b32.xlu0 %v425, 96
    %v711 = vpop.permute.xlu0 %710
    %v714 = vpack.i.b16 %v707, %v705
    %v716 = vshrl.u32 %v705, 16
    %v717 = vshrl.u32 %v707, 16
    %v718 = vpack.i.b16 %v717, %v716
    %v722 = vpack.i.b16 %v711, %v709
    %v724 = vshrl.u32 %v709, 16
    %v725 = vshrl.u32 %v711, 16
    %v726 = vpack.i.b16 %v725, %v724
    %v728 = vcombine.high %v714, %v443
    %v730 = vunpack.c.l.s4 1983009808
    %v731 = vunpack.c.0.s8 %v730
    %v732 = vlaneseq
    %v733 = vshrl.u32 %v732, 7
    %v734 = vsub.s32 %v731, %v733
    %v735 = vrot.slane %v714, %v734
    %v737 = vunpack.c.l.s4 1983009808
    %v738 = vunpack.c.0.s8 %v737
    %v739 = vlaneseq
    %v740 = vshrl.u32 %v739, 7
    %v741 = vsub.s32 %v738, %v740
    %v742 = vrot.slane %v728, %v741
    %v743 = vcombine.high %v722, %v443
    %v745 = vunpack.c.l.s4 1983009808
    %v746 = vunpack.c.0.s8 %v745
    %v747 = vlaneseq
    %v748 = vshrl.u32 %v747, 7
    %v749 = vsub.s32 %v746, %v748
    %v750 = vrot.slane %v722, %v749
    %v752 = vunpack.c.l.s4 1983009808
    %v753 = vunpack.c.0.s8 %v752
    %v754 = vlaneseq
    %v755 = vshrl.u32 %v754, 7
    %v756 = vsub.s32 %v753, %v755
    %v757 = vrot.slane %v743, %v756
    %v758 = vcombine.low %v735, %v750
    %v759 = vcombine.high %v735, %v750
    %v761 = vunpack.c.l.s4 1934713408
    %v762 = vunpack.c.0.s8 %v761
    %v763 = vlaneseq
    %v764 = vshrl.u32 %v763, 7
    %v765 = vsub.s32 %v762, %v764
    %v766 = vrot.slane %v758, %v765
    %v768 = vunpack.c.l.s4 1934713408
    %v769 = vunpack.c.0.s8 %v768
    %v770 = vlaneseq
    %v771 = vshrl.u32 %v770, 7
    %v772 = vsub.s32 %v769, %v771
    %v773 = vrot.slane %v759, %v772
    %v774 = vcombine.low %v742, %v757
    %v775 = vcombine.high %v742, %v757
    %v777 = vunpack.c.l.s4 1934713408
    %v778 = vunpack.c.0.s8 %v777
    %v779 = vlaneseq
    %v780 = vshrl.u32 %v779, 7
    %v781 = vsub.s32 %v778, %v780
    %v782 = vrot.slane %v774, %v781
    %v784 = vunpack.c.l.s4 1934713408
    %v785 = vunpack.c.0.s8 %v784
    %v786 = vlaneseq
    %v787 = vshrl.u32 %v786, 7
    %v788 = vsub.s32 %v785, %v787
    %v789 = vrot.slane %v775, %v788
    %v790 = vcombine.high %v766, 0
    %v791 = vcombine.high %v773, 0
    %v792 = vcombine.high %v782, 0
    %v793 = vcombine.high %v789, 0
    %v794 = vcombine.high %v718, %v446
    %v796 = vunpack.c.l.s4 1983009808
    %v797 = vunpack.c.0.s8 %v796
    %v798 = vlaneseq
    %v799 = vshrl.u32 %v798, 7
    %v800 = vsub.s32 %v797, %v799
    %v801 = vrot.slane %v718, %v800
    %v803 = vunpack.c.l.s4 1983009808
    %v804 = vunpack.c.0.s8 %v803
    %v805 = vlaneseq
    %v806 = vshrl.u32 %v805, 7
    %v807 = vsub.s32 %v804, %v806
    %v808 = vrot.slane %v794, %v807
    %v809 = vcombine.high %v726, %v446
    %v811 = vunpack.c.l.s4 1983009808
    %v812 = vunpack.c.0.s8 %v811
    %v813 = vlaneseq
    %v814 = vshrl.u32 %v813, 7
    %v815 = vsub.s32 %v812, %v814
    %v816 = vrot.slane %v726, %v815
    %v818 = vunpack.c.l.s4 1983009808
    %v819 = vunpack.c.0.s8 %v818
    %v820 = vlaneseq
    %v821 = vshrl.u32 %v820, 7
    %v822 = vsub.s32 %v819, %v821
    %v823 = vrot.slane %v809, %v822
    %v824 = vcombine.low %v801, %v816
    %v825 = vcombine.high %v801, %v816
    %v827 = vunpack.c.l.s4 1934713408
    %v828 = vunpack.c.0.s8 %v827
    %v829 = vlaneseq
    %v830 = vshrl.u32 %v829, 7
    %v831 = vsub.s32 %v828, %v830
    %v832 = vrot.slane %v824, %v831
    %v834 = vunpack.c.l.s4 1934713408
    %v835 = vunpack.c.0.s8 %v834
    %v836 = vlaneseq
    %v837 = vshrl.u32 %v836, 7
    %v838 = vsub.s32 %v835, %v837
    %v839 = vrot.slane %v825, %v838
    %v840 = vcombine.low %v808, %v823
    %v841 = vcombine.high %v808, %v823
    %v843 = vunpack.c.l.s4 1934713408
    %v844 = vunpack.c.0.s8 %v843
    %v845 = vlaneseq
    %v846 = vshrl.u32 %v845, 7
    %v847 = vsub.s32 %v844, %v846
    %v848 = vrot.slane %v840, %v847
    %v850 = vunpack.c.l.s4 1934713408
    %v851 = vunpack.c.0.s8 %v850
    %v852 = vlaneseq
    %v853 = vshrl.u32 %v852, 7
    %v854 = vsub.s32 %v851, %v853
    %v855 = vrot.slane %v841, %v854
    %v856 = vcombine.high %v832, 0
    %v857 = vcombine.high %v839, 0
    %v858 = vcombine.high %v848, 0
    %v859 = vcombine.high %v855, 0
    %v860 = vcombine.low %v766, %v773
    %v862 = vunpack.c.l.s4 1983009808
    %v863 = vunpack.c.0.s8 %v862
    %v864 = vlaneseq
    %v865 = vshrl.u32 %v864, 7
    %v866 = vsub.s32 %v863, %v865
    %v867 = vrot.slane %v860, %v866
    %v868 = vcombine.low %v790, %v791
    %v870 = vunpack.c.l.s4 1983009808
    %v871 = vunpack.c.0.s8 %v870
    %v872 = vlaneseq
    %v873 = vshrl.u32 %v872, 7
    %v874 = vsub.s32 %v871, %v873
    %v875 = vrot.slane %v868, %v874
    %v876 = vcombine.low %v867, %v875
    %v878 = vunpack.c.l.s4 1934713408
    %v879 = vunpack.c.0.s8 %v878
    %v880 = vlaneseq
    %v881 = vshrl.u32 %v880, 7
    %v882 = vsub.s32 %v879, %v881
    %v883 = vrot.slane %v876, %v882
    %v884 = vcombine.high %v883, 0
    %v885 = vcombine.low %v832, %v839
    %v887 = vunpack.c.l.s4 1983009808
    %v888 = vunpack.c.0.s8 %v887
    %v889 = vlaneseq
    %v890 = vshrl.u32 %v889, 7
    %v891 = vsub.s32 %v888, %v890
    %v892 = vrot.slane %v885, %v891
    %v893 = vcombine.low %v856, %v857
    %v895 = vunpack.c.l.s4 1983009808
    %v896 = vunpack.c.0.s8 %v895
    %v897 = vlaneseq
    %v898 = vshrl.u32 %v897, 7
    %v899 = vsub.s32 %v896, %v898
    %v900 = vrot.slane %v893, %v899
    %v901 = vcombine.low %v892, %v900
    %v903 = vunpack.c.l.s4 1934713408
    %v904 = vunpack.c.0.s8 %v903
    %v905 = vlaneseq
    %v906 = vshrl.u32 %v905, 7
    %v907 = vsub.s32 %v904, %v906
    %v908 = vrot.slane %v901, %v907
    %v909 = vcombine.high %v908, 0
    %v910 = vcombine.low %v782, %v789
    %v912 = vunpack.c.l.s4 1983009808
    %v913 = vunpack.c.0.s8 %v912
    %v914 = vlaneseq
    %v915 = vshrl.u32 %v914, 7
    %v916 = vsub.s32 %v913, %v915
    %v917 = vrot.slane %v910, %v916
    %v918 = vcombine.low %v792, %v793
    %v920 = vunpack.c.l.s4 1983009808
    %v921 = vunpack.c.0.s8 %v920
    %v922 = vlaneseq
    %v923 = vshrl.u32 %v922, 7
    %v924 = vsub.s32 %v921, %v923
    %v925 = vrot.slane %v918, %v924
    %v926 = vcombine.low %v917, %v925
    %v928 = vunpack.c.l.s4 1934713408
    %v929 = vunpack.c.0.s8 %v928
    %v930 = vlaneseq
    %v931 = vshrl.u32 %v930, 7
    %v932 = vsub.s32 %v929, %v931
    %v933 = vrot.slane %v926, %v932
    %v934 = vcombine.high %v933, 0
    %v935 = vcombine.low %v848, %v855
    %v937 = vunpack.c.l.s4 1983009808
    %v938 = vunpack.c.0.s8 %v937
    %v939 = vlaneseq
    %v940 = vshrl.u32 %v939, 7
    %v941 = vsub.s32 %v938, %v940
    %v942 = vrot.slane %v935, %v941
    %v943 = vcombine.low %v858, %v859
    %v945 = vunpack.c.l.s4 1983009808
    %v946 = vunpack.c.0.s8 %v945
    %v947 = vlaneseq
    %v948 = vshrl.u32 %v947, 7
    %v949 = vsub.s32 %v946, %v948
    %v950 = vrot.slane %v943, %v949
    %v951 = vcombine.low %v942, %v950
    %v953 = vunpack.c.l.s4 1934713408
    %v954 = vunpack.c.0.s8 %v953
    %v955 = vlaneseq
    %v956 = vshrl.u32 %v955, 7
    %v957 = vsub.s32 %v954, %v956
    %v958 = vrot.slane %v951, %v957
    %v959 = vcombine.high %v958, 0
    %v962 = vpack.i.b16 %v908, %v883
    %v963 = vshrl.u32 %v883, 16
    %v964 = vshrl.u32 %v908, 16
    %v965 = vpack.i.b16 %v964, %v963
    %v968 = vpack.i.b16 %v909, %v884
    %v969 = vshrl.u32 %v884, 16
    %v970 = vshrl.u32 %v909, 16
    %v971 = vpack.i.b16 %v970, %v969
    %v974 = vpack.i.b16 %v958, %v933
    %v975 = vshrl.u32 %v933, 16
    %v976 = vshrl.u32 %v958, 16
    %v977 = vpack.i.b16 %v976, %v975
    %v980 = vpack.i.b16 %v959, %v934
    %v981 = vshrl.u32 %v934, 16
    %v982 = vshrl.u32 %v959, 16
    %v983 = vpack.i.b16 %v982, %v981
    %984 = vrot.lane.b32.xlu0 %v418, 64
    %v985 = vpop.permute.xlu0 %984
    %986 = vrot.lane.b32.xlu0 %v421, 64
    %v987 = vpop.permute.xlu0 %986
    %988 = vrot.lane.b32.xlu0 %v423, 64
    %v989 = vpop.permute.xlu0 %988
    %990 = vrot.lane.b32.xlu0 %v425, 64
    %v991 = vpop.permute.xlu0 %990
    %v994 = vpack.i.b16 %v987, %v985
    %v996 = vshrl.u32 %v985, 16
    %v997 = vshrl.u32 %v987, 16
    %v998 = vpack.i.b16 %v997, %v996
    %v1002 = vpack.i.b16 %v991, %v989
    %v1004 = vshrl.u32 %v989, 16
    %v1005 = vshrl.u32 %v991, 16
    %v1006 = vpack.i.b16 %v1005, %v1004
    %v1008 = vcombine.high %v994, %v443
    %v1010 = vunpack.c.l.s4 1983009808
    %v1011 = vunpack.c.0.s8 %v1010
    %v1012 = vlaneseq
    %v1013 = vshrl.u32 %v1012, 7
    %v1014 = vsub.s32 %v1011, %v1013
    %v1015 = vrot.slane %v994, %v1014
    %v1017 = vunpack.c.l.s4 1983009808
    %v1018 = vunpack.c.0.s8 %v1017
    %v1019 = vlaneseq
    %v1020 = vshrl.u32 %v1019, 7
    %v1021 = vsub.s32 %v1018, %v1020
    %v1022 = vrot.slane %v1008, %v1021
    %v1023 = vcombine.high %v1002, %v443
    %v1025 = vunpack.c.l.s4 1983009808
    %v1026 = vunpack.c.0.s8 %v1025
    %v1027 = vlaneseq
    %v1028 = vshrl.u32 %v1027, 7
    %v1029 = vsub.s32 %v1026, %v1028
    %v1030 = vrot.slane %v1002, %v1029
    %v1032 = vunpack.c.l.s4 1983009808
    %v1033 = vunpack.c.0.s8 %v1032
    %v1034 = vlaneseq
    %v1035 = vshrl.u32 %v1034, 7
    %v1036 = vsub.s32 %v1033, %v1035
    %v1037 = vrot.slane %v1023, %v1036
    %v1038 = vcombine.low %v1015, %v1030
    %v1039 = vcombine.high %v1015, %v1030
    %v1041 = vunpack.c.l.s4 1934713408
    %v1042 = vunpack.c.0.s8 %v1041
    %v1043 = vlaneseq
    %v1044 = vshrl.u32 %v1043, 7
    %v1045 = vsub.s32 %v1042, %v1044
    %v1046 = vrot.slane %v1038, %v1045
    %v1048 = vunpack.c.l.s4 1934713408
    %v1049 = vunpack.c.0.s8 %v1048
    %v1050 = vlaneseq
    %v1051 = vshrl.u32 %v1050, 7
    %v1052 = vsub.s32 %v1049, %v1051
    %v1053 = vrot.slane %v1039, %v1052
    %v1054 = vcombine.low %v1022, %v1037
    %v1055 = vcombine.high %v1022, %v1037
    %v1057 = vunpack.c.l.s4 1934713408
    %v1058 = vunpack.c.0.s8 %v1057
    %v1059 = vlaneseq
    %v1060 = vshrl.u32 %v1059, 7
    %v1061 = vsub.s32 %v1058, %v1060
    %v1062 = vrot.slane %v1054, %v1061
    %v1064 = vunpack.c.l.s4 1934713408
    %v1065 = vunpack.c.0.s8 %v1064
    %v1066 = vlaneseq
    %v1067 = vshrl.u32 %v1066, 7
    %v1068 = vsub.s32 %v1065, %v1067
    %v1069 = vrot.slane %v1055, %v1068
    %v1070 = vcombine.high %v1046, 0
    %v1071 = vcombine.high %v1053, 0
    %v1072 = vcombine.high %v1062, 0
    %v1073 = vcombine.high %v1069, 0
    %v1074 = vcombine.high %v998, %v446
    %v1076 = vunpack.c.l.s4 1983009808
    %v1077 = vunpack.c.0.s8 %v1076
    %v1078 = vlaneseq
    %v1079 = vshrl.u32 %v1078, 7
    %v1080 = vsub.s32 %v1077, %v1079
    %v1081 = vrot.slane %v998, %v1080
    %v1083 = vunpack.c.l.s4 1983009808
    %v1084 = vunpack.c.0.s8 %v1083
    %v1085 = vlaneseq
    %v1086 = vshrl.u32 %v1085, 7
    %v1087 = vsub.s32 %v1084, %v1086
    %v1088 = vrot.slane %v1074, %v1087
    %v1089 = vcombine.high %v1006, %v446
    %v1091 = vunpack.c.l.s4 1983009808
    %v1092 = vunpack.c.0.s8 %v1091
    %v1093 = vlaneseq
    %v1094 = vshrl.u32 %v1093, 7
    %v1095 = vsub.s32 %v1092, %v1094
    %v1096 = vrot.slane %v1006, %v1095
    %v1098 = vunpack.c.l.s4 1983009808
    %v1099 = vunpack.c.0.s8 %v1098
    %v1100 = vlaneseq
    %v1101 = vshrl.u32 %v1100, 7
    %v1102 = vsub.s32 %v1099, %v1101
    %v1103 = vrot.slane %v1089, %v1102
    %v1104 = vcombine.low %v1081, %v1096
    %v1105 = vcombine.high %v1081, %v1096
    %v1107 = vunpack.c.l.s4 1934713408
    %v1108 = vunpack.c.0.s8 %v1107
    %v1109 = vlaneseq
    %v1110 = vshrl.u32 %v1109, 7
    %v1111 = vsub.s32 %v1108, %v1110
    %v1112 = vrot.slane %v1104, %v1111
    %v1114 = vunpack.c.l.s4 1934713408
    %v1115 = vunpack.c.0.s8 %v1114
    %v1116 = vlaneseq
    %v1117 = vshrl.u32 %v1116, 7
    %v1118 = vsub.s32 %v1115, %v1117
    %v1119 = vrot.slane %v1105, %v1118
    %v1120 = vcombine.low %v1088, %v1103
    %v1121 = vcombine.high %v1088, %v1103
    %v1123 = vunpack.c.l.s4 1934713408
    %v1124 = vunpack.c.0.s8 %v1123
    %v1125 = vlaneseq
    %v1126 = vshrl.u32 %v1125, 7
    %v1127 = vsub.s32 %v1124, %v1126
    %v1128 = vrot.slane %v1120, %v1127
    %v1130 = vunpack.c.l.s4 1934713408
    %v1131 = vunpack.c.0.s8 %v1130
    %v1132 = vlaneseq
    %v1133 = vshrl.u32 %v1132, 7
    %v1134 = vsub.s32 %v1131, %v1133
    %v1135 = vrot.slane %v1121, %v1134
    %v1136 = vcombine.high %v1112, 0
    %v1137 = vcombine.high %v1119, 0
    %v1138 = vcombine.high %v1128, 0
    %v1139 = vcombine.high %v1135, 0
    %v1140 = vcombine.low %v1046, %v1053
    %v1142 = vunpack.c.l.s4 1983009808
    %v1143 = vunpack.c.0.s8 %v1142
    %v1144 = vlaneseq
    %v1145 = vshrl.u32 %v1144, 7
    %v1146 = vsub.s32 %v1143, %v1145
    %v1147 = vrot.slane %v1140, %v1146
    %v1148 = vcombine.low %v1070, %v1071
    %v1150 = vunpack.c.l.s4 1983009808
    %v1151 = vunpack.c.0.s8 %v1150
    %v1152 = vlaneseq
    %v1153 = vshrl.u32 %v1152, 7
    %v1154 = vsub.s32 %v1151, %v1153
    %v1155 = vrot.slane %v1148, %v1154
    %v1156 = vcombine.low %v1147, %v1155
    %v1158 = vunpack.c.l.s4 1934713408
    %v1159 = vunpack.c.0.s8 %v1158
    %v1160 = vlaneseq
    %v1161 = vshrl.u32 %v1160, 7
    %v1162 = vsub.s32 %v1159, %v1161
    %v1163 = vrot.slane %v1156, %v1162
    %v1164 = vcombine.high %v1163, 0
    %v1165 = vcombine.low %v1112, %v1119
    %v1167 = vunpack.c.l.s4 1983009808
    %v1168 = vunpack.c.0.s8 %v1167
    %v1169 = vlaneseq
    %v1170 = vshrl.u32 %v1169, 7
    %v1171 = vsub.s32 %v1168, %v1170
    %v1172 = vrot.slane %v1165, %v1171
    %v1173 = vcombine.low %v1136, %v1137
    %v1175 = vunpack.c.l.s4 1983009808
    %v1176 = vunpack.c.0.s8 %v1175
    %v1177 = vlaneseq
    %v1178 = vshrl.u32 %v1177, 7
    %v1179 = vsub.s32 %v1176, %v1178
    %v1180 = vrot.slane %v1173, %v1179
    %v1181 = vcombine.low %v1172, %v1180
    %v1183 = vunpack.c.l.s4 1934713408
    %v1184 = vunpack.c.0.s8 %v1183
    %v1185 = vlaneseq
    %v1186 = vshrl.u32 %v1185, 7
    %v1187 = vsub.s32 %v1184, %v1186
    %v1188 = vrot.slane %v1181, %v1187
    %v1189 = vcombine.high %v1188, 0
    %v1190 = vcombine.low %v1062, %v1069
    %v1192 = vunpack.c.l.s4 1983009808
    %v1193 = vunpack.c.0.s8 %v1192
    %v1194 = vlaneseq
    %v1195 = vshrl.u32 %v1194, 7
    %v1196 = vsub.s32 %v1193, %v1195
    %v1197 = vrot.slane %v1190, %v1196
    %v1198 = vcombine.low %v1072, %v1073
    %v1200 = vunpack.c.l.s4 1983009808
    %v1201 = vunpack.c.0.s8 %v1200
    %v1202 = vlaneseq
    %v1203 = vshrl.u32 %v1202, 7
    %v1204 = vsub.s32 %v1201, %v1203
    %v1205 = vrot.slane %v1198, %v1204
    %v1206 = vcombine.low %v1197, %v1205
    %v1208 = vunpack.c.l.s4 1934713408
    %v1209 = vunpack.c.0.s8 %v1208
    %v1210 = vlaneseq
    %v1211 = vshrl.u32 %v1210, 7
    %v1212 = vsub.s32 %v1209, %v1211
    %v1213 = vrot.slane %v1206, %v1212
    %v1214 = vcombine.high %v1213, 0
    %v1215 = vcombine.low %v1128, %v1135
    %v1217 = vunpack.c.l.s4 1983009808
    %v1218 = vunpack.c.0.s8 %v1217
    %v1219 = vlaneseq
    %v1220 = vshrl.u32 %v1219, 7
    %v1221 = vsub.s32 %v1218, %v1220
    %v1222 = vrot.slane %v1215, %v1221
    %v1223 = vcombine.low %v1138, %v1139
    %v1225 = vunpack.c.l.s4 1983009808
    %v1226 = vunpack.c.0.s8 %v1225
    %v1227 = vlaneseq
    %v1228 = vshrl.u32 %v1227, 7
    %v1229 = vsub.s32 %v1226, %v1228
    %v1230 = vrot.slane %v1223, %v1229
    %v1231 = vcombine.low %v1222, %v1230
    %v1233 = vunpack.c.l.s4 1934713408
    %v1234 = vunpack.c.0.s8 %v1233
    %v1235 = vlaneseq
    %v1236 = vshrl.u32 %v1235, 7
    %v1237 = vsub.s32 %v1234, %v1236
    %v1238 = vrot.slane %v1231, %v1237
    %v1239 = vcombine.high %v1238, 0
    %v1242 = vpack.i.b16 %v1188, %v1163
    %v1243 = vshrl.u32 %v1163, 16
    %v1244 = vshrl.u32 %v1188, 16
    %v1245 = vpack.i.b16 %v1244, %v1243
    %v1248 = vpack.i.b16 %v1189, %v1164
    %v1249 = vshrl.u32 %v1164, 16
    %v1250 = vshrl.u32 %v1189, 16
    %v1251 = vpack.i.b16 %v1250, %v1249
    %v1254 = vpack.i.b16 %v1238, %v1213
    %v1255 = vshrl.u32 %v1213, 16
    %v1256 = vshrl.u32 %v1238, 16
    %v1257 = vpack.i.b16 %v1256, %v1255
    %v1260 = vpack.i.b16 %v1239, %v1214
    %v1261 = vshrl.u32 %v1214, 16
    %v1262 = vshrl.u32 %v1239, 16
    %v1263 = vpack.i.b16 %v1262, %v1261
    %v1264 = vlaneseq
    %v1265 = vshrl.u32 %v1264, 7
    %v1266 = vlaneseq
    %v1267 = vand.u32 %v1266, 127
    %vm1268 = vcmp.le.s32.totalorder %v1267, %v1265
    %v1269 = vsel %vm1268, 0.0, -1e+09
    %vm1270 = vcmask 64512
    %v1272 = vsel %vm1270, %v682, 0
    %v1275 = vsel %vm1270, %v962, 0
    %1277 = vmatprep.subr.bf16.mxu0 0
    %1278 = vmatpush1.bf16.xpose.msra.mxu0 %v1275
    %1279 = vmatprep.subr.bf16.mxu0 0
    %1280 = vmatpush1.bf16.xpose.msra.mxu0 0
    %1281 = vmatprep.subr.bf16.mxu0 0
    %1282 = vmatpush1.bf16.xpose.msra.mxu0 0
    %1283 = vmatprep.subr.bf16.mxu0 0
    %1284 = vmatpush1.bf16.xpose.msra.mxu0 0
    %1285 = vmatprep.subr.bf16.mxu0 0
    %1286 = vmatpush1.bf16.xpose.msra.mxu0 0
    %1287 = vmatprep.subr.bf16.mxu0 0
    %1288 = vmatpush1.bf16.xpose.msra.mxu0 0
    %1289 = vmatprep.subr.bf16.mxu0 0
    %1290 = vmatpush1.bf16.xpose.msra.mxu0 0
    %1291 = vmatprep.subr.bf16.mxu0 0
    %1292 = vmatpush1.bf16.xpose.msra.mxu0 0
    %1293 = vmatprep.subr.bf16.mxu0 0
    %1294 = vmatpush1.bf16.xpose.msra.mxu0 0
    %1295 = vmatprep.subr.bf16.mxu0 0
    %1296 = vmatpush1.bf16.xpose.msra.mxu0 0
    %1297 = vmatprep.subr.bf16.mxu0 0
    %1298 = vmatpush1.bf16.xpose.msra.mxu0 0
    %1299 = vmatprep.subr.bf16.mxu0 0
    %1300 = vmatpush1.bf16.xpose.msra.mxu0 0
    %1301 = vmatprep.subr.bf16.mxu0 0
    %1302 = vmatpush1.bf16.xpose.msra.mxu0 0
    %1303 = vmatprep.subr.bf16.mxu0 0
    %1304 = vmatpush1.bf16.xpose.msra.mxu0 0
    %1305 = vmatprep.subr.bf16.mxu0 0
    %1306 = vmatpush1.bf16.xpose.msra.mxu0 0
    %1307 = vmatprep.subr.bf16.mxu0 0
    %1308 = vmatpush1.bf16.xpose.msra.mxu0 0
    %1309 = vmatprep.mubr.bf16.mxu0 0
    %1310 = vmatmul.mubr.bf16.gmra.mrb[0].mxu0 %v1272
    %v1311 = vpop.f32.mrb[0].mxu0
    %v1312 = vadd.f32 %v1269, %v1311
    %v1313 = vpop.f32.mrb[0].mxu0
    %v1314 = vpop.f32.mrb[0].mxu0
    %v1315 = vpop.f32.mrb[0].mxu0
    %1316 = vdwg.mxu0
    %v1318 = vsel %vm1270, %v685, 0
    %v1321 = vsel %vm1270, %v965, 0
    %1323 = vmatprep.subr.bf16.mxu0 0
    %1324 = vmatpush1.bf16.xpose.msra.mxu0 %v1321
    %1325 = vmatprep.subr.bf16.mxu0 0
    %1326 = vmatpush1.bf16.xpose.msra.mxu0 0
    %1327 = vmatprep.subr.bf16.mxu0 0
    %1328 = vmatpush1.bf16.xpose.msra.mxu0 0
    %1329 = vmatprep.subr.bf16.mxu0 0
    %1330 = vmatpush1.bf16.xpose.msra.mxu0 0
    %1331 = vmatprep.subr.bf16.mxu0 0
    %1332 = vmatpush1.bf16.xpose.msra.mxu0 0
    %1333 = vmatprep.subr.bf16.mxu0 0
    %1334 = vmatpush1.bf16.xpose.msra.mxu0 0
    %1335 = vmatprep.subr.bf16.mxu0 0
    %1336 = vmatpush1.bf16.xpose.msra.mxu0 0
    %1337 = vmatprep.subr.bf16.mxu0 0
    %1338 = vmatpush1.bf16.xpose.msra.mxu0 0
    %1339 = vmatprep.subr.bf16.mxu0 0
    %1340 = vmatpush1.bf16.xpose.msra.mxu0 0
    %1341 = vmatprep.subr.bf16.mxu0 0
    %1342 = vmatpush1.bf16.xpose.msra.mxu0 0
    %1343 = vmatprep.subr.bf16.mxu0 0
    %1344 = vmatpush1.bf16.xpose.msra.mxu0 0
    %1345 = vmatprep.subr.bf16.mxu0 0
    %1346 = vmatpush1.bf16.xpose.msra.mxu0 0
    %1347 = vmatprep.subr.bf16.mxu0 0
    %1348 = vmatpush1.bf16.xpose.msra.mxu0 0
    %1349 = vmatprep.subr.bf16.mxu0 0
    %1350 = vmatpush1.bf16.xpose.msra.mxu0 0
    %1351 = vmatprep.subr.bf16.mxu0 0
    %1352 = vmatpush1.bf16.xpose.msra.mxu0 0
    %1353 = vmatprep.subr.bf16.mxu0 0
    %1354 = vmatpush1.bf16.xpose.msra.mxu0 0
    %1355 = vmatprep.mubr.bf16.mxu0 0
    %1356 = vmatmul.mubr.bf16.gmra.mrb[0].mxu0 %v1318
    %v1357 = vpop.f32.mrb[0].mxu0
    %v1358 = vadd.f32 %v1269, %v1357
    %v1359 = vpop.f32.mrb[0].mxu0
    %v1360 = vpop.f32.mrb[0].mxu0
    %v1361 = vpop.f32.mrb[0].mxu0
    %1362 = vdwg.mxu0
    %v1364 = vsel %vm1270, %v688, 0
    %v1367 = vsel %vm1270, %v968, 0
    %1369 = vmatprep.subr.bf16.mxu0 0
    %1370 = vmatpush1.bf16.xpose.msra.mxu0 %v1367
    %1371 = vmatprep.subr.bf16.mxu0 0
    %1372 = vmatpush1.bf16.xpose.msra.mxu0 0
    %1373 = vmatprep.subr.bf16.mxu0 0
    %1374 = vmatpush1.bf16.xpose.msra.mxu0 0
    %1375 = vmatprep.subr.bf16.mxu0 0
    %1376 = vmatpush1.bf16.xpose.msra.mxu0 0
    %1377 = vmatprep.subr.bf16.mxu0 0
    %1378 = vmatpush1.bf16.xpose.msra.mxu0 0
    %1379 = vmatprep.subr.bf16.mxu0 0
    %1380 = vmatpush1.bf16.xpose.msra.mxu0 0
    %1381 = vmatprep.subr.bf16.mxu0 0
    %1382 = vmatpush1.bf16.xpose.msra.mxu0 0
    %1383 = vmatprep.subr.bf16.mxu0 0
    %1384 = vmatpush1.bf16.xpose.msra.mxu0 0
    %1385 = vmatprep.subr.bf16.mxu0 0
    %1386 = vmatpush1.bf16.xpose.msra.mxu0 0
    %1387 = vmatprep.subr.bf16.mxu0 0
    %1388 = vmatpush1.bf16.xpose.msra.mxu0 0
    %1389 = vmatprep.subr.bf16.mxu0 0
    %1390 = vmatpush1.bf16.xpose.msra.mxu0 0
    %1391 = vmatprep.subr.bf16.mxu0 0
    %1392 = vmatpush1.bf16.xpose.msra.mxu0 0
    %1393 = vmatprep.subr.bf16.mxu0 0
    %1394 = vmatpush1.bf16.xpose.msra.mxu0 0
    %1395 = vmatprep.subr.bf16.mxu0 0
    %1396 = vmatpush1.bf16.xpose.msra.mxu0 0
    %1397 = vmatprep.subr.bf16.mxu0 0
    %1398 = vmatpush1.bf16.xpose.msra.mxu0 0
    %1399 = vmatprep.subr.bf16.mxu0 0
    %1400 = vmatpush1.bf16.xpose.msra.mxu0 0
    %1401 = vmatprep.mubr.bf16.mxu0 0
    %1402 = vmatmul.mubr.bf16.gmra.mrb[0].mxu0 %v1364
    %v1403 = vpop.f32.mrb[0].mxu0
    %v1404 = vadd.f32 %v1269, %v1403
    %v1405 = vpop.f32.mrb[0].mxu0
    %v1406 = vpop.f32.mrb[0].mxu0
    %v1407 = vpop.f32.mrb[0].mxu0
    %1408 = vdwg.mxu0
    %v1410 = vsel %vm1270, %v691, 0
    %v1413 = vsel %vm1270, %v971, 0
    %1415 = vmatprep.subr.bf16.mxu0 0
    %1416 = vmatpush1.bf16.xpose.msra.mxu0 %v1413
    %1417 = vmatprep.subr.bf16.mxu0 0
    %1418 = vmatpush1.bf16.xpose.msra.mxu0 0
    %1419 = vmatprep.subr.bf16.mxu0 0
    %1420 = vmatpush1.bf16.xpose.msra.mxu0 0
    %1421 = vmatprep.subr.bf16.mxu0 0
    %1422 = vmatpush1.bf16.xpose.msra.mxu0 0
    %1423 = vmatprep.subr.bf16.mxu0 0
    %1424 = vmatpush1.bf16.xpose.msra.mxu0 0
    %1425 = vmatprep.subr.bf16.mxu0 0
    %1426 = vmatpush1.bf16.xpose.msra.mxu0 0
    %1427 = vmatprep.subr.bf16.mxu0 0
    %1428 = vmatpush1.bf16.xpose.msra.mxu0 0
    %1429 = vmatprep.subr.bf16.mxu0 0
    %1430 = vmatpush1.bf16.xpose.msra.mxu0 0
    %1431 = vmatprep.subr.bf16.mxu0 0
    %1432 = vmatpush1.bf16.xpose.msra.mxu0 0
    %1433 = vmatprep.subr.bf16.mxu0 0
    %1434 = vmatpush1.bf16.xpose.msra.mxu0 0
    %1435 = vmatprep.subr.bf16.mxu0 0
    %1436 = vmatpush1.bf16.xpose.msra.mxu0 0
    %1437 = vmatprep.subr.bf16.mxu0 0
    %1438 = vmatpush1.bf16.xpose.msra.mxu0 0
    %1439 = vmatprep.subr.bf16.mxu0 0
    %1440 = vmatpush1.bf16.xpose.msra.mxu0 0
    %1441 = vmatprep.subr.bf16.mxu0 0
    %1442 = vmatpush1.bf16.xpose.msra.mxu0 0
    %1443 = vmatprep.subr.bf16.mxu0 0
    %1444 = vmatpush1.bf16.xpose.msra.mxu0 0
    %1445 = vmatprep.subr.bf16.mxu0 0
    %1446 = vmatpush1.bf16.xpose.msra.mxu0 0
    %1447 = vmatprep.mubr.bf16.mxu0 0
    %1448 = vmatmul.mubr.bf16.gmra.mrb[0].mxu0 %v1410
    %v1449 = vpop.f32.mrb[0].mxu0
    %v1450 = vadd.f32 %v1269, %v1449
    %v1451 = vpop.f32.mrb[0].mxu0
    %v1452 = vpop.f32.mrb[0].mxu0
    %v1453 = vpop.f32.mrb[0].mxu0
    %1454 = vdwg.mxu0
    %v1456 = vsel %vm1270, %v694, 0
    %v1459 = vsel %vm1270, %v974, 0
    %1461 = vmatprep.subr.bf16.mxu0 0
    %1462 = vmatpush1.bf16.xpose.msra.mxu0 %v1459
    %1463 = vmatprep.subr.bf16.mxu0 0
    %1464 = vmatpush1.bf16.xpose.msra.mxu0 0
    %1465 = vmatprep.subr.bf16.mxu0 0
    %1466 = vmatpush1.bf16.xpose.msra.mxu0 0
    %1467 = vmatprep.subr.bf16.mxu0 0
    %1468 = vmatpush1.bf16.xpose.msra.mxu0 0
    %1469 = vmatprep.subr.bf16.mxu0 0
    %1470 = vmatpush1.bf16.xpose.msra.mxu0 0
    %1471 = vmatprep.subr.bf16.mxu0 0
    %1472 = vmatpush1.bf16.xpose.msra.mxu0 0
    %1473 = vmatprep.subr.bf16.mxu0 0
    %1474 = vmatpush1.bf16.xpose.msra.mxu0 0
    %1475 = vmatprep.subr.bf16.mxu0 0
    %1476 = vmatpush1.bf16.xpose.msra.mxu0 0
    %1477 = vmatprep.subr.bf16.mxu0 0
    %1478 = vmatpush1.bf16.xpose.msra.mxu0 0
    %1479 = vmatprep.subr.bf16.mxu0 0
    %1480 = vmatpush1.bf16.xpose.msra.mxu0 0
    %1481 = vmatprep.subr.bf16.mxu0 0
    %1482 = vmatpush1.bf16.xpose.msra.mxu0 0
    %1483 = vmatprep.subr.bf16.mxu0 0
    %1484 = vmatpush1.bf16.xpose.msra.mxu0 0
    %1485 = vmatprep.subr.bf16.mxu0 0
    %1486 = vmatpush1.bf16.xpose.msra.mxu0 0
    %1487 = vmatprep.subr.bf16.mxu0 0
    %1488 = vmatpush1.bf16.xpose.msra.mxu0 0
    %1489 = vmatprep.subr.bf16.mxu0 0
    %1490 = vmatpush1.bf16.xpose.msra.mxu0 0
    %1491 = vmatprep.subr.bf16.mxu0 0
    %1492 = vmatpush1.bf16.xpose.msra.mxu0 0
    %1493 = vmatprep.mubr.bf16.mxu0 0
    %1494 = vmatmul.mubr.bf16.gmra.mrb[0].mxu0 %v1456
    %v1495 = vpop.f32.mrb[0].mxu0
    %v1496 = vadd.f32 %v1269, %v1495
    %v1497 = vpop.f32.mrb[0].mxu0
    %v1498 = vpop.f32.mrb[0].mxu0
    %v1499 = vpop.f32.mrb[0].mxu0
    %1500 = vdwg.mxu0
    %v1502 = vsel %vm1270, %v697, 0
    %v1505 = vsel %vm1270, %v977, 0
    %1507 = vmatprep.subr.bf16.mxu0 0
    %1508 = vmatpush1.bf16.xpose.msra.mxu0 %v1505
    %1509 = vmatprep.subr.bf16.mxu0 0
    %1510 = vmatpush1.bf16.xpose.msra.mxu0 0
    %1511 = vmatprep.subr.bf16.mxu0 0
    %1512 = vmatpush1.bf16.xpose.msra.mxu0 0
    %1513 = vmatprep.subr.bf16.mxu0 0
    %1514 = vmatpush1.bf16.xpose.msra.mxu0 0
    %1515 = vmatprep.subr.bf16.mxu0 0
    %1516 = vmatpush1.bf16.xpose.msra.mxu0 0
    %1517 = vmatprep.subr.bf16.mxu0 0
    %1518 = vmatpush1.bf16.xpose.msra.mxu0 0
    %1519 = vmatprep.subr.bf16.mxu0 0
    %1520 = vmatpush1.bf16.xpose.msra.mxu0 0
    %1521 = vmatprep.subr.bf16.mxu0 0
    %1522 = vmatpush1.bf16.xpose.msra.mxu0 0
    %1523 = vmatprep.subr.bf16.mxu0 0
    %1524 = vmatpush1.bf16.xpose.msra.mxu0 0
    %1525 = vmatprep.subr.bf16.mxu0 0
    %1526 = vmatpush1.bf16.xpose.msra.mxu0 0
    %1527 = vmatprep.subr.bf16.mxu0 0
    %1528 = vmatpush1.bf16.xpose.msra.mxu0 0
    %1529 = vmatprep.subr.bf16.mxu0 0
    %1530 = vmatpush1.bf16.xpose.msra.mxu0 0
    %1531 = vmatprep.subr.bf16.mxu0 0
    %1532 = vmatpush1.bf16.xpose.msra.mxu0 0
    %1533 = vmatprep.subr.bf16.mxu0 0
    %1534 = vmatpush1.bf16.xpose.msra.mxu0 0
    %1535 = vmatprep.subr.bf16.mxu0 0
    %1536 = vmatpush1.bf16.xpose.msra.mxu0 0
    %1537 = vmatprep.subr.bf16.mxu0 0
    %1538 = vmatpush1.bf16.xpose.msra.mxu0 0
    %1539 = vmatprep.mubr.bf16.mxu0 0
    %1540 = vmatmul.mubr.bf16.gmra.mrb[0].mxu0 %v1502
    %v1541 = vpop.f32.mrb[0].mxu0
    %v1542 = vadd.f32 %v1269, %v1541
    %v1543 = vpop.f32.mrb[0].mxu0
    %v1544 = vpop.f32.mrb[0].mxu0
    %v1545 = vpop.f32.mrb[0].mxu0
    %1546 = vdwg.mxu0
    %v1548 = vsel %vm1270, %v700, 0
    %v1551 = vsel %vm1270, %v980, 0
    %1553 = vmatprep.subr.bf16.mxu0 0
    %1554 = vmatpush1.bf16.xpose.msra.mxu0 %v1551
    %1555 = vmatprep.subr.bf16.mxu0 0
    %1556 = vmatpush1.bf16.xpose.msra.mxu0 0
    %1557 = vmatprep.subr.bf16.mxu0 0
    %1558 = vmatpush1.bf16.xpose.msra.mxu0 0
    %1559 = vmatprep.subr.bf16.mxu0 0
    %1560 = vmatpush1.bf16.xpose.msra.mxu0 0
    %1561 = vmatprep.subr.bf16.mxu0 0
    %1562 = vmatpush1.bf16.xpose.msra.mxu0 0
    %1563 = vmatprep.subr.bf16.mxu0 0
    %1564 = vmatpush1.bf16.xpose.msra.mxu0 0
    %1565 = vmatprep.subr.bf16.mxu0 0
    %1566 = vmatpush1.bf16.xpose.msra.mxu0 0
    %1567 = vmatprep.subr.bf16.mxu0 0
    %1568 = vmatpush1.bf16.xpose.msra.mxu0 0
    %1569 = vmatprep.subr.bf16.mxu0 0
    %1570 = vmatpush1.bf16.xpose.msra.mxu0 0
    %1571 = vmatprep.subr.bf16.mxu0 0
    %1572 = vmatpush1.bf16.xpose.msra.mxu0 0
    %1573 = vmatprep.subr.bf16.mxu0 0
    %1574 = vmatpush1.bf16.xpose.msra.mxu0 0
    %1575 = vmatprep.subr.bf16.mxu0 0
    %1576 = vmatpush1.bf16.xpose.msra.mxu0 0
    %1577 = vmatprep.subr.bf16.mxu0 0
    %1578 = vmatpush1.bf16.xpose.msra.mxu0 0
    %1579 = vmatprep.subr.bf16.mxu0 0
    %1580 = vmatpush1.bf16.xpose.msra.mxu0 0
    %1581 = vmatprep.subr.bf16.mxu0 0
    %1582 = vmatpush1.bf16.xpose.msra.mxu0 0
    %1583 = vmatprep.subr.bf16.mxu0 0
    %1584 = vmatpush1.bf16.xpose.msra.mxu0 0
    %1585 = vmatprep.mubr.bf16.mxu0 0
    %1586 = vmatmul.mubr.bf16.gmra.mrb[0].mxu0 %v1548
    %v1587 = vpop.f32.mrb[0].mxu0
    %v1588 = vadd.f32 %v1269, %v1587
    %v1589 = vpop.f32.mrb[0].mxu0
    %v1590 = vpop.f32.mrb[0].mxu0
    %v1591 = vpop.f32.mrb[0].mxu0
    %1592 = vdwg.mxu0
    %v1594 = vsel %vm1270, %v703, 0
    %v1597 = vsel %vm1270, %v983, 0
    %1599 = vmatprep.subr.bf16.mxu0 0
    %1600 = vmatpush1.bf16.xpose.msra.mxu0 %v1597
    %1601 = vmatprep.subr.bf16.mxu0 0
    %1602 = vmatpush1.bf16.xpose.msra.mxu0 0
    %1603 = vmatprep.subr.bf16.mxu0 0
    %1604 = vmatpush1.bf16.xpose.msra.mxu0 0
    %1605 = vmatprep.subr.bf16.mxu0 0
    %1606 = vmatpush1.bf16.xpose.msra.mxu0 0
    %1607 = vmatprep.subr.bf16.mxu0 0
    %1608 = vmatpush1.bf16.xpose.msra.mxu0 0
    %1609 = vmatprep.subr.bf16.mxu0 0
    %1610 = vmatpush1.bf16.xpose.msra.mxu0 0
    %1611 = vmatprep.subr.bf16.mxu0 0
    %1612 = vmatpush1.bf16.xpose.msra.mxu0 0
    %1613 = vmatprep.subr.bf16.mxu0 0
    %1614 = vmatpush1.bf16.xpose.msra.mxu0 0
    %1615 = vmatprep.subr.bf16.mxu0 0
    %1616 = vmatpush1.bf16.xpose.msra.mxu0 0
    %1617 = vmatprep.subr.bf16.mxu0 0
    %1618 = vmatpush1.bf16.xpose.msra.mxu0 0
    %1619 = vmatprep.subr.bf16.mxu0 0
    %1620 = vmatpush1.bf16.xpose.msra.mxu0 0
    %1621 = vmatprep.subr.bf16.mxu0 0
    %1622 = vmatpush1.bf16.xpose.msra.mxu0 0
    %1623 = vmatprep.subr.bf16.mxu0 0
    %1624 = vmatpush1.bf16.xpose.msra.mxu0 0
    %1625 = vmatprep.subr.bf16.mxu0 0
    %1626 = vmatpush1.bf16.xpose.msra.mxu0 0
    %1627 = vmatprep.subr.bf16.mxu0 0
    %1628 = vmatpush1.bf16.xpose.msra.mxu0 0
    %1629 = vmatprep.subr.bf16.mxu0 0
    %1630 = vmatpush1.bf16.xpose.msra.mxu0 0
    %1631 = vmatprep.mubr.bf16.mxu0 0
    %1632 = vmatmul.mubr.bf16.gmra.mrb[0].mxu0 %v1594
    %v1633 = vpop.f32.mrb[0].mxu0
    %v1634 = vadd.f32 %v1269, %v1633
    %v1635 = vpop.f32.mrb[0].mxu0
    %v1636 = vpop.f32.mrb[0].mxu0
    %v1637 = vpop.f32.mrb[0].mxu0
    %1638 = vdwg.mxu0
    %v1639 = vsel %vm1270, %v1312, -inf
    %1640 = vmax.xlane.f32.xlu0 %v1639
    %v1641 = vpop.xlane.xlu0 %1640
    %v1642 = vsel %vm1270, %v1358, -inf
    %1643 = vmax.xlane.f32.xlu0 %v1642
    %v1644 = vpop.xlane.xlu0 %1643
    %v1645 = vsel %vm1270, %v1404, -inf
    %1646 = vmax.xlane.f32.xlu0 %v1645
    %v1647 = vpop.xlane.xlu0 %1646
    %v1648 = vsel %vm1270, %v1450, -inf
    %1649 = vmax.xlane.f32.xlu0 %v1648
    %v1650 = vpop.xlane.xlu0 %1649
    %v1651 = vsel %vm1270, %v1496, -inf
    %1652 = vmax.xlane.f32.xlu0 %v1651
    %v1653 = vpop.xlane.xlu0 %1652
    %v1654 = vsel %vm1270, %v1542, -inf
    %1655 = vmax.xlane.f32.xlu0 %v1654
    %v1656 = vpop.xlane.xlu0 %1655
    %v1657 = vsel %vm1270, %v1588, -inf
    %1658 = vmax.xlane.f32.xlu0 %v1657
    %v1659 = vpop.xlane.xlu0 %1658
    %v1660 = vsel %vm1270, %v1634, -inf
    %1661 = vmax.xlane.f32.xlu0 %v1660
    %v1662 = vpop.xlane.xlu0 %1661
    %v1663 = vsub.f32 -inf, %v1641
    %v1664 = vsub.f32 -inf, %v1644
    %v1665 = vsub.f32 -inf, %v1647
    %v1666 = vsub.f32 -inf, %v1650
    %v1667 = vsub.f32 -inf, %v1653
    %v1668 = vsub.f32 -inf, %v1656
    %v1669 = vsub.f32 -inf, %v1659
    %v1670 = vsub.f32 -inf, %v1662
    %v1671 = vmul.f32 %v1663, 1.442695
    %v1672 = vpow.pop %v1671
    %v1673 = vmul.f32 %v1664, 1.442695
    %v1674 = vpow.pop %v1673
    %v1675 = vmul.f32 %v1665, 1.442695
    %v1676 = vpow.pop %v1675
    %v1677 = vmul.f32 %v1666, 1.442695
    %v1678 = vpow.pop %v1677
    %v1679 = vmul.f32 %v1667, 1.442695
    %v1680 = vpow.pop %v1679
    %v1681 = vmul.f32 %v1668, 1.442695
    %v1682 = vpow.pop %v1681
    %v1683 = vmul.f32 %v1669, 1.442695
    %v1684 = vpow.pop %v1683
    %v1685 = vmul.f32 %v1670, 1.442695
    %v1686 = vpow.pop %v1685
    %v1687 = vsub.f32 %v1312, %v1641
    %v1688 = vsub.f32 %v1358, %v1644
    %v1689 = vsub.f32 %v1404, %v1647
    %v1690 = vsub.f32 %v1450, %v1650
    %v1691 = vsub.f32 %v1496, %v1653
    %v1692 = vsub.f32 %v1542, %v1656
    %v1693 = vsub.f32 %v1588, %v1659
    %v1694 = vsub.f32 %v1634, %v1662
    %v1695 = vmul.f32 %v1687, 1.442695
    %v1696 = vpow.pop %v1695
    %v1697 = vmul.f32 %v1688, 1.442695
    %v1698 = vpow.pop %v1697
    %v1699 = vmul.f32 %v1689, 1.442695
    %v1700 = vpow.pop %v1699
    %v1701 = vmul.f32 %v1690, 1.442695
    %v1702 = vpow.pop %v1701
    %v1703 = vmul.f32 %v1691, 1.442695
    %v1704 = vpow.pop %v1703
    %v1705 = vmul.f32 %v1692, 1.442695
    %v1706 = vpow.pop %v1705
    %v1707 = vmul.f32 %v1693, 1.442695
    %v1708 = vpow.pop %v1707
    %v1709 = vmul.f32 %v1694, 1.442695
    %v1710 = vpow.pop %v1709
    %v1711 = vmul.f32 %v1672, 0.0
    %v1712 = vmul.f32 %v1674, 0.0
    %v1713 = vmul.f32 %v1676, 0.0
    %v1714 = vmul.f32 %v1678, 0.0
    %v1715 = vmul.f32 %v1680, 0.0
    %v1716 = vmul.f32 %v1682, 0.0
    %v1717 = vmul.f32 %v1684, 0.0
    %v1718 = vmul.f32 %v1686, 0.0
    %v1719 = vsel %vm1270, %v1696, 0.0
    %1720 = vadd.xlane.f32.xlu0 %v1719
    %v1721 = vpop.xlane.xlu0 %1720
    %v1722 = vsel %vm1270, %v1698, 0.0
    %1723 = vadd.xlane.f32.xlu0 %v1722
    %v1724 = vpop.xlane.xlu0 %1723
    %v1725 = vsel %vm1270, %v1700, 0.0
    %1726 = vadd.xlane.f32.xlu0 %v1725
    %v1727 = vpop.xlane.xlu0 %1726
    %v1728 = vsel %vm1270, %v1702, 0.0
    %1729 = vadd.xlane.f32.xlu0 %v1728
    %v1730 = vpop.xlane.xlu0 %1729
    %v1731 = vsel %vm1270, %v1704, 0.0
    %1732 = vadd.xlane.f32.xlu0 %v1731
    %v1733 = vpop.xlane.xlu0 %1732
    %v1734 = vsel %vm1270, %v1706, 0.0
    %1735 = vadd.xlane.f32.xlu0 %v1734
    %v1736 = vpop.xlane.xlu0 %1735
    %v1737 = vsel %vm1270, %v1708, 0.0
    %1738 = vadd.xlane.f32.xlu0 %v1737
    %v1739 = vpop.xlane.xlu0 %1738
    %v1740 = vsel %vm1270, %v1710, 0.0
    %1741 = vadd.xlane.f32.xlu0 %v1740
    %v1742 = vpop.xlane.xlu0 %1741
    %v1743 = vadd.f32 %v1711, %v1721
    %v1744 = vadd.f32 %v1712, %v1724
    %v1745 = vadd.f32 %v1713, %v1727
    %v1746 = vadd.f32 %v1714, %v1730
    %v1747 = vadd.f32 %v1715, %v1733
    %v1748 = vadd.f32 %v1716, %v1736
    %v1749 = vadd.f32 %v1717, %v1739
    %v1750 = vadd.f32 %v1718, %v1742
    %v1751 = vpack.c.bf16 %v1696, %v1696
    %v1752 = vpack.c.bf16 %v1698, %v1698
    %v1753 = vpack.c.bf16 %v1700, %v1700
    %v1754 = vpack.c.bf16 %v1702, %v1702
    %v1755 = vpack.c.bf16 %v1704, %v1704
    %v1756 = vpack.c.bf16 %v1706, %v1706
    %v1757 = vpack.c.bf16 %v1708, %v1708
    %v1758 = vpack.c.bf16 %v1710, %v1710
    %v1760 = vsel %vm1270, %v1751, 0
    %vm1762 = vcmask 1043456
    %v1764 = vsel %vm1762, %v1242, 0
    %1766 = vmatprep.subr.bf16.mxu0 0
    %1767 = vmatpush1.bf16.msra.mxu0 %v1764
    %1768 = vmatprep.subr.bf16.mxu0 0
    %1769 = vmatpush1.bf16.msra.mxu0 0
    %1770 = vmatprep.subr.bf16.mxu0 0
    %1771 = vmatpush1.bf16.msra.mxu0 0
    %1772 = vmatprep.subr.bf16.mxu0 0
    %1773 = vmatpush1.bf16.msra.mxu0 0
    %1774 = vmatprep.subr.bf16.mxu0 0
    %1775 = vmatpush1.bf16.msra.mxu0 0
    %1776 = vmatprep.subr.bf16.mxu0 0
    %1777 = vmatpush1.bf16.msra.mxu0 0
    %1778 = vmatprep.subr.bf16.mxu0 0
    %1779 = vmatpush1.bf16.msra.mxu0 0
    %1780 = vmatprep.subr.bf16.mxu0 0
    %1781 = vmatpush1.bf16.msra.mxu0 0
    %1782 = vmatprep.subr.bf16.mxu0 0
    %1783 = vmatpush1.bf16.msra.mxu0 0
    %1784 = vmatprep.subr.bf16.mxu0 0
    %1785 = vmatpush1.bf16.msra.mxu0 0
    %1786 = vmatprep.subr.bf16.mxu0 0
    %1787 = vmatpush1.bf16.msra.mxu0 0
    %1788 = vmatprep.subr.bf16.mxu0 0
    %1789 = vmatpush1.bf16.msra.mxu0 0
    %1790 = vmatprep.subr.bf16.mxu0 0
    %1791 = vmatpush1.bf16.msra.mxu0 0
    %1792 = vmatprep.subr.bf16.mxu0 0
    %1793 = vmatpush1.bf16.msra.mxu0 0
    %1794 = vmatprep.subr.bf16.mxu0 0
    %1795 = vmatpush1.bf16.msra.mxu0 0
    %1796 = vmatprep.subr.bf16.mxu0 0
    %1797 = vmatpush1.bf16.msra.mxu0 0
    %1798 = vmatprep.mubr.bf16.mxu0 0
    %1799 = vmatmul.mubr.bf16.gmra.mrb[0].mxu0 %v1760
    %v1800 = vpop.f32.mrb[0].mxu0
    %v1801 = vadd.f32 0.0, %v1800
    %v1802 = vpop.f32.mrb[0].mxu0
    %v1803 = vpop.f32.mrb[0].mxu0
    %v1804 = vpop.f32.mrb[0].mxu0
    %1805 = vdwg.mxu0
    %v1807 = vsel %vm1270, %v1752, 0
    %v1810 = vsel %vm1762, %v1245, 0
    %1812 = vmatprep.subr.bf16.mxu0 0
    %1813 = vmatpush1.bf16.msra.mxu0 %v1810
    %1814 = vmatprep.subr.bf16.mxu0 0
    %1815 = vmatpush1.bf16.msra.mxu0 0
    %1816 = vmatprep.subr.bf16.mxu0 0
    %1817 = vmatpush1.bf16.msra.mxu0 0
    %1818 = vmatprep.subr.bf16.mxu0 0
    %1819 = vmatpush1.bf16.msra.mxu0 0
    %1820 = vmatprep.subr.bf16.mxu0 0
    %1821 = vmatpush1.bf16.msra.mxu0 0
    %1822 = vmatprep.subr.bf16.mxu0 0
    %1823 = vmatpush1.bf16.msra.mxu0 0
    %1824 = vmatprep.subr.bf16.mxu0 0
    %1825 = vmatpush1.bf16.msra.mxu0 0
    %1826 = vmatprep.subr.bf16.mxu0 0
    %1827 = vmatpush1.bf16.msra.mxu0 0
    %1828 = vmatprep.subr.bf16.mxu0 0
    %1829 = vmatpush1.bf16.msra.mxu0 0
    %1830 = vmatprep.subr.bf16.mxu0 0
    %1831 = vmatpush1.bf16.msra.mxu0 0
    %1832 = vmatprep.subr.bf16.mxu0 0
    %1833 = vmatpush1.bf16.msra.mxu0 0
    %1834 = vmatprep.subr.bf16.mxu0 0
    %1835 = vmatpush1.bf16.msra.mxu0 0
    %1836 = vmatprep.subr.bf16.mxu0 0
    %1837 = vmatpush1.bf16.msra.mxu0 0
    %1838 = vmatprep.subr.bf16.mxu0 0
    %1839 = vmatpush1.bf16.msra.mxu0 0
    %1840 = vmatprep.subr.bf16.mxu0 0
    %1841 = vmatpush1.bf16.msra.mxu0 0
    %1842 = vmatprep.subr.bf16.mxu0 0
    %1843 = vmatpush1.bf16.msra.mxu0 0
    %1844 = vmatprep.mubr.bf16.mxu0 0
    %1845 = vmatmul.mubr.bf16.gmra.mrb[0].mxu0 %v1807
    %v1846 = vpop.f32.mrb[0].mxu0
    %v1847 = vadd.f32 0.0, %v1846
    %v1848 = vpop.f32.mrb[0].mxu0
    %v1849 = vpop.f32.mrb[0].mxu0
    %v1850 = vpop.f32.mrb[0].mxu0
    %1851 = vdwg.mxu0
    %v1853 = vsel %vm1270, %v1753, 0
    %v1856 = vsel %vm1762, %v1248, 0
    %1858 = vmatprep.subr.bf16.mxu0 0
    %1859 = vmatpush1.bf16.msra.mxu0 %v1856
    %1860 = vmatprep.subr.bf16.mxu0 0
    %1861 = vmatpush1.bf16.msra.mxu0 0
    %1862 = vmatprep.subr.bf16.mxu0 0
    %1863 = vmatpush1.bf16.msra.mxu0 0
    %1864 = vmatprep.subr.bf16.mxu0 0
    %1865 = vmatpush1.bf16.msra.mxu0 0
    %1866 = vmatprep.subr.bf16.mxu0 0
    %1867 = vmatpush1.bf16.msra.mxu0 0
    %1868 = vmatprep.subr.bf16.mxu0 0
    %1869 = vmatpush1.bf16.msra.mxu0 0
    %1870 = vmatprep.subr.bf16.mxu0 0
    %1871 = vmatpush1.bf16.msra.mxu0 0
    %1872 = vmatprep.subr.bf16.mxu0 0
    %1873 = vmatpush1.bf16.msra.mxu0 0
    %1874 = vmatprep.subr.bf16.mxu0 0
    %1875 = vmatpush1.bf16.msra.mxu0 0
    %1876 = vmatprep.subr.bf16.mxu0 0
    %1877 = vmatpush1.bf16.msra.mxu0 0
    %1878 = vmatprep.subr.bf16.mxu0 0
    %1879 = vmatpush1.bf16.msra.mxu0 0
    %1880 = vmatprep.subr.bf16.mxu0 0
    %1881 = vmatpush1.bf16.msra.mxu0 0
    %1882 = vmatprep.subr.bf16.mxu0 0
    %1883 = vmatpush1.bf16.msra.mxu0 0
    %1884 = vmatprep.subr.bf16.mxu0 0
    %1885 = vmatpush1.bf16.msra.mxu0 0
    %1886 = vmatprep.subr.bf16.mxu0 0
    %1887 = vmatpush1.bf16.msra.mxu0 0
    %1888 = vmatprep.subr.bf16.mxu0 0
    %1889 = vmatpush1.bf16.msra.mxu0 0
    %1890 = vmatprep.mubr.bf16.mxu0 0
    %1891 = vmatmul.mubr.bf16.gmra.mrb[0].mxu0 %v1853
    %v1892 = vpop.f32.mrb[0].mxu0
    %v1893 = vadd.f32 0.0, %v1892
    %v1894 = vpop.f32.mrb[0].mxu0
    %v1895 = vpop.f32.mrb[0].mxu0
    %v1896 = vpop.f32.mrb[0].mxu0
    %1897 = vdwg.mxu0
    %v1899 = vsel %vm1270, %v1754, 0
    %v1902 = vsel %vm1762, %v1251, 0
    %1904 = vmatprep.subr.bf16.mxu0 0
    %1905 = vmatpush1.bf16.msra.mxu0 %v1902
    %1906 = vmatprep.subr.bf16.mxu0 0
    %1907 = vmatpush1.bf16.msra.mxu0 0
    %1908 = vmatprep.subr.bf16.mxu0 0
    %1909 = vmatpush1.bf16.msra.mxu0 0
    %1910 = vmatprep.subr.bf16.mxu0 0
    %1911 = vmatpush1.bf16.msra.mxu0 0
    %1912 = vmatprep.subr.bf16.mxu0 0
    %1913 = vmatpush1.bf16.msra.mxu0 0
    %1914 = vmatprep.subr.bf16.mxu0 0
    %1915 = vmatpush1.bf16.msra.mxu0 0
    %1916 = vmatprep.subr.bf16.mxu0 0
    %1917 = vmatpush1.bf16.msra.mxu0 0
    %1918 = vmatprep.subr.bf16.mxu0 0
    %1919 = vmatpush1.bf16.msra.mxu0 0
    %1920 = vmatprep.subr.bf16.mxu0 0
    %1921 = vmatpush1.bf16.msra.mxu0 0
    %1922 = vmatprep.subr.bf16.mxu0 0
    %1923 = vmatpush1.bf16.msra.mxu0 0
    %1924 = vmatprep.subr.bf16.mxu0 0
    %1925 = vmatpush1.bf16.msra.mxu0 0
    %1926 = vmatprep.subr.bf16.mxu0 0
    %1927 = vmatpush1.bf16.msra.mxu0 0
    %1928 = vmatprep.subr.bf16.mxu0 0
    %1929 = vmatpush1.bf16.msra.mxu0 0
    %1930 = vmatprep.subr.bf16.mxu0 0
    %1931 = vmatpush1.bf16.msra.mxu0 0
    %1932 = vmatprep.subr.bf16.mxu0 0
    %1933 = vmatpush1.bf16.msra.mxu0 0
    %1934 = vmatprep.subr.bf16.mxu0 0
    %1935 = vmatpush1.bf16.msra.mxu0 0
    %1936 = vmatprep.mubr.bf16.mxu0 0
    %1937 = vmatmul.mubr.bf16.gmra.mrb[0].mxu0 %v1899
    %v1938 = vpop.f32.mrb[0].mxu0
    %v1939 = vadd.f32 0.0, %v1938
    %v1940 = vpop.f32.mrb[0].mxu0
    %v1941 = vpop.f32.mrb[0].mxu0
    %v1942 = vpop.f32.mrb[0].mxu0
    %1943 = vdwg.mxu0
    %v1945 = vsel %vm1270, %v1755, 0
    %v1948 = vsel %vm1762, %v1254, 0
    %1950 = vmatprep.subr.bf16.mxu0 0
    %1951 = vmatpush1.bf16.msra.mxu0 %v1948
    %1952 = vmatprep.subr.bf16.mxu0 0
    %1953 = vmatpush1.bf16.msra.mxu0 0
    %1954 = vmatprep.subr.bf16.mxu0 0
    %1955 = vmatpush1.bf16.msra.mxu0 0
    %1956 = vmatprep.subr.bf16.mxu0 0
    %1957 = vmatpush1.bf16.msra.mxu0 0
    %1958 = vmatprep.subr.bf16.mxu0 0
    %1959 = vmatpush1.bf16.msra.mxu0 0
    %1960 = vmatprep.subr.bf16.mxu0 0
    %1961 = vmatpush1.bf16.msra.mxu0 0
    %1962 = vmatprep.subr.bf16.mxu0 0
    %1963 = vmatpush1.bf16.msra.mxu0 0
    %1964 = vmatprep.subr.bf16.mxu0 0
    %1965 = vmatpush1.bf16.msra.mxu0 0
    %1966 = vmatprep.subr.bf16.mxu0 0
    %1967 = vmatpush1.bf16.msra.mxu0 0
    %1968 = vmatprep.subr.bf16.mxu0 0
    %1969 = vmatpush1.bf16.msra.mxu0 0
    %1970 = vmatprep.subr.bf16.mxu0 0
    %1971 = vmatpush1.bf16.msra.mxu0 0
    %1972 = vmatprep.subr.bf16.mxu0 0
    %1973 = vmatpush1.bf16.msra.mxu0 0
    %1974 = vmatprep.subr.bf16.mxu0 0
    %1975 = vmatpush1.bf16.msra.mxu0 0
    %1976 = vmatprep.subr.bf16.mxu0 0
    %1977 = vmatpush1.bf16.msra.mxu0 0
    %1978 = vmatprep.subr.bf16.mxu0 0
    %1979 = vmatpush1.bf16.msra.mxu0 0
    %1980 = vmatprep.subr.bf16.mxu0 0
    %1981 = vmatpush1.bf16.msra.mxu0 0
    %1982 = vmatprep.mubr.bf16.mxu0 0
    %1983 = vmatmul.mubr.bf16.gmra.mrb[0].mxu0 %v1945
    %v1984 = vpop.f32.mrb[0].mxu0
    %v1985 = vadd.f32 0.0, %v1984
    %v1986 = vpop.f32.mrb[0].mxu0
    %v1987 = vpop.f32.mrb[0].mxu0
    %v1988 = vpop.f32.mrb[0].mxu0
    %1989 = vdwg.mxu0
    %v1991 = vsel %vm1270, %v1756, 0
    %v1994 = vsel %vm1762, %v1257, 0
    %1996 = vmatprep.subr.bf16.mxu0 0
    %1997 = vmatpush1.bf16.msra.mxu0 %v1994
    %1998 = vmatprep.subr.bf16.mxu0 0
    %1999 = vmatpush1.bf16.msra.mxu0 0
    %2000 = vmatprep.subr.bf16.mxu0 0
    %2001 = vmatpush1.bf16.msra.mxu0 0
    %2002 = vmatprep.subr.bf16.mxu0 0
    %2003 = vmatpush1.bf16.msra.mxu0 0
    %2004 = vmatprep.subr.bf16.mxu0 0
    %2005 = vmatpush1.bf16.msra.mxu0 0
    %2006 = vmatprep.subr.bf16.mxu0 0
    %2007 = vmatpush1.bf16.msra.mxu0 0
    %2008 = vmatprep.subr.bf16.mxu0 0
    %2009 = vmatpush1.bf16.msra.mxu0 0
    %2010 = vmatprep.subr.bf16.mxu0 0
    %2011 = vmatpush1.bf16.msra.mxu0 0
    %2012 = vmatprep.subr.bf16.mxu0 0
    %2013 = vmatpush1.bf16.msra.mxu0 0
    %2014 = vmatprep.subr.bf16.mxu0 0
    %2015 = vmatpush1.bf16.msra.mxu0 0
    %2016 = vmatprep.subr.bf16.mxu0 0
    %2017 = vmatpush1.bf16.msra.mxu0 0
    %2018 = vmatprep.subr.bf16.mxu0 0
    %2019 = vmatpush1.bf16.msra.mxu0 0
    %2020 = vmatprep.subr.bf16.mxu0 0
    %2021 = vmatpush1.bf16.msra.mxu0 0
    %2022 = vmatprep.subr.bf16.mxu0 0
    %2023 = vmatpush1.bf16.msra.mxu0 0
    %2024 = vmatprep.subr.bf16.mxu0 0
    %2025 = vmatpush1.bf16.msra.mxu0 0
    %2026 = vmatprep.subr.bf16.mxu0 0
    %2027 = vmatpush1.bf16.msra.mxu0 0
    %2028 = vmatprep.mubr.bf16.mxu0 0
    %2029 = vmatmul.mubr.bf16.gmra.mrb[0].mxu0 %v1991
    %v2030 = vpop.f32.mrb[0].mxu0
    %v2031 = vadd.f32 0.0, %v2030
    %v2032 = vpop.f32.mrb[0].mxu0
    %v2033 = vpop.f32.mrb[0].mxu0
    %v2034 = vpop.f32.mrb[0].mxu0
    %2035 = vdwg.mxu0
    %v2037 = vsel %vm1270, %v1757, 0
    %v2040 = vsel %vm1762, %v1260, 0
    %2042 = vmatprep.subr.bf16.mxu0 0
    %2043 = vmatpush1.bf16.msra.mxu0 %v2040
    %2044 = vmatprep.subr.bf16.mxu0 0
    %2045 = vmatpush1.bf16.msra.mxu0 0
    %2046 = vmatprep.subr.bf16.mxu0 0
    %2047 = vmatpush1.bf16.msra.mxu0 0
    %2048 = vmatprep.subr.bf16.mxu0 0
    %2049 = vmatpush1.bf16.msra.mxu0 0
    %2050 = vmatprep.subr.bf16.mxu0 0
    %2051 = vmatpush1.bf16.msra.mxu0 0
    %2052 = vmatprep.subr.bf16.mxu0 0
    %2053 = vmatpush1.bf16.msra.mxu0 0
    %2054 = vmatprep.subr.bf16.mxu0 0
    %2055 = vmatpush1.bf16.msra.mxu0 0
    %2056 = vmatprep.subr.bf16.mxu0 0
    %2057 = vmatpush1.bf16.msra.mxu0 0
    %2058 = vmatprep.subr.bf16.mxu0 0
    %2059 = vmatpush1.bf16.msra.mxu0 0
    %2060 = vmatprep.subr.bf16.mxu0 0
    %2061 = vmatpush1.bf16.msra.mxu0 0
    %2062 = vmatprep.subr.bf16.mxu0 0
    %2063 = vmatpush1.bf16.msra.mxu0 0
    %2064 = vmatprep.subr.bf16.mxu0 0
    %2065 = vmatpush1.bf16.msra.mxu0 0
    %2066 = vmatprep.subr.bf16.mxu0 0
    %2067 = vmatpush1.bf16.msra.mxu0 0
    %2068 = vmatprep.subr.bf16.mxu0 0
    %2069 = vmatpush1.bf16.msra.mxu0 0
    %2070 = vmatprep.subr.bf16.mxu0 0
    %2071 = vmatpush1.bf16.msra.mxu0 0
    %2072 = vmatprep.subr.bf16.mxu0 0
    %2073 = vmatpush1.bf16.msra.mxu0 0
    %2074 = vmatprep.mubr.bf16.mxu0 0
    %2075 = vmatmul.mubr.bf16.gmra.mrb[0].mxu0 %v2037
    %v2076 = vpop.f32.mrb[0].mxu0
    %v2077 = vadd.f32 0.0, %v2076
    %v2078 = vpop.f32.mrb[0].mxu0
    %v2079 = vpop.f32.mrb[0].mxu0
    %v2080 = vpop.f32.mrb[0].mxu0
    %2081 = vdwg.mxu0
    %v2083 = vsel %vm1270, %v1758, 0
    %v2086 = vsel %vm1762, %v1263, 0
    %2088 = vmatprep.subr.bf16.mxu0 0
    %2089 = vmatpush1.bf16.msra.mxu0 %v2086
    %2090 = vmatprep.subr.bf16.mxu0 0
    %2091 = vmatpush1.bf16.msra.mxu0 0
    %2092 = vmatprep.subr.bf16.mxu0 0
    %2093 = vmatpush1.bf16.msra.mxu0 0
    %2094 = vmatprep.subr.bf16.mxu0 0
    %2095 = vmatpush1.bf16.msra.mxu0 0
    %2096 = vmatprep.subr.bf16.mxu0 0
    %2097 = vmatpush1.bf16.msra.mxu0 0
    %2098 = vmatprep.subr.bf16.mxu0 0
    %2099 = vmatpush1.bf16.msra.mxu0 0
    %2100 = vmatprep.subr.bf16.mxu0 0
    %2101 = vmatpush1.bf16.msra.mxu0 0
    %2102 = vmatprep.subr.bf16.mxu0 0
    %2103 = vmatpush1.bf16.msra.mxu0 0
    %2104 = vmatprep.subr.bf16.mxu0 0
    %2105 = vmatpush1.bf16.msra.mxu0 0
    %2106 = vmatprep.subr.bf16.mxu0 0
    %2107 = vmatpush1.bf16.msra.mxu0 0
    %2108 = vmatprep.subr.bf16.mxu0 0
    %2109 = vmatpush1.bf16.msra.mxu0 0
    %2110 = vmatprep.subr.bf16.mxu0 0
    %2111 = vmatpush1.bf16.msra.mxu0 0
    %2112 = vmatprep.subr.bf16.mxu0 0
    %2113 = vmatpush1.bf16.msra.mxu0 0
    %2114 = vmatprep.subr.bf16.mxu0 0
    %2115 = vmatpush1.bf16.msra.mxu0 0
    %2116 = vmatprep.subr.bf16.mxu0 0
    %2117 = vmatpush1.bf16.msra.mxu0 0
    %2118 = vmatprep.subr.bf16.mxu0 0
    %2119 = vmatpush1.bf16.msra.mxu0 0
    %2120 = vmatprep.mubr.bf16.mxu0 0
    %2121 = vmatmul.mubr.bf16.gmra.mrb[0].mxu0 %v2083
    %v2122 = vpop.f32.mrb[0].mxu0
    %v2123 = vadd.f32 0.0, %v2122
    %v2124 = vpop.f32.mrb[0].mxu0
    %v2125 = vpop.f32.mrb[0].mxu0
    %v2126 = vpop.f32.mrb[0].mxu0
    %2127 = vdwg.mxu0
    %v2128 = vadd.f32 %v1711, %v1801
    %v2129 = vadd.f32 %v1712, %v1847
    %v2130 = vadd.f32 %v1713, %v1893
    %v2131 = vadd.f32 %v1714, %v1939
    %v2132 = vadd.f32 %v1715, %v1985
    %v2133 = vadd.f32 %v1716, %v2031
    %v2134 = vadd.f32 %v1717, %v2077
    %v2135 = vadd.f32 %v1718, %v2123
    %v2136 = vrcp.pop %v1743
    %v2137 = vrcp.pop %v1744
    %v2138 = vrcp.pop %v1745
    %v2139 = vrcp.pop %v1746
    %v2140 = vrcp.pop %v1747
    %v2141 = vrcp.pop %v1748
    %v2142 = vrcp.pop %v1749
    %v2143 = vrcp.pop %v1750
    %v2144 = vmul.f32 %v2128, %v2136
    %v2145 = vmul.f32 %v2129, %v2137
    %v2146 = vmul.f32 %v2130, %v2138
    %v2147 = vmul.f32 %v2131, %v2139
    %v2148 = vmul.f32 %v2132, %v2140
    %v2149 = vmul.f32 %v2133, %v2141
    %v2150 = vmul.f32 %v2134, %v2142
    %v2151 = vmul.f32 %v2135, %v2143
    %v2152 = vpack.c.bf16 %v2144, %v2144
    %v2154 = vunpack.c.l.s4 1983009808
    %v2155 = vunpack.c.0.s8 %v2154
    %v2156 = vlaneseq
    %v2157 = vshrl.u32 %v2156, 7
    %v2158 = vsub.s32 %v2155, %v2157
    %v2159 = vrot.slane %v2152, %v2158
    %v2160 = vpack.c.bf16 %v2146, %v2146
    %v2162 = vunpack.c.l.s4 1983009808
    %v2163 = vunpack.c.0.s8 %v2162
    %v2164 = vlaneseq
    %v2165 = vshrl.u32 %v2164, 7
    %v2166 = vsub.s32 %v2163, %v2165
    %v2167 = vrot.slane %v2160, %v2166
    %v2168 = vcombine.low %v2159, %v2167
    %v2169 = vcombine.high %v2159, %v2167
    %v2171 = vunpack.c.l.s4 1934713408
    %v2172 = vunpack.c.0.s8 %v2171
    %v2173 = vlaneseq
    %v2174 = vshrl.u32 %v2173, 7
    %v2175 = vsub.s32 %v2172, %v2174
    %v2176 = vrot.slane %v2168, %v2175
    %v2178 = vunpack.c.l.s4 1934713408
    %v2179 = vunpack.c.0.s8 %v2178
    %v2180 = vlaneseq
    %v2181 = vshrl.u32 %v2180, 7
    %v2182 = vsub.s32 %v2179, %v2181
    %v2183 = vrot.slane %v2169, %v2182
    %v2184 = vcombine.high %v2176, 0
    %v2185 = vcombine.high %v2183, 0
    %v2186 = vpack.c.bf16 %v2145, %v2145
    %v2188 = vunpack.c.l.s4 1983009808
    %v2189 = vunpack.c.0.s8 %v2188
    %v2190 = vlaneseq
    %v2191 = vshrl.u32 %v2190, 7
    %v2192 = vsub.s32 %v2189, %v2191
    %v2193 = vrot.slane %v2186, %v2192
    %v2194 = vpack.c.bf16 %v2147, %v2147
    %v2196 = vunpack.c.l.s4 1983009808
    %v2197 = vunpack.c.0.s8 %v2196
    %v2198 = vlaneseq
    %v2199 = vshrl.u32 %v2198, 7
    %v2200 = vsub.s32 %v2197, %v2199
    %v2201 = vrot.slane %v2194, %v2200
    %v2202 = vcombine.low %v2193, %v2201
    %v2203 = vcombine.high %v2193, %v2201
    %v2205 = vunpack.c.l.s4 1934713408
    %v2206 = vunpack.c.0.s8 %v2205
    %v2207 = vlaneseq
    %v2208 = vshrl.u32 %v2207, 7
    %v2209 = vsub.s32 %v2206, %v2208
    %v2210 = vrot.slane %v2202, %v2209
    %v2212 = vunpack.c.l.s4 1934713408
    %v2213 = vunpack.c.0.s8 %v2212
    %v2214 = vlaneseq
    %v2215 = vshrl.u32 %v2214, 7
    %v2216 = vsub.s32 %v2213, %v2215
    %v2217 = vrot.slane %v2203, %v2216
    %v2218 = vcombine.high %v2210, 0
    %v2219 = vcombine.high %v2217, 0
    %v2220 = vpack.c.bf16 %v2148, %v2148
    %v2222 = vunpack.c.l.s4 1983009808
    %v2223 = vunpack.c.0.s8 %v2222
    %v2224 = vlaneseq
    %v2225 = vshrl.u32 %v2224, 7
    %v2226 = vsub.s32 %v2223, %v2225
    %v2227 = vrot.slane %v2220, %v2226
    %v2228 = vpack.c.bf16 %v2150, %v2150
    %v2230 = vunpack.c.l.s4 1983009808
    %v2231 = vunpack.c.0.s8 %v2230
    %v2232 = vlaneseq
    %v2233 = vshrl.u32 %v2232, 7
    %v2234 = vsub.s32 %v2231, %v2233
    %v2235 = vrot.slane %v2228, %v2234
    %v2236 = vcombine.low %v2227, %v2235
    %v2237 = vcombine.high %v2227, %v2235
    %v2239 = vunpack.c.l.s4 1934713408
    %v2240 = vunpack.c.0.s8 %v2239
    %v2241 = vlaneseq
    %v2242 = vshrl.u32 %v2241, 7
    %v2243 = vsub.s32 %v2240, %v2242
    %v2244 = vrot.slane %v2236, %v2243
    %v2246 = vunpack.c.l.s4 1934713408
    %v2247 = vunpack.c.0.s8 %v2246
    %v2248 = vlaneseq
    %v2249 = vshrl.u32 %v2248, 7
    %v2250 = vsub.s32 %v2247, %v2249
    %v2251 = vrot.slane %v2237, %v2250
    %v2252 = vcombine.high %v2244, 0
    %v2253 = vcombine.high %v2251, 0
    %v2254 = vpack.c.bf16 %v2149, %v2149
    %v2256 = vunpack.c.l.s4 1983009808
    %v2257 = vunpack.c.0.s8 %v2256
    %v2258 = vlaneseq
    %v2259 = vshrl.u32 %v2258, 7
    %v2260 = vsub.s32 %v2257, %v2259
    %v2261 = vrot.slane %v2254, %v2260
    %v2262 = vpack.c.bf16 %v2151, %v2151
    %v2264 = vunpack.c.l.s4 1983009808
    %v2265 = vunpack.c.0.s8 %v2264
    %v2266 = vlaneseq
    %v2267 = vshrl.u32 %v2266, 7
    %v2268 = vsub.s32 %v2265, %v2267
    %v2269 = vrot.slane %v2262, %v2268
    %v2270 = vcombine.low %v2261, %v2269
    %v2271 = vcombine.high %v2261, %v2269
    %v2273 = vunpack.c.l.s4 1934713408
    %v2274 = vunpack.c.0.s8 %v2273
    %v2275 = vlaneseq
    %v2276 = vshrl.u32 %v2275, 7
    %v2277 = vsub.s32 %v2274, %v2276
    %v2278 = vrot.slane %v2270, %v2277
    %v2280 = vunpack.c.l.s4 1934713408
    %v2281 = vunpack.c.0.s8 %v2280
    %v2282 = vlaneseq
    %v2283 = vshrl.u32 %v2282, 7
    %v2284 = vsub.s32 %v2281, %v2283
    %v2285 = vrot.slane %v2271, %v2284
    %v2286 = vcombine.high %v2278, 0
    %v2287 = vcombine.high %v2285, 0
    %v2290 = vpack.i.b16 %v2210, %v2176
    %v2292 = vshrl.u32 %v2176, 16
    %v2293 = vshrl.u32 %v2210, 16
    %v2294 = vpack.i.b16 %v2293, %v2292
    %v2298 = vpack.i.b16 %v2218, %v2184
    %v2300 = vshrl.u32 %v2184, 16
    %v2301 = vshrl.u32 %v2218, 16
    %v2302 = vpack.i.b16 %v2301, %v2300
    %v2306 = vpack.i.b16 %v2217, %v2183
    %v2308 = vshrl.u32 %v2183, 16
    %v2309 = vshrl.u32 %v2217, 16
    %v2310 = vpack.i.b16 %v2309, %v2308
    %v2314 = vpack.i.b16 %v2219, %v2185
    %v2316 = vshrl.u32 %v2185, 16
    %v2317 = vshrl.u32 %v2219, 16
    %v2318 = vpack.i.b16 %v2317, %v2316
    %v2322 = vpack.i.b16 %v2278, %v2244
    %v2324 = vshrl.u32 %v2244, 16
    %v2325 = vshrl.u32 %v2278, 16
    %v2326 = vpack.i.b16 %v2325, %v2324
    %v2330 = vpack.i.b16 %v2286, %v2252
    %v2332 = vshrl.u32 %v2252, 16
    %v2333 = vshrl.u32 %v2286, 16
    %v2334 = vpack.i.b16 %v2333, %v2332
    %v2338 = vpack.i.b16 %v2285, %v2251
    %v2340 = vshrl.u32 %v2251, 16
    %v2341 = vshrl.u32 %v2285, 16
    %v2342 = vpack.i.b16 %v2341, %v2340
    %v2346 = vpack.i.b16 %v2287, %v2253
    %v2348 = vshrl.u32 %v2253, 16
    %v2349 = vshrl.u32 %v2287, 16
    %v2350 = vpack.i.b16 %v2349, %v2348
    %v2352 = vcombine.low %v2290, %v2306
    %v2354 = vunpack.c.l.s4 1983009808
    %v2355 = vunpack.c.0.s8 %v2354
    %v2356 = vlaneseq
    %v2357 = vshrl.u32 %v2356, 7
    %v2358 = vsub.s32 %v2355, %v2357
    %v2359 = vrot.slane %v2352, %v2358
    %v2360 = vcombine.low %v2298, %v2314
    %v2362 = vunpack.c.l.s4 1983009808
    %v2363 = vunpack.c.0.s8 %v2362
    %v2364 = vlaneseq
    %v2365 = vshrl.u32 %v2364, 7
    %v2366 = vsub.s32 %v2363, %v2365
    %v2367 = vrot.slane %v2360, %v2366
    %v2368 = vcombine.low %v2322, %v2338
    %v2370 = vunpack.c.l.s4 1983009808
    %v2371 = vunpack.c.0.s8 %v2370
    %v2372 = vlaneseq
    %v2373 = vshrl.u32 %v2372, 7
    %v2374 = vsub.s32 %v2371, %v2373
    %v2375 = vrot.slane %v2368, %v2374
    %v2376 = vcombine.low %v2330, %v2346
    %v2378 = vunpack.c.l.s4 1983009808
    %v2379 = vunpack.c.0.s8 %v2378
    %v2380 = vlaneseq
    %v2381 = vshrl.u32 %v2380, 7
    %v2382 = vsub.s32 %v2379, %v2381
    %v2383 = vrot.slane %v2376, %v2382
    %v2384 = vcombine.low %v2359, %v2367
    %v2386 = vunpack.c.l.s4 1934713408
    %v2387 = vunpack.c.0.s8 %v2386
    %v2388 = vlaneseq
    %v2389 = vshrl.u32 %v2388, 7
    %v2390 = vsub.s32 %v2387, %v2389
    %v2391 = vrot.slane %v2384, %v2390
    %v2392 = vcombine.low %v2375, %v2383
    %v2394 = vunpack.c.l.s4 1934713408
    %v2395 = vunpack.c.0.s8 %v2394
    %v2396 = vlaneseq
    %v2397 = vshrl.u32 %v2396, 7
    %v2398 = vsub.s32 %v2395, %v2397
    %v2399 = vrot.slane %v2392, %v2398
    %v2400 = vcombine.low %v2391, %v2399
    %v2401 = vcombine.high %v2391, %v2399
    %v2402 = vcombine.low %v2294, %v2310
    %v2404 = vunpack.c.l.s4 1983009808
    %v2405 = vunpack.c.0.s8 %v2404
    %v2406 = vlaneseq
    %v2407 = vshrl.u32 %v2406, 7
    %v2408 = vsub.s32 %v2405, %v2407
    %v2409 = vrot.slane %v2402, %v2408
    %v2410 = vcombine.low %v2302, %v2318
    %v2412 = vunpack.c.l.s4 1983009808
    %v2413 = vunpack.c.0.s8 %v2412
    %v2414 = vlaneseq
    %v2415 = vshrl.u32 %v2414, 7
    %v2416 = vsub.s32 %v2413, %v2415
    %v2417 = vrot.slane %v2410, %v2416
    %v2418 = vcombine.low %v2326, %v2342
    %v2420 = vunpack.c.l.s4 1983009808
    %v2421 = vunpack.c.0.s8 %v2420
    %v2422 = vlaneseq
    %v2423 = vshrl.u32 %v2422, 7
    %v2424 = vsub.s32 %v2421, %v2423
    %v2425 = vrot.slane %v2418, %v2424
    %v2426 = vcombine.low %v2334, %v2350
    %v2428 = vunpack.c.l.s4 1983009808
    %v2429 = vunpack.c.0.s8 %v2428
    %v2430 = vlaneseq
    %v2431 = vshrl.u32 %v2430, 7
    %v2432 = vsub.s32 %v2429, %v2431
    %v2433 = vrot.slane %v2426, %v2432
    %v2434 = vcombine.low %v2409, %v2417
    %v2436 = vunpack.c.l.s4 1934713408
    %v2437 = vunpack.c.0.s8 %v2436
    %v2438 = vlaneseq
    %v2439 = vshrl.u32 %v2438, 7
    %v2440 = vsub.s32 %v2437, %v2439
    %v2441 = vrot.slane %v2434, %v2440
    %v2442 = vcombine.low %v2425, %v2433
    %v2444 = vunpack.c.l.s4 1934713408
    %v2445 = vunpack.c.0.s8 %v2444
    %v2446 = vlaneseq
    %v2447 = vshrl.u32 %v2446, 7
    %v2448 = vsub.s32 %v2445, %v2447
    %v2449 = vrot.slane %v2442, %v2448
    %v2450 = vcombine.low %v2441, %v2449
    %v2451 = vcombine.high %v2441, %v2449
    %v2454 = vpack.i.b16 %v2450, %v2400
    %v2455 = vshrl.u32 %v2400, 16
    %v2456 = vshrl.u32 %v2450, 16
    %v2457 = vpack.i.b16 %v2456, %v2455
    %v2460 = vpack.i.b16 %v2451, %v2401
    %v2461 = vshrl.u32 %v2401, 16
    %v2462 = vshrl.u32 %v2451, 16
    %v2463 = vpack.i.b16 %v2462, %v2461
    %2464 = vrot.lane.b32.xlu0 %v2457, 8
    %v2465 = vpop.permute.xlu0 %2464
    %2466 = vrot.lane.b32.xlu0 %v2460, 16
    %v2467 = vpop.permute.xlu0 %2466
    %2468 = vrot.lane.b32.xlu0 %v2463, 24
    %v2469 = vpop.permute.xlu0 %2468
    %v2472 = vsel %vm1270, %v2454, %v2465
    %vm2473 = vcmask 130048
    %v2475 = vsel %vm2473, %v2472, %v2467
    %vm2476 = vcmask 195584
    %v2478 = vsel %vm2476, %v2475, %v2469
    %v2479 = vld [vmem:[#allocation10] sm:$0xf]
    %v2480 = vld [vmem:[#allocation10 + $0x4] sm:$0xf]
    %v2481 = vld [vmem:[#allocation10 + $0x8] sm:$0xf]
    %v2482 = vld [vmem:[#allocation10 + $0xc] sm:$0xf]
    %v2483 = vld [vmem:[#allocation11] sm:$0x1]
    %v2485 = vlaneseq
    %v2486 = vshrl.u32 %v2485, 7
    %v2487 = vsub.s32 0, %v2486
    %v2488 = vrot.slane %v2483, %v2487
    %v2494 = vunpack.c.l.b16 %v2479
    %v2495 = vunpack.c.l.b16 %v2480
    %v2496 = vunpack.c.l.b16 %v2481
    %v2497 = vunpack.c.l.b16 %v2482
    %v2498 = vpack.c.b16 %v2495, %v2494
    %v2499 = vpack.c.b16 %v2497, %v2496
    %v2502 = vsel %vm373, %v2478, 0
    %2504 = vmatprep.subr.bf16.mxu0 0
    %2505 = vmatpush1.bf16.msra.mxu0 %v2498
    %2506 = vmatprep.subr.bf16.mxu0 0
    %2507 = vmatpush1.bf16.msra.mxu0 %v2499
    %2508 = vmatprep.subr.bf16.mxu0 0
    %2509 = vmatpush1.bf16.msra.mxu0 0
    %2510 = vmatprep.subr.bf16.mxu0 0
    %2511 = vmatpush1.bf16.msra.mxu0 0
    %2512 = vmatprep.subr.bf16.mxu0 0
    %2513 = vmatpush1.bf16.msra.mxu0 0
    %2514 = vmatprep.subr.bf16.mxu0 0
    %2515 = vmatpush1.bf16.msra.mxu0 0
    %2516 = vmatprep.subr.bf16.mxu0 0
    %2517 = vmatpush1.bf16.msra.mxu0 0
    %2518 = vmatprep.subr.bf16.mxu0 0
    %2519 = vmatpush1.bf16.msra.mxu0 0
    %2520 = vmatprep.subr.bf16.mxu0 0
    %2521 = vmatpush1.bf16.msra.mxu0 0
    %2522 = vmatprep.subr.bf16.mxu0 0
    %2523 = vmatpush1.bf16.msra.mxu0 0
    %2524 = vmatprep.subr.bf16.mxu0 0
    %2525 = vmatpush1.bf16.msra.mxu0 0
    %2526 = vmatprep.subr.bf16.mxu0 0
    %2527 = vmatpush1.bf16.msra.mxu0 0
    %2528 = vmatprep.subr.bf16.mxu0 0
    %2529 = vmatpush1.bf16.msra.mxu0 0
    %2530 = vmatprep.subr.bf16.mxu0 0
    %2531 = vmatpush1.bf16.msra.mxu0 0
    %2532 = vmatprep.subr.bf16.mxu0 0
    %2533 = vmatpush1.bf16.msra.mxu0 0
    %2534 = vmatprep.subr.bf16.mxu0 0
    %2535 = vmatpush1.bf16.msra.mxu0 0
    %2536 = vmatprep.mubr.bf16.mxu0 0
    %2537 = vmatmul.mubr.bf16.gmra.mrb[0].mxu0 %v2502
    %v2538 = vpop.f32.mrb[0].mxu0
    %v2539 = vadd.f32 %v2488, %v2538
    %v2540 = vpop.f32.mrb[0].mxu0
    %v2541 = vpop.f32.mrb[0].mxu0
    %v2542 = vadd.f32 %v2488, %v2541
    %v2543 = vpop.f32.mrb[0].mxu0
    %2544 = vdwg.mxu0
    %v2545 = vadd.f32 %v345, %v2539
    %v2546 = vadd.f32 %v346, %v2542
    %v2547 = vld [vmem:[#allocation13] sm:$0x1]
    %v2548 = vld [vmem:[#allocation14] sm:$0x1]
    %v2549 = vsel %vm373, %v2545, 0.0
    %2550 = vadd.xlane.f32.xlu0 %v2549
    %v2551 = vpop.xlane.xlu0 %2550
    %v2552 = vsel %vm373, %v2546, 0.0
    %2553 = vadd.xlane.f32.xlu0 %v2552
    %v2554 = vpop.xlane.xlu0 %2553
    %v2555 = vrcp.pop 32.0
    %v2556 = vmul.f32 %v2551, %v2555
    %v2557 = vmul.f32 %v2554, %v2555
    %v2558 = vsub.f32 %v2545, %v2556
    %v2559 = vsub.f32 %v2546, %v2557
    %v2560 = vmul.f32 %v2558, %v2558
    %v2561 = vmul.f32 %v2559, %v2559
    %v2562 = vsel %vm373, %v2560, 0.0
    %2563 = vadd.xlane.f32.xlu0 %v2562
    %v2564 = vpop.xlane.xlu0 %2563
    %v2565 = vsel %vm373, %v2561, 0.0
    %2566 = vadd.xlane.f32.xlu0 %v2565
    %v2567 = vpop.xlane.xlu0 %2566
    %v2568 = vmul.f32 %v2564, %v2555
    %v2569 = vmul.f32 %v2567, %v2555
    %v2570 = vadd.f32 %v2568, 1e-05
    %v2571 = vadd.f32 %v2569, 1e-05
    %v2572 = vrsqrt.pop %v2570
    %v2573 = vrsqrt.pop %v2571
    %v2574 = vmul.f32 %v2558, %v2572
    %v2575 = vmul.f32 %v2559, %v2573
    %v2577 = vlaneseq
    %v2578 = vshrl.u32 %v2577, 7
    %v2579 = vsub.s32 0, %v2578
    %v2580 = vrot.slane %v2547, %v2579
    %v2582 = vmul.f32 %v2574, %v2580
    %v2583 = vmul.f32 %v2575, %v2580
    %v2585 = vlaneseq
    %v2586 = vshrl.u32 %v2585, 7
    %v2587 = vsub.s32 0, %v2586
    %v2588 = vrot.slane %v2548, %v2587
    %v2590 = vadd.f32 %v2582, %v2588
    %v2591 = vadd.f32 %v2583, %v2588
    %v2592 = vpack.c.bf16 %v2591, %v2590
    %v2593 = vld [vmem:[#allocation16] sm:$0xf]
    %v2594 = vld [vmem:[#allocation16 + $0x4] sm:$0xf]
    %v2595 = vld [vmem:[#allocation16 + $0x8] sm:$0xf]
    %v2596 = vld [vmem:[#allocation16 + $0xc] sm:$0xf]
    %v2597 = vld [vmem:[#allocation17] sm:$0x1]
    %v2599 = vlaneseq
    %v2600 = vshrl.u32 %v2599, 7
    %v2601 = vsub.s32 0, %v2600
    %v2602 = vrot.slane %v2597, %v2601
    %v2608 = vunpack.c.l.b16 %v2593
    %v2609 = vunpack.c.l.b16 %v2594
    %v2610 = vunpack.c.l.b16 %v2595
    %v2611 = vunpack.c.l.b16 %v2596
    %v2612 = vpack.c.b16 %v2609, %v2608
    %v2613 = vpack.c.b16 %v2611, %v2610
    %v2617 = vsel %vm373, %v2592, 0
    %2619 = vmatprep.subr.bf16.mxu0 0
    %2620 = vmatpush1.bf16.msra.mxu0 %v2612
    %2621 = vmatprep.subr.bf16.mxu0 0
    %2622 = vmatpush1.bf16.msra.mxu0 %v2613
    %2623 = vmatprep.subr.bf16.mxu0 0
    %2624 = vmatpush1.bf16.msra.mxu0 0
    %2625 = vmatprep.subr.bf16.mxu0 0
    %2626 = vmatpush1.bf16.msra.mxu0 0
    %2627 = vmatprep.subr.bf16.mxu0 0
    %2628 = vmatpush1.bf16.msra.mxu0 0
    %2629 = vmatprep.subr.bf16.mxu0 0
    %2630 = vmatpush1.bf16.msra.mxu0 0
    %2631 = vmatprep.subr.bf16.mxu0 0
    %2632 = vmatpush1.bf16.msra.mxu0 0
    %2633 = vmatprep.subr.bf16.mxu0 0
    %2634 = vmatpush1.bf16.msra.mxu0 0
    %2635 = vmatprep.subr.bf16.mxu0 0
    %2636 = vmatpush1.bf16.msra.mxu0 0
    %2637 = vmatprep.subr.bf16.mxu0 0
    %2638 = vmatpush1.bf16.msra.mxu0 0
    %2639 = vmatprep.subr.bf16.mxu0 0
    %2640 = vmatpush1.bf16.msra.mxu0 0
    %2641 = vmatprep.subr.bf16.mxu0 0
    %2642 = vmatpush1.bf16.msra.mxu0 0
    %2643 = vmatprep.subr.bf16.mxu0 0
    %2644 = vmatpush1.bf16.msra.mxu0 0
    %2645 = vmatprep.subr.bf16.mxu0 0
    %2646 = vmatpush1.bf16.msra.mxu0 0
    %2647 = vmatprep.subr.bf16.mxu0 0
    %2648 = vmatpush1.bf16.msra.mxu0 0
    %2649 = vmatprep.subr.bf16.mxu0 0
    %2650 = vmatpush1.bf16.msra.mxu0 0
    %2651 = vmatprep.mubr.bf16.mxu0 0
    %2652 = vmatmul.mubr.bf16.gmra.mrb[0].mxu0 %v2617
    %v2653 = vpop.f32.mrb[0].mxu0
    %v2654 = vadd.f32 %v2602, %v2653
    %v2655 = vpop.f32.mrb[0].mxu0
    %v2656 = vpop.f32.mrb[0].mxu0
    %v2657 = vadd.f32 %v2602, %v2656
    %v2658 = vpop.f32.mrb[0].mxu0
    %2659 = vdwg.mxu0
    %v2660 = vld [vmem:[#allocation19] sm:$0xf]
    %v2661 = vld [vmem:[#allocation19 + $0x4] sm:$0xf]
    %v2662 = vld [vmem:[#allocation19 + $0x8] sm:$0xf]
    %v2663 = vld [vmem:[#allocation19 + $0xc] sm:$0xf]
    %v2664 = vld [vmem:[#allocation20] sm:$0x1]
    %v2666 = vlaneseq
    %v2667 = vshrl.u32 %v2666, 7
    %v2668 = vsub.s32 0, %v2667
    %v2669 = vrot.slane %v2664, %v2668
    %v2673 = vunpack.c.l.b16 %v347
    %v2674 = vunpack.c.l.b16 %v348
    %v2675 = vpack.c.b16 %v2674, %v2673
    %v2680 = vunpack.c.l.b16 %v2660
    %v2681 = vunpack.c.l.b16 %v2661
    %v2682 = vunpack.c.l.b16 %v2662
    %v2683 = vunpack.c.l.b16 %v2663
    %v2684 = vpack.c.b16 %v2681, %v2680
    %v2685 = vpack.c.b16 %v2683, %v2682
    %v2689 = vsel %vm373, %v2675, 0
    %2691 = vmatprep.subr.bf16.mxu0 0
    %2692 = vmatpush1.bf16.msra.mxu0 %v2684
    %2693 = vmatprep.subr.bf16.mxu0 0
    %2694 = vmatpush1.bf16.msra.mxu0 %v2685
    %2695 = vmatprep.subr.bf16.mxu0 0
    %2696 = vmatpush1.bf16.msra.mxu0 0
    %2697 = vmatprep.subr.bf16.mxu0 0
    %2698 = vmatpush1.bf16.msra.mxu0 0
    %2699 = vmatprep.subr.bf16.mxu0 0
    %2700 = vmatpush1.bf16.msra.mxu0 0
    %2701 = vmatprep.subr.bf16.mxu0 0
    %2702 = vmatpush1.bf16.msra.mxu0 0
    %2703 = vmatprep.subr.bf16.mxu0 0
    %2704 = vmatpush1.bf16.msra.mxu0 0
    %2705 = vmatprep.subr.bf16.mxu0 0
    %2706 = vmatpush1.bf16.msra.mxu0 0
    %2707 = vmatprep.subr.bf16.mxu0 0
    %2708 = vmatpush1.bf16.msra.mxu0 0
    %2709 = vmatprep.subr.bf16.mxu0 0
    %2710 = vmatpush1.bf16.msra.mxu0 0
    %2711 = vmatprep.subr.bf16.mxu0 0
    %2712 = vmatpush1.bf16.msra.mxu0 0
    %2713 = vmatprep.subr.bf16.mxu0 0
    %2714 = vmatpush1.bf16.msra.mxu0 0
    %2715 = vmatprep.subr.bf16.mxu0 0
    %2716 = vmatpush1.bf16.msra.mxu0 0
    %2717 = vmatprep.subr.bf16.mxu0 0
    %2718 = vmatpush1.bf16.msra.mxu0 0
    %2719 = vmatprep.subr.bf16.mxu0 0
    %2720 = vmatpush1.bf16.msra.mxu0 0
    %2721 = vmatprep.subr.bf16.mxu0 0
    %2722 = vmatpush1.bf16.msra.mxu0 0
    %2723 = vmatprep.mubr.bf16.mxu0 0
    %2724 = vmatmul.mubr.bf16.gmra.mrb[0].mxu0 %v2689
    %v2725 = vpop.f32.mrb[0].mxu0
    %v2726 = vadd.f32 %v2669, %v2725
    %v2727 = vpop.f32.mrb[0].mxu0
    %v2728 = vpop.f32.mrb[0].mxu0
    %v2729 = vadd.f32 %v2669, %v2728
    %v2730 = vpop.f32.mrb[0].mxu0
    %2731 = vdwg.mxu0
    %v2732 = vpack.c.bf16 %v2657, %v2654
    %v2733 = vpack.c.bf16 %v2729, %v2726
    %2735 = vrot.lane.b32.xlu0 %v2732, 120
    %v2736 = vpop.permute.xlu0 %2735
    %2737 = vrot.lane.b32.xlu0 %v2732, 112
    %v2738 = vpop.permute.xlu0 %2737
    %2739 = vrot.lane.b32.xlu0 %v2732, 104
    %v2740 = vpop.permute.xlu0 %2739
    %v2743 = vpack.i.b16 %v2736, %v2732
    %v2745 = vshrl.u32 %v2732, 16
    %v2746 = vshrl.u32 %v2736, 16
    %v2747 = vpack.i.b16 %v2746, %v2745
    %v2751 = vpack.i.b16 %v2740, %v2738
    %v2753 = vshrl.u32 %v2738, 16
    %v2754 = vshrl.u32 %v2740, 16
    %v2755 = vpack.i.b16 %v2754, %v2753
    %v2757 = vcombine.high %v2743, %v443
    %v2759 = vunpack.c.l.s4 1983009808
    %v2760 = vunpack.c.0.s8 %v2759
    %v2761 = vlaneseq
    %v2762 = vshrl.u32 %v2761, 7
    %v2763 = vsub.s32 %v2760, %v2762
    %v2764 = vrot.slane %v2743, %v2763
    %v2766 = vunpack.c.l.s4 1983009808
    %v2767 = vunpack.c.0.s8 %v2766
    %v2768 = vlaneseq
    %v2769 = vshrl.u32 %v2768, 7
    %v2770 = vsub.s32 %v2767, %v2769
    %v2771 = vrot.slane %v2757, %v2770
    %v2772 = vcombine.high %v2751, %v443
    %v2774 = vunpack.c.l.s4 1983009808
    %v2775 = vunpack.c.0.s8 %v2774
    %v2776 = vlaneseq
    %v2777 = vshrl.u32 %v2776, 7
    %v2778 = vsub.s32 %v2775, %v2777
    %v2779 = vrot.slane %v2751, %v2778
    %v2781 = vunpack.c.l.s4 1983009808
    %v2782 = vunpack.c.0.s8 %v2781
    %v2783 = vlaneseq
    %v2784 = vshrl.u32 %v2783, 7
    %v2785 = vsub.s32 %v2782, %v2784
    %v2786 = vrot.slane %v2772, %v2785
    %v2787 = vcombine.low %v2764, %v2779
    %v2788 = vcombine.high %v2764, %v2779
    %v2790 = vunpack.c.l.s4 1934713408
    %v2791 = vunpack.c.0.s8 %v2790
    %v2792 = vlaneseq
    %v2793 = vshrl.u32 %v2792, 7
    %v2794 = vsub.s32 %v2791, %v2793
    %v2795 = vrot.slane %v2787, %v2794
    %v2797 = vunpack.c.l.s4 1934713408
    %v2798 = vunpack.c.0.s8 %v2797
    %v2799 = vlaneseq
    %v2800 = vshrl.u32 %v2799, 7
    %v2801 = vsub.s32 %v2798, %v2800
    %v2802 = vrot.slane %v2788, %v2801
    %v2803 = vcombine.low %v2771, %v2786
    %v2804 = vcombine.high %v2771, %v2786
    %v2806 = vunpack.c.l.s4 1934713408
    %v2807 = vunpack.c.0.s8 %v2806
    %v2808 = vlaneseq
    %v2809 = vshrl.u32 %v2808, 7
    %v2810 = vsub.s32 %v2807, %v2809
    %v2811 = vrot.slane %v2803, %v2810
    %v2813 = vunpack.c.l.s4 1934713408
    %v2814 = vunpack.c.0.s8 %v2813
    %v2815 = vlaneseq
    %v2816 = vshrl.u32 %v2815, 7
    %v2817 = vsub.s32 %v2814, %v2816
    %v2818 = vrot.slane %v2804, %v2817
    %v2819 = vcombine.high %v2795, 0
    %v2820 = vcombine.high %v2802, 0
    %v2821 = vcombine.high %v2811, 0
    %v2822 = vcombine.high %v2818, 0
    %v2823 = vcombine.high %v2747, %v446
    %v2825 = vunpack.c.l.s4 1983009808
    %v2826 = vunpack.c.0.s8 %v2825
    %v2827 = vlaneseq
    %v2828 = vshrl.u32 %v2827, 7
    %v2829 = vsub.s32 %v2826, %v2828
    %v2830 = vrot.slane %v2747, %v2829
    %v2832 = vunpack.c.l.s4 1983009808
    %v2833 = vunpack.c.0.s8 %v2832
    %v2834 = vlaneseq
    %v2835 = vshrl.u32 %v2834, 7
    %v2836 = vsub.s32 %v2833, %v2835
    %v2837 = vrot.slane %v2823, %v2836
    %v2838 = vcombine.high %v2755, %v446
    %v2840 = vunpack.c.l.s4 1983009808
    %v2841 = vunpack.c.0.s8 %v2840
    %v2842 = vlaneseq
    %v2843 = vshrl.u32 %v2842, 7
    %v2844 = vsub.s32 %v2841, %v2843
    %v2845 = vrot.slane %v2755, %v2844
    %v2847 = vunpack.c.l.s4 1983009808
    %v2848 = vunpack.c.0.s8 %v2847
    %v2849 = vlaneseq
    %v2850 = vshrl.u32 %v2849, 7
    %v2851 = vsub.s32 %v2848, %v2850
    %v2852 = vrot.slane %v2838, %v2851
    %v2853 = vcombine.low %v2830, %v2845
    %v2854 = vcombine.high %v2830, %v2845
    %v2856 = vunpack.c.l.s4 1934713408
    %v2857 = vunpack.c.0.s8 %v2856
    %v2858 = vlaneseq
    %v2859 = vshrl.u32 %v2858, 7
    %v2860 = vsub.s32 %v2857, %v2859
    %v2861 = vrot.slane %v2853, %v2860
    %v2863 = vunpack.c.l.s4 1934713408
    %v2864 = vunpack.c.0.s8 %v2863
    %v2865 = vlaneseq
    %v2866 = vshrl.u32 %v2865, 7
    %v2867 = vsub.s32 %v2864, %v2866
    %v2868 = vrot.slane %v2854, %v2867
    %v2869 = vcombine.low %v2837, %v2852
    %v2870 = vcombine.high %v2837, %v2852
    %v2872 = vunpack.c.l.s4 1934713408
    %v2873 = vunpack.c.0.s8 %v2872
    %v2874 = vlaneseq
    %v2875 = vshrl.u32 %v2874, 7
    %v2876 = vsub.s32 %v2873, %v2875
    %v2877 = vrot.slane %v2869, %v2876
    %v2879 = vunpack.c.l.s4 1934713408
    %v2880 = vunpack.c.0.s8 %v2879
    %v2881 = vlaneseq
    %v2882 = vshrl.u32 %v2881, 7
    %v2883 = vsub.s32 %v2880, %v2882
    %v2884 = vrot.slane %v2870, %v2883
    %v2885 = vcombine.high %v2861, 0
    %v2886 = vcombine.high %v2868, 0
    %v2887 = vcombine.high %v2877, 0
    %v2888 = vcombine.high %v2884, 0
    %v2889 = vcombine.low %v2795, %v2802
    %v2891 = vunpack.c.l.s4 1983009808
    %v2892 = vunpack.c.0.s8 %v2891
    %v2893 = vlaneseq
    %v2894 = vshrl.u32 %v2893, 7
    %v2895 = vsub.s32 %v2892, %v2894
    %v2896 = vrot.slane %v2889, %v2895
    %v2897 = vcombine.low %v2819, %v2820
    %v2899 = vunpack.c.l.s4 1983009808
    %v2900 = vunpack.c.0.s8 %v2899
    %v2901 = vlaneseq
    %v2902 = vshrl.u32 %v2901, 7
    %v2903 = vsub.s32 %v2900, %v2902
    %v2904 = vrot.slane %v2897, %v2903
    %v2905 = vcombine.low %v2896, %v2904
    %v2907 = vunpack.c.l.s4 1934713408
    %v2908 = vunpack.c.0.s8 %v2907
    %v2909 = vlaneseq
    %v2910 = vshrl.u32 %v2909, 7
    %v2911 = vsub.s32 %v2908, %v2910
    %v2912 = vrot.slane %v2905, %v2911
    %v2913 = vcombine.high %v2912, 0
    %v2914 = vcombine.low %v2861, %v2868
    %v2916 = vunpack.c.l.s4 1983009808
    %v2917 = vunpack.c.0.s8 %v2916
    %v2918 = vlaneseq
    %v2919 = vshrl.u32 %v2918, 7
    %v2920 = vsub.s32 %v2917, %v2919
    %v2921 = vrot.slane %v2914, %v2920
    %v2922 = vcombine.low %v2885, %v2886
    %v2924 = vunpack.c.l.s4 1983009808
    %v2925 = vunpack.c.0.s8 %v2924
    %v2926 = vlaneseq
    %v2927 = vshrl.u32 %v2926, 7
    %v2928 = vsub.s32 %v2925, %v2927
    %v2929 = vrot.slane %v2922, %v2928
    %v2930 = vcombine.low %v2921, %v2929
    %v2932 = vunpack.c.l.s4 1934713408
    %v2933 = vunpack.c.0.s8 %v2932
    %v2934 = vlaneseq
    %v2935 = vshrl.u32 %v2934, 7
    %v2936 = vsub.s32 %v2933, %v2935
    %v2937 = vrot.slane %v2930, %v2936
    %v2938 = vcombine.high %v2937, 0
    %v2939 = vcombine.low %v2811, %v2818
    %v2941 = vunpack.c.l.s4 1983009808
    %v2942 = vunpack.c.0.s8 %v2941
    %v2943 = vlaneseq
    %v2944 = vshrl.u32 %v2943, 7
    %v2945 = vsub.s32 %v2942, %v2944
    %v2946 = vrot.slane %v2939, %v2945
    %v2947 = vcombine.low %v2821, %v2822
    %v2949 = vunpack.c.l.s4 1983009808
    %v2950 = vunpack.c.0.s8 %v2949
    %v2951 = vlaneseq
    %v2952 = vshrl.u32 %v2951, 7
    %v2953 = vsub.s32 %v2950, %v2952
    %v2954 = vrot.slane %v2947, %v2953
    %v2955 = vcombine.low %v2946, %v2954
    %v2957 = vunpack.c.l.s4 1934713408
    %v2958 = vunpack.c.0.s8 %v2957
    %v2959 = vlaneseq
    %v2960 = vshrl.u32 %v2959, 7
    %v2961 = vsub.s32 %v2958, %v2960
    %v2962 = vrot.slane %v2955, %v2961
    %v2963 = vcombine.high %v2962, 0
    %v2964 = vcombine.low %v2877, %v2884
    %v2966 = vunpack.c.l.s4 1983009808
    %v2967 = vunpack.c.0.s8 %v2966
    %v2968 = vlaneseq
    %v2969 = vshrl.u32 %v2968, 7
    %v2970 = vsub.s32 %v2967, %v2969
    %v2971 = vrot.slane %v2964, %v2970
    %v2972 = vcombine.low %v2887, %v2888
    %v2974 = vunpack.c.l.s4 1983009808
    %v2975 = vunpack.c.0.s8 %v2974
    %v2976 = vlaneseq
    %v2977 = vshrl.u32 %v2976, 7
    %v2978 = vsub.s32 %v2975, %v2977
    %v2979 = vrot.slane %v2972, %v2978
    %v2980 = vcombine.low %v2971, %v2979
    %v2982 = vunpack.c.l.s4 1934713408
    %v2983 = vunpack.c.0.s8 %v2982
    %v2984 = vlaneseq
    %v2985 = vshrl.u32 %v2984, 7
    %v2986 = vsub.s32 %v2983, %v2985
    %v2987 = vrot.slane %v2980, %v2986
    %v2988 = vcombine.high %v2987, 0
    %v2991 = vpack.i.b16 %v2937, %v2912
    %v2992 = vshrl.u32 %v2912, 16
    %v2993 = vshrl.u32 %v2937, 16
    %v2994 = vpack.i.b16 %v2993, %v2992
    %v2997 = vpack.i.b16 %v2938, %v2913
    %v2998 = vshrl.u32 %v2913, 16
    %v2999 = vshrl.u32 %v2938, 16
    %v3000 = vpack.i.b16 %v2999, %v2998
    %v3003 = vpack.i.b16 %v2987, %v2962
    %v3004 = vshrl.u32 %v2962, 16
    %v3005 = vshrl.u32 %v2987, 16
    %v3006 = vpack.i.b16 %v3005, %v3004
    %v3009 = vpack.i.b16 %v2988, %v2963
    %v3010 = vshrl.u32 %v2963, 16
    %v3011 = vshrl.u32 %v2988, 16
    %v3012 = vpack.i.b16 %v3011, %v3010
    %3014 = vrot.lane.b32.xlu0 %v2733, 120
    %v3015 = vpop.permute.xlu0 %3014
    %3016 = vrot.lane.b32.xlu0 %v2733, 112
    %v3017 = vpop.permute.xlu0 %3016
    %3018 = vrot.lane.b32.xlu0 %v2733, 104
    %v3019 = vpop.permute.xlu0 %3018
    %v3022 = vpack.i.b16 %v3015, %v2733
    %v3024 = vshrl.u32 %v2733, 16
    %v3025 = vshrl.u32 %v3015, 16
    %v3026 = vpack.i.b16 %v3025, %v3024
    %v3030 = vpack.i.b16 %v3019, %v3017
    %v3032 = vshrl.u32 %v3017, 16
    %v3033 = vshrl.u32 %v3019, 16
    %v3034 = vpack.i.b16 %v3033, %v3032
    %v3036 = vcombine.high %v3022, %v443
    %v3038 = vunpack.c.l.s4 1983009808
    %v3039 = vunpack.c.0.s8 %v3038
    %v3040 = vlaneseq
    %v3041 = vshrl.u32 %v3040, 7
    %v3042 = vsub.s32 %v3039, %v3041
    %v3043 = vrot.slane %v3022, %v3042
    %v3045 = vunpack.c.l.s4 1983009808
    %v3046 = vunpack.c.0.s8 %v3045
    %v3047 = vlaneseq
    %v3048 = vshrl.u32 %v3047, 7
    %v3049 = vsub.s32 %v3046, %v3048
    %v3050 = vrot.slane %v3036, %v3049
    %v3051 = vcombine.high %v3030, %v443
    %v3053 = vunpack.c.l.s4 1983009808
    %v3054 = vunpack.c.0.s8 %v3053
    %v3055 = vlaneseq
    %v3056 = vshrl.u32 %v3055, 7
    %v3057 = vsub.s32 %v3054, %v3056
    %v3058 = vrot.slane %v3030, %v3057
    %v3060 = vunpack.c.l.s4 1983009808
    %v3061 = vunpack.c.0.s8 %v3060
    %v3062 = vlaneseq
    %v3063 = vshrl.u32 %v3062, 7
    %v3064 = vsub.s32 %v3061, %v3063
    %v3065 = vrot.slane %v3051, %v3064
    %v3066 = vcombine.low %v3043, %v3058
    %v3067 = vcombine.high %v3043, %v3058
    %v3069 = vunpack.c.l.s4 1934713408
    %v3070 = vunpack.c.0.s8 %v3069
    %v3071 = vlaneseq
    %v3072 = vshrl.u32 %v3071, 7
    %v3073 = vsub.s32 %v3070, %v3072
    %v3074 = vrot.slane %v3066, %v3073
    %v3076 = vunpack.c.l.s4 1934713408
    %v3077 = vunpack.c.0.s8 %v3076
    %v3078 = vlaneseq
    %v3079 = vshrl.u32 %v3078, 7
    %v3080 = vsub.s32 %v3077, %v3079
    %v3081 = vrot.slane %v3067, %v3080
    %v3082 = vcombine.low %v3050, %v3065
    %v3083 = vcombine.high %v3050, %v3065
    %v3085 = vunpack.c.l.s4 1934713408
    %v3086 = vunpack.c.0.s8 %v3085
    %v3087 = vlaneseq
    %v3088 = vshrl.u32 %v3087, 7
    %v3089 = vsub.s32 %v3086, %v3088
    %v3090 = vrot.slane %v3082, %v3089
    %v3092 = vunpack.c.l.s4 1934713408
    %v3093 = vunpack.c.0.s8 %v3092
    %v3094 = vlaneseq
    %v3095 = vshrl.u32 %v3094, 7
    %v3096 = vsub.s32 %v3093, %v3095
    %v3097 = vrot.slane %v3083, %v3096
    %v3098 = vcombine.high %v3074, 0
    %v3099 = vcombine.high %v3081, 0
    %v3100 = vcombine.high %v3090, 0
    %v3101 = vcombine.high %v3097, 0
    %v3102 = vcombine.high %v3026, %v446
    %v3104 = vunpack.c.l.s4 1983009808
    %v3105 = vunpack.c.0.s8 %v3104
    %v3106 = vlaneseq
    %v3107 = vshrl.u32 %v3106, 7
    %v3108 = vsub.s32 %v3105, %v3107
    %v3109 = vrot.slane %v3026, %v3108
    %v3111 = vunpack.c.l.s4 1983009808
    %v3112 = vunpack.c.0.s8 %v3111
    %v3113 = vlaneseq
    %v3114 = vshrl.u32 %v3113, 7
    %v3115 = vsub.s32 %v3112, %v3114
    %v3116 = vrot.slane %v3102, %v3115
    %v3117 = vcombine.high %v3034, %v446
    %v3119 = vunpack.c.l.s4 1983009808
    %v3120 = vunpack.c.0.s8 %v3119
    %v3121 = vlaneseq
    %v3122 = vshrl.u32 %v3121, 7
    %v3123 = vsub.s32 %v3120, %v3122
    %v3124 = vrot.slane %v3034, %v3123
    %v3126 = vunpack.c.l.s4 1983009808
    %v3127 = vunpack.c.0.s8 %v3126
    %v3128 = vlaneseq
    %v3129 = vshrl.u32 %v3128, 7
    %v3130 = vsub.s32 %v3127, %v3129
    %v3131 = vrot.slane %v3117, %v3130
    %v3132 = vcombine.low %v3109, %v3124
    %v3133 = vcombine.high %v3109, %v3124
    %v3135 = vunpack.c.l.s4 1934713408
    %v3136 = vunpack.c.0.s8 %v3135
    %v3137 = vlaneseq
    %v3138 = vshrl.u32 %v3137, 7
    %v3139 = vsub.s32 %v3136, %v3138
    %v3140 = vrot.slane %v3132, %v3139
    %v3142 = vunpack.c.l.s4 1934713408
    %v3143 = vunpack.c.0.s8 %v3142
    %v3144 = vlaneseq
    %v3145 = vshrl.u32 %v3144, 7
    %v3146 = vsub.s32 %v3143, %v3145
    %v3147 = vrot.slane %v3133, %v3146
    %v3148 = vcombine.low %v3116, %v3131
    %v3149 = vcombine.high %v3116, %v3131
    %v3151 = vunpack.c.l.s4 1934713408
    %v3152 = vunpack.c.0.s8 %v3151
    %v3153 = vlaneseq
    %v3154 = vshrl.u32 %v3153, 7
    %v3155 = vsub.s32 %v3152, %v3154
    %v3156 = vrot.slane %v3148, %v3155
    %v3158 = vunpack.c.l.s4 1934713408
    %v3159 = vunpack.c.0.s8 %v3158
    %v3160 = vlaneseq
    %v3161 = vshrl.u32 %v3160, 7
    %v3162 = vsub.s32 %v3159, %v3161
    %v3163 = vrot.slane %v3149, %v3162
    %v3164 = vcombine.high %v3140, 0
    %v3165 = vcombine.high %v3147, 0
    %v3166 = vcombine.high %v3156, 0
    %v3167 = vcombine.high %v3163, 0
    %v3168 = vcombine.low %v3074, %v3081
    %v3170 = vunpack.c.l.s4 1983009808
    %v3171 = vunpack.c.0.s8 %v3170
    %v3172 = vlaneseq
    %v3173 = vshrl.u32 %v3172, 7
    %v3174 = vsub.s32 %v3171, %v3173
    %v3175 = vrot.slane %v3168, %v3174
    %v3176 = vcombine.low %v3098, %v3099
    %v3178 = vunpack.c.l.s4 1983009808
    %v3179 = vunpack.c.0.s8 %v3178
    %v3180 = vlaneseq
    %v3181 = vshrl.u32 %v3180, 7
    %v3182 = vsub.s32 %v3179, %v3181
    %v3183 = vrot.slane %v3176, %v3182
    %v3184 = vcombine.low %v3175, %v3183
    %v3186 = vunpack.c.l.s4 1934713408
    %v3187 = vunpack.c.0.s8 %v3186
    %v3188 = vlaneseq
    %v3189 = vshrl.u32 %v3188, 7
    %v3190 = vsub.s32 %v3187, %v3189
    %v3191 = vrot.slane %v3184, %v3190
    %v3192 = vcombine.high %v3191, 0
    %v3193 = vcombine.low %v3140, %v3147
    %v3195 = vunpack.c.l.s4 1983009808
    %v3196 = vunpack.c.0.s8 %v3195
    %v3197 = vlaneseq
    %v3198 = vshrl.u32 %v3197, 7
    %v3199 = vsub.s32 %v3196, %v3198
    %v3200 = vrot.slane %v3193, %v3199
    %v3201 = vcombine.low %v3164, %v3165
    %v3203 = vunpack.c.l.s4 1983009808
    %v3204 = vunpack.c.0.s8 %v3203
    %v3205 = vlaneseq
    %v3206 = vshrl.u32 %v3205, 7
    %v3207 = vsub.s32 %v3204, %v3206
    %v3208 = vrot.slane %v3201, %v3207
    %v3209 = vcombine.low %v3200, %v3208
    %v3211 = vunpack.c.l.s4 1934713408
    %v3212 = vunpack.c.0.s8 %v3211
    %v3213 = vlaneseq
    %v3214 = vshrl.u32 %v3213, 7
    %v3215 = vsub.s32 %v3212, %v3214
    %v3216 = vrot.slane %v3209, %v3215
    %v3217 = vcombine.high %v3216, 0
    %v3218 = vcombine.low %v3090, %v3097
    %v3220 = vunpack.c.l.s4 1983009808
    %v3221 = vunpack.c.0.s8 %v3220
    %v3222 = vlaneseq
    %v3223 = vshrl.u32 %v3222, 7
    %v3224 = vsub.s32 %v3221, %v3223
    %v3225 = vrot.slane %v3218, %v3224
    %v3226 = vcombine.low %v3100, %v3101
    %v3228 = vunpack.c.l.s4 1983009808
    %v3229 = vunpack.c.0.s8 %v3228
    %v3230 = vlaneseq
    %v3231 = vshrl.u32 %v3230, 7
    %v3232 = vsub.s32 %v3229, %v3231
    %v3233 = vrot.slane %v3226, %v3232
    %v3234 = vcombine.low %v3225, %v3233
    %v3236 = vunpack.c.l.s4 1934713408
    %v3237 = vunpack.c.0.s8 %v3236
    %v3238 = vlaneseq
    %v3239 = vshrl.u32 %v3238, 7
    %v3240 = vsub.s32 %v3237, %v3239
    %v3241 = vrot.slane %v3234, %v3240
    %v3242 = vcombine.high %v3241, 0
    %v3243 = vcombine.low %v3156, %v3163
    %v3245 = vunpack.c.l.s4 1983009808
    %v3246 = vunpack.c.0.s8 %v3245
    %v3247 = vlaneseq
    %v3248 = vshrl.u32 %v3247, 7
    %v3249 = vsub.s32 %v3246, %v3248
    %v3250 = vrot.slane %v3243, %v3249
    %v3251 = vcombine.low %v3166, %v3167
    %v3253 = vunpack.c.l.s4 1983009808
    %v3254 = vunpack.c.0.s8 %v3253
    %v3255 = vlaneseq
    %v3256 = vshrl.u32 %v3255, 7
    %v3257 = vsub.s32 %v3254, %v3256
    %v3258 = vrot.slane %v3251, %v3257
    %v3259 = vcombine.low %v3250, %v3258
    %v3261 = vunpack.c.l.s4 1934713408
    %v3262 = vunpack.c.0.s8 %v3261
    %v3263 = vlaneseq
    %v3264 = vshrl.u32 %v3263, 7
    %v3265 = vsub.s32 %v3262, %v3264
    %v3266 = vrot.slane %v3259, %v3265
    %v3267 = vcombine.high %v3266, 0
    %v3270 = vpack.i.b16 %v3216, %v3191
    %v3271 = vshrl.u32 %v3191, 16
    %v3272 = vshrl.u32 %v3216, 16
    %v3273 = vpack.i.b16 %v3272, %v3271
    %v3276 = vpack.i.b16 %v3217, %v3192
    %v3277 = vshrl.u32 %v3192, 16
    %v3278 = vshrl.u32 %v3217, 16
    %v3279 = vpack.i.b16 %v3278, %v3277
    %v3282 = vpack.i.b16 %v3266, %v3241
    %v3283 = vshrl.u32 %v3241, 16
    %v3284 = vshrl.u32 %v3266, 16
    %v3285 = vpack.i.b16 %v3284, %v3283
    %v3288 = vpack.i.b16 %v3267, %v3242
    %v3289 = vshrl.u32 %v3242, 16
    %v3290 = vshrl.u32 %v3267, 16
    %v3291 = vpack.i.b16 %v3290, %v3289
    %3292 = vrot.lane.b32.xlu0 %v2733, 96
    %v3293 = vpop.permute.xlu0 %3292
    %3294 = vrot.lane.b32.xlu0 %v3015, 96
    %v3295 = vpop.permute.xlu0 %3294
    %3296 = vrot.lane.b32.xlu0 %v3017, 96
    %v3297 = vpop.permute.xlu0 %3296
    %3298 = vrot.lane.b32.xlu0 %v3019, 96
    %v3299 = vpop.permute.xlu0 %3298
    %v3302 = vpack.i.b16 %v3295, %v3293
    %v3304 = vshrl.u32 %v3293, 16
    %v3305 = vshrl.u32 %v3295, 16
    %v3306 = vpack.i.b16 %v3305, %v3304
    %v3310 = vpack.i.b16 %v3299, %v3297
    %v3312 = vshrl.u32 %v3297, 16
    %v3313 = vshrl.u32 %v3299, 16
    %v3314 = vpack.i.b16 %v3313, %v3312
    %v3316 = vcombine.high %v3302, %v443
    %v3318 = vunpack.c.l.s4 1983009808
    %v3319 = vunpack.c.0.s8 %v3318
    %v3320 = vlaneseq
    %v3321 = vshrl.u32 %v3320, 7
    %v3322 = vsub.s32 %v3319, %v3321
    %v3323 = vrot.slane %v3302, %v3322
    %v3325 = vunpack.c.l.s4 1983009808
    %v3326 = vunpack.c.0.s8 %v3325
    %v3327 = vlaneseq
    %v3328 = vshrl.u32 %v3327, 7
    %v3329 = vsub.s32 %v3326, %v3328
    %v3330 = vrot.slane %v3316, %v3329
    %v3331 = vcombine.high %v3310, %v443
    %v3333 = vunpack.c.l.s4 1983009808
    %v3334 = vunpack.c.0.s8 %v3333
    %v3335 = vlaneseq
    %v3336 = vshrl.u32 %v3335, 7
    %v3337 = vsub.s32 %v3334, %v3336
    %v3338 = vrot.slane %v3310, %v3337
    %v3340 = vunpack.c.l.s4 1983009808
    %v3341 = vunpack.c.0.s8 %v3340
    %v3342 = vlaneseq
    %v3343 = vshrl.u32 %v3342, 7
    %v3344 = vsub.s32 %v3341, %v3343
    %v3345 = vrot.slane %v3331, %v3344
    %v3346 = vcombine.low %v3323, %v3338
    %v3347 = vcombine.high %v3323, %v3338
    %v3349 = vunpack.c.l.s4 1934713408
    %v3350 = vunpack.c.0.s8 %v3349
    %v3351 = vlaneseq
    %v3352 = vshrl.u32 %v3351, 7
    %v3353 = vsub.s32 %v3350, %v3352
    %v3354 = vrot.slane %v3346, %v3353
    %v3356 = vunpack.c.l.s4 1934713408
    %v3357 = vunpack.c.0.s8 %v3356
    %v3358 = vlaneseq
    %v3359 = vshrl.u32 %v3358, 7
    %v3360 = vsub.s32 %v3357, %v3359
    %v3361 = vrot.slane %v3347, %v3360
    %v3362 = vcombine.low %v3330, %v3345
    %v3363 = vcombine.high %v3330, %v3345
    %v3365 = vunpack.c.l.s4 1934713408
    %v3366 = vunpack.c.0.s8 %v3365
    %v3367 = vlaneseq
    %v3368 = vshrl.u32 %v3367, 7
    %v3369 = vsub.s32 %v3366, %v3368
    %v3370 = vrot.slane %v3362, %v3369
    %v3372 = vunpack.c.l.s4 1934713408
    %v3373 = vunpack.c.0.s8 %v3372
    %v3374 = vlaneseq
    %v3375 = vshrl.u32 %v3374, 7
    %v3376 = vsub.s32 %v3373, %v3375
    %v3377 = vrot.slane %v3363, %v3376
    %v3378 = vcombine.high %v3354, 0
    %v3379 = vcombine.high %v3361, 0
    %v3380 = vcombine.high %v3370, 0
    %v3381 = vcombine.high %v3377, 0
    %v3382 = vcombine.high %v3306, %v446
    %v3384 = vunpack.c.l.s4 1983009808
    %v3385 = vunpack.c.0.s8 %v3384
    %v3386 = vlaneseq
    %v3387 = vshrl.u32 %v3386, 7
    %v3388 = vsub.s32 %v3385, %v3387
    %v3389 = vrot.slane %v3306, %v3388
    %v3391 = vunpack.c.l.s4 1983009808
    %v3392 = vunpack.c.0.s8 %v3391
    %v3393 = vlaneseq
    %v3394 = vshrl.u32 %v3393, 7
    %v3395 = vsub.s32 %v3392, %v3394
    %v3396 = vrot.slane %v3382, %v3395
    %v3397 = vcombine.high %v3314, %v446
    %v3399 = vunpack.c.l.s4 1983009808
    %v3400 = vunpack.c.0.s8 %v3399
    %v3401 = vlaneseq
    %v3402 = vshrl.u32 %v3401, 7
    %v3403 = vsub.s32 %v3400, %v3402
    %v3404 = vrot.slane %v3314, %v3403
    %v3406 = vunpack.c.l.s4 1983009808
    %v3407 = vunpack.c.0.s8 %v3406
    %v3408 = vlaneseq
    %v3409 = vshrl.u32 %v3408, 7
    %v3410 = vsub.s32 %v3407, %v3409
    %v3411 = vrot.slane %v3397, %v3410
    %v3412 = vcombine.low %v3389, %v3404
    %v3413 = vcombine.high %v3389, %v3404
    %v3415 = vunpack.c.l.s4 1934713408
    %v3416 = vunpack.c.0.s8 %v3415
    %v3417 = vlaneseq
    %v3418 = vshrl.u32 %v3417, 7
    %v3419 = vsub.s32 %v3416, %v3418
    %v3420 = vrot.slane %v3412, %v3419
    %v3422 = vunpack.c.l.s4 1934713408
    %v3423 = vunpack.c.0.s8 %v3422
    %v3424 = vlaneseq
    %v3425 = vshrl.u32 %v3424, 7
    %v3426 = vsub.s32 %v3423, %v3425
    %v3427 = vrot.slane %v3413, %v3426
    %v3428 = vcombine.low %v3396, %v3411
    %v3429 = vcombine.high %v3396, %v3411
    %v3431 = vunpack.c.l.s4 1934713408
    %v3432 = vunpack.c.0.s8 %v3431
    %v3433 = vlaneseq
    %v3434 = vshrl.u32 %v3433, 7
    %v3435 = vsub.s32 %v3432, %v3434
    %v3436 = vrot.slane %v3428, %v3435
    %v3438 = vunpack.c.l.s4 1934713408
    %v3439 = vunpack.c.0.s8 %v3438
    %v3440 = vlaneseq
    %v3441 = vshrl.u32 %v3440, 7
    %v3442 = vsub.s32 %v3439, %v3441
    %v3443 = vrot.slane %v3429, %v3442
    %v3444 = vcombine.high %v3420, 0
    %v3445 = vcombine.high %v3427, 0
    %v3446 = vcombine.high %v3436, 0
    %v3447 = vcombine.high %v3443, 0
    %v3448 = vcombine.low %v3354, %v3361
    %v3450 = vunpack.c.l.s4 1983009808
    %v3451 = vunpack.c.0.s8 %v3450
    %v3452 = vlaneseq
    %v3453 = vshrl.u32 %v3452, 7
    %v3454 = vsub.s32 %v3451, %v3453
    %v3455 = vrot.slane %v3448, %v3454
    %v3456 = vcombine.low %v3378, %v3379
    %v3458 = vunpack.c.l.s4 1983009808
    %v3459 = vunpack.c.0.s8 %v3458
    %v3460 = vlaneseq
    %v3461 = vshrl.u32 %v3460, 7
    %v3462 = vsub.s32 %v3459, %v3461
    %v3463 = vrot.slane %v3456, %v3462
    %v3464 = vcombine.low %v3455, %v3463
    %v3466 = vunpack.c.l.s4 1934713408
    %v3467 = vunpack.c.0.s8 %v3466
    %v3468 = vlaneseq
    %v3469 = vshrl.u32 %v3468, 7
    %v3470 = vsub.s32 %v3467, %v3469
    %v3471 = vrot.slane %v3464, %v3470
    %v3472 = vcombine.high %v3471, 0
    %v3473 = vcombine.low %v3420, %v3427
    %v3475 = vunpack.c.l.s4 1983009808
    %v3476 = vunpack.c.0.s8 %v3475
    %v3477 = vlaneseq
    %v3478 = vshrl.u32 %v3477, 7
    %v3479 = vsub.s32 %v3476, %v3478
    %v3480 = vrot.slane %v3473, %v3479
    %v3481 = vcombine.low %v3444, %v3445
    %v3483 = vunpack.c.l.s4 1983009808
    %v3484 = vunpack.c.0.s8 %v3483
    %v3485 = vlaneseq
    %v3486 = vshrl.u32 %v3485, 7
    %v3487 = vsub.s32 %v3484, %v3486
    %v3488 = vrot.slane %v3481, %v3487
    %v3489 = vcombine.low %v3480, %v3488
    %v3491 = vunpack.c.l.s4 1934713408
    %v3492 = vunpack.c.0.s8 %v3491
    %v3493 = vlaneseq
    %v3494 = vshrl.u32 %v3493, 7
    %v3495 = vsub.s32 %v3492, %v3494
    %v3496 = vrot.slane %v3489, %v3495
    %v3497 = vcombine.high %v3496, 0
    %v3498 = vcombine.low %v3370, %v3377
    %v3500 = vunpack.c.l.s4 1983009808
    %v3501 = vunpack.c.0.s8 %v3500
    %v3502 = vlaneseq
    %v3503 = vshrl.u32 %v3502, 7
    %v3504 = vsub.s32 %v3501, %v3503
    %v3505 = vrot.slane %v3498, %v3504
    %v3506 = vcombine.low %v3380, %v3381
    %v3508 = vunpack.c.l.s4 1983009808
    %v3509 = vunpack.c.0.s8 %v3508
    %v3510 = vlaneseq
    %v3511 = vshrl.u32 %v3510, 7
    %v3512 = vsub.s32 %v3509, %v3511
    %v3513 = vrot.slane %v3506, %v3512
    %v3514 = vcombine.low %v3505, %v3513
    %v3516 = vunpack.c.l.s4 1934713408
    %v3517 = vunpack.c.0.s8 %v3516
    %v3518 = vlaneseq
    %v3519 = vshrl.u32 %v3518, 7
    %v3520 = vsub.s32 %v3517, %v3519
    %v3521 = vrot.slane %v3514, %v3520
    %v3522 = vcombine.high %v3521, 0
    %v3523 = vcombine.low %v3436, %v3443
    %v3525 = vunpack.c.l.s4 1983009808
    %v3526 = vunpack.c.0.s8 %v3525
    %v3527 = vlaneseq
    %v3528 = vshrl.u32 %v3527, 7
    %v3529 = vsub.s32 %v3526, %v3528
    %v3530 = vrot.slane %v3523, %v3529
    %v3531 = vcombine.low %v3446, %v3447
    %v3533 = vunpack.c.l.s4 1983009808
    %v3534 = vunpack.c.0.s8 %v3533
    %v3535 = vlaneseq
    %v3536 = vshrl.u32 %v3535, 7
    %v3537 = vsub.s32 %v3534, %v3536
    %v3538 = vrot.slane %v3531, %v3537
    %v3539 = vcombine.low %v3530, %v3538
    %v3541 = vunpack.c.l.s4 1934713408
    %v3542 = vunpack.c.0.s8 %v3541
    %v3543 = vlaneseq
    %v3544 = vshrl.u32 %v3543, 7
    %v3545 = vsub.s32 %v3542, %v3544
    %v3546 = vrot.slane %v3539, %v3545
    %v3547 = vcombine.high %v3546, 0
    %v3550 = vpack.i.b16 %v3496, %v3471
    %v3551 = vshrl.u32 %v3471, 16
    %v3552 = vshrl.u32 %v3496, 16
    %v3553 = vpack.i.b16 %v3552, %v3551
    %v3556 = vpack.i.b16 %v3497, %v3472
    %v3557 = vshrl.u32 %v3472, 16
    %v3558 = vshrl.u32 %v3497, 16
    %v3559 = vpack.i.b16 %v3558, %v3557
    %v3562 = vpack.i.b16 %v3546, %v3521
    %v3563 = vshrl.u32 %v3521, 16
    %v3564 = vshrl.u32 %v3546, 16
    %v3565 = vpack.i.b16 %v3564, %v3563
    %v3568 = vpack.i.b16 %v3547, %v3522
    %v3569 = vshrl.u32 %v3522, 16
    %v3570 = vshrl.u32 %v3547, 16
    %v3571 = vpack.i.b16 %v3570, %v3569
    %v3573 = vsel %vm1270, %v2991, 0
    %v3576 = vsel %vm1270, %v3270, 0
    %3578 = vmatprep.subr.bf16.mxu0 0
    %3579 = vmatpush1.bf16.xpose.msra.mxu0 %v3576
    %3580 = vmatprep.subr.bf16.mxu0 0
    %3581 = vmatpush1.bf16.xpose.msra.mxu0 0
    %3582 = vmatprep.subr.bf16.mxu0 0
    %3583 = vmatpush1.bf16.xpose.msra.mxu0 0
    %3584 = vmatprep.subr.bf16.mxu0 0
    %3585 = vmatpush1.bf16.xpose.msra.mxu0 0
    %3586 = vmatprep.subr.bf16.mxu0 0
    %3587 = vmatpush1.bf16.xpose.msra.mxu0 0
    %3588 = vmatprep.subr.bf16.mxu0 0
    %3589 = vmatpush1.bf16.xpose.msra.mxu0 0
    %3590 = vmatprep.subr.bf16.mxu0 0
    %3591 = vmatpush1.bf16.xpose.msra.mxu0 0
    %3592 = vmatprep.subr.bf16.mxu0 0
    %3593 = vmatpush1.bf16.xpose.msra.mxu0 0
    %3594 = vmatprep.subr.bf16.mxu0 0
    %3595 = vmatpush1.bf16.xpose.msra.mxu0 0
    %3596 = vmatprep.subr.bf16.mxu0 0
    %3597 = vmatpush1.bf16.xpose.msra.mxu0 0
    %3598 = vmatprep.subr.bf16.mxu0 0
    %3599 = vmatpush1.bf16.xpose.msra.mxu0 0
    %3600 = vmatprep.subr.bf16.mxu0 0
    %3601 = vmatpush1.bf16.xpose.msra.mxu0 0
    %3602 = vmatprep.subr.bf16.mxu0 0
    %3603 = vmatpush1.bf16.xpose.msra.mxu0 0
    %3604 = vmatprep.subr.bf16.mxu0 0
    %3605 = vmatpush1.bf16.xpose.msra.mxu0 0
    %3606 = vmatprep.subr.bf16.mxu0 0
    %3607 = vmatpush1.bf16.xpose.msra.mxu0 0
    %3608 = vmatprep.subr.bf16.mxu0 0
    %3609 = vmatpush1.bf16.xpose.msra.mxu0 0
    %3610 = vmatprep.mubr.bf16.mxu0 0
    %3611 = vmatmul.mubr.bf16.gmra.mrb[0].mxu0 %v3573
    %v3612 = vpop.f32.mrb[0].mxu0
    %v3613 = vadd.f32 0.0, %v3612
    %v3614 = vpop.f32.mrb[0].mxu0
    %v3615 = vpop.f32.mrb[0].mxu0
    %v3616 = vpop.f32.mrb[0].mxu0
    %3617 = vdwg.mxu0
    %v3619 = vsel %vm1270, %v2994, 0
    %v3622 = vsel %vm1270, %v3273, 0
    %3624 = vmatprep.subr.bf16.mxu0 0
    %3625 = vmatpush1.bf16.xpose.msra.mxu0 %v3622
    %3626 = vmatprep.subr.bf16.mxu0 0
    %3627 = vmatpush1.bf16.xpose.msra.mxu0 0
    %3628 = vmatprep.subr.bf16.mxu0 0
    %3629 = vmatpush1.bf16.xpose.msra.mxu0 0
    %3630 = vmatprep.subr.bf16.mxu0 0
    %3631 = vmatpush1.bf16.xpose.msra.mxu0 0
    %3632 = vmatprep.subr.bf16.mxu0 0
    %3633 = vmatpush1.bf16.xpose.msra.mxu0 0
    %3634 = vmatprep.subr.bf16.mxu0 0
    %3635 = vmatpush1.bf16.xpose.msra.mxu0 0
    %3636 = vmatprep.subr.bf16.mxu0 0
    %3637 = vmatpush1.bf16.xpose.msra.mxu0 0
    %3638 = vmatprep.subr.bf16.mxu0 0
    %3639 = vmatpush1.bf16.xpose.msra.mxu0 0
    %3640 = vmatprep.subr.bf16.mxu0 0
    %3641 = vmatpush1.bf16.xpose.msra.mxu0 0
    %3642 = vmatprep.subr.bf16.mxu0 0
    %3643 = vmatpush1.bf16.xpose.msra.mxu0 0
    %3644 = vmatprep.subr.bf16.mxu0 0
    %3645 = vmatpush1.bf16.xpose.msra.mxu0 0
    %3646 = vmatprep.subr.bf16.mxu0 0
    %3647 = vmatpush1.bf16.xpose.msra.mxu0 0
    %3648 = vmatprep.subr.bf16.mxu0 0
    %3649 = vmatpush1.bf16.xpose.msra.mxu0 0
    %3650 = vmatprep.subr.bf16.mxu0 0
    %3651 = vmatpush1.bf16.xpose.msra.mxu0 0
    %3652 = vmatprep.subr.bf16.mxu0 0
    %3653 = vmatpush1.bf16.xpose.msra.mxu0 0
    %3654 = vmatprep.subr.bf16.mxu0 0
    %3655 = vmatpush1.bf16.xpose.msra.mxu0 0
    %3656 = vmatprep.mubr.bf16.mxu0 0
    %3657 = vmatmul.mubr.bf16.gmra.mrb[0].mxu0 %v3619
    %v3658 = vpop.f32.mrb[0].mxu0
    %v3659 = vadd.f32 0.0, %v3658
    %v3660 = vpop.f32.mrb[0].mxu0
    %v3661 = vpop.f32.mrb[0].mxu0
    %v3662 = vpop.f32.mrb[0].mxu0
    %3663 = vdwg.mxu0
    %v3665 = vsel %vm1270, %v2997, 0
    %v3668 = vsel %vm1270, %v3276, 0
    %3670 = vmatprep.subr.bf16.mxu0 0
    %3671 = vmatpush1.bf16.xpose.msra.mxu0 %v3668
    %3672 = vmatprep.subr.bf16.mxu0 0
    %3673 = vmatpush1.bf16.xpose.msra.mxu0 0
    %3674 = vmatprep.subr.bf16.mxu0 0
    %3675 = vmatpush1.bf16.xpose.msra.mxu0 0
    %3676 = vmatprep.subr.bf16.mxu0 0
    %3677 = vmatpush1.bf16.xpose.msra.mxu0 0
    %3678 = vmatprep.subr.bf16.mxu0 0
    %3679 = vmatpush1.bf16.xpose.msra.mxu0 0
    %3680 = vmatprep.subr.bf16.mxu0 0
    %3681 = vmatpush1.bf16.xpose.msra.mxu0 0
    %3682 = vmatprep.subr.bf16.mxu0 0
    %3683 = vmatpush1.bf16.xpose.msra.mxu0 0
    %3684 = vmatprep.subr.bf16.mxu0 0
    %3685 = vmatpush1.bf16.xpose.msra.mxu0 0
    %3686 = vmatprep.subr.bf16.mxu0 0
    %3687 = vmatpush1.bf16.xpose.msra.mxu0 0
    %3688 = vmatprep.subr.bf16.mxu0 0
    %3689 = vmatpush1.bf16.xpose.msra.mxu0 0
    %3690 = vmatprep.subr.bf16.mxu0 0
    %3691 = vmatpush1.bf16.xpose.msra.mxu0 0
    %3692 = vmatprep.subr.bf16.mxu0 0
    %3693 = vmatpush1.bf16.xpose.msra.mxu0 0
    %3694 = vmatprep.subr.bf16.mxu0 0
    %3695 = vmatpush1.bf16.xpose.msra.mxu0 0
    %3696 = vmatprep.subr.bf16.mxu0 0
    %3697 = vmatpush1.bf16.xpose.msra.mxu0 0
    %3698 = vmatprep.subr.bf16.mxu0 0
    %3699 = vmatpush1.bf16.xpose.msra.mxu0 0
    %3700 = vmatprep.subr.bf16.mxu0 0
    %3701 = vmatpush1.bf16.xpose.msra.mxu0 0
    %3702 = vmatprep.mubr.bf16.mxu0 0
    %3703 = vmatmul.mubr.bf16.gmra.mrb[0].mxu0 %v3665
    %v3704 = vpop.f32.mrb[0].mxu0
    %v3705 = vadd.f32 0.0, %v3704
    %v3706 = vpop.f32.mrb[0].mxu0
    %v3707 = vpop.f32.mrb[0].mxu0
    %v3708 = vpop.f32.mrb[0].mxu0
    %3709 = vdwg.mxu0
    %v3711 = vsel %vm1270, %v3000, 0
    %v3714 = vsel %vm1270, %v3279, 0
    %3716 = vmatprep.subr.bf16.mxu0 0
    %3717 = vmatpush1.bf16.xpose.msra.mxu0 %v3714
    %3718 = vmatprep.subr.bf16.mxu0 0
    %3719 = vmatpush1.bf16.xpose.msra.mxu0 0
    %3720 = vmatprep.subr.bf16.mxu0 0
    %3721 = vmatpush1.bf16.xpose.msra.mxu0 0
    %3722 = vmatprep.subr.bf16.mxu0 0
    %3723 = vmatpush1.bf16.xpose.msra.mxu0 0
    %3724 = vmatprep.subr.bf16.mxu0 0
    %3725 = vmatpush1.bf16.xpose.msra.mxu0 0
    %3726 = vmatprep.subr.bf16.mxu0 0
    %3727 = vmatpush1.bf16.xpose.msra.mxu0 0
    %3728 = vmatprep.subr.bf16.mxu0 0
    %3729 = vmatpush1.bf16.xpose.msra.mxu0 0
    %3730 = vmatprep.subr.bf16.mxu0 0
    %3731 = vmatpush1.bf16.xpose.msra.mxu0 0
    %3732 = vmatprep.subr.bf16.mxu0 0
    %3733 = vmatpush1.bf16.xpose.msra.mxu0 0
    %3734 = vmatprep.subr.bf16.mxu0 0
    %3735 = vmatpush1.bf16.xpose.msra.mxu0 0
    %3736 = vmatprep.subr.bf16.mxu0 0
    %3737 = vmatpush1.bf16.xpose.msra.mxu0 0
    %3738 = vmatprep.subr.bf16.mxu0 0
    %3739 = vmatpush1.bf16.xpose.msra.mxu0 0
    %3740 = vmatprep.subr.bf16.mxu0 0
    %3741 = vmatpush1.bf16.xpose.msra.mxu0 0
    %3742 = vmatprep.subr.bf16.mxu0 0
    %3743 = vmatpush1.bf16.xpose.msra.mxu0 0
    %3744 = vmatprep.subr.bf16.mxu0 0
    %3745 = vmatpush1.bf16.xpose.msra.mxu0 0
    %3746 = vmatprep.subr.bf16.mxu0 0
    %3747 = vmatpush1.bf16.xpose.msra.mxu0 0
    %3748 = vmatprep.mubr.bf16.mxu0 0
    %3749 = vmatmul.mubr.bf16.gmra.mrb[0].mxu0 %v3711
    %v3750 = vpop.f32.mrb[0].mxu0
    %v3751 = vadd.f32 0.0, %v3750
    %v3752 = vpop.f32.mrb[0].mxu0
    %v3753 = vpop.f32.mrb[0].mxu0
    %v3754 = vpop.f32.mrb[0].mxu0
    %3755 = vdwg.mxu0
    %v3757 = vsel %vm1270, %v3003, 0
    %v3760 = vsel %vm1270, %v3282, 0
    %3762 = vmatprep.subr.bf16.mxu0 0
    %3763 = vmatpush1.bf16.xpose.msra.mxu0 %v3760
    %3764 = vmatprep.subr.bf16.mxu0 0
    %3765 = vmatpush1.bf16.xpose.msra.mxu0 0
    %3766 = vmatprep.subr.bf16.mxu0 0
    %3767 = vmatpush1.bf16.xpose.msra.mxu0 0
    %3768 = vmatprep.subr.bf16.mxu0 0
    %3769 = vmatpush1.bf16.xpose.msra.mxu0 0
    %3770 = vmatprep.subr.bf16.mxu0 0
    %3771 = vmatpush1.bf16.xpose.msra.mxu0 0
    %3772 = vmatprep.subr.bf16.mxu0 0
    %3773 = vmatpush1.bf16.xpose.msra.mxu0 0
    %3774 = vmatprep.subr.bf16.mxu0 0
    %3775 = vmatpush1.bf16.xpose.msra.mxu0 0
    %3776 = vmatprep.subr.bf16.mxu0 0
    %3777 = vmatpush1.bf16.xpose.msra.mxu0 0
    %3778 = vmatprep.subr.bf16.mxu0 0
    %3779 = vmatpush1.bf16.xpose.msra.mxu0 0
    %3780 = vmatprep.subr.bf16.mxu0 0
    %3781 = vmatpush1.bf16.xpose.msra.mxu0 0
    %3782 = vmatprep.subr.bf16.mxu0 0
    %3783 = vmatpush1.bf16.xpose.msra.mxu0 0
    %3784 = vmatprep.subr.bf16.mxu0 0
    %3785 = vmatpush1.bf16.xpose.msra.mxu0 0
    %3786 = vmatprep.subr.bf16.mxu0 0
    %3787 = vmatpush1.bf16.xpose.msra.mxu0 0
    %3788 = vmatprep.subr.bf16.mxu0 0
    %3789 = vmatpush1.bf16.xpose.msra.mxu0 0
    %3790 = vmatprep.subr.bf16.mxu0 0
    %3791 = vmatpush1.bf16.xpose.msra.mxu0 0
    %3792 = vmatprep.subr.bf16.mxu0 0
    %3793 = vmatpush1.bf16.xpose.msra.mxu0 0
    %3794 = vmatprep.mubr.bf16.mxu0 0
    %3795 = vmatmul.mubr.bf16.gmra.mrb[0].mxu0 %v3757
    %v3796 = vpop.f32.mrb[0].mxu0
    %v3797 = vadd.f32 0.0, %v3796
    %v3798 = vpop.f32.mrb[0].mxu0
    %v3799 = vpop.f32.mrb[0].mxu0
    %v3800 = vpop.f32.mrb[0].mxu0
    %3801 = vdwg.mxu0
    %v3803 = vsel %vm1270, %v3006, 0
    %v3806 = vsel %vm1270, %v3285, 0
    %3808 = vmatprep.subr.bf16.mxu0 0
    %3809 = vmatpush1.bf16.xpose.msra.mxu0 %v3806
    %3810 = vmatprep.subr.bf16.mxu0 0
    %3811 = vmatpush1.bf16.xpose.msra.mxu0 0
    %3812 = vmatprep.subr.bf16.mxu0 0
    %3813 = vmatpush1.bf16.xpose.msra.mxu0 0
    %3814 = vmatprep.subr.bf16.mxu0 0
    %3815 = vmatpush1.bf16.xpose.msra.mxu0 0
    %3816 = vmatprep.subr.bf16.mxu0 0
    %3817 = vmatpush1.bf16.xpose.msra.mxu0 0
    %3818 = vmatprep.subr.bf16.mxu0 0
    %3819 = vmatpush1.bf16.xpose.msra.mxu0 0
    %3820 = vmatprep.subr.bf16.mxu0 0
    %3821 = vmatpush1.bf16.xpose.msra.mxu0 0
    %3822 = vmatprep.subr.bf16.mxu0 0
    %3823 = vmatpush1.bf16.xpose.msra.mxu0 0
    %3824 = vmatprep.subr.bf16.mxu0 0
    %3825 = vmatpush1.bf16.xpose.msra.mxu0 0
    %3826 = vmatprep.subr.bf16.mxu0 0
    %3827 = vmatpush1.bf16.xpose.msra.mxu0 0
    %3828 = vmatprep.subr.bf16.mxu0 0
    %3829 = vmatpush1.bf16.xpose.msra.mxu0 0
    %3830 = vmatprep.subr.bf16.mxu0 0
    %3831 = vmatpush1.bf16.xpose.msra.mxu0 0
    %3832 = vmatprep.subr.bf16.mxu0 0
    %3833 = vmatpush1.bf16.xpose.msra.mxu0 0
    %3834 = vmatprep.subr.bf16.mxu0 0
    %3835 = vmatpush1.bf16.xpose.msra.mxu0 0
    %3836 = vmatprep.subr.bf16.mxu0 0
    %3837 = vmatpush1.bf16.xpose.msra.mxu0 0
    %3838 = vmatprep.subr.bf16.mxu0 0
    %3839 = vmatpush1.bf16.xpose.msra.mxu0 0
    %3840 = vmatprep.mubr.bf16.mxu0 0
    %3841 = vmatmul.mubr.bf16.gmra.mrb[0].mxu0 %v3803
    %v3842 = vpop.f32.mrb[0].mxu0
    %v3843 = vadd.f32 0.0, %v3842
    %v3844 = vpop.f32.mrb[0].mxu0
    %v3845 = vpop.f32.mrb[0].mxu0
    %v3846 = vpop.f32.mrb[0].mxu0
    %3847 = vdwg.mxu0
    %v3849 = vsel %vm1270, %v3009, 0
    %v3852 = vsel %vm1270, %v3288, 0
    %3854 = vmatprep.subr.bf16.mxu0 0
    %3855 = vmatpush1.bf16.xpose.msra.mxu0 %v3852
    %3856 = vmatprep.subr.bf16.mxu0 0
    %3857 = vmatpush1.bf16.xpose.msra.mxu0 0
    %3858 = vmatprep.subr.bf16.mxu0 0
    %3859 = vmatpush1.bf16.xpose.msra.mxu0 0
    %3860 = vmatprep.subr.bf16.mxu0 0
    %3861 = vmatpush1.bf16.xpose.msra.mxu0 0
    %3862 = vmatprep.subr.bf16.mxu0 0
    %3863 = vmatpush1.bf16.xpose.msra.mxu0 0
    %3864 = vmatprep.subr.bf16.mxu0 0
    %3865 = vmatpush1.bf16.xpose.msra.mxu0 0
    %3866 = vmatprep.subr.bf16.mxu0 0
    %3867 = vmatpush1.bf16.xpose.msra.mxu0 0
    %3868 = vmatprep.subr.bf16.mxu0 0
    %3869 = vmatpush1.bf16.xpose.msra.mxu0 0
    %3870 = vmatprep.subr.bf16.mxu0 0
    %3871 = vmatpush1.bf16.xpose.msra.mxu0 0
    %3872 = vmatprep.subr.bf16.mxu0 0
    %3873 = vmatpush1.bf16.xpose.msra.mxu0 0
    %3874 = vmatprep.subr.bf16.mxu0 0
    %3875 = vmatpush1.bf16.xpose.msra.mxu0 0
    %3876 = vmatprep.subr.bf16.mxu0 0
    %3877 = vmatpush1.bf16.xpose.msra.mxu0 0
    %3878 = vmatprep.subr.bf16.mxu0 0
    %3879 = vmatpush1.bf16.xpose.msra.mxu0 0
    %3880 = vmatprep.subr.bf16.mxu0 0
    %3881 = vmatpush1.bf16.xpose.msra.mxu0 0
    %3882 = vmatprep.subr.bf16.mxu0 0
    %3883 = vmatpush1.bf16.xpose.msra.mxu0 0
    %3884 = vmatprep.subr.bf16.mxu0 0
    %3885 = vmatpush1.bf16.xpose.msra.mxu0 0
    %3886 = vmatprep.mubr.bf16.mxu0 0
    %3887 = vmatmul.mubr.bf16.gmra.mrb[0].mxu0 %v3849
    %v3888 = vpop.f32.mrb[0].mxu0
    %v3889 = vadd.f32 0.0, %v3888
    %v3890 = vpop.f32.mrb[0].mxu0
    %v3891 = vpop.f32.mrb[0].mxu0
    %v3892 = vpop.f32.mrb[0].mxu0
    %3893 = vdwg.mxu0
    %v3895 = vsel %vm1270, %v3012, 0
    %v3898 = vsel %vm1270, %v3291, 0
    %3900 = vmatprep.subr.bf16.mxu0 0
    %3901 = vmatpush1.bf16.xpose.msra.mxu0 %v3898
    %3902 = vmatprep.subr.bf16.mxu0 0
    %3903 = vmatpush1.bf16.xpose.msra.mxu0 0
    %3904 = vmatprep.subr.bf16.mxu0 0
    %3905 = vmatpush1.bf16.xpose.msra.mxu0 0
    %3906 = vmatprep.subr.bf16.mxu0 0
    %3907 = vmatpush1.bf16.xpose.msra.mxu0 0
    %3908 = vmatprep.subr.bf16.mxu0 0
    %3909 = vmatpush1.bf16.xpose.msra.mxu0 0
    %3910 = vmatprep.subr.bf16.mxu0 0
    %3911 = vmatpush1.bf16.xpose.msra.mxu0 0
    %3912 = vmatprep.subr.bf16.mxu0 0
    %3913 = vmatpush1.bf16.xpose.msra.mxu0 0
    %3914 = vmatprep.subr.bf16.mxu0 0
    %3915 = vmatpush1.bf16.xpose.msra.mxu0 0
    %3916 = vmatprep.subr.bf16.mxu0 0
    %3917 = vmatpush1.bf16.xpose.msra.mxu0 0
    %3918 = vmatprep.subr.bf16.mxu0 0
    %3919 = vmatpush1.bf16.xpose.msra.mxu0 0
    %3920 = vmatprep.subr.bf16.mxu0 0
    %3921 = vmatpush1.bf16.xpose.msra.mxu0 0
    %3922 = vmatprep.subr.bf16.mxu0 0
    %3923 = vmatpush1.bf16.xpose.msra.mxu0 0
    %3924 = vmatprep.subr.bf16.mxu0 0
    %3925 = vmatpush1.bf16.xpose.msra.mxu0 0
    %3926 = vmatprep.subr.bf16.mxu0 0
    %3927 = vmatpush1.bf16.xpose.msra.mxu0 0
    %3928 = vmatprep.subr.bf16.mxu0 0
    %3929 = vmatpush1.bf16.xpose.msra.mxu0 0
    %3930 = vmatprep.subr.bf16.mxu0 0
    %3931 = vmatpush1.bf16.xpose.msra.mxu0 0
    %3932 = vmatprep.mubr.bf16.mxu0 0
    %3933 = vmatmul.mubr.bf16.gmra.mrb[0].mxu0 %v3895
    %v3934 = vpop.f32.mrb[0].mxu0
    %v3935 = vadd.f32 0.0, %v3934
    %v3936 = vpop.f32.mrb[0].mxu0
    %v3937 = vpop.f32.mrb[0].mxu0
    %v3938 = vpop.f32.mrb[0].mxu0
    %3939 = vdwg.mxu0
    %v3940 = vsel %vm1270, %v3613, -inf
    %3941 = vmax.xlane.f32.xlu0 %v3940
    %v3942 = vpop.xlane.xlu0 %3941
    %v3943 = vsel %vm1270, %v3659, -inf
    %3944 = vmax.xlane.f32.xlu0 %v3943
    %v3945 = vpop.xlane.xlu0 %3944
    %v3946 = vsel %vm1270, %v3705, -inf
    %3947 = vmax.xlane.f32.xlu0 %v3946
    %v3948 = vpop.xlane.xlu0 %3947
    %v3949 = vsel %vm1270, %v3751, -inf
    %3950 = vmax.xlane.f32.xlu0 %v3949
    %v3951 = vpop.xlane.xlu0 %3950
    %v3952 = vsel %vm1270, %v3797, -inf
    %3953 = vmax.xlane.f32.xlu0 %v3952
    %v3954 = vpop.xlane.xlu0 %3953
    %v3955 = vsel %vm1270, %v3843, -inf
    %3956 = vmax.xlane.f32.xlu0 %v3955
    %v3957 = vpop.xlane.xlu0 %3956
    %v3958 = vsel %vm1270, %v3889, -inf
    %3959 = vmax.xlane.f32.xlu0 %v3958
    %v3960 = vpop.xlane.xlu0 %3959
    %v3961 = vsel %vm1270, %v3935, -inf
    %3962 = vmax.xlane.f32.xlu0 %v3961
    %v3963 = vpop.xlane.xlu0 %3962
    %v3964 = vsub.f32 -inf, %v3942
    %v3965 = vsub.f32 -inf, %v3945
    %v3966 = vsub.f32 -inf, %v3948
    %v3967 = vsub.f32 -inf, %v3951
    %v3968 = vsub.f32 -inf, %v3954
    %v3969 = vsub.f32 -inf, %v3957
    %v3970 = vsub.f32 -inf, %v3960
    %v3971 = vsub.f32 -inf, %v3963
    %v3972 = vmul.f32 %v3964, 1.442695
    %v3973 = vpow.pop %v3972
    %v3974 = vmul.f32 %v3965, 1.442695
    %v3975 = vpow.pop %v3974
    %v3976 = vmul.f32 %v3966, 1.442695
    %v3977 = vpow.pop %v3976
    %v3978 = vmul.f32 %v3967, 1.442695
    %v3979 = vpow.pop %v3978
    %v3980 = vmul.f32 %v3968, 1.442695
    %v3981 = vpow.pop %v3980
    %v3982 = vmul.f32 %v3969, 1.442695
    %v3983 = vpow.pop %v3982
    %v3984 = vmul.f32 %v3970, 1.442695
    %v3985 = vpow.pop %v3984
    %v3986 = vmul.f32 %v3971, 1.442695
    %v3987 = vpow.pop %v3986
    %v3988 = vsub.f32 %v3613, %v3942
    %v3989 = vsub.f32 %v3659, %v3945
    %v3990 = vsub.f32 %v3705, %v3948
    %v3991 = vsub.f32 %v3751, %v3951
    %v3992 = vsub.f32 %v3797, %v3954
    %v3993 = vsub.f32 %v3843, %v3957
    %v3994 = vsub.f32 %v3889, %v3960
    %v3995 = vsub.f32 %v3935, %v3963
    %v3996 = vmul.f32 %v3988, 1.442695
    %v3997 = vpow.pop %v3996
    %v3998 = vmul.f32 %v3989, 1.442695
    %v3999 = vpow.pop %v3998
    %v4000 = vmul.f32 %v3990, 1.442695
    %v4001 = vpow.pop %v4000
    %v4002 = vmul.f32 %v3991, 1.442695
    %v4003 = vpow.pop %v4002
    %v4004 = vmul.f32 %v3992, 1.442695
    %v4005 = vpow.pop %v4004
    %v4006 = vmul.f32 %v3993, 1.442695
    %v4007 = vpow.pop %v4006
    %v4008 = vmul.f32 %v3994, 1.442695
    %v4009 = vpow.pop %v4008
    %v4010 = vmul.f32 %v3995, 1.442695
    %v4011 = vpow.pop %v4010
    %v4012 = vmul.f32 %v3973, 0.0
    %v4013 = vmul.f32 %v3975, 0.0
    %v4014 = vmul.f32 %v3977, 0.0
    %v4015 = vmul.f32 %v3979, 0.0
    %v4016 = vmul.f32 %v3981, 0.0
    %v4017 = vmul.f32 %v3983, 0.0
    %v4018 = vmul.f32 %v3985, 0.0
    %v4019 = vmul.f32 %v3987, 0.0
    %v4020 = vsel %vm1270, %v3997, 0.0
    %4021 = vadd.xlane.f32.xlu0 %v4020
    %v4022 = vpop.xlane.xlu0 %4021
    %v4023 = vsel %vm1270, %v3999, 0.0
    %4024 = vadd.xlane.f32.xlu0 %v4023
    %v4025 = vpop.xlane.xlu0 %4024
    %v4026 = vsel %vm1270, %v4001, 0.0
    %4027 = vadd.xlane.f32.xlu0 %v4026
    %v4028 = vpop.xlane.xlu0 %4027
    %v4029 = vsel %vm1270, %v4003, 0.0
    %4030 = vadd.xlane.f32.xlu0 %v4029
    %v4031 = vpop.xlane.xlu0 %4030
    %v4032 = vsel %vm1270, %v4005, 0.0
    %4033 = vadd.xlane.f32.xlu0 %v4032
    %v4034 = vpop.xlane.xlu0 %4033
    %v4035 = vsel %vm1270, %v4007, 0.0
    %4036 = vadd.xlane.f32.xlu0 %v4035
    %v4037 = vpop.xlane.xlu0 %4036
    %v4038 = vsel %vm1270, %v4009, 0.0
    %4039 = vadd.xlane.f32.xlu0 %v4038
    %v4040 = vpop.xlane.xlu0 %4039
    %v4041 = vsel %vm1270, %v4011, 0.0
    %4042 = vadd.xlane.f32.xlu0 %v4041
    %v4043 = vpop.xlane.xlu0 %4042
    %v4044 = vadd.f32 %v4012, %v4022
    %v4045 = vadd.f32 %v4013, %v4025
    %v4046 = vadd.f32 %v4014, %v4028
    %v4047 = vadd.f32 %v4015, %v4031
    %v4048 = vadd.f32 %v4016, %v4034
    %v4049 = vadd.f32 %v4017, %v4037
    %v4050 = vadd.f32 %v4018, %v4040
    %v4051 = vadd.f32 %v4019, %v4043
    %v4052 = vpack.c.bf16 %v3997, %v3997
    %v4053 = vpack.c.bf16 %v3999, %v3999
    %v4054 = vpack.c.bf16 %v4001, %v4001
    %v4055 = vpack.c.bf16 %v4003, %v4003
    %v4056 = vpack.c.bf16 %v4005, %v4005
    %v4057 = vpack.c.bf16 %v4007, %v4007
    %v4058 = vpack.c.bf16 %v4009, %v4009
    %v4059 = vpack.c.bf16 %v4011, %v4011
    %v4061 = vsel %vm1270, %v4052, 0
    %v4064 = vsel %vm1762, %v3550, 0
    %4066 = vmatprep.subr.bf16.mxu0 0
    %4067 = vmatpush1.bf16.msra.mxu0 %v4064
    %4068 = vmatprep.subr.bf16.mxu0 0
    %4069 = vmatpush1.bf16.msra.mxu0 0
    %4070 = vmatprep.subr.bf16.mxu0 0
    %4071 = vmatpush1.bf16.msra.mxu0 0
    %4072 = vmatprep.subr.bf16.mxu0 0
    %4073 = vmatpush1.bf16.msra.mxu0 0
    %4074 = vmatprep.subr.bf16.mxu0 0
    %4075 = vmatpush1.bf16.msra.mxu0 0
    %4076 = vmatprep.subr.bf16.mxu0 0
    %4077 = vmatpush1.bf16.msra.mxu0 0
    %4078 = vmatprep.subr.bf16.mxu0 0
    %4079 = vmatpush1.bf16.msra.mxu0 0
    %4080 = vmatprep.subr.bf16.mxu0 0
    %4081 = vmatpush1.bf16.msra.mxu0 0
    %4082 = vmatprep.subr.bf16.mxu0 0
    %4083 = vmatpush1.bf16.msra.mxu0 0
    %4084 = vmatprep.subr.bf16.mxu0 0
    %4085 = vmatpush1.bf16.msra.mxu0 0
    %4086 = vmatprep.subr.bf16.mxu0 0
    %4087 = vmatpush1.bf16.msra.mxu0 0
    %4088 = vmatprep.subr.bf16.mxu0 0
    %4089 = vmatpush1.bf16.msra.mxu0 0
    %4090 = vmatprep.subr.bf16.mxu0 0
    %4091 = vmatpush1.bf16.msra.mxu0 0
    %4092 = vmatprep.subr.bf16.mxu0 0
    %4093 = vmatpush1.bf16.msra.mxu0 0
    %4094 = vmatprep.subr.bf16.mxu0 0
    %4095 = vmatpush1.bf16.msra.mxu0 0
    %4096 = vmatprep.subr.bf16.mxu0 0
    %4097 = vmatpush1.bf16.msra.mxu0 0
    %4098 = vmatprep.mubr.bf16.mxu0 0
    %4099 = vmatmul.mubr.bf16.gmra.mrb[0].mxu0 %v4061
    %v4100 = vpop.f32.mrb[0].mxu0
    %v4101 = vadd.f32 0.0, %v4100
    %v4102 = vpop.f32.mrb[0].mxu0
    %v4103 = vpop.f32.mrb[0].mxu0
    %v4104 = vpop.f32.mrb[0].mxu0
    %4105 = vdwg.mxu0
    %v4107 = vsel %vm1270, %v4053, 0
    %v4110 = vsel %vm1762, %v3553, 0
    %4112 = vmatprep.subr.bf16.mxu0 0
    %4113 = vmatpush1.bf16.msra.mxu0 %v4110
    %4114 = vmatprep.subr.bf16.mxu0 0
    %4115 = vmatpush1.bf16.msra.mxu0 0
    %4116 = vmatprep.subr.bf16.mxu0 0
    %4117 = vmatpush1.bf16.msra.mxu0 0
    %4118 = vmatprep.subr.bf16.mxu0 0
    %4119 = vmatpush1.bf16.msra.mxu0 0
    %4120 = vmatprep.subr.bf16.mxu0 0
    %4121 = vmatpush1.bf16.msra.mxu0 0
    %4122 = vmatprep.subr.bf16.mxu0 0
    %4123 = vmatpush1.bf16.msra.mxu0 0
    %4124 = vmatprep.subr.bf16.mxu0 0
    %4125 = vmatpush1.bf16.msra.mxu0 0
    %4126 = vmatprep.subr.bf16.mxu0 0
    %4127 = vmatpush1.bf16.msra.mxu0 0
    %4128 = vmatprep.subr.bf16.mxu0 0
    %4129 = vmatpush1.bf16.msra.mxu0 0
    %4130 = vmatprep.subr.bf16.mxu0 0
    %4131 = vmatpush1.bf16.msra.mxu0 0
    %4132 = vmatprep.subr.bf16.mxu0 0
    %4133 = vmatpush1.bf16.msra.mxu0 0
    %4134 = vmatprep.subr.bf16.mxu0 0
    %4135 = vmatpush1.bf16.msra.mxu0 0
    %4136 = vmatprep.subr.bf16.mxu0 0
    %4137 = vmatpush1.bf16.msra.mxu0 0
    %4138 = vmatprep.subr.bf16.mxu0 0
    %4139 = vmatpush1.bf16.msra.mxu0 0
    %4140 = vmatprep.subr.bf16.mxu0 0
    %4141 = vmatpush1.bf16.msra.mxu0 0
    %4142 = vmatprep.subr.bf16.mxu0 0
    %4143 = vmatpush1.bf16.msra.mxu0 0
    %4144 = vmatprep.mubr.bf16.mxu0 0
    %4145 = vmatmul.mubr.bf16.gmra.mrb[0].mxu0 %v4107
    %v4146 = vpop.f32.mrb[0].mxu0
    %v4147 = vadd.f32 0.0, %v4146
    %v4148 = vpop.f32.mrb[0].mxu0
    %v4149 = vpop.f32.mrb[0].mxu0
    %v4150 = vpop.f32.mrb[0].mxu0
    %4151 = vdwg.mxu0
    %v4153 = vsel %vm1270, %v4054, 0
    %v4156 = vsel %vm1762, %v3556, 0
    %4158 = vmatprep.subr.bf16.mxu0 0
    %4159 = vmatpush1.bf16.msra.mxu0 %v4156
    %4160 = vmatprep.subr.bf16.mxu0 0
    %4161 = vmatpush1.bf16.msra.mxu0 0
    %4162 = vmatprep.subr.bf16.mxu0 0
    %4163 = vmatpush1.bf16.msra.mxu0 0
    %4164 = vmatprep.subr.bf16.mxu0 0
    %4165 = vmatpush1.bf16.msra.mxu0 0
    %4166 = vmatprep.subr.bf16.mxu0 0
    %4167 = vmatpush1.bf16.msra.mxu0 0
    %4168 = vmatprep.subr.bf16.mxu0 0
    %4169 = vmatpush1.bf16.msra.mxu0 0
    %4170 = vmatprep.subr.bf16.mxu0 0
    %4171 = vmatpush1.bf16.msra.mxu0 0
    %4172 = vmatprep.subr.bf16.mxu0 0
    %4173 = vmatpush1.bf16.msra.mxu0 0
    %4174 = vmatprep.subr.bf16.mxu0 0
    %4175 = vmatpush1.bf16.msra.mxu0 0
    %4176 = vmatprep.subr.bf16.mxu0 0
    %4177 = vmatpush1.bf16.msra.mxu0 0
    %4178 = vmatprep.subr.bf16.mxu0 0
    %4179 = vmatpush1.bf16.msra.mxu0 0
    %4180 = vmatprep.subr.bf16.mxu0 0
    %4181 = vmatpush1.bf16.msra.mxu0 0
    %4182 = vmatprep.subr.bf16.mxu0 0
    %4183 = vmatpush1.bf16.msra.mxu0 0
    %4184 = vmatprep.subr.bf16.mxu0 0
    %4185 = vmatpush1.bf16.msra.mxu0 0
    %4186 = vmatprep.subr.bf16.mxu0 0
    %4187 = vmatpush1.bf16.msra.mxu0 0
    %4188 = vmatprep.subr.bf16.mxu0 0
    %4189 = vmatpush1.bf16.msra.mxu0 0
    %4190 = vmatprep.mubr.bf16.mxu0 0
    %4191 = vmatmul.mubr.bf16.gmra.mrb[0].mxu0 %v4153
    %v4192 = vpop.f32.mrb[0].mxu0
    %v4193 = vadd.f32 0.0, %v4192
    %v4194 = vpop.f32.mrb[0].mxu0
    %v4195 = vpop.f32.mrb[0].mxu0
    %v4196 = vpop.f32.mrb[0].mxu0
    %4197 = vdwg.mxu0
    %v4199 = vsel %vm1270, %v4055, 0
    %v4202 = vsel %vm1762, %v3559, 0
    %4204 = vmatprep.subr.bf16.mxu0 0
    %4205 = vmatpush1.bf16.msra.mxu0 %v4202
    %4206 = vmatprep.subr.bf16.mxu0 0
    %4207 = vmatpush1.bf16.msra.mxu0 0
    %4208 = vmatprep.subr.bf16.mxu0 0
    %4209 = vmatpush1.bf16.msra.mxu0 0
    %4210 = vmatprep.subr.bf16.mxu0 0
    %4211 = vmatpush1.bf16.msra.mxu0 0
    %4212 = vmatprep.subr.bf16.mxu0 0
    %4213 = vmatpush1.bf16.msra.mxu0 0
    %4214 = vmatprep.subr.bf16.mxu0 0
    %4215 = vmatpush1.bf16.msra.mxu0 0
    %4216 = vmatprep.subr.bf16.mxu0 0
    %4217 = vmatpush1.bf16.msra.mxu0 0
    %4218 = vmatprep.subr.bf16.mxu0 0
    %4219 = vmatpush1.bf16.msra.mxu0 0
    %4220 = vmatprep.subr.bf16.mxu0 0
    %4221 = vmatpush1.bf16.msra.mxu0 0
    %4222 = vmatprep.subr.bf16.mxu0 0
    %4223 = vmatpush1.bf16.msra.mxu0 0
    %4224 = vmatprep.subr.bf16.mxu0 0
    %4225 = vmatpush1.bf16.msra.mxu0 0
    %4226 = vmatprep.subr.bf16.mxu0 0
    %4227 = vmatpush1.bf16.msra.mxu0 0
    %4228 = vmatprep.subr.bf16.mxu0 0
    %4229 = vmatpush1.bf16.msra.mxu0 0
    %4230 = vmatprep.subr.bf16.mxu0 0
    %4231 = vmatpush1.bf16.msra.mxu0 0
    %4232 = vmatprep.subr.bf16.mxu0 0
    %4233 = vmatpush1.bf16.msra.mxu0 0
    %4234 = vmatprep.subr.bf16.mxu0 0
    %4235 = vmatpush1.bf16.msra.mxu0 0
    %4236 = vmatprep.mubr.bf16.mxu0 0
    %4237 = vmatmul.mubr.bf16.gmra.mrb[0].mxu0 %v4199
    %v4238 = vpop.f32.mrb[0].mxu0
    %v4239 = vadd.f32 0.0, %v4238
    %v4240 = vpop.f32.mrb[0].mxu0
    %v4241 = vpop.f32.mrb[0].mxu0
    %v4242 = vpop.f32.mrb[0].mxu0
    %4243 = vdwg.mxu0
    %v4245 = vsel %vm1270, %v4056, 0
    %v4248 = vsel %vm1762, %v3562, 0
    %4250 = vmatprep.subr.bf16.mxu0 0
    %4251 = vmatpush1.bf16.msra.mxu0 %v4248
    %4252 = vmatprep.subr.bf16.mxu0 0
    %4253 = vmatpush1.bf16.msra.mxu0 0
    %4254 = vmatprep.subr.bf16.mxu0 0
    %4255 = vmatpush1.bf16.msra.mxu0 0
    %4256 = vmatprep.subr.bf16.mxu0 0
    %4257 = vmatpush1.bf16.msra.mxu0 0
    %4258 = vmatprep.subr.bf16.mxu0 0
    %4259 = vmatpush1.bf16.msra.mxu0 0
    %4260 = vmatprep.subr.bf16.mxu0 0
    %4261 = vmatpush1.bf16.msra.mxu0 0
    %4262 = vmatprep.subr.bf16.mxu0 0
    %4263 = vmatpush1.bf16.msra.mxu0 0
    %4264 = vmatprep.subr.bf16.mxu0 0
    %4265 = vmatpush1.bf16.msra.mxu0 0
    %4266 = vmatprep.subr.bf16.mxu0 0
    %4267 = vmatpush1.bf16.msra.mxu0 0
    %4268 = vmatprep.subr.bf16.mxu0 0
    %4269 = vmatpush1.bf16.msra.mxu0 0
    %4270 = vmatprep.subr.bf16.mxu0 0
    %4271 = vmatpush1.bf16.msra.mxu0 0
    %4272 = vmatprep.subr.bf16.mxu0 0
    %4273 = vmatpush1.bf16.msra.mxu0 0
    %4274 = vmatprep.subr.bf16.mxu0 0
    %4275 = vmatpush1.bf16.msra.mxu0 0
    %4276 = vmatprep.subr.bf16.mxu0 0
    %4277 = vmatpush1.bf16.msra.mxu0 0
    %4278 = vmatprep.subr.bf16.mxu0 0
    %4279 = vmatpush1.bf16.msra.mxu0 0
    %4280 = vmatprep.subr.bf16.mxu0 0
    %4281 = vmatpush1.bf16.msra.mxu0 0
    %4282 = vmatprep.mubr.bf16.mxu0 0
    %4283 = vmatmul.mubr.bf16.gmra.mrb[0].mxu0 %v4245
    %v4284 = vpop.f32.mrb[0].mxu0
    %v4285 = vadd.f32 0.0, %v4284
    %v4286 = vpop.f32.mrb[0].mxu0
    %v4287 = vpop.f32.mrb[0].mxu0
    %v4288 = vpop.f32.mrb[0].mxu0
    %4289 = vdwg.mxu0
    %v4291 = vsel %vm1270, %v4057, 0
    %v4294 = vsel %vm1762, %v3565, 0
    %4296 = vmatprep.subr.bf16.mxu0 0
    %4297 = vmatpush1.bf16.msra.mxu0 %v4294
    %4298 = vmatprep.subr.bf16.mxu0 0
    %4299 = vmatpush1.bf16.msra.mxu0 0
    %4300 = vmatprep.subr.bf16.mxu0 0
    %4301 = vmatpush1.bf16.msra.mxu0 0
    %4302 = vmatprep.subr.bf16.mxu0 0
    %4303 = vmatpush1.bf16.msra.mxu0 0
    %4304 = vmatprep.subr.bf16.mxu0 0
    %4305 = vmatpush1.bf16.msra.mxu0 0
    %4306 = vmatprep.subr.bf16.mxu0 0
    %4307 = vmatpush1.bf16.msra.mxu0 0
    %4308 = vmatprep.subr.bf16.mxu0 0
    %4309 = vmatpush1.bf16.msra.mxu0 0
    %4310 = vmatprep.subr.bf16.mxu0 0
    %4311 = vmatpush1.bf16.msra.mxu0 0
    %4312 = vmatprep.subr.bf16.mxu0 0
    %4313 = vmatpush1.bf16.msra.mxu0 0
    %4314 = vmatprep.subr.bf16.mxu0 0
    %4315 = vmatpush1.bf16.msra.mxu0 0
    %4316 = vmatprep.subr.bf16.mxu0 0
    %4317 = vmatpush1.bf16.msra.mxu0 0
    %4318 = vmatprep.subr.bf16.mxu0 0
    %4319 = vmatpush1.bf16.msra.mxu0 0
    %4320 = vmatprep.subr.bf16.mxu0 0
    %4321 = vmatpush1.bf16.msra.mxu0 0
    %4322 = vmatprep.subr.bf16.mxu0 0
    %4323 = vmatpush1.bf16.msra.mxu0 0
    %4324 = vmatprep.subr.bf16.mxu0 0
    %4325 = vmatpush1.bf16.msra.mxu0 0
    %4326 = vmatprep.subr.bf16.mxu0 0
    %4327 = vmatpush1.bf16.msra.mxu0 0
    %4328 = vmatprep.mubr.bf16.mxu0 0
    %4329 = vmatmul.mubr.bf16.gmra.mrb[0].mxu0 %v4291
    %v4330 = vpop.f32.mrb[0].mxu0
    %v4331 = vadd.f32 0.0, %v4330
    %v4332 = vpop.f32.mrb[0].mxu0
    %v4333 = vpop.f32.mrb[0].mxu0
    %v4334 = vpop.f32.mrb[0].mxu0
    %4335 = vdwg.mxu0
    %v4337 = vsel %vm1270, %v4058, 0
    %v4340 = vsel %vm1762, %v3568, 0
    %4342 = vmatprep.subr.bf16.mxu0 0
    %4343 = vmatpush1.bf16.msra.mxu0 %v4340
    %4344 = vmatprep.subr.bf16.mxu0 0
    %4345 = vmatpush1.bf16.msra.mxu0 0
    %4346 = vmatprep.subr.bf16.mxu0 0
    %4347 = vmatpush1.bf16.msra.mxu0 0
    %4348 = vmatprep.subr.bf16.mxu0 0
    %4349 = vmatpush1.bf16.msra.mxu0 0
    %4350 = vmatprep.subr.bf16.mxu0 0
    %4351 = vmatpush1.bf16.msra.mxu0 0
    %4352 = vmatprep.subr.bf16.mxu0 0
    %4353 = vmatpush1.bf16.msra.mxu0 0
    %4354 = vmatprep.subr.bf16.mxu0 0
    %4355 = vmatpush1.bf16.msra.mxu0 0
    %4356 = vmatprep.subr.bf16.mxu0 0
    %4357 = vmatpush1.bf16.msra.mxu0 0
    %4358 = vmatprep.subr.bf16.mxu0 0
    %4359 = vmatpush1.bf16.msra.mxu0 0
    %4360 = vmatprep.subr.bf16.mxu0 0
    %4361 = vmatpush1.bf16.msra.mxu0 0
    %4362 = vmatprep.subr.bf16.mxu0 0
    %4363 = vmatpush1.bf16.msra.mxu0 0
    %4364 = vmatprep.subr.bf16.mxu0 0
    %4365 = vmatpush1.bf16.msra.mxu0 0
    %4366 = vmatprep.subr.bf16.mxu0 0
    %4367 = vmatpush1.bf16.msra.mxu0 0
    %4368 = vmatprep.subr.bf16.mxu0 0
    %4369 = vmatpush1.bf16.msra.mxu0 0
    %4370 = vmatprep.subr.bf16.mxu0 0
    %4371 = vmatpush1.bf16.msra.mxu0 0
    %4372 = vmatprep.subr.bf16.mxu0 0
    %4373 = vmatpush1.bf16.msra.mxu0 0
    %4374 = vmatprep.mubr.bf16.mxu0 0
    %4375 = vmatmul.mubr.bf16.gmra.mrb[0].mxu0 %v4337
    %v4376 = vpop.f32.mrb[0].mxu0
    %v4377 = vadd.f32 0.0, %v4376
    %v4378 = vpop.f32.mrb[0].mxu0
    %v4379 = vpop.f32.mrb[0].mxu0
    %v4380 = vpop.f32.mrb[0].mxu0
    %4381 = vdwg.mxu0
    %v4383 = vsel %vm1270, %v4059, 0
    %v4386 = vsel %vm1762, %v3571, 0
    %4388 = vmatprep.subr.bf16.mxu0 0
    %4389 = vmatpush1.bf16.msra.mxu0 %v4386
    %4390 = vmatprep.subr.bf16.mxu0 0
    %4391 = vmatpush1.bf16.msra.mxu0 0
    %4392 = vmatprep.subr.bf16.mxu0 0
    %4393 = vmatpush1.bf16.msra.mxu0 0
    %4394 = vmatprep.subr.bf16.mxu0 0
    %4395 = vmatpush1.bf16.msra.mxu0 0
    %4396 = vmatprep.subr.bf16.mxu0 0
    %4397 = vmatpush1.bf16.msra.mxu0 0
    %4398 = vmatprep.subr.bf16.mxu0 0
    %4399 = vmatpush1.bf16.msra.mxu0 0
    %4400 = vmatprep.subr.bf16.mxu0 0
    %4401 = vmatpush1.bf16.msra.mxu0 0
    %4402 = vmatprep.subr.bf16.mxu0 0
    %4403 = vmatpush1.bf16.msra.mxu0 0
    %4404 = vmatprep.subr.bf16.mxu0 0
    %4405 = vmatpush1.bf16.msra.mxu0 0
    %4406 = vmatprep.subr.bf16.mxu0 0
    %4407 = vmatpush1.bf16.msra.mxu0 0
    %4408 = vmatprep.subr.bf16.mxu0 0
    %4409 = vmatpush1.bf16.msra.mxu0 0
    %4410 = vmatprep.subr.bf16.mxu0 0
    %4411 = vmatpush1.bf16.msra.mxu0 0
    %4412 = vmatprep.subr.bf16.mxu0 0
    %4413 = vmatpush1.bf16.msra.mxu0 0
    %4414 = vmatprep.subr.bf16.mxu0 0
    %4415 = vmatpush1.bf16.msra.mxu0 0
    %4416 = vmatprep.subr.bf16.mxu0 0
    %4417 = vmatpush1.bf16.msra.mxu0 0
    %4418 = vmatprep.subr.bf16.mxu0 0
    %4419 = vmatpush1.bf16.msra.mxu0 0
    %4420 = vmatprep.mubr.bf16.mxu0 0
    %4421 = vmatmul.mubr.bf16.gmra.mrb[0].mxu0 %v4383
    %v4422 = vpop.f32.mrb[0].mxu0
    %v4423 = vadd.f32 0.0, %v4422
    %v4424 = vpop.f32.mrb[0].mxu0
    %v4425 = vpop.f32.mrb[0].mxu0
    %v4426 = vpop.f32.mrb[0].mxu0
    %4427 = vdwg.mxu0
    %v4428 = vadd.f32 %v4012, %v4101
    %v4429 = vadd.f32 %v4013, %v4147
    %v4430 = vadd.f32 %v4014, %v4193
    %v4431 = vadd.f32 %v4015, %v4239
    %v4432 = vadd.f32 %v4016, %v4285
    %v4433 = vadd.f32 %v4017, %v4331
    %v4434 = vadd.f32 %v4018, %v4377
    %v4435 = vadd.f32 %v4019, %v4423
    %v4436 = vrcp.pop %v4044
    %v4437 = vrcp.pop %v4045
    %v4438 = vrcp.pop %v4046
    %v4439 = vrcp.pop %v4047
    %v4440 = vrcp.pop %v4048
    %v4441 = vrcp.pop %v4049
    %v4442 = vrcp.pop %v4050
    %v4443 = vrcp.pop %v4051
    %v4444 = vmul.f32 %v4428, %v4436
    %v4445 = vmul.f32 %v4429, %v4437
    %v4446 = vmul.f32 %v4430, %v4438
    %v4447 = vmul.f32 %v4431, %v4439
    %v4448 = vmul.f32 %v4432, %v4440
    %v4449 = vmul.f32 %v4433, %v4441
    %v4450 = vmul.f32 %v4434, %v4442
    %v4451 = vmul.f32 %v4435, %v4443
    %v4452 = vpack.c.bf16 %v4444, %v4444
    %v4454 = vunpack.c.l.s4 1983009808
    %v4455 = vunpack.c.0.s8 %v4454
    %v4456 = vlaneseq
    %v4457 = vshrl.u32 %v4456, 7
    %v4458 = vsub.s32 %v4455, %v4457
    %v4459 = vrot.slane %v4452, %v4458
    %v4460 = vpack.c.bf16 %v4446, %v4446
    %v4462 = vunpack.c.l.s4 1983009808
    %v4463 = vunpack.c.0.s8 %v4462
    %v4464 = vlaneseq
    %v4465 = vshrl.u32 %v4464, 7
    %v4466 = vsub.s32 %v4463, %v4465
    %v4467 = vrot.slane %v4460, %v4466
    %v4468 = vcombine.low %v4459, %v4467
    %v4469 = vcombine.high %v4459, %v4467
    %v4471 = vunpack.c.l.s4 1934713408
    %v4472 = vunpack.c.0.s8 %v4471
    %v4473 = vlaneseq
    %v4474 = vshrl.u32 %v4473, 7
    %v4475 = vsub.s32 %v4472, %v4474
    %v4476 = vrot.slane %v4468, %v4475
    %v4478 = vunpack.c.l.s4 1934713408
    %v4479 = vunpack.c.0.s8 %v4478
    %v4480 = vlaneseq
    %v4481 = vshrl.u32 %v4480, 7
    %v4482 = vsub.s32 %v4479, %v4481
    %v4483 = vrot.slane %v4469, %v4482
    %v4484 = vcombine.high %v4476, 0
    %v4485 = vcombine.high %v4483, 0
    %v4486 = vpack.c.bf16 %v4445, %v4445
    %v4488 = vunpack.c.l.s4 1983009808
    %v4489 = vunpack.c.0.s8 %v4488
    %v4490 = vlaneseq
    %v4491 = vshrl.u32 %v4490, 7
    %v4492 = vsub.s32 %v4489, %v4491
    %v4493 = vrot.slane %v4486, %v4492
    %v4494 = vpack.c.bf16 %v4447, %v4447
    %v4496 = vunpack.c.l.s4 1983009808
    %v4497 = vunpack.c.0.s8 %v4496
    %v4498 = vlaneseq
    %v4499 = vshrl.u32 %v4498, 7
    %v4500 = vsub.s32 %v4497, %v4499
    %v4501 = vrot.slane %v4494, %v4500
    %v4502 = vcombine.low %v4493, %v4501
    %v4503 = vcombine.high %v4493, %v4501
    %v4505 = vunpack.c.l.s4 1934713408
    %v4506 = vunpack.c.0.s8 %v4505
    %v4507 = vlaneseq
    %v4508 = vshrl.u32 %v4507, 7
    %v4509 = vsub.s32 %v4506, %v4508
    %v4510 = vrot.slane %v4502, %v4509
    %v4512 = vunpack.c.l.s4 1934713408
    %v4513 = vunpack.c.0.s8 %v4512
    %v4514 = vlaneseq
    %v4515 = vshrl.u32 %v4514, 7
    %v4516 = vsub.s32 %v4513, %v4515
    %v4517 = vrot.slane %v4503, %v4516
    %v4518 = vcombine.high %v4510, 0
    %v4519 = vcombine.high %v4517, 0
    %v4520 = vpack.c.bf16 %v4448, %v4448
    %v4522 = vunpack.c.l.s4 1983009808
    %v4523 = vunpack.c.0.s8 %v4522
    %v4524 = vlaneseq
    %v4525 = vshrl.u32 %v4524, 7
    %v4526 = vsub.s32 %v4523, %v4525
    %v4527 = vrot.slane %v4520, %v4526
    %v4528 = vpack.c.bf16 %v4450, %v4450
    %v4530 = vunpack.c.l.s4 1983009808
    %v4531 = vunpack.c.0.s8 %v4530
    %v4532 = vlaneseq
    %v4533 = vshrl.u32 %v4532, 7
    %v4534 = vsub.s32 %v4531, %v4533
    %v4535 = vrot.slane %v4528, %v4534
    %v4536 = vcombine.low %v4527, %v4535
    %v4537 = vcombine.high %v4527, %v4535
    %v4539 = vunpack.c.l.s4 1934713408
    %v4540 = vunpack.c.0.s8 %v4539
    %v4541 = vlaneseq
    %v4542 = vshrl.u32 %v4541, 7
    %v4543 = vsub.s32 %v4540, %v4542
    %v4544 = vrot.slane %v4536, %v4543
    %v4546 = vunpack.c.l.s4 1934713408
    %v4547 = vunpack.c.0.s8 %v4546
    %v4548 = vlaneseq
    %v4549 = vshrl.u32 %v4548, 7
    %v4550 = vsub.s32 %v4547, %v4549
    %v4551 = vrot.slane %v4537, %v4550
    %v4552 = vcombine.high %v4544, 0
    %v4553 = vcombine.high %v4551, 0
    %v4554 = vpack.c.bf16 %v4449, %v4449
    %v4556 = vunpack.c.l.s4 1983009808
    %v4557 = vunpack.c.0.s8 %v4556
    %v4558 = vlaneseq
    %v4559 = vshrl.u32 %v4558, 7
    %v4560 = vsub.s32 %v4557, %v4559
    %v4561 = vrot.slane %v4554, %v4560
    %v4562 = vpack.c.bf16 %v4451, %v4451
    %v4564 = vunpack.c.l.s4 1983009808
    %v4565 = vunpack.c.0.s8 %v4564
    %v4566 = vlaneseq
    %v4567 = vshrl.u32 %v4566, 7
    %v4568 = vsub.s32 %v4565, %v4567
    %v4569 = vrot.slane %v4562, %v4568
    %v4570 = vcombine.low %v4561, %v4569
    %v4571 = vcombine.high %v4561, %v4569
    %v4573 = vunpack.c.l.s4 1934713408
    %v4574 = vunpack.c.0.s8 %v4573
    %v4575 = vlaneseq
    %v4576 = vshrl.u32 %v4575, 7
    %v4577 = vsub.s32 %v4574, %v4576
    %v4578 = vrot.slane %v4570, %v4577
    %v4580 = vunpack.c.l.s4 1934713408
    %v4581 = vunpack.c.0.s8 %v4580
    %v4582 = vlaneseq
    %v4583 = vshrl.u32 %v4582, 7
    %v4584 = vsub.s32 %v4581, %v4583
    %v4585 = vrot.slane %v4571, %v4584
    %v4586 = vcombine.high %v4578, 0
    %v4587 = vcombine.high %v4585, 0
    %v4590 = vpack.i.b16 %v4510, %v4476
    %v4592 = vshrl.u32 %v4476, 16
    %v4593 = vshrl.u32 %v4510, 16
    %v4594 = vpack.i.b16 %v4593, %v4592
    %v4598 = vpack.i.b16 %v4518, %v4484
    %v4600 = vshrl.u32 %v4484, 16
    %v4601 = vshrl.u32 %v4518, 16
    %v4602 = vpack.i.b16 %v4601, %v4600
    %v4606 = vpack.i.b16 %v4517, %v4483
    %v4608 = vshrl.u32 %v4483, 16
    %v4609 = vshrl.u32 %v4517, 16
    %v4610 = vpack.i.b16 %v4609, %v4608
    %v4614 = vpack.i.b16 %v4519, %v4485
    %v4616 = vshrl.u32 %v4485, 16
    %v4617 = vshrl.u32 %v4519, 16
    %v4618 = vpack.i.b16 %v4617, %v4616
    %v4622 = vpack.i.b16 %v4578, %v4544
    %v4624 = vshrl.u32 %v4544, 16
    %v4625 = vshrl.u32 %v4578, 16
    %v4626 = vpack.i.b16 %v4625, %v4624
    %v4630 = vpack.i.b16 %v4586, %v4552
    %v4632 = vshrl.u32 %v4552, 16
    %v4633 = vshrl.u32 %v4586, 16
    %v4634 = vpack.i.b16 %v4633, %v4632
    %v4638 = vpack.i.b16 %v4585, %v4551
    %v4640 = vshrl.u32 %v4551, 16
    %v4641 = vshrl.u32 %v4585, 16
    %v4642 = vpack.i.b16 %v4641, %v4640
    %v4646 = vpack.i.b16 %v4587, %v4553
    %v4648 = vshrl.u32 %v4553, 16
    %v4649 = vshrl.u32 %v4587, 16
    %v4650 = vpack.i.b16 %v4649, %v4648
    %v4652 = vcombine.low %v4590, %v4606
    %v4654 = vunpack.c.l.s4 1983009808
    %v4655 = vunpack.c.0.s8 %v4654
    %v4656 = vlaneseq
    %v4657 = vshrl.u32 %v4656, 7
    %v4658 = vsub.s32 %v4655, %v4657
    %v4659 = vrot.slane %v4652, %v4658
    %v4660 = vcombine.low %v4598, %v4614
    %v4662 = vunpack.c.l.s4 1983009808
    %v4663 = vunpack.c.0.s8 %v4662
    %v4664 = vlaneseq
    %v4665 = vshrl.u32 %v4664, 7
    %v4666 = vsub.s32 %v4663, %v4665
    %v4667 = vrot.slane %v4660, %v4666
    %v4668 = vcombine.low %v4622, %v4638
    %v4670 = vunpack.c.l.s4 1983009808
    %v4671 = vunpack.c.0.s8 %v4670
    %v4672 = vlaneseq
    %v4673 = vshrl.u32 %v4672, 7
    %v4674 = vsub.s32 %v4671, %v4673
    %v4675 = vrot.slane %v4668, %v4674
    %v4676 = vcombine.low %v4630, %v4646
    %v4678 = vunpack.c.l.s4 1983009808
    %v4679 = vunpack.c.0.s8 %v4678
    %v4680 = vlaneseq
    %v4681 = vshrl.u32 %v4680, 7
    %v4682 = vsub.s32 %v4679, %v4681
    %v4683 = vrot.slane %v4676, %v4682
    %v4684 = vcombine.low %v4659, %v4667
    %v4686 = vunpack.c.l.s4 1934713408
    %v4687 = vunpack.c.0.s8 %v4686
    %v4688 = vlaneseq
    %v4689 = vshrl.u32 %v4688, 7
    %v4690 = vsub.s32 %v4687, %v4689
    %v4691 = vrot.slane %v4684, %v4690
    %v4692 = vcombine.low %v4675, %v4683
    %v4694 = vunpack.c.l.s4 1934713408
    %v4695 = vunpack.c.0.s8 %v4694
    %v4696 = vlaneseq
    %v4697 = vshrl.u32 %v4696, 7
    %v4698 = vsub.s32 %v4695, %v4697
    %v4699 = vrot.slane %v4692, %v4698
    %v4700 = vcombine.low %v4691, %v4699
    %v4701 = vcombine.high %v4691, %v4699
    %v4702 = vcombine.low %v4594, %v4610
    %v4704 = vunpack.c.l.s4 1983009808
    %v4705 = vunpack.c.0.s8 %v4704
    %v4706 = vlaneseq
    %v4707 = vshrl.u32 %v4706, 7
    %v4708 = vsub.s32 %v4705, %v4707
    %v4709 = vrot.slane %v4702, %v4708
    %v4710 = vcombine.low %v4602, %v4618
    %v4712 = vunpack.c.l.s4 1983009808
    %v4713 = vunpack.c.0.s8 %v4712
    %v4714 = vlaneseq
    %v4715 = vshrl.u32 %v4714, 7
    %v4716 = vsub.s32 %v4713, %v4715
    %v4717 = vrot.slane %v4710, %v4716
    %v4718 = vcombine.low %v4626, %v4642
    %v4720 = vunpack.c.l.s4 1983009808
    %v4721 = vunpack.c.0.s8 %v4720
    %v4722 = vlaneseq
    %v4723 = vshrl.u32 %v4722, 7
    %v4724 = vsub.s32 %v4721, %v4723
    %v4725 = vrot.slane %v4718, %v4724
    %v4726 = vcombine.low %v4634, %v4650
    %v4728 = vunpack.c.l.s4 1983009808
    %v4729 = vunpack.c.0.s8 %v4728
    %v4730 = vlaneseq
    %v4731 = vshrl.u32 %v4730, 7
    %v4732 = vsub.s32 %v4729, %v4731
    %v4733 = vrot.slane %v4726, %v4732
    %v4734 = vcombine.low %v4709, %v4717
    %v4736 = vunpack.c.l.s4 1934713408
    %v4737 = vunpack.c.0.s8 %v4736
    %v4738 = vlaneseq
    %v4739 = vshrl.u32 %v4738, 7
    %v4740 = vsub.s32 %v4737, %v4739
    %v4741 = vrot.slane %v4734, %v4740
    %v4742 = vcombine.low %v4725, %v4733
    %v4744 = vunpack.c.l.s4 1934713408
    %v4745 = vunpack.c.0.s8 %v4744
    %v4746 = vlaneseq
    %v4747 = vshrl.u32 %v4746, 7
    %v4748 = vsub.s32 %v4745, %v4747
    %v4749 = vrot.slane %v4742, %v4748
    %v4750 = vcombine.low %v4741, %v4749
    %v4751 = vcombine.high %v4741, %v4749
    %v4754 = vpack.i.b16 %v4750, %v4700
    %v4755 = vshrl.u32 %v4700, 16
    %v4756 = vshrl.u32 %v4750, 16
    %v4757 = vpack.i.b16 %v4756, %v4755
    %v4760 = vpack.i.b16 %v4751, %v4701
    %v4761 = vshrl.u32 %v4701, 16
    %v4762 = vshrl.u32 %v4751, 16
    %v4763 = vpack.i.b16 %v4762, %v4761
    %4764 = vrot.lane.b32.xlu0 %v4757, 8
    %v4765 = vpop.permute.xlu0 %4764
    %4766 = vrot.lane.b32.xlu0 %v4760, 16
    %v4767 = vpop.permute.xlu0 %4766
    %4768 = vrot.lane.b32.xlu0 %v4763, 24
    %v4769 = vpop.permute.xlu0 %4768
    %v4772 = vsel %vm1270, %v4754, %v4765
    %v4774 = vsel %vm2473, %v4772, %v4767
    %v4776 = vsel %vm2476, %v4774, %v4769
    %v4777 = vld [vmem:[#allocation22] sm:$0xf]
    %v4778 = vld [vmem:[#allocation22 + $0x4] sm:$0xf]
    %v4779 = vld [vmem:[#allocation22 + $0x8] sm:$0xf]
    %v4780 = vld [vmem:[#allocation22 + $0xc] sm:$0xf]
    %v4781 = vld [vmem:[#allocation23] sm:$0x1]
    %v4783 = vlaneseq
    %v4784 = vshrl.u32 %v4783, 7
    %v4785 = vsub.s32 0, %v4784
    %v4786 = vrot.slane %v4781, %v4785
    %v4792 = vunpack.c.l.b16 %v4777
    %v4793 = vunpack.c.l.b16 %v4778
    %v4794 = vunpack.c.l.b16 %v4779
    %v4795 = vunpack.c.l.b16 %v4780
    %v4796 = vpack.c.b16 %v4793, %v4792
    %v4797 = vpack.c.b16 %v4795, %v4794
    %v4800 = vsel %vm373, %v4776, 0
    %4802 = vmatprep.subr.bf16.mxu0 0
    %4803 = vmatpush1.bf16.msra.mxu0 %v4796
    %4804 = vmatprep.subr.bf16.mxu0 0
    %4805 = vmatpush1.bf16.msra.mxu0 %v4797
    %4806 = vmatprep.subr.bf16.mxu0 0
    %4807 = vmatpush1.bf16.msra.mxu0 0
    %4808 = vmatprep.subr.bf16.mxu0 0
    %4809 = vmatpush1.bf16.msra.mxu0 0
    %4810 = vmatprep.subr.bf16.mxu0 0
    %4811 = vmatpush1.bf16.msra.mxu0 0
    %4812 = vmatprep.subr.bf16.mxu0 0
    %4813 = vmatpush1.bf16.msra.mxu0 0
    %4814 = vmatprep.subr.bf16.mxu0 0
    %4815 = vmatpush1.bf16.msra.mxu0 0
    %4816 = vmatprep.subr.bf16.mxu0 0
    %4817 = vmatpush1.bf16.msra.mxu0 0
    %4818 = vmatprep.subr.bf16.mxu0 0
    %4819 = vmatpush1.bf16.msra.mxu0 0
    %4820 = vmatprep.subr.bf16.mxu0 0
    %4821 = vmatpush1.bf16.msra.mxu0 0
    %4822 = vmatprep.subr.bf16.mxu0 0
    %4823 = vmatpush1.bf16.msra.mxu0 0
    %4824 = vmatprep.subr.bf16.mxu0 0
    %4825 = vmatpush1.bf16.msra.mxu0 0
    %4826 = vmatprep.subr.bf16.mxu0 0
    %4827 = vmatpush1.bf16.msra.mxu0 0
    %4828 = vmatprep.subr.bf16.mxu0 0
    %4829 = vmatpush1.bf16.msra.mxu0 0
    %4830 = vmatprep.subr.bf16.mxu0 0
    %4831 = vmatpush1.bf16.msra.mxu0 0
    %4832 = vmatprep.subr.bf16.mxu0 0
    %4833 = vmatpush1.bf16.msra.mxu0 0
    %4834 = vmatprep.mubr.bf16.mxu0 0
    %4835 = vmatmul.mubr.bf16.gmra.mrb[0].mxu0 %v4800
    %v4836 = vpop.f32.mrb[0].mxu0
    %v4837 = vadd.f32 %v4786, %v4836
    %v4838 = vpop.f32.mrb[0].mxu0
    %v4839 = vpop.f32.mrb[0].mxu0
    %v4840 = vadd.f32 %v4786, %v4839
    %v4841 = vpop.f32.mrb[0].mxu0
    %4842 = vdwg.mxu0
    %v4843 = vadd.f32 %v2590, %v4837
    %v4844 = vadd.f32 %v2591, %v4840
    %v4845 = vld [vmem:[#allocation25] sm:$0x1]
    %v4846 = vld [vmem:[#allocation26] sm:$0x1]
    %v4847 = vsel %vm373, %v4843, 0.0
    %4848 = vadd.xlane.f32.xlu0 %v4847
    %v4849 = vpop.xlane.xlu0 %4848
    %v4850 = vsel %vm373, %v4844, 0.0
    %4851 = vadd.xlane.f32.xlu0 %v4850
    %v4852 = vpop.xlane.xlu0 %4851
    %v4853 = vmul.f32 %v4849, %v2555
    %v4854 = vmul.f32 %v4852, %v2555
    %v4855 = vsub.f32 %v4843, %v4853
    %v4856 = vsub.f32 %v4844, %v4854
    %v4857 = vmul.f32 %v4855, %v4855
    %v4858 = vmul.f32 %v4856, %v4856
    %v4859 = vsel %vm373, %v4857, 0.0
    %4860 = vadd.xlane.f32.xlu0 %v4859
    %v4861 = vpop.xlane.xlu0 %4860
    %v4862 = vsel %vm373, %v4858, 0.0
    %4863 = vadd.xlane.f32.xlu0 %v4862
    %v4864 = vpop.xlane.xlu0 %4863
    %v4865 = vmul.f32 %v4861, %v2555
    %v4866 = vmul.f32 %v4864, %v2555
    %v4867 = vadd.f32 %v4865, 1e-05
    %v4868 = vadd.f32 %v4866, 1e-05
    %v4869 = vrsqrt.pop %v4867
    %v4870 = vrsqrt.pop %v4868
    %v4871 = vmul.f32 %v4855, %v4869
    %v4872 = vmul.f32 %v4856, %v4870
    %v4874 = vlaneseq
    %v4875 = vshrl.u32 %v4874, 7
    %v4876 = vsub.s32 0, %v4875
    %v4877 = vrot.slane %v4845, %v4876
    %v4879 = vmul.f32 %v4871, %v4877
    %v4880 = vmul.f32 %v4872, %v4877
    %v4882 = vlaneseq
    %v4883 = vshrl.u32 %v4882, 7
    %v4884 = vsub.s32 0, %v4883
    %v4885 = vrot.slane %v4846, %v4884
    %v4887 = vadd.f32 %v4879, %v4885
    %v4888 = vadd.f32 %v4880, %v4885
    %v4889 = vpack.c.bf16 %v4888, %v4887
    %v4890 = vld [vmem:[#allocation28] sm:$0xf]
    %v4891 = vld [vmem:[#allocation28 + $0x4] sm:$0xf]
    %v4892 = vld [vmem:[#allocation28 + $0x8] sm:$0xf]
    %v4893 = vld [vmem:[#allocation28 + $0xc] sm:$0xf]
    %v4894 = vld [vmem:[#allocation29] sm:$0x1]
    %v4896 = vlaneseq
    %v4897 = vshrl.u32 %v4896, 7
    %v4898 = vsub.s32 0, %v4897
    %v4899 = vrot.slane %v4894, %v4898
    %v4905 = vunpack.c.l.b16 %v4890
    %v4906 = vunpack.c.l.b16 %v4891
    %v4907 = vunpack.c.l.b16 %v4892
    %v4908 = vunpack.c.l.b16 %v4893
    %v4909 = vpack.c.b16 %v4906, %v4905
    %v4910 = vpack.c.b16 %v4908, %v4907
    %v4914 = vsel %vm373, %v4889, 0
    %4916 = vmatprep.subr.bf16.mxu0 0
    %4917 = vmatpush1.bf16.msra.mxu0 %v4909
    %4918 = vmatprep.subr.bf16.mxu0 0
    %4919 = vmatpush1.bf16.msra.mxu0 %v4910
    %4920 = vmatprep.subr.bf16.mxu0 0
    %4921 = vmatpush1.bf16.msra.mxu0 0
    %4922 = vmatprep.subr.bf16.mxu0 0
    %4923 = vmatpush1.bf16.msra.mxu0 0
    %4924 = vmatprep.subr.bf16.mxu0 0
    %4925 = vmatpush1.bf16.msra.mxu0 0
    %4926 = vmatprep.subr.bf16.mxu0 0
    %4927 = vmatpush1.bf16.msra.mxu0 0
    %4928 = vmatprep.subr.bf16.mxu0 0
    %4929 = vmatpush1.bf16.msra.mxu0 0
    %4930 = vmatprep.subr.bf16.mxu0 0
    %4931 = vmatpush1.bf16.msra.mxu0 0
    %4932 = vmatprep.subr.bf16.mxu0 0
    %4933 = vmatpush1.bf16.msra.mxu0 0
    %4934 = vmatprep.subr.bf16.mxu0 0
    %4935 = vmatpush1.bf16.msra.mxu0 0
    %4936 = vmatprep.subr.bf16.mxu0 0
    %4937 = vmatpush1.bf16.msra.mxu0 0
    %4938 = vmatprep.subr.bf16.mxu0 0
    %4939 = vmatpush1.bf16.msra.mxu0 0
    %4940 = vmatprep.subr.bf16.mxu0 0
    %4941 = vmatpush1.bf16.msra.mxu0 0
    %4942 = vmatprep.subr.bf16.mxu0 0
    %4943 = vmatpush1.bf16.msra.mxu0 0
    %4944 = vmatprep.subr.bf16.mxu0 0
    %4945 = vmatpush1.bf16.msra.mxu0 0
    %4946 = vmatprep.subr.bf16.mxu0 0
    %4947 = vmatpush1.bf16.msra.mxu0 0
    %4948 = vmatprep.mubr.bf16.mxu0 0
    %4949 = vmatmul.mubr.bf16.gmra.mrb[0].mxu0 %v4914
    %v4950 = vpop.f32.mrb[0].mxu0
    %v4951 = vadd.f32 %v4899, %v4950
    %v4952 = vpop.f32.mrb[0].mxu0
    %v4953 = vpop.f32.mrb[0].mxu0
    %v4954 = vadd.f32 %v4899, %v4953
    %v4955 = vpop.f32.mrb[0].mxu0
    %4956 = vdwg.mxu0
    %v4957 = vmax.f32 %v4951, 0.0
    %v4958 = vmax.f32 %v4954, 0.0
    %v4959 = vpack.c.bf16 %v4958, %v4957
    %v4960 = vld [vmem:[#allocation31] sm:$0xf]
    %v4961 = vld [vmem:[#allocation31 + $0x4] sm:$0xf]
    %v4962 = vld [vmem:[#allocation31 + $0x8] sm:$0xf]
    %v4963 = vld [vmem:[#allocation31 + $0xc] sm:$0xf]
    %v4964 = vld [vmem:[#allocation31 + $0x10] sm:$0xf]
    %v4965 = vld [vmem:[#allocation31 + $0x14] sm:$0xf]
    %v4966 = vld [vmem:[#allocation31 + $0x18] sm:$0xf]
    %v4967 = vld [vmem:[#allocation31 + $0x1c] sm:$0xf]
    %v4968 = vld [vmem:[#allocation32] sm:$0x1]
    %v4970 = vlaneseq
    %v4971 = vshrl.u32 %v4970, 7
    %v4972 = vsub.s32 0, %v4971
    %v4973 = vrot.slane %v4968, %v4972
    %v4983 = vunpack.c.l.b16 %v4960
    %v4984 = vunpack.c.l.b16 %v4961
    %v4985 = vunpack.c.l.b16 %v4962
    %v4986 = vunpack.c.l.b16 %v4963
    %v4987 = vunpack.c.l.b16 %v4964
    %v4988 = vunpack.c.l.b16 %v4965
    %v4989 = vunpack.c.l.b16 %v4966
    %v4990 = vunpack.c.l.b16 %v4967
    %v4991 = vpack.c.b16 %v4984, %v4983
    %v4992 = vpack.c.b16 %v4986, %v4985
    %v4993 = vpack.c.b16 %v4988, %v4987
    %v4994 = vpack.c.b16 %v4990, %v4989
    %vm4999 = vcmask 523264
    %v5001 = vsel %vm4999, %v4959, 0
    %5003 = vmatprep.subr.bf16.mxu0 0
    %5004 = vmatpush1.bf16.msra.mxu0 %v4991
    %5005 = vmatprep.subr.bf16.mxu0 0
    %5006 = vmatpush1.bf16.msra.mxu0 %v4992
    %5007 = vmatprep.subr.bf16.mxu0 0
    %5008 = vmatpush1.bf16.msra.mxu0 %v4993
    %5009 = vmatprep.subr.bf16.mxu0 0
    %5010 = vmatpush1.bf16.msra.mxu0 %v4994
    %5011 = vmatprep.subr.bf16.mxu0 0
    %5012 = vmatpush1.bf16.msra.mxu0 0
    %5013 = vmatprep.subr.bf16.mxu0 0
    %5014 = vmatpush1.bf16.msra.mxu0 0
    %5015 = vmatprep.subr.bf16.mxu0 0
    %5016 = vmatpush1.bf16.msra.mxu0 0
    %5017 = vmatprep.subr.bf16.mxu0 0
    %5018 = vmatpush1.bf16.msra.mxu0 0
    %5019 = vmatprep.subr.bf16.mxu0 0
    %5020 = vmatpush1.bf16.msra.mxu0 0
    %5021 = vmatprep.subr.bf16.mxu0 0
    %5022 = vmatpush1.bf16.msra.mxu0 0
    %5023 = vmatprep.subr.bf16.mxu0 0
    %5024 = vmatpush1.bf16.msra.mxu0 0
    %5025 = vmatprep.subr.bf16.mxu0 0
    %5026 = vmatpush1.bf16.msra.mxu0 0
    %5027 = vmatprep.subr.bf16.mxu0 0
    %5028 = vmatpush1.bf16.msra.mxu0 0
    %5029 = vmatprep.subr.bf16.mxu0 0
    %5030 = vmatpush1.bf16.msra.mxu0 0
    %5031 = vmatprep.subr.bf16.mxu0 0
    %5032 = vmatpush1.bf16.msra.mxu0 0
    %5033 = vmatprep.subr.bf16.mxu0 0
    %5034 = vmatpush1.bf16.msra.mxu0 0
    %5035 = vmatprep.mubr.bf16.mxu0 0
    %5036 = vmatmul.mubr.bf16.gmra.mrb[0].mxu0 %v5001
    %v5037 = vpop.f32.mrb[0].mxu0
    %v5038 = vadd.f32 %v4973, %v5037
    %v5039 = vpop.f32.mrb[0].mxu0
    %v5040 = vpop.f32.mrb[0].mxu0
    %v5041 = vadd.f32 %v4973, %v5040
    %v5042 = vpop.f32.mrb[0].mxu0
    %5043 = vdwg.mxu0
    %v5044 = vadd.f32 %v4887, %v5038
    %v5045 = vadd.f32 %v4888, %v5041
    %v5046 = vld [vmem:[#allocation34] sm:$0x1]
    %v5047 = vld [vmem:[#allocation35] sm:$0x1]
    %v5048 = vsel %vm373, %v5044, 0.0
    %5049 = vadd.xlane.f32.xlu0 %v5048
    %v5050 = vpop.xlane.xlu0 %5049
    %v5051 = vsel %vm373, %v5045, 0.0
    %5052 = vadd.xlane.f32.xlu0 %v5051
    %v5053 = vpop.xlane.xlu0 %5052
    %v5054 = vmul.f32 %v5050, %v2555
    %v5055 = vmul.f32 %v5053, %v2555
    %v5056 = vsub.f32 %v5044, %v5054
    %v5057 = vsub.f32 %v5045, %v5055
    %v5058 = vmul.f32 %v5056, %v5056
    %v5059 = vmul.f32 %v5057, %v5057
    %v5060 = vsel %vm373, %v5058, 0.0
    %5061 = vadd.xlane.f32.xlu0 %v5060
    %v5062 = vpop.xlane.xlu0 %5061
    %v5063 = vsel %vm373, %v5059, 0.0
    %5064 = vadd.xlane.f32.xlu0 %v5063
    %v5065 = vpop.xlane.xlu0 %5064
    %v5066 = vmul.f32 %v5062, %v2555
    %v5067 = vmul.f32 %v5065, %v2555
    %v5068 = vadd.f32 %v5066, 1e-05
    %v5069 = vadd.f32 %v5067, 1e-05
    %v5070 = vrsqrt.pop %v5068
    %v5071 = vrsqrt.pop %v5069
    %v5072 = vmul.f32 %v5056, %v5070
    %v5073 = vmul.f32 %v5057, %v5071
    %v5075 = vlaneseq
    %v5076 = vshrl.u32 %v5075, 7
    %v5077 = vsub.s32 0, %v5076
    %v5078 = vrot.slane %v5046, %v5077
    %v5080 = vmul.f32 %v5072, %v5078
    %v5081 = vmul.f32 %v5073, %v5078
    %v5083 = vlaneseq
    %v5084 = vshrl.u32 %v5083, 7
    %v5085 = vsub.s32 0, %v5084
    %v5086 = vrot.slane %v5047, %v5085
    %v5088 = vadd.f32 %v5080, %v5086
    %v5089 = vadd.f32 %v5081, %v5086
    %5090 = vst.msk [vmem:[#allocation37] sm:$0xff] %vm373, %v5088
    %5091 = vst.msk [vmem:[#allocation37 + $0x8] sm:$0xff] %vm373, %v5089
    // Predicated region
    $region178: #{tpu_custom_call.1} parent=1 // pred_check
      _
    $region179: #{tpu_custom_call.1} parent=1 // pred_check_branch
      %5093 = sbr.rel (0) target = $region181
    $region180: #{tpu_custom_call.1} parent=1 // pred_region
      %s5095 = ssub.s32 256, 256
      %5096 = vsyncadd [#allocation4], %s5095
      %s5097 = sshll.u32 [#allocation37], 4
      %s5098 = int_to_ptr.vmem [resolvable:$true] %s5097
      %5103 = dma.vmem_to_hbm [thread:$0]  %s5098, 256, %s22, [#allocation4], 128, 128, 8
    $region181: #{tpu_custom_call.1} parent=1 // pred_fallthru
      _
    // Predicated region
    $region182: #{tpu_custom_call.1} parent=1 // pred_check
      _
    $region183: #{tpu_custom_call.1} parent=1 // pred_check_branch
      %5105 = sbr.rel (0) target = $region185
    $region184: #{tpu_custom_call.1} parent=1 // pred_region
      %5106 = dma.done [#allocation4], 256
    $region185: #{tpu_custom_call.1} parent=1 // pred_fallthru
      _
    %5107 = vsyncpa [#allocation3], 1
    %5108 = vsyncpa [#allocation6], 1
    %5109 = vsyncpa [#allocation9], 1
    %5110 = vsyncpa [#allocation12], 1
    %5111 = vsyncpa [#allocation15], 1
    %5112 = vsyncpa [#allocation18], 1
    %5113 = vsyncpa [#allocation21], 1
    %5114 = vsyncpa [#allocation24], 1
    %5115 = vsyncpa [#allocation27], 1
    %5116 = vsyncpa [#allocation30], 1
    %5117 = vsyncpa [#allocation33], 1
    %5118 = vsyncpa [#allocation36], 1
    %5119 = vsyncpa [#allocation4], 1

</llo_original>
